<compile_context>
chip_gen: v7x
topology: tpu7x:2x2x1
jax: 0.10.0
libtpu: 0.0.40
codegen_flags: <defaults>
</compile_context>

<pallas_src>
import functools

import jax
import jax.numpy as jnp
from jax.experimental import pallas as pl
from jax.experimental.pallas import tpu as pltpu


def _round_up(x, m):
    return (x + m - 1) // m * m


def _lstm_kernel(x_ref, wih0_ref, wihl_ref, whh_ref, b_ref,   # inputs
                 out_ref, h_ref, c_ref,                        # outputs (h/c resident)
                 proj_ref, *maybe_act,                         # VMEM scratch
                 num_layers, t_blk, hidden_pad):
    act_ref = maybe_act[0] if maybe_act else None
    H = hidden_pad
    TB = t_blk
    B = x_ref.shape[1]                                         # batch tile (padded)
    D = x_ref.shape[2]                                         # padded layer-0 input width

    @pl.when(pl.program_id(1) == 0)                            # first time-chunk
    def _init():
        h_ref[...] = jnp.zeros_like(h_ref)
        c_ref[...] = jnp.zeros_like(c_ref)

    for l in range(num_layers):
        is_last = l == num_layers - 1

        # ---- batched, non-recurrent input projection for the whole chunk ----
        if l == 0:
            x_chunk = x_ref[...].reshape(TB * B, D)            # bf16
            proj = jnp.dot(x_chunk, wih0_ref[...],
                           preferred_element_type=jnp.float32)
        else:
            x_chunk = act_ref[...].reshape(TB * B, H)          # bf16
            proj = jnp.dot(x_chunk, wihl_ref[l - 1],
                           preferred_element_type=jnp.float32)
        proj_ref[...] = (proj + b_ref[l]).reshape(TB, B, 4 * H)

        # ---- serial recurrence; (h, c) carried in vregs, not VMEM ----
        def step(t, carry, l=l, is_last=is_last):
            h_prev, c_prev = carry                             # f32
            gates = proj_ref[t] + jnp.dot(
                h_prev.astype(jnp.bfloat16), whh_ref[l],       # W_hh fed from VMEM
                preferred_element_type=jnp.float32)
            s = jax.nn.sigmoid(gates)                          # one pass over (B, 4H)
            i_g = s[:, 0 * H:1 * H]
            f_g = s[:, 1 * H:2 * H]
            g_g = 2.0 * s[:, 2 * H:3 * H] - 1.0                # tanh via scaled sigmoid
            o_g = s[:, 3 * H:4 * H]
            c_new = f_g * c_prev + i_g * g_g
            h_new = o_g * jnp.tanh(c_new)
            if is_last:
                out_ref[t] = h_new
            else:
                act_ref[t] = h_new.astype(act_ref.dtype)
            return h_new, c_new

        h_fin, c_fin = jax.lax.fori_loop(
            0, TB, step, (h_ref[l], c_ref[l]), unroll=min(TB, 8))
        h_ref[l] = h_fin
        c_ref[l] = c_fin


def pack_lstm_params(params, *, input_size, hidden_size, num_layers,
                     weight_dtype=jnp.bfloat16):
    """One-time host-side packing of torch.nn.LSTM-shaped params.

    Returns (wih0, wihl, whh, bias):
      * weights pre-transposed to (in_features, 4*H_pad), stored in bf16,
      * layer-0 W_ih packed at input width, layers>0 at hidden width,
      * each gate occupies its own lane-aligned 128-wide column block,
      * g-gate columns/bias pre-scaled by 2 (tanh via fused sigmoid),
      * bias kept in f32 (added to the f32 projection),
      * zero padding everywhere else.
    """
    H = hidden_size
    H_pad = _round_up(H, 128)
    In_pad = _round_up(input_size, 128)
    G = 4 * H_pad

    wih0 = jnp.zeros((In_pad, G), jnp.float32)
    wihl = jnp.zeros((max(num_layers - 1, 1), H_pad, G), jnp.float32)
    whh = jnp.zeros((num_layers, H_pad, G), jnp.float32)
    bias = jnp.zeros((num_layers, 1, G), jnp.float32)
    for l in range(num_layers):
        w_ih_l, w_hh_l, b_ih_l, b_hh_l = params[l]             # (4H,d),(4H,H),(4H,),(4H,)
        b_l = b_ih_l + b_hh_l
        for g in range(4):                                     # gate order: i, f, g, o
            scale = 2.0 if g == 2 else 1.0
            col = slice(g * H_pad, g * H_pad + H)
            w_ih_g = scale * w_ih_l[g * H:(g + 1) * H, :].T
            if l == 0:
                wih0 = wih0.at[:input_size, col].set(w_ih_g)
            else:
                wihl = wihl.at[l - 1, :hidden_size, col].set(w_ih_g)
            whh = whh.at[l, :H, col].set(scale * w_hh_l[g * H:(g + 1) * H, :].T)
            bias = bias.at[l, 0, col].set(scale * b_l[g * H:(g + 1) * H])
    return (wih0.astype(weight_dtype), wihl.astype(weight_dtype),
            whh.astype(weight_dtype), bias, (H_pad, In_pad))


def encoder_lstm_forward(inputs, packed, *, input_size, hidden_size, num_layers,
                         t_blk=None):
    """inputs: [seq_len, batch, input_size]; packed: output of pack_lstm_params."""
    S, B, _ = inputs.shape
    H = hidden_size
    wih0, wihl, whh, bias, (H_pad, In_pad) = packed
    G = 4 * H_pad
    Lm1 = max(num_layers - 1, 1)

    # Batch tiling: pad to sublanes, tile toward the MXU row dimension.
    if B <= 128:
        b_blk = _round_up(B, 8)
        B_pad = b_blk
    else:
        b_blk = 128
        B_pad = _round_up(B, 128)
    b_tiles = B_pad // b_blk

    # Time chunking: bound the projection scratch and keep DMA/compute overlap.
    if t_blk is None:
        t_blk = S
        for cand in range(min(S, 64), 0, -1):
            if S % cand == 0:
                t_blk = cand
                break
    assert S % t_blk == 0, "t_blk must divide seq_len"
    num_chunks = S // t_blk

    # bf16 input padding (no 4-byte HBM copy of the padded input).
    x_pad = jnp.zeros((S, B_pad, In_pad), jnp.bfloat16).at[:, :B, :input_size].set(
        inputs.astype(jnp.bfloat16))

    # Generation-aware VMEM budget.
    try:
        vmem_cap = int(pltpu.get_tpu_info().vmem_capacity_bytes)
    except Exception:  # pragma: no cover - conservative fallback
        vmem_cap = 64 * 1024 * 1024
    vmem_limit = min(vmem_cap * 3 // 4, 100 * 1024 * 1024)

    kernel = functools.partial(_lstm_kernel, num_layers=num_layers,
                               t_blk=t_blk, hidden_pad=H_pad)

    scratch_shapes = [pltpu.VMEM((t_blk, b_blk, G), jnp.float32)]   # chunk projections
    if num_layers > 1:
        scratch_shapes.append(pltpu.VMEM((t_blk, b_blk, H_pad), jnp.bfloat16))

    grid_spec = pltpu.PrefetchScalarGridSpec(
        num_scalar_prefetch=0,
        grid=(b_tiles, num_chunks),
        in_specs=[
            pl.BlockSpec((t_blk, b_blk, In_pad), lambda b, c: (c, b, 0)),
            pl.BlockSpec((In_pad, G), lambda b, c: (0, 0)),
            pl.BlockSpec((Lm1, H_pad, G), lambda b, c: (0, 0, 0)),
            pl.BlockSpec((num_layers, H_pad, G), lambda b, c: (0, 0, 0)),
            pl.BlockSpec((num_layers, 1, G), lambda b, c: (0, 0, 0)),
        ],
        out_specs=[
            pl.BlockSpec((t_blk, b_blk, H_pad), lambda b, c: (c, b, 0)),
            pl.BlockSpec((num_layers, b_blk, H_pad), lambda b, c: (0, b, 0)),
            pl.BlockSpec((num_layers, b_blk, H_pad), lambda b, c: (0, b, 0)),
        ],
        scratch_shapes=scratch_shapes,
    )

    out_p, h_p, c_p = pl.pallas_call(
        kernel,
        out_shape=(
            jax.ShapeDtypeStruct((S, B_pad, H_pad), jnp.float32),
            jax.ShapeDtypeStruct((num_layers, B_pad, H_pad), jnp.float32),
            jax.ShapeDtypeStruct((num_layers, B_pad, H_pad), jnp.float32),
        ),
        grid_spec=grid_spec,
        compiler_params=pltpu.CompilerParams(
            # Batch tiles are independent (megacore); time chunks are recurrent.
            dimension_semantics=("parallel", "arbitrary"),
            vmem_limit_bytes=vmem_limit),
    )(x_pad, wih0, wihl, whh, bias)

    # Strip batch / hidden padding.
    output = out_p[:, :B, :H]
    h_n = h_p[:, :B, :H]
    c_n = c_p[:, :B, :H]
    return output, (h_n, c_n)


def lstm_reference(inputs, params, hidden_size, num_layers):
    """Pure-JAX reference identical to torch.nn.LSTM forward (zero init states)."""
    S, B, _ = inputs.shape
    H = hidden_size
    h = [jnp.zeros((B, H), jnp.float32) for _ in range(num_layers)]
    c = [jnp.zeros((B, H), jnp.float32) for _ in range(num_layers)]
    outs = []
    for t in range(S):
        x = inputs[t]
        for l in range(num_layers):
            w_ih, w_hh, b_ih, b_hh = params[l]
            gates = x @ w_ih.T + b_ih + h[l] @ w_hh.T + b_hh
            i = jax.nn.sigmoid(gates[:, 0:H])
            f = jax.nn.sigmoid(gates[:, H:2 * H])
            g = jnp.tanh(gates[:, 2 * H:3 * H])
            o = jax.nn.sigmoid(gates[:, 3 * H:4 * H])
            c[l] = f * c[l] + i * g
            h[l] = o * jnp.tanh(c[l])
            x = h[l]
        outs.append(x)
    return jnp.stack(outs), jnp.stack(h), jnp.stack(c)


if __name__ == "__main__":
    SEQ_LEN, BATCH = 8, 4
    INPUT_SIZE, HIDDEN_SIZE, NUM_LAYERS = 16, 32, 2

    key = jax.random.PRNGKey(0)
    k = 1.0 / jnp.sqrt(HIDDEN_SIZE)

    # Deterministic parameter init matching torch.nn.LSTM shapes (gate order i,f,g,o).
    params = []
    for l in range(NUM_LAYERS):
        d_in = INPUT_SIZE if l == 0 else HIDDEN_SIZE
        key, k1, k2, k3, k4 = jax.random.split(key, 5)
        w_ih = jax.random.uniform(k1, (4 * HIDDEN_SIZE, d_in), jnp.float32, -k, k)
        w_hh = jax.random.uniform(k2, (4 * HIDDEN_SIZE, HIDDEN_SIZE), jnp.float32, -k, k)
        b_ih = jax.random.uniform(k3, (4 * HIDDEN_SIZE,), jnp.float32, -k, k)
        b_hh = jax.random.uniform(k4, (4 * HIDDEN_SIZE,), jnp.float32, -k, k)
        params.append((w_ih, w_hh, b_ih, b_hh))

    # The kernel stores weights in bf16; use the same bf16-rounded weight values
    # for the f32 reference so the comparison isolates kernel numerics.
    params_q = [tuple(jnp.asarray(p).astype(jnp.bfloat16).astype(jnp.float32)
                      for p in lay) for lay in params]

    key, kx = jax.random.split(key)
    inputs = jax.random.normal(kx, (SEQ_LEN, BATCH, INPUT_SIZE), jnp.float32)

    # Parameter packing is hoisted out of the per-call path (done once).
    packed = pack_lstm_params(params_q, input_size=INPUT_SIZE,
                              hidden_size=HIDDEN_SIZE, num_layers=NUM_LAYERS)

    output, (h_n, c_n) = encoder_lstm_forward(
        inputs, packed,
        input_size=INPUT_SIZE, hidden_size=HIDDEN_SIZE, num_layers=NUM_LAYERS)
    jax.block_until_ready((output, h_n, c_n))

    ref_out, ref_h, ref_c = lstm_reference(inputs, params_q, HIDDEN_SIZE, NUM_LAYERS)
    assert output.shape == (SEQ_LEN, BATCH, HIDDEN_SIZE)
    assert h_n.shape == (NUM_LAYERS, BATCH, HIDDEN_SIZE)
    assert c_n.shape == (NUM_LAYERS, BATCH, HIDDEN_SIZE)
    # bf16 activations on the kernel path -> slightly relaxed tolerance.
    assert jnp.allclose(output, ref_out, atol=2e-2, rtol=2e-2)
    assert jnp.allclose(h_n, ref_h, atol=2e-2, rtol=2e-2)
    assert jnp.allclose(c_n, ref_c, atol=2e-2, rtol=2e-2)

    print("KERNEL_OK")
</pallas_src>

<mosaic_0001>
module attributes {stable_mosaic.version = 11 : i64} {
  func.func @_lstm_kernel(%arg0: i32, %arg1: i32, %arg2: memref<8x8x128xbf16, #tpu.memory_space<vmem>>, %arg3: memref<128x512xbf16, #tpu.memory_space<vmem>>, %arg4: memref<1x128x512xbf16, #tpu.memory_space<vmem>>, %arg5: memref<2x128x512xbf16, #tpu.memory_space<vmem>>, %arg6: memref<2x1x512xf32, #tpu.memory_space<vmem>>, %arg7: memref<8x8x128xf32, #tpu.memory_space<vmem>>, %arg8: memref<2x8x128xf32, #tpu.memory_space<vmem>>, %arg9: memref<2x8x128xf32, #tpu.memory_space<vmem>>, %arg10: memref<8x8x512xf32, #tpu.memory_space<vmem>>, %arg11: memref<8x8x128xbf16, #tpu.memory_space<vmem>>) attributes {dimension_semantics = [#tpu.dimension_semantics<parallel>, #tpu.dimension_semantics<arbitrary>], iteration_bounds = array<i64: 1, 1>, scalar_prefetch = 0 : i64, scratch_operands = 2 : i64, tpu.core_type = #tpu.core_type<tc>, window_params = [{transform_indices = @transform_0, window_bounds = array<i64: 8, 8, 128>}, {pipeline_mode = #tpu.pipeline_mode<synchronous>, transform_indices = @transform_1, window_bounds = array<i64: 128, 512>}, {pipeline_mode = #tpu.pipeline_mode<synchronous>, transform_indices = @transform_2, window_bounds = array<i64: 1, 128, 512>}, {pipeline_mode = #tpu.pipeline_mode<synchronous>, transform_indices = @transform_3, window_bounds = array<i64: 2, 128, 512>}, {pipeline_mode = #tpu.pipeline_mode<synchronous>, transform_indices = @transform_4, window_bounds = array<i64: 2, 1, 512>}, {transform_indices = @transform_5, window_bounds = array<i64: 8, 8, 128>}, {transform_indices = @transform_6, window_bounds = array<i64: 2, 8, 128>}, {transform_indices = @transform_7, window_bounds = array<i64: 2, 8, 128>}]} {
    %c0_i32 = arith.constant 0 : i32
    %0 = arith.cmpi eq, %arg1, %c0_i32 : i32
    %1 = arith.extui %0 : i1 to i32
    %c0_i32_0 = arith.constant 0 : i32
    %2 = arith.cmpi ne, %1, %c0_i32_0 : i32
    scf.if %2 {
      %cst_233 = arith.constant 0.000000e+00 : f32
      %532 = vector.broadcast %cst_233 : f32 to vector<2x8x128xf32>
      %c0_234 = arith.constant 0 : index
      %c0_235 = arith.constant 0 : index
      %c0_236 = arith.constant 0 : index
      %533 = vector.load %arg8[%c0_234, %c0_235, %c0_236] : memref<2x8x128xf32, #tpu.memory_space<vmem>>, vector<2x8x128xf32>
      tpu.vector_store %arg8[%c0_234, %c0_235, %c0_236], %532 {strides = array<i32>} : memref<2x8x128xf32, #tpu.memory_space<vmem>>, vector<2x8x128xf32>,
      %cst_237 = arith.constant 0.000000e+00 : f32
      %534 = vector.broadcast %cst_237 : f32 to vector<2x8x128xf32>
      %c0_238 = arith.constant 0 : index
      %c0_239 = arith.constant 0 : index
      %c0_240 = arith.constant 0 : index
      %535 = vector.load %arg9[%c0_238, %c0_239, %c0_240] : memref<2x8x128xf32, #tpu.memory_space<vmem>>, vector<2x8x128xf32>
      tpu.vector_store %arg9[%c0_238, %c0_239, %c0_240], %534 {strides = array<i32>} : memref<2x8x128xf32, #tpu.memory_space<vmem>>, vector<2x8x128xf32>,
    } else {
    }
    %c0 = arith.constant 0 : index
    %c0_1 = arith.constant 0 : index
    %c0_2 = arith.constant 0 : index
    %3 = vector.load %arg2[%c0, %c0_1, %c0_2] : memref<8x8x128xbf16, #tpu.memory_space<vmem>>, vector<8x8x128xbf16>
    %4 = vector.shape_cast %3 : vector<8x8x128xbf16> to vector<64x128xbf16>
    %c0_3 = arith.constant 0 : index
    %c0_4 = arith.constant 0 : index
    %5 = vector.load %arg3[%c0_3, %c0_4] : memref<128x512xbf16, #tpu.memory_space<vmem>>, vector<128x512xbf16>
    %cst = arith.constant dense<0.000000e+00> : vector<64x512xf32>
    %6 = tpu.matmul %4, %5, %cst {dimension_numbers = #tpu.dot_dimension_numbers<[1], [0], [0], [1], [0, 0, 1, 1], [], []>} : vector<64x128xbf16>, vector<128x512xbf16>, vector<64x512xf32> -> vector<64x512xf32>
    %c0_5 = arith.constant 0 : index
    %c0_6 = arith.constant 0 : index
    %c0_7 = arith.constant 0 : index
    %7 = vector.load %arg6[%c0_5, %c0_6, %c0_7] : memref<2x1x512xf32, #tpu.memory_space<vmem>>, vector<1x1x512xf32>
    %8 = vector.shape_cast %7 : vector<1x1x512xf32> to vector<1x512xf32>
    %9 = vector.broadcast %8 : vector<1x512xf32> to vector<64x512xf32>
    %10 = arith.addf %6, %9 : vector<64x512xf32>
    %11 = vector.shape_cast %10 : vector<64x512xf32> to vector<8x8x512xf32>
    %c0_8 = arith.constant 0 : index
    %c0_9 = arith.constant 0 : index
    %c0_10 = arith.constant 0 : index
    %12 = vector.load %arg10[%c0_8, %c0_9, %c0_10] : memref<8x8x512xf32, #tpu.memory_space<vmem>>, vector<8x8x512xf32>
    tpu.vector_store %arg10[%c0_8, %c0_9, %c0_10], %11 {strides = array<i32>} : memref<8x8x512xf32, #tpu.memory_space<vmem>>, vector<8x8x512xf32>,
    %c0_11 = arith.constant 0 : index
    %c0_12 = arith.constant 0 : index
    %c0_13 = arith.constant 0 : index
    %13 = vector.load %arg8[%c0_11, %c0_12, %c0_13] : memref<2x8x128xf32, #tpu.memory_space<vmem>>, vector<1x8x128xf32>
    %14 = vector.shape_cast %13 : vector<1x8x128xf32> to vector<8x128xf32>
    %c0_14 = arith.constant 0 : index
    %c0_15 = arith.constant 0 : index
    %c0_16 = arith.constant 0 : index
    %15 = vector.load %arg9[%c0_14, %c0_15, %c0_16] : memref<2x8x128xf32, #tpu.memory_space<vmem>>, vector<1x8x128xf32>
    %16 = vector.shape_cast %15 : vector<1x8x128xf32> to vector<8x128xf32>
    %c0_i32_17 = arith.constant 0 : i32
    %17 = arith.index_cast %c0_i32_17 : i32 to index
    %c0_18 = arith.constant 0 : index
    %c0_19 = arith.constant 0 : index
    %18 = vector.load %arg10[%17, %c0_18, %c0_19] : memref<8x8x512xf32, #tpu.memory_space<vmem>>, vector<1x8x512xf32>
    %19 = vector.shape_cast %18 : vector<1x8x512xf32> to vector<8x512xf32>
    %20 = arith.truncf %14 : vector<8x128xf32> to vector<8x128xbf16>
    %c0_20 = arith.constant 0 : index
    %c0_21 = arith.constant 0 : index
    %c0_22 = arith.constant 0 : index
    %21 = vector.load %arg5[%c0_20, %c0_21, %c0_22] : memref<2x128x512xbf16, #tpu.memory_space<vmem>>, vector<1x128x512xbf16>
    %22 = vector.shape_cast %21 : vector<1x128x512xbf16> to vector<128x512xbf16>
    %cst_23 = arith.constant dense<0.000000e+00> : vector<8x512xf32>
    %23 = tpu.matmul %20, %22, %cst_23 {dimension_numbers = #tpu.dot_dimension_numbers<[1], [0], [0], [1], [0, 0, 1, 1], [], []>} : vector<8x128xbf16>, vector<128x512xbf16>, vector<8x512xf32> -> vector<8x512xf32>
    %24 = arith.addf %19, %23 : vector<8x512xf32>
    %25 = arith.negf %24 : vector<8x512xf32>
    %26 = math.exp %25 : vector<8x512xf32>
    %cst_24 = arith.constant 1.000000e+00 : f32
    %27 = vector.broadcast %cst_24 : f32 to vector<8x512xf32>
    %28 = arith.addf %27, %26 : vector<8x512xf32>
    %29 = arith.divf %27, %28 : vector<8x512xf32>
    %30 = vector.extract_strided_slice %29 {offsets = [0, 0], sizes = [8, 128], strides = [1, 1]} : vector<8x512xf32> to vector<8x128xf32>
    %31 = vector.extract_strided_slice %29 {offsets = [0, 128], sizes = [8, 128], strides = [1, 1]} : vector<8x512xf32> to vector<8x128xf32>
    %32 = vector.extract_strided_slice %29 {offsets = [0, 256], sizes = [8, 128], strides = [1, 1]} : vector<8x512xf32> to vector<8x128xf32>
    %cst_25 = arith.constant 2.000000e+00 : f32
    %33 = vector.broadcast %cst_25 : f32 to vector<8x128xf32>
    %34 = arith.mulf %33, %32 : vector<8x128xf32>
    %cst_26 = arith.constant 1.000000e+00 : f32
    %35 = vector.broadcast %cst_26 : f32 to vector<8x128xf32>
    %36 = arith.subf %34, %35 : vector<8x128xf32>
    %37 = vector.extract_strided_slice %29 {offsets = [0, 384], sizes = [8, 128], strides = [1, 1]} : vector<8x512xf32> to vector<8x128xf32>
    %38 = arith.mulf %31, %16 : vector<8x128xf32>
    %39 = arith.mulf %30, %36 : vector<8x128xf32>
    %40 = arith.addf %38, %39 : vector<8x128xf32>
    %41 = math.tanh %40 : vector<8x128xf32>
    %42 = arith.mulf %37, %41 : vector<8x128xf32>
    %43 = arith.truncf %42 : vector<8x128xf32> to vector<8x128xbf16>
    %44 = arith.index_cast %c0_i32_17 : i32 to index
    %c0_27 = arith.constant 0 : index
    %c0_28 = arith.constant 0 : index
    %45 = vector.load %arg11[%44, %c0_27, %c0_28] : memref<8x8x128xbf16, #tpu.memory_space<vmem>>, vector<1x8x128xbf16>
    %46 = vector.shape_cast %45 : vector<1x8x128xbf16> to vector<8x128xbf16>
    %47 = vector.shape_cast %43 : vector<8x128xbf16> to vector<1x8x128xbf16>
    tpu.vector_store %arg11[%44, %c0_27, %c0_28], %47 {strides = array<i32>} : memref<8x8x128xbf16, #tpu.memory_space<vmem>>, vector<1x8x128xbf16>,
    %c1_i32 = arith.constant 1 : i32
    %48 = arith.index_cast %c1_i32 : i32 to index
    %c0_29 = arith.constant 0 : index
    %c0_30 = arith.constant 0 : index
    %49 = vector.load %arg10[%48, %c0_29, %c0_30] : memref<8x8x512xf32, #tpu.memory_space<vmem>>, vector<1x8x512xf32>
    %50 = vector.shape_cast %49 : vector<1x8x512xf32> to vector<8x512xf32>
    %51 = arith.truncf %42 : vector<8x128xf32> to vector<8x128xbf16>
    %c0_31 = arith.constant 0 : index
    %c0_32 = arith.constant 0 : index
    %c0_33 = arith.constant 0 : index
    %52 = vector.load %arg5[%c0_31, %c0_32, %c0_33] : memref<2x128x512xbf16, #tpu.memory_space<vmem>>, vector<1x128x512xbf16>
    %53 = vector.shape_cast %52 : vector<1x128x512xbf16> to vector<128x512xbf16>
    %cst_34 = arith.constant dense<0.000000e+00> : vector<8x512xf32>
    %54 = tpu.matmul %51, %53, %cst_34 {dimension_numbers = #tpu.dot_dimension_numbers<[1], [0], [0], [1], [0, 0, 1, 1], [], []>} : vector<8x128xbf16>, vector<128x512xbf16>, vector<8x512xf32> -> vector<8x512xf32>
    %55 = arith.addf %50, %54 : vector<8x512xf32>
    %56 = arith.negf %55 : vector<8x512xf32>
    %57 = math.exp %56 : vector<8x512xf32>
    %cst_35 = arith.constant 1.000000e+00 : f32
    %58 = vector.broadcast %cst_35 : f32 to vector<8x512xf32>
    %59 = arith.addf %58, %57 : vector<8x512xf32>
    %60 = arith.divf %58, %59 : vector<8x512xf32>
    %61 = vector.extract_strided_slice %60 {offsets = [0, 0], sizes = [8, 128], strides = [1, 1]} : vector<8x512xf32> to vector<8x128xf32>
    %62 = vector.extract_strided_slice %60 {offsets = [0, 128], sizes = [8, 128], strides = [1, 1]} : vector<8x512xf32> to vector<8x128xf32>
    %63 = vector.extract_strided_slice %60 {offsets = [0, 256], sizes = [8, 128], strides = [1, 1]} : vector<8x512xf32> to vector<8x128xf32>
    %cst_36 = arith.constant 2.000000e+00 : f32
    %64 = vector.broadcast %cst_36 : f32 to vector<8x128xf32>
    %65 = arith.mulf %64, %63 : vector<8x128xf32>
    %cst_37 = arith.constant 1.000000e+00 : f32
    %66 = vector.broadcast %cst_37 : f32 to vector<8x128xf32>
    %67 = arith.subf %65, %66 : vector<8x128xf32>
    %68 = vector.extract_strided_slice %60 {offsets = [0, 384], sizes = [8, 128], strides = [1, 1]} : vector<8x512xf32> to vector<8x128xf32>
    %69 = arith.mulf %62, %40 : vector<8x128xf32>
    %70 = arith.mulf %61, %67 : vector<8x128xf32>
    %71 = arith.addf %69, %70 : vector<8x128xf32>
    %72 = math.tanh %71 : vector<8x128xf32>
    %73 = arith.mulf %68, %72 : vector<8x128xf32>
    %74 = arith.truncf %73 : vector<8x128xf32> to vector<8x128xbf16>
    %75 = arith.index_cast %c1_i32 : i32 to index
    %c0_38 = arith.constant 0 : index
    %c0_39 = arith.constant 0 : index
    %76 = vector.load %arg11[%75, %c0_38, %c0_39] : memref<8x8x128xbf16, #tpu.memory_space<vmem>>, vector<1x8x128xbf16>
    %77 = vector.shape_cast %76 : vector<1x8x128xbf16> to vector<8x128xbf16>
    %78 = vector.shape_cast %74 : vector<8x128xbf16> to vector<1x8x128xbf16>
    tpu.vector_store %arg11[%75, %c0_38, %c0_39], %78 {strides = array<i32>} : memref<8x8x128xbf16, #tpu.memory_space<vmem>>, vector<1x8x128xbf16>,
    %c2_i32 = arith.constant 2 : i32
    %79 = arith.index_cast %c2_i32 : i32 to index
    %c0_40 = arith.constant 0 : index
    %c0_41 = arith.constant 0 : index
    %80 = vector.load %arg10[%79, %c0_40, %c0_41] : memref<8x8x512xf32, #tpu.memory_space<vmem>>, vector<1x8x512xf32>
    %81 = vector.shape_cast %80 : vector<1x8x512xf32> to vector<8x512xf32>
    %82 = arith.truncf %73 : vector<8x128xf32> to vector<8x128xbf16>
    %c0_42 = arith.constant 0 : index
    %c0_43 = arith.constant 0 : index
    %c0_44 = arith.constant 0 : index
    %83 = vector.load %arg5[%c0_42, %c0_43, %c0_44] : memref<2x128x512xbf16, #tpu.memory_space<vmem>>, vector<1x128x512xbf16>
    %84 = vector.shape_cast %83 : vector<1x128x512xbf16> to vector<128x512xbf16>
    %cst_45 = arith.constant dense<0.000000e+00> : vector<8x512xf32>
    %85 = tpu.matmul %82, %84, %cst_45 {dimension_numbers = #tpu.dot_dimension_numbers<[1], [0], [0], [1], [0, 0, 1, 1], [], []>} : vector<8x128xbf16>, vector<128x512xbf16>, vector<8x512xf32> -> vector<8x512xf32>
    %86 = arith.addf %81, %85 : vector<8x512xf32>
    %87 = arith.negf %86 : vector<8x512xf32>
    %88 = math.exp %87 : vector<8x512xf32>
    %cst_46 = arith.constant 1.000000e+00 : f32
    %89 = vector.broadcast %cst_46 : f32 to vector<8x512xf32>
    %90 = arith.addf %89, %88 : vector<8x512xf32>
    %91 = arith.divf %89, %90 : vector<8x512xf32>
    %92 = vector.extract_strided_slice %91 {offsets = [0, 0], sizes = [8, 128], strides = [1, 1]} : vector<8x512xf32> to vector<8x128xf32>
    %93 = vector.extract_strided_slice %91 {offsets = [0, 128], sizes = [8, 128], strides = [1, 1]} : vector<8x512xf32> to vector<8x128xf32>
    %94 = vector.extract_strided_slice %91 {offsets = [0, 256], sizes = [8, 128], strides = [1, 1]} : vector<8x512xf32> to vector<8x128xf32>
    %cst_47 = arith.constant 2.000000e+00 : f32
    %95 = vector.broadcast %cst_47 : f32 to vector<8x128xf32>
    %96 = arith.mulf %95, %94 : vector<8x128xf32>
    %cst_48 = arith.constant 1.000000e+00 : f32
    %97 = vector.broadcast %cst_48 : f32 to vector<8x128xf32>
    %98 = arith.subf %96, %97 : vector<8x128xf32>
    %99 = vector.extract_strided_slice %91 {offsets = [0, 384], sizes = [8, 128], strides = [1, 1]} : vector<8x512xf32> to vector<8x128xf32>
    %100 = arith.mulf %93, %71 : vector<8x128xf32>
    %101 = arith.mulf %92, %98 : vector<8x128xf32>
    %102 = arith.addf %100, %101 : vector<8x128xf32>
    %103 = math.tanh %102 : vector<8x128xf32>
    %104 = arith.mulf %99, %103 : vector<8x128xf32>
    %105 = arith.truncf %104 : vector<8x128xf32> to vector<8x128xbf16>
    %106 = arith.index_cast %c2_i32 : i32 to index
    %c0_49 = arith.constant 0 : index
    %c0_50 = arith.constant 0 : index
    %107 = vector.load %arg11[%106, %c0_49, %c0_50] : memref<8x8x128xbf16, #tpu.memory_space<vmem>>, vector<1x8x128xbf16>
    %108 = vector.shape_cast %107 : vector<1x8x128xbf16> to vector<8x128xbf16>
    %109 = vector.shape_cast %105 : vector<8x128xbf16> to vector<1x8x128xbf16>
    tpu.vector_store %arg11[%106, %c0_49, %c0_50], %109 {strides = array<i32>} : memref<8x8x128xbf16, #tpu.memory_space<vmem>>, vector<1x8x128xbf16>,
    %c3_i32 = arith.constant 3 : i32
    %110 = arith.index_cast %c3_i32 : i32 to index
    %c0_51 = arith.constant 0 : index
    %c0_52 = arith.constant 0 : index
    %111 = vector.load %arg10[%110, %c0_51, %c0_52] : memref<8x8x512xf32, #tpu.memory_space<vmem>>, vector<1x8x512xf32>
    %112 = vector.shape_cast %111 : vector<1x8x512xf32> to vector<8x512xf32>
    %113 = arith.truncf %104 : vector<8x128xf32> to vector<8x128xbf16>
    %c0_53 = arith.constant 0 : index
    %c0_54 = arith.constant 0 : index
    %c0_55 = arith.constant 0 : index
    %114 = vector.load %arg5[%c0_53, %c0_54, %c0_55] : memref<2x128x512xbf16, #tpu.memory_space<vmem>>, vector<1x128x512xbf16>
    %115 = vector.shape_cast %114 : vector<1x128x512xbf16> to vector<128x512xbf16>
    %cst_56 = arith.constant dense<0.000000e+00> : vector<8x512xf32>
    %116 = tpu.matmul %113, %115, %cst_56 {dimension_numbers = #tpu.dot_dimension_numbers<[1], [0], [0], [1], [0, 0, 1, 1], [], []>} : vector<8x128xbf16>, vector<128x512xbf16>, vector<8x512xf32> -> vector<8x512xf32>
    %117 = arith.addf %112, %116 : vector<8x512xf32>
    %118 = arith.negf %117 : vector<8x512xf32>
    %119 = math.exp %118 : vector<8x512xf32>
    %cst_57 = arith.constant 1.000000e+00 : f32
    %120 = vector.broadcast %cst_57 : f32 to vector<8x512xf32>
    %121 = arith.addf %120, %119 : vector<8x512xf32>
    %122 = arith.divf %120, %121 : vector<8x512xf32>
    %123 = vector.extract_strided_slice %122 {offsets = [0, 0], sizes = [8, 128], strides = [1, 1]} : vector<8x512xf32> to vector<8x128xf32>
    %124 = vector.extract_strided_slice %122 {offsets = [0, 128], sizes = [8, 128], strides = [1, 1]} : vector<8x512xf32> to vector<8x128xf32>
    %125 = vector.extract_strided_slice %122 {offsets = [0, 256], sizes = [8, 128], strides = [1, 1]} : vector<8x512xf32> to vector<8x128xf32>
    %cst_58 = arith.constant 2.000000e+00 : f32
    %126 = vector.broadcast %cst_58 : f32 to vector<8x128xf32>
    %127 = arith.mulf %126, %125 : vector<8x128xf32>
    %cst_59 = arith.constant 1.000000e+00 : f32
    %128 = vector.broadcast %cst_59 : f32 to vector<8x128xf32>
    %129 = arith.subf %127, %128 : vector<8x128xf32>
    %130 = vector.extract_strided_slice %122 {offsets = [0, 384], sizes = [8, 128], strides = [1, 1]} : vector<8x512xf32> to vector<8x128xf32>
    %131 = arith.mulf %124, %102 : vector<8x128xf32>
    %132 = arith.mulf %123, %129 : vector<8x128xf32>
    %133 = arith.addf %131, %132 : vector<8x128xf32>
    %134 = math.tanh %133 : vector<8x128xf32>
    %135 = arith.mulf %130, %134 : vector<8x128xf32>
    %136 = arith.truncf %135 : vector<8x128xf32> to vector<8x128xbf16>
    %137 = arith.index_cast %c3_i32 : i32 to index
    %c0_60 = arith.constant 0 : index
    %c0_61 = arith.constant 0 : index
    %138 = vector.load %arg11[%137, %c0_60, %c0_61] : memref<8x8x128xbf16, #tpu.memory_space<vmem>>, vector<1x8x128xbf16>
    %139 = vector.shape_cast %138 : vector<1x8x128xbf16> to vector<8x128xbf16>
    %140 = vector.shape_cast %136 : vector<8x128xbf16> to vector<1x8x128xbf16>
    tpu.vector_store %arg11[%137, %c0_60, %c0_61], %140 {strides = array<i32>} : memref<8x8x128xbf16, #tpu.memory_space<vmem>>, vector<1x8x128xbf16>,
    %c4_i32 = arith.constant 4 : i32
    %141 = arith.index_cast %c4_i32 : i32 to index
    %c0_62 = arith.constant 0 : index
    %c0_63 = arith.constant 0 : index
    %142 = vector.load %arg10[%141, %c0_62, %c0_63] : memref<8x8x512xf32, #tpu.memory_space<vmem>>, vector<1x8x512xf32>
    %143 = vector.shape_cast %142 : vector<1x8x512xf32> to vector<8x512xf32>
    %144 = arith.truncf %135 : vector<8x128xf32> to vector<8x128xbf16>
    %c0_64 = arith.constant 0 : index
    %c0_65 = arith.constant 0 : index
    %c0_66 = arith.constant 0 : index
    %145 = vector.load %arg5[%c0_64, %c0_65, %c0_66] : memref<2x128x512xbf16, #tpu.memory_space<vmem>>, vector<1x128x512xbf16>
    %146 = vector.shape_cast %145 : vector<1x128x512xbf16> to vector<128x512xbf16>
    %cst_67 = arith.constant dense<0.000000e+00> : vector<8x512xf32>
    %147 = tpu.matmul %144, %146, %cst_67 {dimension_numbers = #tpu.dot_dimension_numbers<[1], [0], [0], [1], [0, 0, 1, 1], [], []>} : vector<8x128xbf16>, vector<128x512xbf16>, vector<8x512xf32> -> vector<8x512xf32>
    %148 = arith.addf %143, %147 : vector<8x512xf32>
    %149 = arith.negf %148 : vector<8x512xf32>
    %150 = math.exp %149 : vector<8x512xf32>
    %cst_68 = arith.constant 1.000000e+00 : f32
    %151 = vector.broadcast %cst_68 : f32 to vector<8x512xf32>
    %152 = arith.addf %151, %150 : vector<8x512xf32>
    %153 = arith.divf %151, %152 : vector<8x512xf32>
    %154 = vector.extract_strided_slice %153 {offsets = [0, 0], sizes = [8, 128], strides = [1, 1]} : vector<8x512xf32> to vector<8x128xf32>
    %155 = vector.extract_strided_slice %153 {offsets = [0, 128], sizes = [8, 128], strides = [1, 1]} : vector<8x512xf32> to vector<8x128xf32>
    %156 = vector.extract_strided_slice %153 {offsets = [0, 256], sizes = [8, 128], strides = [1, 1]} : vector<8x512xf32> to vector<8x128xf32>
    %cst_69 = arith.constant 2.000000e+00 : f32
    %157 = vector.broadcast %cst_69 : f32 to vector<8x128xf32>
    %158 = arith.mulf %157, %156 : vector<8x128xf32>
    %cst_70 = arith.constant 1.000000e+00 : f32
    %159 = vector.broadcast %cst_70 : f32 to vector<8x128xf32>
    %160 = arith.subf %158, %159 : vector<8x128xf32>
    %161 = vector.extract_strided_slice %153 {offsets = [0, 384], sizes = [8, 128], strides = [1, 1]} : vector<8x512xf32> to vector<8x128xf32>
    %162 = arith.mulf %155, %133 : vector<8x128xf32>
    %163 = arith.mulf %154, %160 : vector<8x128xf32>
    %164 = arith.addf %162, %163 : vector<8x128xf32>
    %165 = math.tanh %164 : vector<8x128xf32>
    %166 = arith.mulf %161, %165 : vector<8x128xf32>
    %167 = arith.truncf %166 : vector<8x128xf32> to vector<8x128xbf16>
    %168 = arith.index_cast %c4_i32 : i32 to index
    %c0_71 = arith.constant 0 : index
    %c0_72 = arith.constant 0 : index
    %169 = vector.load %arg11[%168, %c0_71, %c0_72] : memref<8x8x128xbf16, #tpu.memory_space<vmem>>, vector<1x8x128xbf16>
    %170 = vector.shape_cast %169 : vector<1x8x128xbf16> to vector<8x128xbf16>
    %171 = vector.shape_cast %167 : vector<8x128xbf16> to vector<1x8x128xbf16>
    tpu.vector_store %arg11[%168, %c0_71, %c0_72], %171 {strides = array<i32>} : memref<8x8x128xbf16, #tpu.memory_space<vmem>>, vector<1x8x128xbf16>,
    %c5_i32 = arith.constant 5 : i32
    %172 = arith.index_cast %c5_i32 : i32 to index
    %c0_73 = arith.constant 0 : index
    %c0_74 = arith.constant 0 : index
    %173 = vector.load %arg10[%172, %c0_73, %c0_74] : memref<8x8x512xf32, #tpu.memory_space<vmem>>, vector<1x8x512xf32>
    %174 = vector.shape_cast %173 : vector<1x8x512xf32> to vector<8x512xf32>
    %175 = arith.truncf %166 : vector<8x128xf32> to vector<8x128xbf16>
    %c0_75 = arith.constant 0 : index
    %c0_76 = arith.constant 0 : index
    %c0_77 = arith.constant 0 : index
    %176 = vector.load %arg5[%c0_75, %c0_76, %c0_77] : memref<2x128x512xbf16, #tpu.memory_space<vmem>>, vector<1x128x512xbf16>
    %177 = vector.shape_cast %176 : vector<1x128x512xbf16> to vector<128x512xbf16>
    %cst_78 = arith.constant dense<0.000000e+00> : vector<8x512xf32>
    %178 = tpu.matmul %175, %177, %cst_78 {dimension_numbers = #tpu.dot_dimension_numbers<[1], [0], [0], [1], [0, 0, 1, 1], [], []>} : vector<8x128xbf16>, vector<128x512xbf16>, vector<8x512xf32> -> vector<8x512xf32>
    %179 = arith.addf %174, %178 : vector<8x512xf32>
    %180 = arith.negf %179 : vector<8x512xf32>
    %181 = math.exp %180 : vector<8x512xf32>
    %cst_79 = arith.constant 1.000000e+00 : f32
    %182 = vector.broadcast %cst_79 : f32 to vector<8x512xf32>
    %183 = arith.addf %182, %181 : vector<8x512xf32>
    %184 = arith.divf %182, %183 : vector<8x512xf32>
    %185 = vector.extract_strided_slice %184 {offsets = [0, 0], sizes = [8, 128], strides = [1, 1]} : vector<8x512xf32> to vector<8x128xf32>
    %186 = vector.extract_strided_slice %184 {offsets = [0, 128], sizes = [8, 128], strides = [1, 1]} : vector<8x512xf32> to vector<8x128xf32>
    %187 = vector.extract_strided_slice %184 {offsets = [0, 256], sizes = [8, 128], strides = [1, 1]} : vector<8x512xf32> to vector<8x128xf32>
    %cst_80 = arith.constant 2.000000e+00 : f32
    %188 = vector.broadcast %cst_80 : f32 to vector<8x128xf32>
    %189 = arith.mulf %188, %187 : vector<8x128xf32>
    %cst_81 = arith.constant 1.000000e+00 : f32
    %190 = vector.broadcast %cst_81 : f32 to vector<8x128xf32>
    %191 = arith.subf %189, %190 : vector<8x128xf32>
    %192 = vector.extract_strided_slice %184 {offsets = [0, 384], sizes = [8, 128], strides = [1, 1]} : vector<8x512xf32> to vector<8x128xf32>
    %193 = arith.mulf %186, %164 : vector<8x128xf32>
    %194 = arith.mulf %185, %191 : vector<8x128xf32>
    %195 = arith.addf %193, %194 : vector<8x128xf32>
    %196 = math.tanh %195 : vector<8x128xf32>
    %197 = arith.mulf %192, %196 : vector<8x128xf32>
    %198 = arith.truncf %197 : vector<8x128xf32> to vector<8x128xbf16>
    %199 = arith.index_cast %c5_i32 : i32 to index
    %c0_82 = arith.constant 0 : index
    %c0_83 = arith.constant 0 : index
    %200 = vector.load %arg11[%199, %c0_82, %c0_83] : memref<8x8x128xbf16, #tpu.memory_space<vmem>>, vector<1x8x128xbf16>
    %201 = vector.shape_cast %200 : vector<1x8x128xbf16> to vector<8x128xbf16>
    %202 = vector.shape_cast %198 : vector<8x128xbf16> to vector<1x8x128xbf16>
    tpu.vector_store %arg11[%199, %c0_82, %c0_83], %202 {strides = array<i32>} : memref<8x8x128xbf16, #tpu.memory_space<vmem>>, vector<1x8x128xbf16>,
    %c6_i32 = arith.constant 6 : i32
    %203 = arith.index_cast %c6_i32 : i32 to index
    %c0_84 = arith.constant 0 : index
    %c0_85 = arith.constant 0 : index
    %204 = vector.load %arg10[%203, %c0_84, %c0_85] : memref<8x8x512xf32, #tpu.memory_space<vmem>>, vector<1x8x512xf32>
    %205 = vector.shape_cast %204 : vector<1x8x512xf32> to vector<8x512xf32>
    %206 = arith.truncf %197 : vector<8x128xf32> to vector<8x128xbf16>
    %c0_86 = arith.constant 0 : index
    %c0_87 = arith.constant 0 : index
    %c0_88 = arith.constant 0 : index
    %207 = vector.load %arg5[%c0_86, %c0_87, %c0_88] : memref<2x128x512xbf16, #tpu.memory_space<vmem>>, vector<1x128x512xbf16>
    %208 = vector.shape_cast %207 : vector<1x128x512xbf16> to vector<128x512xbf16>
    %cst_89 = arith.constant dense<0.000000e+00> : vector<8x512xf32>
    %209 = tpu.matmul %206, %208, %cst_89 {dimension_numbers = #tpu.dot_dimension_numbers<[1], [0], [0], [1], [0, 0, 1, 1], [], []>} : vector<8x128xbf16>, vector<128x512xbf16>, vector<8x512xf32> -> vector<8x512xf32>
    %210 = arith.addf %205, %209 : vector<8x512xf32>
    %211 = arith.negf %210 : vector<8x512xf32>
    %212 = math.exp %211 : vector<8x512xf32>
    %cst_90 = arith.constant 1.000000e+00 : f32
    %213 = vector.broadcast %cst_90 : f32 to vector<8x512xf32>
    %214 = arith.addf %213, %212 : vector<8x512xf32>
    %215 = arith.divf %213, %214 : vector<8x512xf32>
    %216 = vector.extract_strided_slice %215 {offsets = [0, 0], sizes = [8, 128], strides = [1, 1]} : vector<8x512xf32> to vector<8x128xf32>
    %217 = vector.extract_strided_slice %215 {offsets = [0, 128], sizes = [8, 128], strides = [1, 1]} : vector<8x512xf32> to vector<8x128xf32>
    %218 = vector.extract_strided_slice %215 {offsets = [0, 256], sizes = [8, 128], strides = [1, 1]} : vector<8x512xf32> to vector<8x128xf32>
    %cst_91 = arith.constant 2.000000e+00 : f32
    %219 = vector.broadcast %cst_91 : f32 to vector<8x128xf32>
    %220 = arith.mulf %219, %218 : vector<8x128xf32>
    %cst_92 = arith.constant 1.000000e+00 : f32
    %221 = vector.broadcast %cst_92 : f32 to vector<8x128xf32>
    %222 = arith.subf %220, %221 : vector<8x128xf32>
    %223 = vector.extract_strided_slice %215 {offsets = [0, 384], sizes = [8, 128], strides = [1, 1]} : vector<8x512xf32> to vector<8x128xf32>
    %224 = arith.mulf %217, %195 : vector<8x128xf32>
    %225 = arith.mulf %216, %222 : vector<8x128xf32>
    %226 = arith.addf %224, %225 : vector<8x128xf32>
    %227 = math.tanh %226 : vector<8x128xf32>
    %228 = arith.mulf %223, %227 : vector<8x128xf32>
    %229 = arith.truncf %228 : vector<8x128xf32> to vector<8x128xbf16>
    %230 = arith.index_cast %c6_i32 : i32 to index
    %c0_93 = arith.constant 0 : index
    %c0_94 = arith.constant 0 : index
    %231 = vector.load %arg11[%230, %c0_93, %c0_94] : memref<8x8x128xbf16, #tpu.memory_space<vmem>>, vector<1x8x128xbf16>
    %232 = vector.shape_cast %231 : vector<1x8x128xbf16> to vector<8x128xbf16>
    %233 = vector.shape_cast %229 : vector<8x128xbf16> to vector<1x8x128xbf16>
    tpu.vector_store %arg11[%230, %c0_93, %c0_94], %233 {strides = array<i32>} : memref<8x8x128xbf16, #tpu.memory_space<vmem>>, vector<1x8x128xbf16>,
    %c7_i32 = arith.constant 7 : i32
    %234 = arith.index_cast %c7_i32 : i32 to index
    %c0_95 = arith.constant 0 : index
    %c0_96 = arith.constant 0 : index
    %235 = vector.load %arg10[%234, %c0_95, %c0_96] : memref<8x8x512xf32, #tpu.memory_space<vmem>>, vector<1x8x512xf32>
    %236 = vector.shape_cast %235 : vector<1x8x512xf32> to vector<8x512xf32>
    %237 = arith.truncf %228 : vector<8x128xf32> to vector<8x128xbf16>
    %c0_97 = arith.constant 0 : index
    %c0_98 = arith.constant 0 : index
    %c0_99 = arith.constant 0 : index
    %238 = vector.load %arg5[%c0_97, %c0_98, %c0_99] : memref<2x128x512xbf16, #tpu.memory_space<vmem>>, vector<1x128x512xbf16>
    %239 = vector.shape_cast %238 : vector<1x128x512xbf16> to vector<128x512xbf16>
    %cst_100 = arith.constant dense<0.000000e+00> : vector<8x512xf32>
    %240 = tpu.matmul %237, %239, %cst_100 {dimension_numbers = #tpu.dot_dimension_numbers<[1], [0], [0], [1], [0, 0, 1, 1], [], []>} : vector<8x128xbf16>, vector<128x512xbf16>, vector<8x512xf32> -> vector<8x512xf32>
    %241 = arith.addf %236, %240 : vector<8x512xf32>
    %242 = arith.negf %241 : vector<8x512xf32>
    %243 = math.exp %242 : vector<8x512xf32>
    %cst_101 = arith.constant 1.000000e+00 : f32
    %244 = vector.broadcast %cst_101 : f32 to vector<8x512xf32>
    %245 = arith.addf %244, %243 : vector<8x512xf32>
    %246 = arith.divf %244, %245 : vector<8x512xf32>
    %247 = vector.extract_strided_slice %246 {offsets = [0, 0], sizes = [8, 128], strides = [1, 1]} : vector<8x512xf32> to vector<8x128xf32>
    %248 = vector.extract_strided_slice %246 {offsets = [0, 128], sizes = [8, 128], strides = [1, 1]} : vector<8x512xf32> to vector<8x128xf32>
    %249 = vector.extract_strided_slice %246 {offsets = [0, 256], sizes = [8, 128], strides = [1, 1]} : vector<8x512xf32> to vector<8x128xf32>
    %cst_102 = arith.constant 2.000000e+00 : f32
    %250 = vector.broadcast %cst_102 : f32 to vector<8x128xf32>
    %251 = arith.mulf %250, %249 : vector<8x128xf32>
    %cst_103 = arith.constant 1.000000e+00 : f32
    %252 = vector.broadcast %cst_103 : f32 to vector<8x128xf32>
    %253 = arith.subf %251, %252 : vector<8x128xf32>
    %254 = vector.extract_strided_slice %246 {offsets = [0, 384], sizes = [8, 128], strides = [1, 1]} : vector<8x512xf32> to vector<8x128xf32>
    %255 = arith.mulf %248, %226 : vector<8x128xf32>
    %256 = arith.mulf %247, %253 : vector<8x128xf32>
    %257 = arith.addf %255, %256 : vector<8x128xf32>
    %258 = math.tanh %257 : vector<8x128xf32>
    %259 = arith.mulf %254, %258 : vector<8x128xf32>
    %260 = arith.truncf %259 : vector<8x128xf32> to vector<8x128xbf16>
    %261 = arith.index_cast %c7_i32 : i32 to index
    %c0_104 = arith.constant 0 : index
    %c0_105 = arith.constant 0 : index
    %262 = vector.load %arg11[%261, %c0_104, %c0_105] : memref<8x8x128xbf16, #tpu.memory_space<vmem>>, vector<1x8x128xbf16>
    %263 = vector.shape_cast %262 : vector<1x8x128xbf16> to vector<8x128xbf16>
    %264 = vector.shape_cast %260 : vector<8x128xbf16> to vector<1x8x128xbf16>
    tpu.vector_store %arg11[%261, %c0_104, %c0_105], %264 {strides = array<i32>} : memref<8x8x128xbf16, #tpu.memory_space<vmem>>, vector<1x8x128xbf16>,
    %c8_i32 = arith.constant 8 : i32
    %c0_106 = arith.constant 0 : index
    %c0_107 = arith.constant 0 : index
    %c0_108 = arith.constant 0 : index
    %265 = vector.load %arg8[%c0_106, %c0_107, %c0_108] : memref<2x8x128xf32, #tpu.memory_space<vmem>>, vector<1x8x128xf32>
    %266 = vector.shape_cast %265 : vector<1x8x128xf32> to vector<8x128xf32>
    %267 = vector.shape_cast %259 : vector<8x128xf32> to vector<1x8x128xf32>
    tpu.vector_store %arg8[%c0_106, %c0_107, %c0_108], %267 {strides = array<i32>} : memref<2x8x128xf32, #tpu.memory_space<vmem>>, vector<1x8x128xf32>,
    %c0_109 = arith.constant 0 : index
    %c0_110 = arith.constant 0 : index
    %c0_111 = arith.constant 0 : index
    %268 = vector.load %arg9[%c0_109, %c0_110, %c0_111] : memref<2x8x128xf32, #tpu.memory_space<vmem>>, vector<1x8x128xf32>
    %269 = vector.shape_cast %268 : vector<1x8x128xf32> to vector<8x128xf32>
    %270 = vector.shape_cast %257 : vector<8x128xf32> to vector<1x8x128xf32>
    tpu.vector_store %arg9[%c0_109, %c0_110, %c0_111], %270 {strides = array<i32>} : memref<2x8x128xf32, #tpu.memory_space<vmem>>, vector<1x8x128xf32>,
    %c0_112 = arith.constant 0 : index
    %c0_113 = arith.constant 0 : index
    %c0_114 = arith.constant 0 : index
    %271 = vector.load %arg11[%c0_112, %c0_113, %c0_114] : memref<8x8x128xbf16, #tpu.memory_space<vmem>>, vector<8x8x128xbf16>
    %272 = vector.shape_cast %271 : vector<8x8x128xbf16> to vector<64x128xbf16>
    %c0_115 = arith.constant 0 : index
    %c0_116 = arith.constant 0 : index
    %c0_117 = arith.constant 0 : index
    %273 = vector.load %arg4[%c0_115, %c0_116, %c0_117] : memref<1x128x512xbf16, #tpu.memory_space<vmem>>, vector<1x128x512xbf16>
    %274 = vector.shape_cast %273 : vector<1x128x512xbf16> to vector<128x512xbf16>
    %cst_118 = arith.constant dense<0.000000e+00> : vector<64x512xf32>
    %275 = tpu.matmul %272, %274, %cst_118 {dimension_numbers = #tpu.dot_dimension_numbers<[1], [0], [0], [1], [0, 0, 1, 1], [], []>} : vector<64x128xbf16>, vector<128x512xbf16>, vector<64x512xf32> -> vector<64x512xf32>
    %c1 = arith.constant 1 : index
    %c0_119 = arith.constant 0 : index
    %c0_120 = arith.constant 0 : index
    %276 = vector.load %arg6[%c1, %c0_119, %c0_120] : memref<2x1x512xf32, #tpu.memory_space<vmem>>, vector<1x1x512xf32>
    %277 = vector.shape_cast %276 : vector<1x1x512xf32> to vector<1x512xf32>
    %278 = vector.broadcast %277 : vector<1x512xf32> to vector<64x512xf32>
    %279 = arith.addf %275, %278 : vector<64x512xf32>
    %280 = vector.shape_cast %279 : vector<64x512xf32> to vector<8x8x512xf32>
    %c0_121 = arith.constant 0 : index
    %c0_122 = arith.constant 0 : index
    %c0_123 = arith.constant 0 : index
    %281 = vector.load %arg10[%c0_121, %c0_122, %c0_123] : memref<8x8x512xf32, #tpu.memory_space<vmem>>, vector<8x8x512xf32>
    tpu.vector_store %arg10[%c0_121, %c0_122, %c0_123], %280 {strides = array<i32>} : memref<8x8x512xf32, #tpu.memory_space<vmem>>, vector<8x8x512xf32>,
    %c1_124 = arith.constant 1 : index
    %c0_125 = arith.constant 0 : index
    %c0_126 = arith.constant 0 : index
    %282 = vector.load %arg8[%c1_124, %c0_125, %c0_126] : memref<2x8x128xf32, #tpu.memory_space<vmem>>, vector<1x8x128xf32>
    %283 = vector.shape_cast %282 : vector<1x8x128xf32> to vector<8x128xf32>
    %c1_127 = arith.constant 1 : index
    %c0_128 = arith.constant 0 : index
    %c0_129 = arith.constant 0 : index
    %284 = vector.load %arg9[%c1_127, %c0_128, %c0_129] : memref<2x8x128xf32, #tpu.memory_space<vmem>>, vector<1x8x128xf32>
    %285 = vector.shape_cast %284 : vector<1x8x128xf32> to vector<8x128xf32>
    %c0_i32_130 = arith.constant 0 : i32
    %286 = arith.index_cast %c0_i32_130 : i32 to index
    %c0_131 = arith.constant 0 : index
    %c0_132 = arith.constant 0 : index
    %287 = vector.load %arg10[%286, %c0_131, %c0_132] : memref<8x8x512xf32, #tpu.memory_space<vmem>>, vector<1x8x512xf32>
    %288 = vector.shape_cast %287 : vector<1x8x512xf32> to vector<8x512xf32>
    %289 = arith.truncf %283 : vector<8x128xf32> to vector<8x128xbf16>
    %c1_133 = arith.constant 1 : index
    %c0_134 = arith.constant 0 : index
    %c0_135 = arith.constant 0 : index
    %290 = vector.load %arg5[%c1_133, %c0_134, %c0_135] : memref<2x128x512xbf16, #tpu.memory_space<vmem>>, vector<1x128x512xbf16>
    %291 = vector.shape_cast %290 : vector<1x128x512xbf16> to vector<128x512xbf16>
    %cst_136 = arith.constant dense<0.000000e+00> : vector<8x512xf32>
    %292 = tpu.matmul %289, %291, %cst_136 {dimension_numbers = #tpu.dot_dimension_numbers<[1], [0], [0], [1], [0, 0, 1, 1], [], []>} : vector<8x128xbf16>, vector<128x512xbf16>, vector<8x512xf32> -> vector<8x512xf32>
    %293 = arith.addf %288, %292 : vector<8x512xf32>
    %294 = arith.negf %293 : vector<8x512xf32>
    %295 = math.exp %294 : vector<8x512xf32>
    %cst_137 = arith.constant 1.000000e+00 : f32
    %296 = vector.broadcast %cst_137 : f32 to vector<8x512xf32>
    %297 = arith.addf %296, %295 : vector<8x512xf32>
    %298 = arith.divf %296, %297 : vector<8x512xf32>
    %299 = vector.extract_strided_slice %298 {offsets = [0, 0], sizes = [8, 128], strides = [1, 1]} : vector<8x512xf32> to vector<8x128xf32>
    %300 = vector.extract_strided_slice %298 {offsets = [0, 128], sizes = [8, 128], strides = [1, 1]} : vector<8x512xf32> to vector<8x128xf32>
    %301 = vector.extract_strided_slice %298 {offsets = [0, 256], sizes = [8, 128], strides = [1, 1]} : vector<8x512xf32> to vector<8x128xf32>
    %cst_138 = arith.constant 2.000000e+00 : f32
    %302 = vector.broadcast %cst_138 : f32 to vector<8x128xf32>
    %303 = arith.mulf %302, %301 : vector<8x128xf32>
    %cst_139 = arith.constant 1.000000e+00 : f32
    %304 = vector.broadcast %cst_139 : f32 to vector<8x128xf32>
    %305 = arith.subf %303, %304 : vector<8x128xf32>
    %306 = vector.extract_strided_slice %298 {offsets = [0, 384], sizes = [8, 128], strides = [1, 1]} : vector<8x512xf32> to vector<8x128xf32>
    %307 = arith.mulf %300, %285 : vector<8x128xf32>
    %308 = arith.mulf %299, %305 : vector<8x128xf32>
    %309 = arith.addf %307, %308 : vector<8x128xf32>
    %310 = math.tanh %309 : vector<8x128xf32>
    %311 = arith.mulf %306, %310 : vector<8x128xf32>
    %312 = arith.index_cast %c0_i32_130 : i32 to index
    %c0_140 = arith.constant 0 : index
    %c0_141 = arith.constant 0 : index
    %313 = vector.load %arg7[%312, %c0_140, %c0_141] : memref<8x8x128xf32, #tpu.memory_space<vmem>>, vector<1x8x128xf32>
    %314 = vector.shape_cast %313 : vector<1x8x128xf32> to vector<8x128xf32>
    %315 = vector.shape_cast %311 : vector<8x128xf32> to vector<1x8x128xf32>
    tpu.vector_store %arg7[%312, %c0_140, %c0_141], %315 {strides = array<i32>} : memref<8x8x128xf32, #tpu.memory_space<vmem>>, vector<1x8x128xf32>,
    %c1_i32_142 = arith.constant 1 : i32
    %316 = arith.index_cast %c1_i32_142 : i32 to index
    %c0_143 = arith.constant 0 : index
    %c0_144 = arith.constant 0 : index
    %317 = vector.load %arg10[%316, %c0_143, %c0_144] : memref<8x8x512xf32, #tpu.memory_space<vmem>>, vector<1x8x512xf32>
    %318 = vector.shape_cast %317 : vector<1x8x512xf32> to vector<8x512xf32>
    %319 = arith.truncf %311 : vector<8x128xf32> to vector<8x128xbf16>
    %c1_145 = arith.constant 1 : index
    %c0_146 = arith.constant 0 : index
    %c0_147 = arith.constant 0 : index
    %320 = vector.load %arg5[%c1_145, %c0_146, %c0_147] : memref<2x128x512xbf16, #tpu.memory_space<vmem>>, vector<1x128x512xbf16>
    %321 = vector.shape_cast %320 : vector<1x128x512xbf16> to vector<128x512xbf16>
    %cst_148 = arith.constant dense<0.000000e+00> : vector<8x512xf32>
    %322 = tpu.matmul %319, %321, %cst_148 {dimension_numbers = #tpu.dot_dimension_numbers<[1], [0], [0], [1], [0, 0, 1, 1], [], []>} : vector<8x128xbf16>, vector<128x512xbf16>, vector<8x512xf32> -> vector<8x512xf32>
    %323 = arith.addf %318, %322 : vector<8x512xf32>
    %324 = arith.negf %323 : vector<8x512xf32>
    %325 = math.exp %324 : vector<8x512xf32>
    %cst_149 = arith.constant 1.000000e+00 : f32
    %326 = vector.broadcast %cst_149 : f32 to vector<8x512xf32>
    %327 = arith.addf %326, %325 : vector<8x512xf32>
    %328 = arith.divf %326, %327 : vector<8x512xf32>
    %329 = vector.extract_strided_slice %328 {offsets = [0, 0], sizes = [8, 128], strides = [1, 1]} : vector<8x512xf32> to vector<8x128xf32>
    %330 = vector.extract_strided_slice %328 {offsets = [0, 128], sizes = [8, 128], strides = [1, 1]} : vector<8x512xf32> to vector<8x128xf32>
    %331 = vector.extract_strided_slice %328 {offsets = [0, 256], sizes = [8, 128], strides = [1, 1]} : vector<8x512xf32> to vector<8x128xf32>
    %cst_150 = arith.constant 2.000000e+00 : f32
    %332 = vector.broadcast %cst_150 : f32 to vector<8x128xf32>
    %333 = arith.mulf %332, %331 : vector<8x128xf32>
    %cst_151 = arith.constant 1.000000e+00 : f32
    %334 = vector.broadcast %cst_151 : f32 to vector<8x128xf32>
    %335 = arith.subf %333, %334 : vector<8x128xf32>
    %336 = vector.extract_strided_slice %328 {offsets = [0, 384], sizes = [8, 128], strides = [1, 1]} : vector<8x512xf32> to vector<8x128xf32>
    %337 = arith.mulf %330, %309 : vector<8x128xf32>
    %338 = arith.mulf %329, %335 : vector<8x128xf32>
    %339 = arith.addf %337, %338 : vector<8x128xf32>
    %340 = math.tanh %339 : vector<8x128xf32>
    %341 = arith.mulf %336, %340 : vector<8x128xf32>
    %342 = arith.index_cast %c1_i32_142 : i32 to index
    %c0_152 = arith.constant 0 : index
    %c0_153 = arith.constant 0 : index
    %343 = vector.load %arg7[%342, %c0_152, %c0_153] : memref<8x8x128xf32, #tpu.memory_space<vmem>>, vector<1x8x128xf32>
    %344 = vector.shape_cast %343 : vector<1x8x128xf32> to vector<8x128xf32>
    %345 = vector.shape_cast %341 : vector<8x128xf32> to vector<1x8x128xf32>
    tpu.vector_store %arg7[%342, %c0_152, %c0_153], %345 {strides = array<i32>} : memref<8x8x128xf32, #tpu.memory_space<vmem>>, vector<1x8x128xf32>,
    %c2_i32_154 = arith.constant 2 : i32
    %346 = arith.index_cast %c2_i32_154 : i32 to index
    %c0_155 = arith.constant 0 : index
    %c0_156 = arith.constant 0 : index
    %347 = vector.load %arg10[%346, %c0_155, %c0_156] : memref<8x8x512xf32, #tpu.memory_space<vmem>>, vector<1x8x512xf32>
    %348 = vector.shape_cast %347 : vector<1x8x512xf32> to vector<8x512xf32>
    %349 = arith.truncf %341 : vector<8x128xf32> to vector<8x128xbf16>
    %c1_157 = arith.constant 1 : index
    %c0_158 = arith.constant 0 : index
    %c0_159 = arith.constant 0 : index
    %350 = vector.load %arg5[%c1_157, %c0_158, %c0_159] : memref<2x128x512xbf16, #tpu.memory_space<vmem>>, vector<1x128x512xbf16>
    %351 = vector.shape_cast %350 : vector<1x128x512xbf16> to vector<128x512xbf16>
    %cst_160 = arith.constant dense<0.000000e+00> : vector<8x512xf32>
    %352 = tpu.matmul %349, %351, %cst_160 {dimension_numbers = #tpu.dot_dimension_numbers<[1], [0], [0], [1], [0, 0, 1, 1], [], []>} : vector<8x128xbf16>, vector<128x512xbf16>, vector<8x512xf32> -> vector<8x512xf32>
    %353 = arith.addf %348, %352 : vector<8x512xf32>
    %354 = arith.negf %353 : vector<8x512xf32>
    %355 = math.exp %354 : vector<8x512xf32>
    %cst_161 = arith.constant 1.000000e+00 : f32
    %356 = vector.broadcast %cst_161 : f32 to vector<8x512xf32>
    %357 = arith.addf %356, %355 : vector<8x512xf32>
    %358 = arith.divf %356, %357 : vector<8x512xf32>
    %359 = vector.extract_strided_slice %358 {offsets = [0, 0], sizes = [8, 128], strides = [1, 1]} : vector<8x512xf32> to vector<8x128xf32>
    %360 = vector.extract_strided_slice %358 {offsets = [0, 128], sizes = [8, 128], strides = [1, 1]} : vector<8x512xf32> to vector<8x128xf32>
    %361 = vector.extract_strided_slice %358 {offsets = [0, 256], sizes = [8, 128], strides = [1, 1]} : vector<8x512xf32> to vector<8x128xf32>
    %cst_162 = arith.constant 2.000000e+00 : f32
    %362 = vector.broadcast %cst_162 : f32 to vector<8x128xf32>
    %363 = arith.mulf %362, %361 : vector<8x128xf32>
    %cst_163 = arith.constant 1.000000e+00 : f32
    %364 = vector.broadcast %cst_163 : f32 to vector<8x128xf32>
    %365 = arith.subf %363, %364 : vector<8x128xf32>
    %366 = vector.extract_strided_slice %358 {offsets = [0, 384], sizes = [8, 128], strides = [1, 1]} : vector<8x512xf32> to vector<8x128xf32>
    %367 = arith.mulf %360, %339 : vector<8x128xf32>
    %368 = arith.mulf %359, %365 : vector<8x128xf32>
    %369 = arith.addf %367, %368 : vector<8x128xf32>
    %370 = math.tanh %369 : vector<8x128xf32>
    %371 = arith.mulf %366, %370 : vector<8x128xf32>
    %372 = arith.index_cast %c2_i32_154 : i32 to index
    %c0_164 = arith.constant 0 : index
    %c0_165 = arith.constant 0 : index
    %373 = vector.load %arg7[%372, %c0_164, %c0_165] : memref<8x8x128xf32, #tpu.memory_space<vmem>>, vector<1x8x128xf32>
    %374 = vector.shape_cast %373 : vector<1x8x128xf32> to vector<8x128xf32>
    %375 = vector.shape_cast %371 : vector<8x128xf32> to vector<1x8x128xf32>
    tpu.vector_store %arg7[%372, %c0_164, %c0_165], %375 {strides = array<i32>} : memref<8x8x128xf32, #tpu.memory_space<vmem>>, vector<1x8x128xf32>,
    %c3_i32_166 = arith.constant 3 : i32
    %376 = arith.index_cast %c3_i32_166 : i32 to index
    %c0_167 = arith.constant 0 : index
    %c0_168 = arith.constant 0 : index
    %377 = vector.load %arg10[%376, %c0_167, %c0_168] : memref<8x8x512xf32, #tpu.memory_space<vmem>>, vector<1x8x512xf32>
    %378 = vector.shape_cast %377 : vector<1x8x512xf32> to vector<8x512xf32>
    %379 = arith.truncf %371 : vector<8x128xf32> to vector<8x128xbf16>
    %c1_169 = arith.constant 1 : index
    %c0_170 = arith.constant 0 : index
    %c0_171 = arith.constant 0 : index
    %380 = vector.load %arg5[%c1_169, %c0_170, %c0_171] : memref<2x128x512xbf16, #tpu.memory_space<vmem>>, vector<1x128x512xbf16>
    %381 = vector.shape_cast %380 : vector<1x128x512xbf16> to vector<128x512xbf16>
    %cst_172 = arith.constant dense<0.000000e+00> : vector<8x512xf32>
    %382 = tpu.matmul %379, %381, %cst_172 {dimension_numbers = #tpu.dot_dimension_numbers<[1], [0], [0], [1], [0, 0, 1, 1], [], []>} : vector<8x128xbf16>, vector<128x512xbf16>, vector<8x512xf32> -> vector<8x512xf32>
    %383 = arith.addf %378, %382 : vector<8x512xf32>
    %384 = arith.negf %383 : vector<8x512xf32>
    %385 = math.exp %384 : vector<8x512xf32>
    %cst_173 = arith.constant 1.000000e+00 : f32
    %386 = vector.broadcast %cst_173 : f32 to vector<8x512xf32>
    %387 = arith.addf %386, %385 : vector<8x512xf32>
    %388 = arith.divf %386, %387 : vector<8x512xf32>
    %389 = vector.extract_strided_slice %388 {offsets = [0, 0], sizes = [8, 128], strides = [1, 1]} : vector<8x512xf32> to vector<8x128xf32>
    %390 = vector.extract_strided_slice %388 {offsets = [0, 128], sizes = [8, 128], strides = [1, 1]} : vector<8x512xf32> to vector<8x128xf32>
    %391 = vector.extract_strided_slice %388 {offsets = [0, 256], sizes = [8, 128], strides = [1, 1]} : vector<8x512xf32> to vector<8x128xf32>
    %cst_174 = arith.constant 2.000000e+00 : f32
    %392 = vector.broadcast %cst_174 : f32 to vector<8x128xf32>
    %393 = arith.mulf %392, %391 : vector<8x128xf32>
    %cst_175 = arith.constant 1.000000e+00 : f32
    %394 = vector.broadcast %cst_175 : f32 to vector<8x128xf32>
    %395 = arith.subf %393, %394 : vector<8x128xf32>
    %396 = vector.extract_strided_slice %388 {offsets = [0, 384], sizes = [8, 128], strides = [1, 1]} : vector<8x512xf32> to vector<8x128xf32>
    %397 = arith.mulf %390, %369 : vector<8x128xf32>
    %398 = arith.mulf %389, %395 : vector<8x128xf32>
    %399 = arith.addf %397, %398 : vector<8x128xf32>
    %400 = math.tanh %399 : vector<8x128xf32>
    %401 = arith.mulf %396, %400 : vector<8x128xf32>
    %402 = arith.index_cast %c3_i32_166 : i32 to index
    %c0_176 = arith.constant 0 : index
    %c0_177 = arith.constant 0 : index
    %403 = vector.load %arg7[%402, %c0_176, %c0_177] : memref<8x8x128xf32, #tpu.memory_space<vmem>>, vector<1x8x128xf32>
    %404 = vector.shape_cast %403 : vector<1x8x128xf32> to vector<8x128xf32>
    %405 = vector.shape_cast %401 : vector<8x128xf32> to vector<1x8x128xf32>
    tpu.vector_store %arg7[%402, %c0_176, %c0_177], %405 {strides = array<i32>} : memref<8x8x128xf32, #tpu.memory_space<vmem>>, vector<1x8x128xf32>,
    %c4_i32_178 = arith.constant 4 : i32
    %406 = arith.index_cast %c4_i32_178 : i32 to index
    %c0_179 = arith.constant 0 : index
    %c0_180 = arith.constant 0 : index
    %407 = vector.load %arg10[%406, %c0_179, %c0_180] : memref<8x8x512xf32, #tpu.memory_space<vmem>>, vector<1x8x512xf32>
    %408 = vector.shape_cast %407 : vector<1x8x512xf32> to vector<8x512xf32>
    %409 = arith.truncf %401 : vector<8x128xf32> to vector<8x128xbf16>
    %c1_181 = arith.constant 1 : index
    %c0_182 = arith.constant 0 : index
    %c0_183 = arith.constant 0 : index
    %410 = vector.load %arg5[%c1_181, %c0_182, %c0_183] : memref<2x128x512xbf16, #tpu.memory_space<vmem>>, vector<1x128x512xbf16>
    %411 = vector.shape_cast %410 : vector<1x128x512xbf16> to vector<128x512xbf16>
    %cst_184 = arith.constant dense<0.000000e+00> : vector<8x512xf32>
    %412 = tpu.matmul %409, %411, %cst_184 {dimension_numbers = #tpu.dot_dimension_numbers<[1], [0], [0], [1], [0, 0, 1, 1], [], []>} : vector<8x128xbf16>, vector<128x512xbf16>, vector<8x512xf32> -> vector<8x512xf32>
    %413 = arith.addf %408, %412 : vector<8x512xf32>
    %414 = arith.negf %413 : vector<8x512xf32>
    %415 = math.exp %414 : vector<8x512xf32>
    %cst_185 = arith.constant 1.000000e+00 : f32
    %416 = vector.broadcast %cst_185 : f32 to vector<8x512xf32>
    %417 = arith.addf %416, %415 : vector<8x512xf32>
    %418 = arith.divf %416, %417 : vector<8x512xf32>
    %419 = vector.extract_strided_slice %418 {offsets = [0, 0], sizes = [8, 128], strides = [1, 1]} : vector<8x512xf32> to vector<8x128xf32>
    %420 = vector.extract_strided_slice %418 {offsets = [0, 128], sizes = [8, 128], strides = [1, 1]} : vector<8x512xf32> to vector<8x128xf32>
    %421 = vector.extract_strided_slice %418 {offsets = [0, 256], sizes = [8, 128], strides = [1, 1]} : vector<8x512xf32> to vector<8x128xf32>
    %cst_186 = arith.constant 2.000000e+00 : f32
    %422 = vector.broadcast %cst_186 : f32 to vector<8x128xf32>
    %423 = arith.mulf %422, %421 : vector<8x128xf32>
    %cst_187 = arith.constant 1.000000e+00 : f32
    %424 = vector.broadcast %cst_187 : f32 to vector<8x128xf32>
    %425 = arith.subf %423, %424 : vector<8x128xf32>
    %426 = vector.extract_strided_slice %418 {offsets = [0, 384], sizes = [8, 128], strides = [1, 1]} : vector<8x512xf32> to vector<8x128xf32>
    %427 = arith.mulf %420, %399 : vector<8x128xf32>
    %428 = arith.mulf %419, %425 : vector<8x128xf32>
    %429 = arith.addf %427, %428 : vector<8x128xf32>
    %430 = math.tanh %429 : vector<8x128xf32>
    %431 = arith.mulf %426, %430 : vector<8x128xf32>
    %432 = arith.index_cast %c4_i32_178 : i32 to index
    %c0_188 = arith.constant 0 : index
    %c0_189 = arith.constant 0 : index
    %433 = vector.load %arg7[%432, %c0_188, %c0_189] : memref<8x8x128xf32, #tpu.memory_space<vmem>>, vector<1x8x128xf32>
    %434 = vector.shape_cast %433 : vector<1x8x128xf32> to vector<8x128xf32>
    %435 = vector.shape_cast %431 : vector<8x128xf32> to vector<1x8x128xf32>
    tpu.vector_store %arg7[%432, %c0_188, %c0_189], %435 {strides = array<i32>} : memref<8x8x128xf32, #tpu.memory_space<vmem>>, vector<1x8x128xf32>,
    %c5_i32_190 = arith.constant 5 : i32
    %436 = arith.index_cast %c5_i32_190 : i32 to index
    %c0_191 = arith.constant 0 : index
    %c0_192 = arith.constant 0 : index
    %437 = vector.load %arg10[%436, %c0_191, %c0_192] : memref<8x8x512xf32, #tpu.memory_space<vmem>>, vector<1x8x512xf32>
    %438 = vector.shape_cast %437 : vector<1x8x512xf32> to vector<8x512xf32>
    %439 = arith.truncf %431 : vector<8x128xf32> to vector<8x128xbf16>
    %c1_193 = arith.constant 1 : index
    %c0_194 = arith.constant 0 : index
    %c0_195 = arith.constant 0 : index
    %440 = vector.load %arg5[%c1_193, %c0_194, %c0_195] : memref<2x128x512xbf16, #tpu.memory_space<vmem>>, vector<1x128x512xbf16>
    %441 = vector.shape_cast %440 : vector<1x128x512xbf16> to vector<128x512xbf16>
    %cst_196 = arith.constant dense<0.000000e+00> : vector<8x512xf32>
    %442 = tpu.matmul %439, %441, %cst_196 {dimension_numbers = #tpu.dot_dimension_numbers<[1], [0], [0], [1], [0, 0, 1, 1], [], []>} : vector<8x128xbf16>, vector<128x512xbf16>, vector<8x512xf32> -> vector<8x512xf32>
    %443 = arith.addf %438, %442 : vector<8x512xf32>
    %444 = arith.negf %443 : vector<8x512xf32>
    %445 = math.exp %444 : vector<8x512xf32>
    %cst_197 = arith.constant 1.000000e+00 : f32
    %446 = vector.broadcast %cst_197 : f32 to vector<8x512xf32>
    %447 = arith.addf %446, %445 : vector<8x512xf32>
    %448 = arith.divf %446, %447 : vector<8x512xf32>
    %449 = vector.extract_strided_slice %448 {offsets = [0, 0], sizes = [8, 128], strides = [1, 1]} : vector<8x512xf32> to vector<8x128xf32>
    %450 = vector.extract_strided_slice %448 {offsets = [0, 128], sizes = [8, 128], strides = [1, 1]} : vector<8x512xf32> to vector<8x128xf32>
    %451 = vector.extract_strided_slice %448 {offsets = [0, 256], sizes = [8, 128], strides = [1, 1]} : vector<8x512xf32> to vector<8x128xf32>
    %cst_198 = arith.constant 2.000000e+00 : f32
    %452 = vector.broadcast %cst_198 : f32 to vector<8x128xf32>
    %453 = arith.mulf %452, %451 : vector<8x128xf32>
    %cst_199 = arith.constant 1.000000e+00 : f32
    %454 = vector.broadcast %cst_199 : f32 to vector<8x128xf32>
    %455 = arith.subf %453, %454 : vector<8x128xf32>
    %456 = vector.extract_strided_slice %448 {offsets = [0, 384], sizes = [8, 128], strides = [1, 1]} : vector<8x512xf32> to vector<8x128xf32>
    %457 = arith.mulf %450, %429 : vector<8x128xf32>
    %458 = arith.mulf %449, %455 : vector<8x128xf32>
    %459 = arith.addf %457, %458 : vector<8x128xf32>
    %460 = math.tanh %459 : vector<8x128xf32>
    %461 = arith.mulf %456, %460 : vector<8x128xf32>
    %462 = arith.index_cast %c5_i32_190 : i32 to index
    %c0_200 = arith.constant 0 : index
    %c0_201 = arith.constant 0 : index
    %463 = vector.load %arg7[%462, %c0_200, %c0_201] : memref<8x8x128xf32, #tpu.memory_space<vmem>>, vector<1x8x128xf32>
    %464 = vector.shape_cast %463 : vector<1x8x128xf32> to vector<8x128xf32>
    %465 = vector.shape_cast %461 : vector<8x128xf32> to vector<1x8x128xf32>
    tpu.vector_store %arg7[%462, %c0_200, %c0_201], %465 {strides = array<i32>} : memref<8x8x128xf32, #tpu.memory_space<vmem>>, vector<1x8x128xf32>,
    %c6_i32_202 = arith.constant 6 : i32
    %466 = arith.index_cast %c6_i32_202 : i32 to index
    %c0_203 = arith.constant 0 : index
    %c0_204 = arith.constant 0 : index
    %467 = vector.load %arg10[%466, %c0_203, %c0_204] : memref<8x8x512xf32, #tpu.memory_space<vmem>>, vector<1x8x512xf32>
    %468 = vector.shape_cast %467 : vector<1x8x512xf32> to vector<8x512xf32>
    %469 = arith.truncf %461 : vector<8x128xf32> to vector<8x128xbf16>
    %c1_205 = arith.constant 1 : index
    %c0_206 = arith.constant 0 : index
    %c0_207 = arith.constant 0 : index
    %470 = vector.load %arg5[%c1_205, %c0_206, %c0_207] : memref<2x128x512xbf16, #tpu.memory_space<vmem>>, vector<1x128x512xbf16>
    %471 = vector.shape_cast %470 : vector<1x128x512xbf16> to vector<128x512xbf16>
    %cst_208 = arith.constant dense<0.000000e+00> : vector<8x512xf32>
    %472 = tpu.matmul %469, %471, %cst_208 {dimension_numbers = #tpu.dot_dimension_numbers<[1], [0], [0], [1], [0, 0, 1, 1], [], []>} : vector<8x128xbf16>, vector<128x512xbf16>, vector<8x512xf32> -> vector<8x512xf32>
    %473 = arith.addf %468, %472 : vector<8x512xf32>
    %474 = arith.negf %473 : vector<8x512xf32>
    %475 = math.exp %474 : vector<8x512xf32>
    %cst_209 = arith.constant 1.000000e+00 : f32
    %476 = vector.broadcast %cst_209 : f32 to vector<8x512xf32>
    %477 = arith.addf %476, %475 : vector<8x512xf32>
    %478 = arith.divf %476, %477 : vector<8x512xf32>
    %479 = vector.extract_strided_slice %478 {offsets = [0, 0], sizes = [8, 128], strides = [1, 1]} : vector<8x512xf32> to vector<8x128xf32>
    %480 = vector.extract_strided_slice %478 {offsets = [0, 128], sizes = [8, 128], strides = [1, 1]} : vector<8x512xf32> to vector<8x128xf32>
    %481 = vector.extract_strided_slice %478 {offsets = [0, 256], sizes = [8, 128], strides = [1, 1]} : vector<8x512xf32> to vector<8x128xf32>
    %cst_210 = arith.constant 2.000000e+00 : f32
    %482 = vector.broadcast %cst_210 : f32 to vector<8x128xf32>
    %483 = arith.mulf %482, %481 : vector<8x128xf32>
    %cst_211 = arith.constant 1.000000e+00 : f32
    %484 = vector.broadcast %cst_211 : f32 to vector<8x128xf32>
    %485 = arith.subf %483, %484 : vector<8x128xf32>
    %486 = vector.extract_strided_slice %478 {offsets = [0, 384], sizes = [8, 128], strides = [1, 1]} : vector<8x512xf32> to vector<8x128xf32>
    %487 = arith.mulf %480, %459 : vector<8x128xf32>
    %488 = arith.mulf %479, %485 : vector<8x128xf32>
    %489 = arith.addf %487, %488 : vector<8x128xf32>
    %490 = math.tanh %489 : vector<8x128xf32>
    %491 = arith.mulf %486, %490 : vector<8x128xf32>
    %492 = arith.index_cast %c6_i32_202 : i32 to index
    %c0_212 = arith.constant 0 : index
    %c0_213 = arith.constant 0 : index
    %493 = vector.load %arg7[%492, %c0_212, %c0_213] : memref<8x8x128xf32, #tpu.memory_space<vmem>>, vector<1x8x128xf32>
    %494 = vector.shape_cast %493 : vector<1x8x128xf32> to vector<8x128xf32>
    %495 = vector.shape_cast %491 : vector<8x128xf32> to vector<1x8x128xf32>
    tpu.vector_store %arg7[%492, %c0_212, %c0_213], %495 {strides = array<i32>} : memref<8x8x128xf32, #tpu.memory_space<vmem>>, vector<1x8x128xf32>,
    %c7_i32_214 = arith.constant 7 : i32
    %496 = arith.index_cast %c7_i32_214 : i32 to index
    %c0_215 = arith.constant 0 : index
    %c0_216 = arith.constant 0 : index
    %497 = vector.load %arg10[%496, %c0_215, %c0_216] : memref<8x8x512xf32, #tpu.memory_space<vmem>>, vector<1x8x512xf32>
    %498 = vector.shape_cast %497 : vector<1x8x512xf32> to vector<8x512xf32>
    %499 = arith.truncf %491 : vector<8x128xf32> to vector<8x128xbf16>
    %c1_217 = arith.constant 1 : index
    %c0_218 = arith.constant 0 : index
    %c0_219 = arith.constant 0 : index
    %500 = vector.load %arg5[%c1_217, %c0_218, %c0_219] : memref<2x128x512xbf16, #tpu.memory_space<vmem>>, vector<1x128x512xbf16>
    %501 = vector.shape_cast %500 : vector<1x128x512xbf16> to vector<128x512xbf16>
    %cst_220 = arith.constant dense<0.000000e+00> : vector<8x512xf32>
    %502 = tpu.matmul %499, %501, %cst_220 {dimension_numbers = #tpu.dot_dimension_numbers<[1], [0], [0], [1], [0, 0, 1, 1], [], []>} : vector<8x128xbf16>, vector<128x512xbf16>, vector<8x512xf32> -> vector<8x512xf32>
    %503 = arith.addf %498, %502 : vector<8x512xf32>
    %504 = arith.negf %503 : vector<8x512xf32>
    %505 = math.exp %504 : vector<8x512xf32>
    %cst_221 = arith.constant 1.000000e+00 : f32
    %506 = vector.broadcast %cst_221 : f32 to vector<8x512xf32>
    %507 = arith.addf %506, %505 : vector<8x512xf32>
    %508 = arith.divf %506, %507 : vector<8x512xf32>
    %509 = vector.extract_strided_slice %508 {offsets = [0, 0], sizes = [8, 128], strides = [1, 1]} : vector<8x512xf32> to vector<8x128xf32>
    %510 = vector.extract_strided_slice %508 {offsets = [0, 128], sizes = [8, 128], strides = [1, 1]} : vector<8x512xf32> to vector<8x128xf32>
    %511 = vector.extract_strided_slice %508 {offsets = [0, 256], sizes = [8, 128], strides = [1, 1]} : vector<8x512xf32> to vector<8x128xf32>
    %cst_222 = arith.constant 2.000000e+00 : f32
    %512 = vector.broadcast %cst_222 : f32 to vector<8x128xf32>
    %513 = arith.mulf %512, %511 : vector<8x128xf32>
    %cst_223 = arith.constant 1.000000e+00 : f32
    %514 = vector.broadcast %cst_223 : f32 to vector<8x128xf32>
    %515 = arith.subf %513, %514 : vector<8x128xf32>
    %516 = vector.extract_strided_slice %508 {offsets = [0, 384], sizes = [8, 128], strides = [1, 1]} : vector<8x512xf32> to vector<8x128xf32>
    %517 = arith.mulf %510, %489 : vector<8x128xf32>
    %518 = arith.mulf %509, %515 : vector<8x128xf32>
    %519 = arith.addf %517, %518 : vector<8x128xf32>
    %520 = math.tanh %519 : vector<8x128xf32>
    %521 = arith.mulf %516, %520 : vector<8x128xf32>
    %522 = arith.index_cast %c7_i32_214 : i32 to index
    %c0_224 = arith.constant 0 : index
    %c0_225 = arith.constant 0 : index
    %523 = vector.load %arg7[%522, %c0_224, %c0_225] : memref<8x8x128xf32, #tpu.memory_space<vmem>>, vector<1x8x128xf32>
    %524 = vector.shape_cast %523 : vector<1x8x128xf32> to vector<8x128xf32>
    %525 = vector.shape_cast %521 : vector<8x128xf32> to vector<1x8x128xf32>
    tpu.vector_store %arg7[%522, %c0_224, %c0_225], %525 {strides = array<i32>} : memref<8x8x128xf32, #tpu.memory_space<vmem>>, vector<1x8x128xf32>,
    %c8_i32_226 = arith.constant 8 : i32
    %c1_227 = arith.constant 1 : index
    %c0_228 = arith.constant 0 : index
    %c0_229 = arith.constant 0 : index
    %526 = vector.load %arg8[%c1_227, %c0_228, %c0_229] : memref<2x8x128xf32, #tpu.memory_space<vmem>>, vector<1x8x128xf32>
    %527 = vector.shape_cast %526 : vector<1x8x128xf32> to vector<8x128xf32>
    %528 = vector.shape_cast %521 : vector<8x128xf32> to vector<1x8x128xf32>
    tpu.vector_store %arg8[%c1_227, %c0_228, %c0_229], %528 {strides = array<i32>} : memref<2x8x128xf32, #tpu.memory_space<vmem>>, vector<1x8x128xf32>,
    %c1_230 = arith.constant 1 : index
    %c0_231 = arith.constant 0 : index
    %c0_232 = arith.constant 0 : index
    %529 = vector.load %arg9[%c1_230, %c0_231, %c0_232] : memref<2x8x128xf32, #tpu.memory_space<vmem>>, vector<1x8x128xf32>
    %530 = vector.shape_cast %529 : vector<1x8x128xf32> to vector<8x128xf32>
    %531 = vector.shape_cast %519 : vector<8x128xf32> to vector<1x8x128xf32>
    tpu.vector_store %arg9[%c1_230, %c0_231, %c0_232], %531 {strides = array<i32>} : memref<2x8x128xf32, #tpu.memory_space<vmem>>, vector<1x8x128xf32>,
    return
  }
  func.func @transform_0(%arg0: i32, %arg1: i32) -> (i32, i32, i32) {
    %c0_i32 = arith.constant 0 : i32
    %c0_i32_0 = arith.constant 0 : i32
    return %arg1, %arg0, %c0_i32 : i32, i32, i32
  }
  func.func @transform_1(%arg0: i32, %arg1: i32) -> (i32, i32) {
    %c0_i32 = arith.constant 0 : i32
    %c0_i32_0 = arith.constant 0 : i32
    %c0_i32_1 = arith.constant 0 : i32
    return %c0_i32, %c0_i32_0 : i32, i32
  }
  func.func @transform_2(%arg0: i32, %arg1: i32) -> (i32, i32, i32) {
    %c0_i32 = arith.constant 0 : i32
    %c0_i32_0 = arith.constant 0 : i32
    %c0_i32_1 = arith.constant 0 : i32
    %c0_i32_2 = arith.constant 0 : i32
    return %c0_i32, %c0_i32_0, %c0_i32_1 : i32, i32, i32
  }
  func.func @transform_3(%arg0: i32, %arg1: i32) -> (i32, i32, i32) {
    %c0_i32 = arith.constant 0 : i32
    %c0_i32_0 = arith.constant 0 : i32
    %c0_i32_1 = arith.constant 0 : i32
    %c0_i32_2 = arith.constant 0 : i32
    return %c0_i32, %c0_i32_0, %c0_i32_1 : i32, i32, i32
  }
  func.func @transform_4(%arg0: i32, %arg1: i32) -> (i32, i32, i32) {
    %c0_i32 = arith.constant 0 : i32
    %c0_i32_0 = arith.constant 0 : i32
    %c0_i32_1 = arith.constant 0 : i32
    %c0_i32_2 = arith.constant 0 : i32
    return %c0_i32, %c0_i32_0, %c0_i32_1 : i32, i32, i32
  }
  func.func @transform_5(%arg0: i32, %arg1: i32) -> (i32, i32, i32) {
    %c0_i32 = arith.constant 0 : i32
    %c0_i32_0 = arith.constant 0 : i32
    return %arg1, %arg0, %c0_i32 : i32, i32, i32
  }
  func.func @transform_6(%arg0: i32, %arg1: i32) -> (i32, i32, i32) {
    %c0_i32 = arith.constant 0 : i32
    %c0_i32_0 = arith.constant 0 : i32
    %c0_i32_1 = arith.constant 0 : i32
    return %c0_i32, %arg0, %c0_i32_0 : i32, i32, i32
  }
  func.func @transform_7(%arg0: i32, %arg1: i32) -> (i32, i32, i32) {
    %c0_i32 = arith.constant 0 : i32
    %c0_i32_0 = arith.constant 0 : i32
    %c0_i32_1 = arith.constant 0 : i32
    return %c0_i32, %arg0, %c0_i32_0 : i32, i32, i32
  }
}

</mosaic_0001>

<llo_original>
// kernel: tpu_custom_call.1
$region0: #{tpu_custom_call.1}
  #allocation0 [shape = 'u32[]', space=smem, size = 0x4, offset = 0x4, fixed_abs, tag = 'smem constant byte address 0x4 - core index']
  #allocation1 [shape = 'u32[144,128]{1,0:T(1,128)}', space=vmem, size = 0x12000, scoped, tag = 'internal scratch']
  #allocation2 [shape = 'f32[8,8,512]{2,1,0:T(8,128)}', space=vmem, size = 0x20000, scoped, tag = 'scratch operand']
  #allocation3 [shape = 'bf16[8,8,128]{2,1,0:T(8,128)(2,1)}', space=vmem, size = 0x4000, scoped, tag = 'scratch operand']
  %s0 = inlined_call_operand.hbm [shape: bf16[8,8,128], index: 0, kind: input, shape index: {}]
  %s1 = inlined_call_operand.hbm [shape: bf16[128,512], index: 1, kind: input, shape index: {}]
  %s2 = inlined_call_operand.hbm [shape: bf16[1,128,512], index: 2, kind: input, shape index: {}]
  %s3 = inlined_call_operand.hbm [shape: bf16[2,128,512], index: 3, kind: input, shape index: {}]
  %s4 = inlined_call_operand.vmem [shape: f32[2,1,512], index: 4, kind: input, shape index: {}]
  %s5 = inlined_call_operand.hbm [shape: f32[8,8,128], index: 5, kind: output, shape index: {0}]
  %s6 = inlined_call_operand.hbm [shape: f32[2,8,128], index: 6, kind: output, shape index: {1}]
  %s7 = inlined_call_operand.hbm [shape: f32[2,8,128], index: 7, kind: output, shape index: {2}]
  %8 = xla_tuple %s5, %s6, %s7
  %s9 = sld [smem:[#allocation0]]
  $region66: #{tpu_custom_call.1} parent=0
    _
  %s11 = ssub.s32 1, %s9
  %s12 = scalar_select 0, %s11, %s9
  $region1: #{tpu_custom_call.1} parent=0
    #allocation4 [shape = 'u8[16384]{0}', space=vmem, size = 0x4000, scoped, tag = 'input window, operand 0, single buffered']
    #allocation5 [shape = 's32[1]{0}', space=sflag, size = 0x4, scoped, tag = 'scoped memory for tpu_custom_call.1']
    #allocation6 [shape = 's32[1]{0}', space=sflag, size = 0x4, scoped, tag = 'scoped memory for tpu_custom_call.1']
    #allocation7 [shape = 'u8[131072]{0}', space=vmem, size = 0x20000, scoped, tag = 'input window, operand 1, single buffered']
    #allocation8 [shape = 's32[1]{0}', space=sflag, size = 0x4, scoped, tag = 'scoped memory for tpu_custom_call.1']
    #allocation9 [shape = 'u8[131072]{0}', space=vmem, size = 0x20000, scoped, tag = 'input window, operand 2, single buffered']
    #allocation10 [shape = 'u8[262144]{0}', space=vmem, size = 0x40000, scoped, tag = 'input window, operand 3, single buffered']
    #allocation11 [shape = 's32[1]{0}', space=sflag, size = 0x4, scoped, tag = 'scoped memory for tpu_custom_call.1']
    #allocation12 [shape = 'u8[32768]{0}', space=vmem, size = 0x8000, scoped, tag = 'output window, operand 0, single buffered']
    #allocation13 [shape = 'u8[8192]{0}', space=vmem, size = 0x2000, scoped, tag = 'output window, operand 1, single buffered']
    #allocation14 [shape = 's32[1]{0}', space=sflag, size = 0x4, scoped, tag = 'scoped memory for tpu_custom_call.1']
    #allocation15 [shape = 'u8[8192]{0}', space=vmem, size = 0x2000, scoped, tag = 'output window, operand 2, single buffered']
    %13 = vsyncpa [#allocation5], 0
    %14 = vsyncpa [#allocation8], 0
    %15 = vsyncpa [#allocation11], 0
    %16 = vsyncpa [#allocation6], 0
    %17 = vsyncpa [#allocation14], 0
    // Predicated region
    $region2: #{tpu_custom_call.1} parent=1 // pred_check
      _
    $region3: #{tpu_custom_call.1} parent=1 // pred_check_branch
      %19 = sbr.rel (0) target = $region5
    $region4: #{tpu_custom_call.1} parent=1 // pred_region
      %s21 = ssub.s32 512, 512
      %22 = vsyncadd [#allocation5], %s21
      %s23 = sshll.u32 [#allocation4], 4
      %s24 = int_to_ptr.vmem [resolvable:$true] %s23
      %29 = dma.hbm_to_vmem [thread:$0]  %s0, 512, %s24, [#allocation5], 64, 64, 4
    $region5: #{tpu_custom_call.1} parent=1 // pred_fallthru
      _
    // Predicated region
    $region6: #{tpu_custom_call.1} parent=1 // pred_check
      _
    $region7: #{tpu_custom_call.1} parent=1 // pred_check_branch
      %31 = sbr.rel (0) target = $region9
    $region8: #{tpu_custom_call.1} parent=1 // pred_region
      %s33 = ssub.s32 4096, 4096
      %34 = vsyncadd [#allocation8], %s33
      %s35 = sshll.u32 [#allocation7], 4
      %s36 = int_to_ptr.vmem [resolvable:$true] %s35
      %41 = dma.hbm_to_vmem [thread:$0]  %s1, 4096, %s36, [#allocation8], 256, 256, 16
    $region9: #{tpu_custom_call.1} parent=1 // pred_fallthru
      _
    // Predicated region
    $region10: #{tpu_custom_call.1} parent=1 // pred_check
      _
    $region11: #{tpu_custom_call.1} parent=1 // pred_check_branch
      %43 = sbr.rel (0) target = $region13
    $region12: #{tpu_custom_call.1} parent=1 // pred_region
      %s45 = ssub.s32 4096, 4096
      %46 = vsyncadd [#allocation8], %s45
      %s47 = sshll.u32 [#allocation9], 4
      %s48 = int_to_ptr.vmem [resolvable:$true] %s47
      %53 = dma.hbm_to_vmem [thread:$0]  %s2, 4096, %s48, [#allocation8], 256, 256, 16
    $region13: #{tpu_custom_call.1} parent=1 // pred_fallthru
      _
    // Predicated region
    $region14: #{tpu_custom_call.1} parent=1 // pred_check
      _
    $region15: #{tpu_custom_call.1} parent=1 // pred_check_branch
      %55 = sbr.rel (0) target = $region17
    $region16: #{tpu_custom_call.1} parent=1 // pred_region
      %s57 = ssub.s32 8192, 8192
      %58 = vsyncadd [#allocation11], %s57
      %s59 = sshll.u32 [#allocation10], 4
      %s60 = int_to_ptr.vmem [resolvable:$true] %s59
      %65 = dma.hbm_to_vmem [thread:$0]  %s3, 8192, %s60, [#allocation11], 256, 256, 16
    $region17: #{tpu_custom_call.1} parent=1 // pred_fallthru
      _
    // Predicated region
    $region18: #{tpu_custom_call.1} parent=1 // pred_check
      _
    $region19: #{tpu_custom_call.1} parent=1 // pred_check_branch
      %67 = sbr.rel (0) target = $region21
    $region20: #{tpu_custom_call.1} parent=1 // pred_region
      _
    $region21: #{tpu_custom_call.1} parent=1 // pred_fallthru
      _
    // Predicated region
    $region22: #{tpu_custom_call.1} parent=1 // pred_check
      _
    $region23: #{tpu_custom_call.1} parent=1 // pred_check_branch
      %69 = sbr.rel (0) target = $region25
    $region24: #{tpu_custom_call.1} parent=1 // pred_region
      %70 = dma.done [#allocation5], 512
    $region25: #{tpu_custom_call.1} parent=1 // pred_fallthru
      _
    // Predicated region
    $region26: #{tpu_custom_call.1} parent=1 // pred_check
      _
    $region27: #{tpu_custom_call.1} parent=1 // pred_check_branch
      %72 = sbr.rel (0) target = $region29
    $region28: #{tpu_custom_call.1} parent=1 // pred_region
      %73 = dma.done [#allocation8], 4096
    $region29: #{tpu_custom_call.1} parent=1 // pred_fallthru
      _
    // Predicated region
    $region30: #{tpu_custom_call.1} parent=1 // pred_check
      _
    $region31: #{tpu_custom_call.1} parent=1 // pred_check_branch
      %75 = sbr.rel (0) target = $region33
    $region32: #{tpu_custom_call.1} parent=1 // pred_region
      %76 = dma.done [#allocation8], 4096
    $region33: #{tpu_custom_call.1} parent=1 // pred_fallthru
      _
    // Predicated region
    $region34: #{tpu_custom_call.1} parent=1 // pred_check
      _
    $region35: #{tpu_custom_call.1} parent=1 // pred_check_branch
      %78 = sbr.rel (0) target = $region37
    $region36: #{tpu_custom_call.1} parent=1 // pred_region
      %79 = dma.done [#allocation11], 8192
    $region37: #{tpu_custom_call.1} parent=1 // pred_fallthru
      _
    %p81 = scmp.eq.s32.totalorder 0, 0
    // Predicated region
    $region38: #{tpu_custom_call.1} parent=1 // pred_check
      %p82 = pneg %p81
    $region39: #{tpu_custom_call.1} parent=1 // pred_check_branch
      %84 = sbr.rel (%p82) target = $region41
    $region40: #{tpu_custom_call.1} parent=1 // pred_region
      %85 = vst [vmem:[#allocation13] sm:$0xff] 0.0
      %86 = vst [vmem:[#allocation13 + $0x8] sm:$0xff] 0.0
      %87 = vst [vmem:[#allocation15] sm:$0xff] 0.0
      %88 = vst [vmem:[#allocation15 + $0x8] sm:$0xff] 0.0
    $region41: #{tpu_custom_call.1} parent=1 // pred_fallthru
      _
    %v89 = vld [vmem:[#allocation4] sm:$0xf]
    %v90 = vld [vmem:[#allocation4 + $0x4] sm:$0xf]
    %v91 = vld [vmem:[#allocation4 + $0x8] sm:$0xf]
    %v92 = vld [vmem:[#allocation4 + $0xc] sm:$0xf]
    %v93 = vld [vmem:[#allocation4 + $0x10] sm:$0xf]
    %v94 = vld [vmem:[#allocation4 + $0x14] sm:$0xf]
    %v95 = vld [vmem:[#allocation4 + $0x18] sm:$0xf]
    %v96 = vld [vmem:[#allocation4 + $0x1c] sm:$0xf]
    %v97 = vld [vmem:[#allocation7] sm:$0xff]
    %v98 = vld [vmem:[#allocation7 + $0x8] sm:$0xff]
    %v99 = vld [vmem:[#allocation7 + $0x10] sm:$0xff]
    %v100 = vld [vmem:[#allocation7 + $0x18] sm:$0xff]
    %v101 = vld [vmem:[#allocation7 + $0x20] sm:$0xff]
    %v102 = vld [vmem:[#allocation7 + $0x28] sm:$0xff]
    %v103 = vld [vmem:[#allocation7 + $0x30] sm:$0xff]
    %v104 = vld [vmem:[#allocation7 + $0x38] sm:$0xff]
    %v105 = vld [vmem:[#allocation7 + $0x40] sm:$0xff]
    %v106 = vld [vmem:[#allocation7 + $0x48] sm:$0xff]
    %v107 = vld [vmem:[#allocation7 + $0x50] sm:$0xff]
    %v108 = vld [vmem:[#allocation7 + $0x58] sm:$0xff]
    %v109 = vld [vmem:[#allocation7 + $0x60] sm:$0xff]
    %v110 = vld [vmem:[#allocation7 + $0x68] sm:$0xff]
    %v111 = vld [vmem:[#allocation7 + $0x70] sm:$0xff]
    %v112 = vld [vmem:[#allocation7 + $0x78] sm:$0xff]
    %v113 = vld [vmem:[#allocation7 + $0x80] sm:$0xff]
    %v114 = vld [vmem:[#allocation7 + $0x88] sm:$0xff]
    %v115 = vld [vmem:[#allocation7 + $0x90] sm:$0xff]
    %v116 = vld [vmem:[#allocation7 + $0x98] sm:$0xff]
    %v117 = vld [vmem:[#allocation7 + $0xa0] sm:$0xff]
    %v118 = vld [vmem:[#allocation7 + $0xa8] sm:$0xff]
    %v119 = vld [vmem:[#allocation7 + $0xb0] sm:$0xff]
    %v120 = vld [vmem:[#allocation7 + $0xb8] sm:$0xff]
    %v121 = vld [vmem:[#allocation7 + $0xc0] sm:$0xff]
    %v122 = vld [vmem:[#allocation7 + $0xc8] sm:$0xff]
    %v123 = vld [vmem:[#allocation7 + $0xd0] sm:$0xff]
    %v124 = vld [vmem:[#allocation7 + $0xd8] sm:$0xff]
    %v125 = vld [vmem:[#allocation7 + $0xe0] sm:$0xff]
    %v126 = vld [vmem:[#allocation7 + $0xe8] sm:$0xff]
    %v127 = vld [vmem:[#allocation7 + $0xf0] sm:$0xff]
    %v128 = vld [vmem:[#allocation7 + $0xf8] sm:$0xff]
    %v129 = vld [vmem:[%s4] sm:$0xf]
    %v131 = vlaneseq
    %v132 = vshrl.u32 %v131, 7
    %v133 = vsub.s32 0, %v132
    %v134 = vrot.slane %v129, %v133
    %v135 = vlaneseq
    %v136 = vshrl.u32 %v135, 7
    %v137 = vsub.s32 1, %v136
    %v138 = vrot.slane %v129, %v137
    %v139 = vlaneseq
    %v140 = vshrl.u32 %v139, 7
    %v141 = vsub.s32 2, %v140
    %v142 = vrot.slane %v129, %v141
    %v143 = vlaneseq
    %v144 = vshrl.u32 %v143, 7
    %v145 = vsub.s32 3, %v144
    %v146 = vrot.slane %v129, %v145
    %v159 = vunpack.c.l.b16 %v89
    %v160 = vunpack.c.l.b16 %v90
    %v161 = vunpack.c.l.b16 %v91
    %v162 = vunpack.c.l.b16 %v92
    %v163 = vunpack.c.l.b16 %v93
    %v164 = vunpack.c.l.b16 %v94
    %v165 = vunpack.c.l.b16 %v95
    %v166 = vunpack.c.l.b16 %v96
    %v167 = vpack.c.b16 %v160, %v159
    %v168 = vpack.c.b16 %v162, %v161
    %v169 = vpack.c.b16 %v164, %v163
    %v170 = vpack.c.b16 %v166, %v165
    %v207 = vunpack.c.l.b16 %v97
    %v208 = vunpack.c.h.b16 %v97
    %v209 = vunpack.c.l.b16 %v98
    %v210 = vunpack.c.h.b16 %v98
    %v211 = vunpack.c.l.b16 %v99
    %v212 = vunpack.c.h.b16 %v99
    %v213 = vunpack.c.l.b16 %v100
    %v214 = vunpack.c.h.b16 %v100
    %v215 = vunpack.c.l.b16 %v101
    %v216 = vunpack.c.h.b16 %v101
    %v217 = vunpack.c.l.b16 %v102
    %v218 = vunpack.c.h.b16 %v102
    %v219 = vunpack.c.l.b16 %v103
    %v220 = vunpack.c.h.b16 %v103
    %v221 = vunpack.c.l.b16 %v104
    %v222 = vunpack.c.h.b16 %v104
    %v223 = vunpack.c.l.b16 %v105
    %v224 = vunpack.c.h.b16 %v105
    %v225 = vunpack.c.l.b16 %v106
    %v226 = vunpack.c.h.b16 %v106
    %v227 = vunpack.c.l.b16 %v107
    %v228 = vunpack.c.h.b16 %v107
    %v229 = vunpack.c.l.b16 %v108
    %v230 = vunpack.c.h.b16 %v108
    %v231 = vunpack.c.l.b16 %v109
    %v232 = vunpack.c.h.b16 %v109
    %v233 = vunpack.c.l.b16 %v110
    %v234 = vunpack.c.h.b16 %v110
    %v235 = vunpack.c.l.b16 %v111
    %v236 = vunpack.c.h.b16 %v111
    %v237 = vunpack.c.l.b16 %v112
    %v238 = vunpack.c.h.b16 %v112
    %v239 = vunpack.c.l.b16 %v113
    %v240 = vunpack.c.h.b16 %v113
    %v241 = vunpack.c.l.b16 %v114
    %v242 = vunpack.c.h.b16 %v114
    %v243 = vunpack.c.l.b16 %v115
    %v244 = vunpack.c.h.b16 %v115
    %v245 = vunpack.c.l.b16 %v116
    %v246 = vunpack.c.h.b16 %v116
    %v247 = vunpack.c.l.b16 %v117
    %v248 = vunpack.c.h.b16 %v117
    %v249 = vunpack.c.l.b16 %v118
    %v250 = vunpack.c.h.b16 %v118
    %v251 = vunpack.c.l.b16 %v119
    %v252 = vunpack.c.h.b16 %v119
    %v253 = vunpack.c.l.b16 %v120
    %v254 = vunpack.c.h.b16 %v120
    %v255 = vunpack.c.l.b16 %v121
    %v256 = vunpack.c.h.b16 %v121
    %v257 = vunpack.c.l.b16 %v122
    %v258 = vunpack.c.h.b16 %v122
    %v259 = vunpack.c.l.b16 %v123
    %v260 = vunpack.c.h.b16 %v123
    %v261 = vunpack.c.l.b16 %v124
    %v262 = vunpack.c.h.b16 %v124
    %v263 = vunpack.c.l.b16 %v125
    %v264 = vunpack.c.h.b16 %v125
    %v265 = vunpack.c.l.b16 %v126
    %v266 = vunpack.c.h.b16 %v126
    %v267 = vunpack.c.l.b16 %v127
    %v268 = vunpack.c.h.b16 %v127
    %v269 = vunpack.c.l.b16 %v128
    %v270 = vunpack.c.h.b16 %v128
    %v271 = vpack.c.b16 %v211, %v207
    %v272 = vpack.c.b16 %v212, %v208
    %v273 = vpack.c.b16 %v213, %v209
    %v274 = vpack.c.b16 %v214, %v210
    %v275 = vpack.c.b16 %v219, %v215
    %v276 = vpack.c.b16 %v220, %v216
    %v277 = vpack.c.b16 %v221, %v217
    %v278 = vpack.c.b16 %v222, %v218
    %v279 = vpack.c.b16 %v227, %v223
    %v280 = vpack.c.b16 %v228, %v224
    %v281 = vpack.c.b16 %v229, %v225
    %v282 = vpack.c.b16 %v230, %v226
    %v283 = vpack.c.b16 %v235, %v231
    %v284 = vpack.c.b16 %v236, %v232
    %v285 = vpack.c.b16 %v237, %v233
    %v286 = vpack.c.b16 %v238, %v234
    %v287 = vpack.c.b16 %v243, %v239
    %v288 = vpack.c.b16 %v244, %v240
    %v289 = vpack.c.b16 %v245, %v241
    %v290 = vpack.c.b16 %v246, %v242
    %v291 = vpack.c.b16 %v251, %v247
    %v292 = vpack.c.b16 %v252, %v248
    %v293 = vpack.c.b16 %v253, %v249
    %v294 = vpack.c.b16 %v254, %v250
    %v295 = vpack.c.b16 %v259, %v255
    %v296 = vpack.c.b16 %v260, %v256
    %v297 = vpack.c.b16 %v261, %v257
    %v298 = vpack.c.b16 %v262, %v258
    %v299 = vpack.c.b16 %v267, %v263
    %v300 = vpack.c.b16 %v268, %v264
    %v301 = vpack.c.b16 %v269, %v265
    %v302 = vpack.c.b16 %v270, %v266
    %335 = vmatprep.subr.bf16.mxu0 %v272
    %336 = vmatpush1.bf16.msra.mxu0 %v271
    %337 = vmatprep.subr.bf16.mxu0 %v276
    %338 = vmatpush1.bf16.msra.mxu0 %v275
    %339 = vmatprep.subr.bf16.mxu0 %v280
    %340 = vmatpush1.bf16.msra.mxu0 %v279
    %341 = vmatprep.subr.bf16.mxu0 %v284
    %342 = vmatpush1.bf16.msra.mxu0 %v283
    %343 = vmatprep.subr.bf16.mxu0 %v288
    %344 = vmatpush1.bf16.msra.mxu0 %v287
    %345 = vmatprep.subr.bf16.mxu0 %v292
    %346 = vmatpush1.bf16.msra.mxu0 %v291
    %347 = vmatprep.subr.bf16.mxu0 %v296
    %348 = vmatpush1.bf16.msra.mxu0 %v295
    %349 = vmatprep.subr.bf16.mxu0 %v300
    %350 = vmatpush1.bf16.msra.mxu0 %v299
    %351 = vmatprep.subr.bf16.mxu0 0
    %352 = vmatpush1.bf16.msra.mxu0 0
    %353 = vmatprep.subr.bf16.mxu0 0
    %354 = vmatpush1.bf16.msra.mxu0 0
    %355 = vmatprep.subr.bf16.mxu0 0
    %356 = vmatpush1.bf16.msra.mxu0 0
    %357 = vmatprep.subr.bf16.mxu0 0
    %358 = vmatpush1.bf16.msra.mxu0 0
    %359 = vmatprep.subr.bf16.mxu0 0
    %360 = vmatpush1.bf16.msra.mxu0 0
    %361 = vmatprep.subr.bf16.mxu0 0
    %362 = vmatpush1.bf16.msra.mxu0 0
    %363 = vmatprep.subr.bf16.mxu0 0
    %364 = vmatpush1.bf16.msra.mxu0 0
    %365 = vmatprep.subr.bf16.mxu0 0
    %366 = vmatpush1.bf16.msra.mxu0 0
    %367 = vmatprep.mubr.bf16.mxu0 0
    %368 = vmatmul.mubr.bf16.gmra.mrb[0].mxu0 %v167
    %v369 = vpop.f32.mrb[0].mxu0
    %v370 = vadd.f32 %v134, %v369
    %v371 = vpop.f32.mrb[0].mxu0
    %v372 = vadd.f32 %v138, %v371
    %v373 = vpop.f32.mrb[0].mxu0
    %v374 = vadd.f32 %v134, %v373
    %v375 = vpop.f32.mrb[0].mxu0
    %v376 = vadd.f32 %v138, %v375
    %377 = vmatprep.mubr.bf16.mxu0 0
    %378 = vmatmul.mubr.bf16.gmra.mrb[0].mxu0 %v168
    %v379 = vpop.f32.mrb[0].mxu0
    %v380 = vadd.f32 %v134, %v379
    %v381 = vpop.f32.mrb[0].mxu0
    %v382 = vadd.f32 %v138, %v381
    %v383 = vpop.f32.mrb[0].mxu0
    %v384 = vadd.f32 %v134, %v383
    %v385 = vpop.f32.mrb[0].mxu0
    %v386 = vadd.f32 %v138, %v385
    %387 = vmatprep.mubr.bf16.mxu0 0
    %388 = vmatmul.mubr.bf16.gmra.mrb[0].mxu0 %v169
    %v389 = vpop.f32.mrb[0].mxu0
    %v390 = vadd.f32 %v134, %v389
    %v391 = vpop.f32.mrb[0].mxu0
    %v392 = vadd.f32 %v138, %v391
    %v393 = vpop.f32.mrb[0].mxu0
    %v394 = vadd.f32 %v134, %v393
    %v395 = vpop.f32.mrb[0].mxu0
    %v396 = vadd.f32 %v138, %v395
    %397 = vmatprep.mubr.bf16.mxu0 0
    %398 = vmatmul.mubr.bf16.gmra.mrb[0].mxu0 %v170
    %v399 = vpop.f32.mrb[0].mxu0
    %v400 = vadd.f32 %v134, %v399
    %v401 = vpop.f32.mrb[0].mxu0
    %v402 = vadd.f32 %v138, %v401
    %v403 = vpop.f32.mrb[0].mxu0
    %v404 = vadd.f32 %v134, %v403
    %v405 = vpop.f32.mrb[0].mxu0
    %v406 = vadd.f32 %v138, %v405
    %407 = vdwg.mxu0
    %408 = vmatprep.subr.bf16.mxu0 %v274
    %409 = vmatpush1.bf16.msra.mxu0 %v273
    %410 = vmatprep.subr.bf16.mxu0 %v278
    %411 = vmatpush1.bf16.msra.mxu0 %v277
    %412 = vmatprep.subr.bf16.mxu0 %v282
    %413 = vmatpush1.bf16.msra.mxu0 %v281
    %414 = vmatprep.subr.bf16.mxu0 %v286
    %415 = vmatpush1.bf16.msra.mxu0 %v285
    %416 = vmatprep.subr.bf16.mxu0 %v290
    %417 = vmatpush1.bf16.msra.mxu0 %v289
    %418 = vmatprep.subr.bf16.mxu0 %v294
    %419 = vmatpush1.bf16.msra.mxu0 %v293
    %420 = vmatprep.subr.bf16.mxu0 %v298
    %421 = vmatpush1.bf16.msra.mxu0 %v297
    %422 = vmatprep.subr.bf16.mxu0 %v302
    %423 = vmatpush1.bf16.msra.mxu0 %v301
    %424 = vmatprep.subr.bf16.mxu0 0
    %425 = vmatpush1.bf16.msra.mxu0 0
    %426 = vmatprep.subr.bf16.mxu0 0
    %427 = vmatpush1.bf16.msra.mxu0 0
    %428 = vmatprep.subr.bf16.mxu0 0
    %429 = vmatpush1.bf16.msra.mxu0 0
    %430 = vmatprep.subr.bf16.mxu0 0
    %431 = vmatpush1.bf16.msra.mxu0 0
    %432 = vmatprep.subr.bf16.mxu0 0
    %433 = vmatpush1.bf16.msra.mxu0 0
    %434 = vmatprep.subr.bf16.mxu0 0
    %435 = vmatpush1.bf16.msra.mxu0 0
    %436 = vmatprep.subr.bf16.mxu0 0
    %437 = vmatpush1.bf16.msra.mxu0 0
    %438 = vmatprep.subr.bf16.mxu0 0
    %439 = vmatpush1.bf16.msra.mxu0 0
    %440 = vmatprep.mubr.bf16.mxu0 0
    %441 = vmatmul.mubr.bf16.gmra.mrb[0].mxu0 %v167
    %v442 = vpop.f32.mrb[0].mxu0
    %v443 = vadd.f32 %v142, %v442
    %v444 = vpop.f32.mrb[0].mxu0
    %v445 = vadd.f32 %v146, %v444
    %v446 = vpop.f32.mrb[0].mxu0
    %v447 = vadd.f32 %v142, %v446
    %v448 = vpop.f32.mrb[0].mxu0
    %v449 = vadd.f32 %v146, %v448
    %450 = vmatprep.mubr.bf16.mxu0 0
    %451 = vmatmul.mubr.bf16.gmra.mrb[0].mxu0 %v168
    %v452 = vpop.f32.mrb[0].mxu0
    %v453 = vadd.f32 %v142, %v452
    %v454 = vpop.f32.mrb[0].mxu0
    %v455 = vadd.f32 %v146, %v454
    %v456 = vpop.f32.mrb[0].mxu0
    %v457 = vadd.f32 %v142, %v456
    %v458 = vpop.f32.mrb[0].mxu0
    %v459 = vadd.f32 %v146, %v458
    %460 = vmatprep.mubr.bf16.mxu0 0
    %461 = vmatmul.mubr.bf16.gmra.mrb[0].mxu0 %v169
    %v462 = vpop.f32.mrb[0].mxu0
    %v463 = vadd.f32 %v142, %v462
    %v464 = vpop.f32.mrb[0].mxu0
    %v465 = vadd.f32 %v146, %v464
    %v466 = vpop.f32.mrb[0].mxu0
    %v467 = vadd.f32 %v142, %v466
    %v468 = vpop.f32.mrb[0].mxu0
    %v469 = vadd.f32 %v146, %v468
    %470 = vmatprep.mubr.bf16.mxu0 0
    %471 = vmatmul.mubr.bf16.gmra.mrb[0].mxu0 %v170
    %v472 = vpop.f32.mrb[0].mxu0
    %v473 = vadd.f32 %v142, %v472
    %v474 = vpop.f32.mrb[0].mxu0
    %v475 = vadd.f32 %v146, %v474
    %v476 = vpop.f32.mrb[0].mxu0
    %v477 = vadd.f32 %v142, %v476
    %v478 = vpop.f32.mrb[0].mxu0
    %v479 = vadd.f32 %v146, %v478
    %480 = vdwg.mxu0
    %481 = vst [vmem:[#allocation2] sm:$0xff] %v370
    %482 = vst [vmem:[#allocation2 + $0x8] sm:$0xff] %v372
    %483 = vst [vmem:[#allocation2 + $0x10] sm:$0xff] %v443
    %484 = vst [vmem:[#allocation2 + $0x18] sm:$0xff] %v445
    %485 = vst [vmem:[#allocation2 + $0x20] sm:$0xff] %v374
    %486 = vst [vmem:[#allocation2 + $0x28] sm:$0xff] %v376
    %487 = vst [vmem:[#allocation2 + $0x30] sm:$0xff] %v447
    %488 = vst [vmem:[#allocation2 + $0x38] sm:$0xff] %v449
    %489 = vst [vmem:[#allocation2 + $0x40] sm:$0xff] %v380
    %490 = vst [vmem:[#allocation2 + $0x48] sm:$0xff] %v382
    %491 = vst [vmem:[#allocation2 + $0x50] sm:$0xff] %v453
    %492 = vst [vmem:[#allocation2 + $0x58] sm:$0xff] %v455
    %493 = vst [vmem:[#allocation2 + $0x60] sm:$0xff] %v384
    %494 = vst [vmem:[#allocation2 + $0x68] sm:$0xff] %v386
    %495 = vst [vmem:[#allocation2 + $0x70] sm:$0xff] %v457
    %496 = vst [vmem:[#allocation2 + $0x78] sm:$0xff] %v459
    %497 = vst [vmem:[#allocation2 + $0x80] sm:$0xff] %v390
    %498 = vst [vmem:[#allocation2 + $0x88] sm:$0xff] %v392
    %499 = vst [vmem:[#allocation2 + $0x90] sm:$0xff] %v463
    %500 = vst [vmem:[#allocation2 + $0x98] sm:$0xff] %v465
    %501 = vst [vmem:[#allocation2 + $0xa0] sm:$0xff] %v394
    %502 = vst [vmem:[#allocation2 + $0xa8] sm:$0xff] %v396
    %503 = vst [vmem:[#allocation2 + $0xb0] sm:$0xff] %v467
    %504 = vst [vmem:[#allocation2 + $0xb8] sm:$0xff] %v469
    %505 = vst [vmem:[#allocation2 + $0xc0] sm:$0xff] %v400
    %506 = vst [vmem:[#allocation2 + $0xc8] sm:$0xff] %v402
    %507 = vst [vmem:[#allocation2 + $0xd0] sm:$0xff] %v473
    %508 = vst [vmem:[#allocation2 + $0xd8] sm:$0xff] %v475
    %509 = vst [vmem:[#allocation2 + $0xe0] sm:$0xff] %v404
    %510 = vst [vmem:[#allocation2 + $0xe8] sm:$0xff] %v406
    %511 = vst [vmem:[#allocation2 + $0xf0] sm:$0xff] %v477
    %512 = vst [vmem:[#allocation2 + $0xf8] sm:$0xff] %v479
    %v513 = vld [vmem:[#allocation13] sm:$0xff]
    %v514 = vld [vmem:[#allocation15] sm:$0xff]
    %v515 = vld [vmem:[#allocation2] sm:$0xff]
    %v516 = vld [vmem:[#allocation2 + $0x8] sm:$0xff]
    %v517 = vld [vmem:[#allocation2 + $0x10] sm:$0xff]
    %v518 = vld [vmem:[#allocation2 + $0x18] sm:$0xff]
    %v519 = vpack.c.bf16 %v513, %v513
    %v520 = vld [vmem:[#allocation10] sm:$0xff]
    %v521 = vld [vmem:[#allocation10 + $0x8] sm:$0xff]
    %v522 = vld [vmem:[#allocation10 + $0x10] sm:$0xff]
    %v523 = vld [vmem:[#allocation10 + $0x18] sm:$0xff]
    %v524 = vld [vmem:[#allocation10 + $0x20] sm:$0xff]
    %v525 = vld [vmem:[#allocation10 + $0x28] sm:$0xff]
    %v526 = vld [vmem:[#allocation10 + $0x30] sm:$0xff]
    %v527 = vld [vmem:[#allocation10 + $0x38] sm:$0xff]
    %v528 = vld [vmem:[#allocation10 + $0x40] sm:$0xff]
    %v529 = vld [vmem:[#allocation10 + $0x48] sm:$0xff]
    %v530 = vld [vmem:[#allocation10 + $0x50] sm:$0xff]
    %v531 = vld [vmem:[#allocation10 + $0x58] sm:$0xff]
    %v532 = vld [vmem:[#allocation10 + $0x60] sm:$0xff]
    %v533 = vld [vmem:[#allocation10 + $0x68] sm:$0xff]
    %v534 = vld [vmem:[#allocation10 + $0x70] sm:$0xff]
    %v535 = vld [vmem:[#allocation10 + $0x78] sm:$0xff]
    %v536 = vld [vmem:[#allocation10 + $0x80] sm:$0xff]
    %v537 = vld [vmem:[#allocation10 + $0x88] sm:$0xff]
    %v538 = vld [vmem:[#allocation10 + $0x90] sm:$0xff]
    %v539 = vld [vmem:[#allocation10 + $0x98] sm:$0xff]
    %v540 = vld [vmem:[#allocation10 + $0xa0] sm:$0xff]
    %v541 = vld [vmem:[#allocation10 + $0xa8] sm:$0xff]
    %v542 = vld [vmem:[#allocation10 + $0xb0] sm:$0xff]
    %v543 = vld [vmem:[#allocation10 + $0xb8] sm:$0xff]
    %v544 = vld [vmem:[#allocation10 + $0xc0] sm:$0xff]
    %v545 = vld [vmem:[#allocation10 + $0xc8] sm:$0xff]
    %v546 = vld [vmem:[#allocation10 + $0xd0] sm:$0xff]
    %v547 = vld [vmem:[#allocation10 + $0xd8] sm:$0xff]
    %v548 = vld [vmem:[#allocation10 + $0xe0] sm:$0xff]
    %v549 = vld [vmem:[#allocation10 + $0xe8] sm:$0xff]
    %v550 = vld [vmem:[#allocation10 + $0xf0] sm:$0xff]
    %v551 = vld [vmem:[#allocation10 + $0xf8] sm:$0xff]
    %v584 = vunpack.c.l.b16 %v520
    %v585 = vunpack.c.h.b16 %v520
    %v586 = vunpack.c.l.b16 %v521
    %v587 = vunpack.c.h.b16 %v521
    %v588 = vunpack.c.l.b16 %v522
    %v589 = vunpack.c.h.b16 %v522
    %v590 = vunpack.c.l.b16 %v523
    %v591 = vunpack.c.h.b16 %v523
    %v592 = vunpack.c.l.b16 %v524
    %v593 = vunpack.c.h.b16 %v524
    %v594 = vunpack.c.l.b16 %v525
    %v595 = vunpack.c.h.b16 %v525
    %v596 = vunpack.c.l.b16 %v526
    %v597 = vunpack.c.h.b16 %v526
    %v598 = vunpack.c.l.b16 %v527
    %v599 = vunpack.c.h.b16 %v527
    %v600 = vunpack.c.l.b16 %v528
    %v601 = vunpack.c.h.b16 %v528
    %v602 = vunpack.c.l.b16 %v529
    %v603 = vunpack.c.h.b16 %v529
    %v604 = vunpack.c.l.b16 %v530
    %v605 = vunpack.c.h.b16 %v530
    %v606 = vunpack.c.l.b16 %v531
    %v607 = vunpack.c.h.b16 %v531
    %v608 = vunpack.c.l.b16 %v532
    %v609 = vunpack.c.h.b16 %v532
    %v610 = vunpack.c.l.b16 %v533
    %v611 = vunpack.c.h.b16 %v533
    %v612 = vunpack.c.l.b16 %v534
    %v613 = vunpack.c.h.b16 %v534
    %v614 = vunpack.c.l.b16 %v535
    %v615 = vunpack.c.h.b16 %v535
    %v616 = vunpack.c.l.b16 %v536
    %v617 = vunpack.c.h.b16 %v536
    %v618 = vunpack.c.l.b16 %v537
    %v619 = vunpack.c.h.b16 %v537
    %v620 = vunpack.c.l.b16 %v538
    %v621 = vunpack.c.h.b16 %v538
    %v622 = vunpack.c.l.b16 %v539
    %v623 = vunpack.c.h.b16 %v539
    %v624 = vunpack.c.l.b16 %v540
    %v625 = vunpack.c.h.b16 %v540
    %v626 = vunpack.c.l.b16 %v541
    %v627 = vunpack.c.h.b16 %v541
    %v628 = vunpack.c.l.b16 %v542
    %v629 = vunpack.c.h.b16 %v542
    %v630 = vunpack.c.l.b16 %v543
    %v631 = vunpack.c.h.b16 %v543
    %v632 = vunpack.c.l.b16 %v544
    %v633 = vunpack.c.h.b16 %v544
    %v634 = vunpack.c.l.b16 %v545
    %v635 = vunpack.c.h.b16 %v545
    %v636 = vunpack.c.l.b16 %v546
    %v637 = vunpack.c.h.b16 %v546
    %v638 = vunpack.c.l.b16 %v547
    %v639 = vunpack.c.h.b16 %v547
    %v640 = vunpack.c.l.b16 %v548
    %v641 = vunpack.c.h.b16 %v548
    %v642 = vunpack.c.l.b16 %v549
    %v643 = vunpack.c.h.b16 %v549
    %v644 = vunpack.c.l.b16 %v550
    %v645 = vunpack.c.h.b16 %v550
    %v646 = vunpack.c.l.b16 %v551
    %v647 = vunpack.c.h.b16 %v551
    %v648 = vpack.c.b16 %v588, %v584
    %v649 = vpack.c.b16 %v589, %v585
    %v650 = vpack.c.b16 %v590, %v586
    %v651 = vpack.c.b16 %v591, %v587
    %v652 = vpack.c.b16 %v596, %v592
    %v653 = vpack.c.b16 %v597, %v593
    %v654 = vpack.c.b16 %v598, %v594
    %v655 = vpack.c.b16 %v599, %v595
    %v656 = vpack.c.b16 %v604, %v600
    %v657 = vpack.c.b16 %v605, %v601
    %v658 = vpack.c.b16 %v606, %v602
    %v659 = vpack.c.b16 %v607, %v603
    %v660 = vpack.c.b16 %v612, %v608
    %v661 = vpack.c.b16 %v613, %v609
    %v662 = vpack.c.b16 %v614, %v610
    %v663 = vpack.c.b16 %v615, %v611
    %v664 = vpack.c.b16 %v620, %v616
    %v665 = vpack.c.b16 %v621, %v617
    %v666 = vpack.c.b16 %v622, %v618
    %v667 = vpack.c.b16 %v623, %v619
    %v668 = vpack.c.b16 %v628, %v624
    %v669 = vpack.c.b16 %v629, %v625
    %v670 = vpack.c.b16 %v630, %v626
    %v671 = vpack.c.b16 %v631, %v627
    %v672 = vpack.c.b16 %v636, %v632
    %v673 = vpack.c.b16 %v637, %v633
    %v674 = vpack.c.b16 %v638, %v634
    %v675 = vpack.c.b16 %v639, %v635
    %v676 = vpack.c.b16 %v644, %v640
    %v677 = vpack.c.b16 %v645, %v641
    %v678 = vpack.c.b16 %v646, %v642
    %v679 = vpack.c.b16 %v647, %v643
    %712 = vmatprep.subr.bf16.mxu0 %v649
    %713 = vmatpush1.bf16.msra.mxu0 %v648
    %714 = vmatprep.subr.bf16.mxu0 %v653
    %715 = vmatpush1.bf16.msra.mxu0 %v652
    %716 = vmatprep.subr.bf16.mxu0 %v657
    %717 = vmatpush1.bf16.msra.mxu0 %v656
    %718 = vmatprep.subr.bf16.mxu0 %v661
    %719 = vmatpush1.bf16.msra.mxu0 %v660
    %720 = vmatprep.subr.bf16.mxu0 %v665
    %721 = vmatpush1.bf16.msra.mxu0 %v664
    %722 = vmatprep.subr.bf16.mxu0 %v669
    %723 = vmatpush1.bf16.msra.mxu0 %v668
    %724 = vmatprep.subr.bf16.mxu0 %v673
    %725 = vmatpush1.bf16.msra.mxu0 %v672
    %726 = vmatprep.subr.bf16.mxu0 %v677
    %727 = vmatpush1.bf16.msra.mxu0 %v676
    %728 = vmatprep.subr.bf16.mxu0 0
    %729 = vmatpush1.bf16.msra.mxu0 0
    %730 = vmatprep.subr.bf16.mxu0 0
    %731 = vmatpush1.bf16.msra.mxu0 0
    %732 = vmatprep.subr.bf16.mxu0 0
    %733 = vmatpush1.bf16.msra.mxu0 0
    %734 = vmatprep.subr.bf16.mxu0 0
    %735 = vmatpush1.bf16.msra.mxu0 0
    %736 = vmatprep.subr.bf16.mxu0 0
    %737 = vmatpush1.bf16.msra.mxu0 0
    %738 = vmatprep.subr.bf16.mxu0 0
    %739 = vmatpush1.bf16.msra.mxu0 0
    %740 = vmatprep.subr.bf16.mxu0 0
    %741 = vmatpush1.bf16.msra.mxu0 0
    %742 = vmatprep.subr.bf16.mxu0 0
    %743 = vmatpush1.bf16.msra.mxu0 0
    %744 = vmatprep.mubr.bf16.mxu0 0
    %745 = vmatmul.mubr.bf16.gmra.mrb[0].mxu0 %v519
    %v746 = vpop.f32.mrb[0].mxu0
    %v747 = vadd.f32 0.0, %v746
    %v748 = vpop.f32.mrb[0].mxu0
    %v749 = vadd.f32 0.0, %v748
    %v750 = vpop.f32.mrb[0].mxu0
    %v751 = vpop.f32.mrb[0].mxu0
    %752 = vdwg.mxu0
    %753 = vmatprep.subr.bf16.mxu0 %v651
    %754 = vmatpush1.bf16.msra.mxu0 %v650
    %755 = vmatprep.subr.bf16.mxu0 %v655
    %756 = vmatpush1.bf16.msra.mxu0 %v654
    %757 = vmatprep.subr.bf16.mxu0 %v659
    %758 = vmatpush1.bf16.msra.mxu0 %v658
    %759 = vmatprep.subr.bf16.mxu0 %v663
    %760 = vmatpush1.bf16.msra.mxu0 %v662
    %761 = vmatprep.subr.bf16.mxu0 %v667
    %762 = vmatpush1.bf16.msra.mxu0 %v666
    %763 = vmatprep.subr.bf16.mxu0 %v671
    %764 = vmatpush1.bf16.msra.mxu0 %v670
    %765 = vmatprep.subr.bf16.mxu0 %v675
    %766 = vmatpush1.bf16.msra.mxu0 %v674
    %767 = vmatprep.subr.bf16.mxu0 %v679
    %768 = vmatpush1.bf16.msra.mxu0 %v678
    %769 = vmatprep.subr.bf16.mxu0 0
    %770 = vmatpush1.bf16.msra.mxu0 0
    %771 = vmatprep.subr.bf16.mxu0 0
    %772 = vmatpush1.bf16.msra.mxu0 0
    %773 = vmatprep.subr.bf16.mxu0 0
    %774 = vmatpush1.bf16.msra.mxu0 0
    %775 = vmatprep.subr.bf16.mxu0 0
    %776 = vmatpush1.bf16.msra.mxu0 0
    %777 = vmatprep.subr.bf16.mxu0 0
    %778 = vmatpush1.bf16.msra.mxu0 0
    %779 = vmatprep.subr.bf16.mxu0 0
    %780 = vmatpush1.bf16.msra.mxu0 0
    %781 = vmatprep.subr.bf16.mxu0 0
    %782 = vmatpush1.bf16.msra.mxu0 0
    %783 = vmatprep.subr.bf16.mxu0 0
    %784 = vmatpush1.bf16.msra.mxu0 0
    %785 = vmatprep.mubr.bf16.mxu0 0
    %786 = vmatmul.mubr.bf16.gmra.mrb[0].mxu0 %v519
    %v787 = vpop.f32.mrb[0].mxu0
    %v788 = vadd.f32 0.0, %v787
    %v789 = vpop.f32.mrb[0].mxu0
    %v790 = vadd.f32 0.0, %v789
    %v791 = vpop.f32.mrb[0].mxu0
    %v792 = vpop.f32.mrb[0].mxu0
    %793 = vdwg.mxu0
    %v794 = vadd.f32 %v515, %v747
    %v795 = vadd.f32 %v516, %v749
    %v796 = vadd.f32 %v517, %v788
    %v797 = vadd.f32 %v518, %v790
    %v798 = vxor.u32 %v794, 2147483648
    %v799 = vxor.u32 %v795, 2147483648
    %v800 = vxor.u32 %v796, 2147483648
    %v801 = vxor.u32 %v797, 2147483648
    %v802 = vmul.f32 %v798, 1.442695
    %v803 = vpow.pop %v802
    %v804 = vmul.f32 %v799, 1.442695
    %v805 = vpow.pop %v804
    %v806 = vmul.f32 %v800, 1.442695
    %v807 = vpow.pop %v806
    %v808 = vmul.f32 %v801, 1.442695
    %v809 = vpow.pop %v808
    %v810 = vadd.f32 %v803, 1.0
    %v811 = vadd.f32 %v805, 1.0
    %v812 = vadd.f32 %v807, 1.0
    %v813 = vadd.f32 %v809, 1.0
    %v814 = vrcp.pop %v810
    %v815 = vmul.f32 1.0, %v814
    %v816 = vrcp.pop %v811
    %v817 = vmul.f32 1.0, %v816
    %v818 = vrcp.pop %v812
    %v819 = vmul.f32 1.0, %v818
    %v820 = vrcp.pop %v813
    %v821 = vmul.f32 1.0, %v820
    %v822 = vmul.f32 %v819, 2.0
    %v823 = vsub.f32 %v822, 1.0
    %v824 = vmul.f32 %v817, %v514
    %v825 = vmul.f32 %v815, %v823
    %v826 = vadd.f32 %v824, %v825
    %v827 = vtanh.pop %v826
    %v828 = vmul.f32 %v821, %v827
    %v829 = vpack.c.bf16 %v828, %v828
    %830 = vst [vmem:[#allocation3] sm:$0xf] %v829
    %s831 = scalar_lea.vmem [#allocation2], 32
    %v832 = vld [vmem:[%s831] sm:$0xff]
    %v833 = vld [vmem:[%s831 + $0x8] sm:$0xff]
    %v834 = vld [vmem:[%s831 + $0x10] sm:$0xff]
    %v835 = vld [vmem:[%s831 + $0x18] sm:$0xff]
    %v836 = vld [vmem:[#allocation10] sm:$0xff]
    %v837 = vld [vmem:[#allocation10 + $0x8] sm:$0xff]
    %v838 = vld [vmem:[#allocation10 + $0x10] sm:$0xff]
    %v839 = vld [vmem:[#allocation10 + $0x18] sm:$0xff]
    %v840 = vld [vmem:[#allocation10 + $0x20] sm:$0xff]
    %v841 = vld [vmem:[#allocation10 + $0x28] sm:$0xff]
    %v842 = vld [vmem:[#allocation10 + $0x30] sm:$0xff]
    %v843 = vld [vmem:[#allocation10 + $0x38] sm:$0xff]
    %v844 = vld [vmem:[#allocation10 + $0x40] sm:$0xff]
    %v845 = vld [vmem:[#allocation10 + $0x48] sm:$0xff]
    %v846 = vld [vmem:[#allocation10 + $0x50] sm:$0xff]
    %v847 = vld [vmem:[#allocation10 + $0x58] sm:$0xff]
    %v848 = vld [vmem:[#allocation10 + $0x60] sm:$0xff]
    %v849 = vld [vmem:[#allocation10 + $0x68] sm:$0xff]
    %v850 = vld [vmem:[#allocation10 + $0x70] sm:$0xff]
    %v851 = vld [vmem:[#allocation10 + $0x78] sm:$0xff]
    %v852 = vld [vmem:[#allocation10 + $0x80] sm:$0xff]
    %v853 = vld [vmem:[#allocation10 + $0x88] sm:$0xff]
    %v854 = vld [vmem:[#allocation10 + $0x90] sm:$0xff]
    %v855 = vld [vmem:[#allocation10 + $0x98] sm:$0xff]
    %v856 = vld [vmem:[#allocation10 + $0xa0] sm:$0xff]
    %v857 = vld [vmem:[#allocation10 + $0xa8] sm:$0xff]
    %v858 = vld [vmem:[#allocation10 + $0xb0] sm:$0xff]
    %v859 = vld [vmem:[#allocation10 + $0xb8] sm:$0xff]
    %v860 = vld [vmem:[#allocation10 + $0xc0] sm:$0xff]
    %v861 = vld [vmem:[#allocation10 + $0xc8] sm:$0xff]
    %v862 = vld [vmem:[#allocation10 + $0xd0] sm:$0xff]
    %v863 = vld [vmem:[#allocation10 + $0xd8] sm:$0xff]
    %v864 = vld [vmem:[#allocation10 + $0xe0] sm:$0xff]
    %v865 = vld [vmem:[#allocation10 + $0xe8] sm:$0xff]
    %v866 = vld [vmem:[#allocation10 + $0xf0] sm:$0xff]
    %v867 = vld [vmem:[#allocation10 + $0xf8] sm:$0xff]
    %v900 = vunpack.c.l.b16 %v836
    %v901 = vunpack.c.h.b16 %v836
    %v902 = vunpack.c.l.b16 %v837
    %v903 = vunpack.c.h.b16 %v837
    %v904 = vunpack.c.l.b16 %v838
    %v905 = vunpack.c.h.b16 %v838
    %v906 = vunpack.c.l.b16 %v839
    %v907 = vunpack.c.h.b16 %v839
    %v908 = vunpack.c.l.b16 %v840
    %v909 = vunpack.c.h.b16 %v840
    %v910 = vunpack.c.l.b16 %v841
    %v911 = vunpack.c.h.b16 %v841
    %v912 = vunpack.c.l.b16 %v842
    %v913 = vunpack.c.h.b16 %v842
    %v914 = vunpack.c.l.b16 %v843
    %v915 = vunpack.c.h.b16 %v843
    %v916 = vunpack.c.l.b16 %v844
    %v917 = vunpack.c.h.b16 %v844
    %v918 = vunpack.c.l.b16 %v845
    %v919 = vunpack.c.h.b16 %v845
    %v920 = vunpack.c.l.b16 %v846
    %v921 = vunpack.c.h.b16 %v846
    %v922 = vunpack.c.l.b16 %v847
    %v923 = vunpack.c.h.b16 %v847
    %v924 = vunpack.c.l.b16 %v848
    %v925 = vunpack.c.h.b16 %v848
    %v926 = vunpack.c.l.b16 %v849
    %v927 = vunpack.c.h.b16 %v849
    %v928 = vunpack.c.l.b16 %v850
    %v929 = vunpack.c.h.b16 %v850
    %v930 = vunpack.c.l.b16 %v851
    %v931 = vunpack.c.h.b16 %v851
    %v932 = vunpack.c.l.b16 %v852
    %v933 = vunpack.c.h.b16 %v852
    %v934 = vunpack.c.l.b16 %v853
    %v935 = vunpack.c.h.b16 %v853
    %v936 = vunpack.c.l.b16 %v854
    %v937 = vunpack.c.h.b16 %v854
    %v938 = vunpack.c.l.b16 %v855
    %v939 = vunpack.c.h.b16 %v855
    %v940 = vunpack.c.l.b16 %v856
    %v941 = vunpack.c.h.b16 %v856
    %v942 = vunpack.c.l.b16 %v857
    %v943 = vunpack.c.h.b16 %v857
    %v944 = vunpack.c.l.b16 %v858
    %v945 = vunpack.c.h.b16 %v858
    %v946 = vunpack.c.l.b16 %v859
    %v947 = vunpack.c.h.b16 %v859
    %v948 = vunpack.c.l.b16 %v860
    %v949 = vunpack.c.h.b16 %v860
    %v950 = vunpack.c.l.b16 %v861
    %v951 = vunpack.c.h.b16 %v861
    %v952 = vunpack.c.l.b16 %v862
    %v953 = vunpack.c.h.b16 %v862
    %v954 = vunpack.c.l.b16 %v863
    %v955 = vunpack.c.h.b16 %v863
    %v956 = vunpack.c.l.b16 %v864
    %v957 = vunpack.c.h.b16 %v864
    %v958 = vunpack.c.l.b16 %v865
    %v959 = vunpack.c.h.b16 %v865
    %v960 = vunpack.c.l.b16 %v866
    %v961 = vunpack.c.h.b16 %v866
    %v962 = vunpack.c.l.b16 %v867
    %v963 = vunpack.c.h.b16 %v867
    %v964 = vpack.c.b16 %v904, %v900
    %v965 = vpack.c.b16 %v905, %v901
    %v966 = vpack.c.b16 %v906, %v902
    %v967 = vpack.c.b16 %v907, %v903
    %v968 = vpack.c.b16 %v912, %v908
    %v969 = vpack.c.b16 %v913, %v909
    %v970 = vpack.c.b16 %v914, %v910
    %v971 = vpack.c.b16 %v915, %v911
    %v972 = vpack.c.b16 %v920, %v916
    %v973 = vpack.c.b16 %v921, %v917
    %v974 = vpack.c.b16 %v922, %v918
    %v975 = vpack.c.b16 %v923, %v919
    %v976 = vpack.c.b16 %v928, %v924
    %v977 = vpack.c.b16 %v929, %v925
    %v978 = vpack.c.b16 %v930, %v926
    %v979 = vpack.c.b16 %v931, %v927
    %v980 = vpack.c.b16 %v936, %v932
    %v981 = vpack.c.b16 %v937, %v933
    %v982 = vpack.c.b16 %v938, %v934
    %v983 = vpack.c.b16 %v939, %v935
    %v984 = vpack.c.b16 %v944, %v940
    %v985 = vpack.c.b16 %v945, %v941
    %v986 = vpack.c.b16 %v946, %v942
    %v987 = vpack.c.b16 %v947, %v943
    %v988 = vpack.c.b16 %v952, %v948
    %v989 = vpack.c.b16 %v953, %v949
    %v990 = vpack.c.b16 %v954, %v950
    %v991 = vpack.c.b16 %v955, %v951
    %v992 = vpack.c.b16 %v960, %v956
    %v993 = vpack.c.b16 %v961, %v957
    %v994 = vpack.c.b16 %v962, %v958
    %v995 = vpack.c.b16 %v963, %v959
    %1028 = vmatprep.subr.bf16.mxu0 %v965
    %1029 = vmatpush1.bf16.msra.mxu0 %v964
    %1030 = vmatprep.subr.bf16.mxu0 %v969
    %1031 = vmatpush1.bf16.msra.mxu0 %v968
    %1032 = vmatprep.subr.bf16.mxu0 %v973
    %1033 = vmatpush1.bf16.msra.mxu0 %v972
    %1034 = vmatprep.subr.bf16.mxu0 %v977
    %1035 = vmatpush1.bf16.msra.mxu0 %v976
    %1036 = vmatprep.subr.bf16.mxu0 %v981
    %1037 = vmatpush1.bf16.msra.mxu0 %v980
    %1038 = vmatprep.subr.bf16.mxu0 %v985
    %1039 = vmatpush1.bf16.msra.mxu0 %v984
    %1040 = vmatprep.subr.bf16.mxu0 %v989
    %1041 = vmatpush1.bf16.msra.mxu0 %v988
    %1042 = vmatprep.subr.bf16.mxu0 %v993
    %1043 = vmatpush1.bf16.msra.mxu0 %v992
    %1044 = vmatprep.subr.bf16.mxu0 0
    %1045 = vmatpush1.bf16.msra.mxu0 0
    %1046 = vmatprep.subr.bf16.mxu0 0
    %1047 = vmatpush1.bf16.msra.mxu0 0
    %1048 = vmatprep.subr.bf16.mxu0 0
    %1049 = vmatpush1.bf16.msra.mxu0 0
    %1050 = vmatprep.subr.bf16.mxu0 0
    %1051 = vmatpush1.bf16.msra.mxu0 0
    %1052 = vmatprep.subr.bf16.mxu0 0
    %1053 = vmatpush1.bf16.msra.mxu0 0
    %1054 = vmatprep.subr.bf16.mxu0 0
    %1055 = vmatpush1.bf16.msra.mxu0 0
    %1056 = vmatprep.subr.bf16.mxu0 0
    %1057 = vmatpush1.bf16.msra.mxu0 0
    %1058 = vmatprep.subr.bf16.mxu0 0
    %1059 = vmatpush1.bf16.msra.mxu0 0
    %1060 = vmatprep.mubr.bf16.mxu0 0
    %1061 = vmatmul.mubr.bf16.gmra.mrb[0].mxu0 %v829
    %v1062 = vpop.f32.mrb[0].mxu0
    %v1063 = vadd.f32 0.0, %v1062
    %v1064 = vpop.f32.mrb[0].mxu0
    %v1065 = vadd.f32 0.0, %v1064
    %v1066 = vpop.f32.mrb[0].mxu0
    %v1067 = vpop.f32.mrb[0].mxu0
    %1068 = vdwg.mxu0
    %1069 = vmatprep.subr.bf16.mxu0 %v967
    %1070 = vmatpush1.bf16.msra.mxu0 %v966
    %1071 = vmatprep.subr.bf16.mxu0 %v971
    %1072 = vmatpush1.bf16.msra.mxu0 %v970
    %1073 = vmatprep.subr.bf16.mxu0 %v975
    %1074 = vmatpush1.bf16.msra.mxu0 %v974
    %1075 = vmatprep.subr.bf16.mxu0 %v979
    %1076 = vmatpush1.bf16.msra.mxu0 %v978
    %1077 = vmatprep.subr.bf16.mxu0 %v983
    %1078 = vmatpush1.bf16.msra.mxu0 %v982
    %1079 = vmatprep.subr.bf16.mxu0 %v987
    %1080 = vmatpush1.bf16.msra.mxu0 %v986
    %1081 = vmatprep.subr.bf16.mxu0 %v991
    %1082 = vmatpush1.bf16.msra.mxu0 %v990
    %1083 = vmatprep.subr.bf16.mxu0 %v995
    %1084 = vmatpush1.bf16.msra.mxu0 %v994
    %1085 = vmatprep.subr.bf16.mxu0 0
    %1086 = vmatpush1.bf16.msra.mxu0 0
    %1087 = vmatprep.subr.bf16.mxu0 0
    %1088 = vmatpush1.bf16.msra.mxu0 0
    %1089 = vmatprep.subr.bf16.mxu0 0
    %1090 = vmatpush1.bf16.msra.mxu0 0
    %1091 = vmatprep.subr.bf16.mxu0 0
    %1092 = vmatpush1.bf16.msra.mxu0 0
    %1093 = vmatprep.subr.bf16.mxu0 0
    %1094 = vmatpush1.bf16.msra.mxu0 0
    %1095 = vmatprep.subr.bf16.mxu0 0
    %1096 = vmatpush1.bf16.msra.mxu0 0
    %1097 = vmatprep.subr.bf16.mxu0 0
    %1098 = vmatpush1.bf16.msra.mxu0 0
    %1099 = vmatprep.subr.bf16.mxu0 0
    %1100 = vmatpush1.bf16.msra.mxu0 0
    %1101 = vmatprep.mubr.bf16.mxu0 0
    %1102 = vmatmul.mubr.bf16.gmra.mrb[0].mxu0 %v829
    %v1103 = vpop.f32.mrb[0].mxu0
    %v1104 = vadd.f32 0.0, %v1103
    %v1105 = vpop.f32.mrb[0].mxu0
    %v1106 = vadd.f32 0.0, %v1105
    %v1107 = vpop.f32.mrb[0].mxu0
    %v1108 = vpop.f32.mrb[0].mxu0
    %1109 = vdwg.mxu0
    %v1110 = vadd.f32 %v832, %v1063
    %v1111 = vadd.f32 %v833, %v1065
    %v1112 = vadd.f32 %v834, %v1104
    %v1113 = vadd.f32 %v835, %v1106
    %v1114 = vxor.u32 %v1110, 2147483648
    %v1115 = vxor.u32 %v1111, 2147483648
    %v1116 = vxor.u32 %v1112, 2147483648
    %v1117 = vxor.u32 %v1113, 2147483648
    %v1118 = vmul.f32 %v1114, 1.442695
    %v1119 = vpow.pop %v1118
    %v1120 = vmul.f32 %v1115, 1.442695
    %v1121 = vpow.pop %v1120
    %v1122 = vmul.f32 %v1116, 1.442695
    %v1123 = vpow.pop %v1122
    %v1124 = vmul.f32 %v1117, 1.442695
    %v1125 = vpow.pop %v1124
    %v1126 = vadd.f32 %v1119, 1.0
    %v1127 = vadd.f32 %v1121, 1.0
    %v1128 = vadd.f32 %v1123, 1.0
    %v1129 = vadd.f32 %v1125, 1.0
    %v1130 = vrcp.pop %v1126
    %v1131 = vmul.f32 1.0, %v1130
    %v1132 = vrcp.pop %v1127
    %v1133 = vmul.f32 1.0, %v1132
    %v1134 = vrcp.pop %v1128
    %v1135 = vmul.f32 1.0, %v1134
    %v1136 = vrcp.pop %v1129
    %v1137 = vmul.f32 1.0, %v1136
    %v1138 = vmul.f32 %v1135, 2.0
    %v1139 = vsub.f32 %v1138, 1.0
    %v1140 = vmul.f32 %v1133, %v826
    %v1141 = vmul.f32 %v1131, %v1139
    %v1142 = vadd.f32 %v1140, %v1141
    %v1143 = vtanh.pop %v1142
    %v1144 = vmul.f32 %v1137, %v1143
    %v1145 = vpack.c.bf16 %v1144, %v1144
    %s1146 = scalar_lea.vmem [#allocation3], 4
    %1147 = vst [vmem:[%s1146] sm:$0xf] %v1145
    %s1148 = scalar_lea.vmem [#allocation2], 64
    %v1149 = vld [vmem:[%s1148] sm:$0xff]
    %v1150 = vld [vmem:[%s1148 + $0x8] sm:$0xff]
    %v1151 = vld [vmem:[%s1148 + $0x10] sm:$0xff]
    %v1152 = vld [vmem:[%s1148 + $0x18] sm:$0xff]
    %v1153 = vld [vmem:[#allocation10] sm:$0xff]
    %v1154 = vld [vmem:[#allocation10 + $0x8] sm:$0xff]
    %v1155 = vld [vmem:[#allocation10 + $0x10] sm:$0xff]
    %v1156 = vld [vmem:[#allocation10 + $0x18] sm:$0xff]
    %v1157 = vld [vmem:[#allocation10 + $0x20] sm:$0xff]
    %v1158 = vld [vmem:[#allocation10 + $0x28] sm:$0xff]
    %v1159 = vld [vmem:[#allocation10 + $0x30] sm:$0xff]
    %v1160 = vld [vmem:[#allocation10 + $0x38] sm:$0xff]
    %v1161 = vld [vmem:[#allocation10 + $0x40] sm:$0xff]
    %v1162 = vld [vmem:[#allocation10 + $0x48] sm:$0xff]
    %v1163 = vld [vmem:[#allocation10 + $0x50] sm:$0xff]
    %v1164 = vld [vmem:[#allocation10 + $0x58] sm:$0xff]
    %v1165 = vld [vmem:[#allocation10 + $0x60] sm:$0xff]
    %v1166 = vld [vmem:[#allocation10 + $0x68] sm:$0xff]
    %v1167 = vld [vmem:[#allocation10 + $0x70] sm:$0xff]
    %v1168 = vld [vmem:[#allocation10 + $0x78] sm:$0xff]
    %v1169 = vld [vmem:[#allocation10 + $0x80] sm:$0xff]
    %v1170 = vld [vmem:[#allocation10 + $0x88] sm:$0xff]
    %v1171 = vld [vmem:[#allocation10 + $0x90] sm:$0xff]
    %v1172 = vld [vmem:[#allocation10 + $0x98] sm:$0xff]
    %v1173 = vld [vmem:[#allocation10 + $0xa0] sm:$0xff]
    %v1174 = vld [vmem:[#allocation10 + $0xa8] sm:$0xff]
    %v1175 = vld [vmem:[#allocation10 + $0xb0] sm:$0xff]
    %v1176 = vld [vmem:[#allocation10 + $0xb8] sm:$0xff]
    %v1177 = vld [vmem:[#allocation10 + $0xc0] sm:$0xff]
    %v1178 = vld [vmem:[#allocation10 + $0xc8] sm:$0xff]
    %v1179 = vld [vmem:[#allocation10 + $0xd0] sm:$0xff]
    %v1180 = vld [vmem:[#allocation10 + $0xd8] sm:$0xff]
    %v1181 = vld [vmem:[#allocation10 + $0xe0] sm:$0xff]
    %v1182 = vld [vmem:[#allocation10 + $0xe8] sm:$0xff]
    %v1183 = vld [vmem:[#allocation10 + $0xf0] sm:$0xff]
    %v1184 = vld [vmem:[#allocation10 + $0xf8] sm:$0xff]
    %v1217 = vunpack.c.l.b16 %v1153
    %v1218 = vunpack.c.h.b16 %v1153
    %v1219 = vunpack.c.l.b16 %v1154
    %v1220 = vunpack.c.h.b16 %v1154
    %v1221 = vunpack.c.l.b16 %v1155
    %v1222 = vunpack.c.h.b16 %v1155
    %v1223 = vunpack.c.l.b16 %v1156
    %v1224 = vunpack.c.h.b16 %v1156
    %v1225 = vunpack.c.l.b16 %v1157
    %v1226 = vunpack.c.h.b16 %v1157
    %v1227 = vunpack.c.l.b16 %v1158
    %v1228 = vunpack.c.h.b16 %v1158
    %v1229 = vunpack.c.l.b16 %v1159
    %v1230 = vunpack.c.h.b16 %v1159
    %v1231 = vunpack.c.l.b16 %v1160
    %v1232 = vunpack.c.h.b16 %v1160
    %v1233 = vunpack.c.l.b16 %v1161
    %v1234 = vunpack.c.h.b16 %v1161
    %v1235 = vunpack.c.l.b16 %v1162
    %v1236 = vunpack.c.h.b16 %v1162
    %v1237 = vunpack.c.l.b16 %v1163
    %v1238 = vunpack.c.h.b16 %v1163
    %v1239 = vunpack.c.l.b16 %v1164
    %v1240 = vunpack.c.h.b16 %v1164
    %v1241 = vunpack.c.l.b16 %v1165
    %v1242 = vunpack.c.h.b16 %v1165
    %v1243 = vunpack.c.l.b16 %v1166
    %v1244 = vunpack.c.h.b16 %v1166
    %v1245 = vunpack.c.l.b16 %v1167
    %v1246 = vunpack.c.h.b16 %v1167
    %v1247 = vunpack.c.l.b16 %v1168
    %v1248 = vunpack.c.h.b16 %v1168
    %v1249 = vunpack.c.l.b16 %v1169
    %v1250 = vunpack.c.h.b16 %v1169
    %v1251 = vunpack.c.l.b16 %v1170
    %v1252 = vunpack.c.h.b16 %v1170
    %v1253 = vunpack.c.l.b16 %v1171
    %v1254 = vunpack.c.h.b16 %v1171
    %v1255 = vunpack.c.l.b16 %v1172
    %v1256 = vunpack.c.h.b16 %v1172
    %v1257 = vunpack.c.l.b16 %v1173
    %v1258 = vunpack.c.h.b16 %v1173
    %v1259 = vunpack.c.l.b16 %v1174
    %v1260 = vunpack.c.h.b16 %v1174
    %v1261 = vunpack.c.l.b16 %v1175
    %v1262 = vunpack.c.h.b16 %v1175
    %v1263 = vunpack.c.l.b16 %v1176
    %v1264 = vunpack.c.h.b16 %v1176
    %v1265 = vunpack.c.l.b16 %v1177
    %v1266 = vunpack.c.h.b16 %v1177
    %v1267 = vunpack.c.l.b16 %v1178
    %v1268 = vunpack.c.h.b16 %v1178
    %v1269 = vunpack.c.l.b16 %v1179
    %v1270 = vunpack.c.h.b16 %v1179
    %v1271 = vunpack.c.l.b16 %v1180
    %v1272 = vunpack.c.h.b16 %v1180
    %v1273 = vunpack.c.l.b16 %v1181
    %v1274 = vunpack.c.h.b16 %v1181
    %v1275 = vunpack.c.l.b16 %v1182
    %v1276 = vunpack.c.h.b16 %v1182
    %v1277 = vunpack.c.l.b16 %v1183
    %v1278 = vunpack.c.h.b16 %v1183
    %v1279 = vunpack.c.l.b16 %v1184
    %v1280 = vunpack.c.h.b16 %v1184
    %v1281 = vpack.c.b16 %v1221, %v1217
    %v1282 = vpack.c.b16 %v1222, %v1218
    %v1283 = vpack.c.b16 %v1223, %v1219
    %v1284 = vpack.c.b16 %v1224, %v1220
    %v1285 = vpack.c.b16 %v1229, %v1225
    %v1286 = vpack.c.b16 %v1230, %v1226
    %v1287 = vpack.c.b16 %v1231, %v1227
    %v1288 = vpack.c.b16 %v1232, %v1228
    %v1289 = vpack.c.b16 %v1237, %v1233
    %v1290 = vpack.c.b16 %v1238, %v1234
    %v1291 = vpack.c.b16 %v1239, %v1235
    %v1292 = vpack.c.b16 %v1240, %v1236
    %v1293 = vpack.c.b16 %v1245, %v1241
    %v1294 = vpack.c.b16 %v1246, %v1242
    %v1295 = vpack.c.b16 %v1247, %v1243
    %v1296 = vpack.c.b16 %v1248, %v1244
    %v1297 = vpack.c.b16 %v1253, %v1249
    %v1298 = vpack.c.b16 %v1254, %v1250
    %v1299 = vpack.c.b16 %v1255, %v1251
    %v1300 = vpack.c.b16 %v1256, %v1252
    %v1301 = vpack.c.b16 %v1261, %v1257
    %v1302 = vpack.c.b16 %v1262, %v1258
    %v1303 = vpack.c.b16 %v1263, %v1259
    %v1304 = vpack.c.b16 %v1264, %v1260
    %v1305 = vpack.c.b16 %v1269, %v1265
    %v1306 = vpack.c.b16 %v1270, %v1266
    %v1307 = vpack.c.b16 %v1271, %v1267
    %v1308 = vpack.c.b16 %v1272, %v1268
    %v1309 = vpack.c.b16 %v1277, %v1273
    %v1310 = vpack.c.b16 %v1278, %v1274
    %v1311 = vpack.c.b16 %v1279, %v1275
    %v1312 = vpack.c.b16 %v1280, %v1276
    %1345 = vmatprep.subr.bf16.mxu0 %v1282
    %1346 = vmatpush1.bf16.msra.mxu0 %v1281
    %1347 = vmatprep.subr.bf16.mxu0 %v1286
    %1348 = vmatpush1.bf16.msra.mxu0 %v1285
    %1349 = vmatprep.subr.bf16.mxu0 %v1290
    %1350 = vmatpush1.bf16.msra.mxu0 %v1289
    %1351 = vmatprep.subr.bf16.mxu0 %v1294
    %1352 = vmatpush1.bf16.msra.mxu0 %v1293
    %1353 = vmatprep.subr.bf16.mxu0 %v1298
    %1354 = vmatpush1.bf16.msra.mxu0 %v1297
    %1355 = vmatprep.subr.bf16.mxu0 %v1302
    %1356 = vmatpush1.bf16.msra.mxu0 %v1301
    %1357 = vmatprep.subr.bf16.mxu0 %v1306
    %1358 = vmatpush1.bf16.msra.mxu0 %v1305
    %1359 = vmatprep.subr.bf16.mxu0 %v1310
    %1360 = vmatpush1.bf16.msra.mxu0 %v1309
    %1361 = vmatprep.subr.bf16.mxu0 0
    %1362 = vmatpush1.bf16.msra.mxu0 0
    %1363 = vmatprep.subr.bf16.mxu0 0
    %1364 = vmatpush1.bf16.msra.mxu0 0
    %1365 = vmatprep.subr.bf16.mxu0 0
    %1366 = vmatpush1.bf16.msra.mxu0 0
    %1367 = vmatprep.subr.bf16.mxu0 0
    %1368 = vmatpush1.bf16.msra.mxu0 0
    %1369 = vmatprep.subr.bf16.mxu0 0
    %1370 = vmatpush1.bf16.msra.mxu0 0
    %1371 = vmatprep.subr.bf16.mxu0 0
    %1372 = vmatpush1.bf16.msra.mxu0 0
    %1373 = vmatprep.subr.bf16.mxu0 0
    %1374 = vmatpush1.bf16.msra.mxu0 0
    %1375 = vmatprep.subr.bf16.mxu0 0
    %1376 = vmatpush1.bf16.msra.mxu0 0
    %1377 = vmatprep.mubr.bf16.mxu0 0
    %1378 = vmatmul.mubr.bf16.gmra.mrb[0].mxu0 %v1145
    %v1379 = vpop.f32.mrb[0].mxu0
    %v1380 = vadd.f32 0.0, %v1379
    %v1381 = vpop.f32.mrb[0].mxu0
    %v1382 = vadd.f32 0.0, %v1381
    %v1383 = vpop.f32.mrb[0].mxu0
    %v1384 = vpop.f32.mrb[0].mxu0
    %1385 = vdwg.mxu0
    %1386 = vmatprep.subr.bf16.mxu0 %v1284
    %1387 = vmatpush1.bf16.msra.mxu0 %v1283
    %1388 = vmatprep.subr.bf16.mxu0 %v1288
    %1389 = vmatpush1.bf16.msra.mxu0 %v1287
    %1390 = vmatprep.subr.bf16.mxu0 %v1292
    %1391 = vmatpush1.bf16.msra.mxu0 %v1291
    %1392 = vmatprep.subr.bf16.mxu0 %v1296
    %1393 = vmatpush1.bf16.msra.mxu0 %v1295
    %1394 = vmatprep.subr.bf16.mxu0 %v1300
    %1395 = vmatpush1.bf16.msra.mxu0 %v1299
    %1396 = vmatprep.subr.bf16.mxu0 %v1304
    %1397 = vmatpush1.bf16.msra.mxu0 %v1303
    %1398 = vmatprep.subr.bf16.mxu0 %v1308
    %1399 = vmatpush1.bf16.msra.mxu0 %v1307
    %1400 = vmatprep.subr.bf16.mxu0 %v1312
    %1401 = vmatpush1.bf16.msra.mxu0 %v1311
    %1402 = vmatprep.subr.bf16.mxu0 0
    %1403 = vmatpush1.bf16.msra.mxu0 0
    %1404 = vmatprep.subr.bf16.mxu0 0
    %1405 = vmatpush1.bf16.msra.mxu0 0
    %1406 = vmatprep.subr.bf16.mxu0 0
    %1407 = vmatpush1.bf16.msra.mxu0 0
    %1408 = vmatprep.subr.bf16.mxu0 0
    %1409 = vmatpush1.bf16.msra.mxu0 0
    %1410 = vmatprep.subr.bf16.mxu0 0
    %1411 = vmatpush1.bf16.msra.mxu0 0
    %1412 = vmatprep.subr.bf16.mxu0 0
    %1413 = vmatpush1.bf16.msra.mxu0 0
    %1414 = vmatprep.subr.bf16.mxu0 0
    %1415 = vmatpush1.bf16.msra.mxu0 0
    %1416 = vmatprep.subr.bf16.mxu0 0
    %1417 = vmatpush1.bf16.msra.mxu0 0
    %1418 = vmatprep.mubr.bf16.mxu0 0
    %1419 = vmatmul.mubr.bf16.gmra.mrb[0].mxu0 %v1145
    %v1420 = vpop.f32.mrb[0].mxu0
    %v1421 = vadd.f32 0.0, %v1420
    %v1422 = vpop.f32.mrb[0].mxu0
    %v1423 = vadd.f32 0.0, %v1422
    %v1424 = vpop.f32.mrb[0].mxu0
    %v1425 = vpop.f32.mrb[0].mxu0
    %1426 = vdwg.mxu0
    %v1427 = vadd.f32 %v1149, %v1380
    %v1428 = vadd.f32 %v1150, %v1382
    %v1429 = vadd.f32 %v1151, %v1421
    %v1430 = vadd.f32 %v1152, %v1423
    %v1431 = vxor.u32 %v1427, 2147483648
    %v1432 = vxor.u32 %v1428, 2147483648
    %v1433 = vxor.u32 %v1429, 2147483648
    %v1434 = vxor.u32 %v1430, 2147483648
    %v1435 = vmul.f32 %v1431, 1.442695
    %v1436 = vpow.pop %v1435
    %v1437 = vmul.f32 %v1432, 1.442695
    %v1438 = vpow.pop %v1437
    %v1439 = vmul.f32 %v1433, 1.442695
    %v1440 = vpow.pop %v1439
    %v1441 = vmul.f32 %v1434, 1.442695
    %v1442 = vpow.pop %v1441
    %v1443 = vadd.f32 %v1436, 1.0
    %v1444 = vadd.f32 %v1438, 1.0
    %v1445 = vadd.f32 %v1440, 1.0
    %v1446 = vadd.f32 %v1442, 1.0
    %v1447 = vrcp.pop %v1443
    %v1448 = vmul.f32 1.0, %v1447
    %v1449 = vrcp.pop %v1444
    %v1450 = vmul.f32 1.0, %v1449
    %v1451 = vrcp.pop %v1445
    %v1452 = vmul.f32 1.0, %v1451
    %v1453 = vrcp.pop %v1446
    %v1454 = vmul.f32 1.0, %v1453
    %v1455 = vmul.f32 %v1452, 2.0
    %v1456 = vsub.f32 %v1455, 1.0
    %v1457 = vmul.f32 %v1450, %v1142
    %v1458 = vmul.f32 %v1448, %v1456
    %v1459 = vadd.f32 %v1457, %v1458
    %v1460 = vtanh.pop %v1459
    %v1461 = vmul.f32 %v1454, %v1460
    %v1462 = vpack.c.bf16 %v1461, %v1461
    %s1463 = scalar_lea.vmem [#allocation3], 8
    %1464 = vst [vmem:[%s1463] sm:$0xf] %v1462
    %s1465 = scalar_lea.vmem [#allocation2], 96
    %v1466 = vld [vmem:[%s1465] sm:$0xff]
    %v1467 = vld [vmem:[%s1465 + $0x8] sm:$0xff]
    %v1468 = vld [vmem:[%s1465 + $0x10] sm:$0xff]
    %v1469 = vld [vmem:[%s1465 + $0x18] sm:$0xff]
    %v1470 = vld [vmem:[#allocation10] sm:$0xff]
    %v1471 = vld [vmem:[#allocation10 + $0x8] sm:$0xff]
    %v1472 = vld [vmem:[#allocation10 + $0x10] sm:$0xff]
    %v1473 = vld [vmem:[#allocation10 + $0x18] sm:$0xff]
    %v1474 = vld [vmem:[#allocation10 + $0x20] sm:$0xff]
    %v1475 = vld [vmem:[#allocation10 + $0x28] sm:$0xff]
    %v1476 = vld [vmem:[#allocation10 + $0x30] sm:$0xff]
    %v1477 = vld [vmem:[#allocation10 + $0x38] sm:$0xff]
    %v1478 = vld [vmem:[#allocation10 + $0x40] sm:$0xff]
    %v1479 = vld [vmem:[#allocation10 + $0x48] sm:$0xff]
    %v1480 = vld [vmem:[#allocation10 + $0x50] sm:$0xff]
    %v1481 = vld [vmem:[#allocation10 + $0x58] sm:$0xff]
    %v1482 = vld [vmem:[#allocation10 + $0x60] sm:$0xff]
    %v1483 = vld [vmem:[#allocation10 + $0x68] sm:$0xff]
    %v1484 = vld [vmem:[#allocation10 + $0x70] sm:$0xff]
    %v1485 = vld [vmem:[#allocation10 + $0x78] sm:$0xff]
    %v1486 = vld [vmem:[#allocation10 + $0x80] sm:$0xff]
    %v1487 = vld [vmem:[#allocation10 + $0x88] sm:$0xff]
    %v1488 = vld [vmem:[#allocation10 + $0x90] sm:$0xff]
    %v1489 = vld [vmem:[#allocation10 + $0x98] sm:$0xff]
    %v1490 = vld [vmem:[#allocation10 + $0xa0] sm:$0xff]
    %v1491 = vld [vmem:[#allocation10 + $0xa8] sm:$0xff]
    %v1492 = vld [vmem:[#allocation10 + $0xb0] sm:$0xff]
    %v1493 = vld [vmem:[#allocation10 + $0xb8] sm:$0xff]
    %v1494 = vld [vmem:[#allocation10 + $0xc0] sm:$0xff]
    %v1495 = vld [vmem:[#allocation10 + $0xc8] sm:$0xff]
    %v1496 = vld [vmem:[#allocation10 + $0xd0] sm:$0xff]
    %v1497 = vld [vmem:[#allocation10 + $0xd8] sm:$0xff]
    %v1498 = vld [vmem:[#allocation10 + $0xe0] sm:$0xff]
    %v1499 = vld [vmem:[#allocation10 + $0xe8] sm:$0xff]
    %v1500 = vld [vmem:[#allocation10 + $0xf0] sm:$0xff]
    %v1501 = vld [vmem:[#allocation10 + $0xf8] sm:$0xff]
    %v1534 = vunpack.c.l.b16 %v1470
    %v1535 = vunpack.c.h.b16 %v1470
    %v1536 = vunpack.c.l.b16 %v1471
    %v1537 = vunpack.c.h.b16 %v1471
    %v1538 = vunpack.c.l.b16 %v1472
    %v1539 = vunpack.c.h.b16 %v1472
    %v1540 = vunpack.c.l.b16 %v1473
    %v1541 = vunpack.c.h.b16 %v1473
    %v1542 = vunpack.c.l.b16 %v1474
    %v1543 = vunpack.c.h.b16 %v1474
    %v1544 = vunpack.c.l.b16 %v1475
    %v1545 = vunpack.c.h.b16 %v1475
    %v1546 = vunpack.c.l.b16 %v1476
    %v1547 = vunpack.c.h.b16 %v1476
    %v1548 = vunpack.c.l.b16 %v1477
    %v1549 = vunpack.c.h.b16 %v1477
    %v1550 = vunpack.c.l.b16 %v1478
    %v1551 = vunpack.c.h.b16 %v1478
    %v1552 = vunpack.c.l.b16 %v1479
    %v1553 = vunpack.c.h.b16 %v1479
    %v1554 = vunpack.c.l.b16 %v1480
    %v1555 = vunpack.c.h.b16 %v1480
    %v1556 = vunpack.c.l.b16 %v1481
    %v1557 = vunpack.c.h.b16 %v1481
    %v1558 = vunpack.c.l.b16 %v1482
    %v1559 = vunpack.c.h.b16 %v1482
    %v1560 = vunpack.c.l.b16 %v1483
    %v1561 = vunpack.c.h.b16 %v1483
    %v1562 = vunpack.c.l.b16 %v1484
    %v1563 = vunpack.c.h.b16 %v1484
    %v1564 = vunpack.c.l.b16 %v1485
    %v1565 = vunpack.c.h.b16 %v1485
    %v1566 = vunpack.c.l.b16 %v1486
    %v1567 = vunpack.c.h.b16 %v1486
    %v1568 = vunpack.c.l.b16 %v1487
    %v1569 = vunpack.c.h.b16 %v1487
    %v1570 = vunpack.c.l.b16 %v1488
    %v1571 = vunpack.c.h.b16 %v1488
    %v1572 = vunpack.c.l.b16 %v1489
    %v1573 = vunpack.c.h.b16 %v1489
    %v1574 = vunpack.c.l.b16 %v1490
    %v1575 = vunpack.c.h.b16 %v1490
    %v1576 = vunpack.c.l.b16 %v1491
    %v1577 = vunpack.c.h.b16 %v1491
    %v1578 = vunpack.c.l.b16 %v1492
    %v1579 = vunpack.c.h.b16 %v1492
    %v1580 = vunpack.c.l.b16 %v1493
    %v1581 = vunpack.c.h.b16 %v1493
    %v1582 = vunpack.c.l.b16 %v1494
    %v1583 = vunpack.c.h.b16 %v1494
    %v1584 = vunpack.c.l.b16 %v1495
    %v1585 = vunpack.c.h.b16 %v1495
    %v1586 = vunpack.c.l.b16 %v1496
    %v1587 = vunpack.c.h.b16 %v1496
    %v1588 = vunpack.c.l.b16 %v1497
    %v1589 = vunpack.c.h.b16 %v1497
    %v1590 = vunpack.c.l.b16 %v1498
    %v1591 = vunpack.c.h.b16 %v1498
    %v1592 = vunpack.c.l.b16 %v1499
    %v1593 = vunpack.c.h.b16 %v1499
    %v1594 = vunpack.c.l.b16 %v1500
    %v1595 = vunpack.c.h.b16 %v1500
    %v1596 = vunpack.c.l.b16 %v1501
    %v1597 = vunpack.c.h.b16 %v1501
    %v1598 = vpack.c.b16 %v1538, %v1534
    %v1599 = vpack.c.b16 %v1539, %v1535
    %v1600 = vpack.c.b16 %v1540, %v1536
    %v1601 = vpack.c.b16 %v1541, %v1537
    %v1602 = vpack.c.b16 %v1546, %v1542
    %v1603 = vpack.c.b16 %v1547, %v1543
    %v1604 = vpack.c.b16 %v1548, %v1544
    %v1605 = vpack.c.b16 %v1549, %v1545
    %v1606 = vpack.c.b16 %v1554, %v1550
    %v1607 = vpack.c.b16 %v1555, %v1551
    %v1608 = vpack.c.b16 %v1556, %v1552
    %v1609 = vpack.c.b16 %v1557, %v1553
    %v1610 = vpack.c.b16 %v1562, %v1558
    %v1611 = vpack.c.b16 %v1563, %v1559
    %v1612 = vpack.c.b16 %v1564, %v1560
    %v1613 = vpack.c.b16 %v1565, %v1561
    %v1614 = vpack.c.b16 %v1570, %v1566
    %v1615 = vpack.c.b16 %v1571, %v1567
    %v1616 = vpack.c.b16 %v1572, %v1568
    %v1617 = vpack.c.b16 %v1573, %v1569
    %v1618 = vpack.c.b16 %v1578, %v1574
    %v1619 = vpack.c.b16 %v1579, %v1575
    %v1620 = vpack.c.b16 %v1580, %v1576
    %v1621 = vpack.c.b16 %v1581, %v1577
    %v1622 = vpack.c.b16 %v1586, %v1582
    %v1623 = vpack.c.b16 %v1587, %v1583
    %v1624 = vpack.c.b16 %v1588, %v1584
    %v1625 = vpack.c.b16 %v1589, %v1585
    %v1626 = vpack.c.b16 %v1594, %v1590
    %v1627 = vpack.c.b16 %v1595, %v1591
    %v1628 = vpack.c.b16 %v1596, %v1592
    %v1629 = vpack.c.b16 %v1597, %v1593
    %1662 = vmatprep.subr.bf16.mxu0 %v1599
    %1663 = vmatpush1.bf16.msra.mxu0 %v1598
    %1664 = vmatprep.subr.bf16.mxu0 %v1603
    %1665 = vmatpush1.bf16.msra.mxu0 %v1602
    %1666 = vmatprep.subr.bf16.mxu0 %v1607
    %1667 = vmatpush1.bf16.msra.mxu0 %v1606
    %1668 = vmatprep.subr.bf16.mxu0 %v1611
    %1669 = vmatpush1.bf16.msra.mxu0 %v1610
    %1670 = vmatprep.subr.bf16.mxu0 %v1615
    %1671 = vmatpush1.bf16.msra.mxu0 %v1614
    %1672 = vmatprep.subr.bf16.mxu0 %v1619
    %1673 = vmatpush1.bf16.msra.mxu0 %v1618
    %1674 = vmatprep.subr.bf16.mxu0 %v1623
    %1675 = vmatpush1.bf16.msra.mxu0 %v1622
    %1676 = vmatprep.subr.bf16.mxu0 %v1627
    %1677 = vmatpush1.bf16.msra.mxu0 %v1626
    %1678 = vmatprep.subr.bf16.mxu0 0
    %1679 = vmatpush1.bf16.msra.mxu0 0
    %1680 = vmatprep.subr.bf16.mxu0 0
    %1681 = vmatpush1.bf16.msra.mxu0 0
    %1682 = vmatprep.subr.bf16.mxu0 0
    %1683 = vmatpush1.bf16.msra.mxu0 0
    %1684 = vmatprep.subr.bf16.mxu0 0
    %1685 = vmatpush1.bf16.msra.mxu0 0
    %1686 = vmatprep.subr.bf16.mxu0 0
    %1687 = vmatpush1.bf16.msra.mxu0 0
    %1688 = vmatprep.subr.bf16.mxu0 0
    %1689 = vmatpush1.bf16.msra.mxu0 0
    %1690 = vmatprep.subr.bf16.mxu0 0
    %1691 = vmatpush1.bf16.msra.mxu0 0
    %1692 = vmatprep.subr.bf16.mxu0 0
    %1693 = vmatpush1.bf16.msra.mxu0 0
    %1694 = vmatprep.mubr.bf16.mxu0 0
    %1695 = vmatmul.mubr.bf16.gmra.mrb[0].mxu0 %v1462
    %v1696 = vpop.f32.mrb[0].mxu0
    %v1697 = vadd.f32 0.0, %v1696
    %v1698 = vpop.f32.mrb[0].mxu0
    %v1699 = vadd.f32 0.0, %v1698
    %v1700 = vpop.f32.mrb[0].mxu0
    %v1701 = vpop.f32.mrb[0].mxu0
    %1702 = vdwg.mxu0
    %1703 = vmatprep.subr.bf16.mxu0 %v1601
    %1704 = vmatpush1.bf16.msra.mxu0 %v1600
    %1705 = vmatprep.subr.bf16.mxu0 %v1605
    %1706 = vmatpush1.bf16.msra.mxu0 %v1604
    %1707 = vmatprep.subr.bf16.mxu0 %v1609
    %1708 = vmatpush1.bf16.msra.mxu0 %v1608
    %1709 = vmatprep.subr.bf16.mxu0 %v1613
    %1710 = vmatpush1.bf16.msra.mxu0 %v1612
    %1711 = vmatprep.subr.bf16.mxu0 %v1617
    %1712 = vmatpush1.bf16.msra.mxu0 %v1616
    %1713 = vmatprep.subr.bf16.mxu0 %v1621
    %1714 = vmatpush1.bf16.msra.mxu0 %v1620
    %1715 = vmatprep.subr.bf16.mxu0 %v1625
    %1716 = vmatpush1.bf16.msra.mxu0 %v1624
    %1717 = vmatprep.subr.bf16.mxu0 %v1629
    %1718 = vmatpush1.bf16.msra.mxu0 %v1628
    %1719 = vmatprep.subr.bf16.mxu0 0
    %1720 = vmatpush1.bf16.msra.mxu0 0
    %1721 = vmatprep.subr.bf16.mxu0 0
    %1722 = vmatpush1.bf16.msra.mxu0 0
    %1723 = vmatprep.subr.bf16.mxu0 0
    %1724 = vmatpush1.bf16.msra.mxu0 0
    %1725 = vmatprep.subr.bf16.mxu0 0
    %1726 = vmatpush1.bf16.msra.mxu0 0
    %1727 = vmatprep.subr.bf16.mxu0 0
    %1728 = vmatpush1.bf16.msra.mxu0 0
    %1729 = vmatprep.subr.bf16.mxu0 0
    %1730 = vmatpush1.bf16.msra.mxu0 0
    %1731 = vmatprep.subr.bf16.mxu0 0
    %1732 = vmatpush1.bf16.msra.mxu0 0
    %1733 = vmatprep.subr.bf16.mxu0 0
    %1734 = vmatpush1.bf16.msra.mxu0 0
    %1735 = vmatprep.mubr.bf16.mxu0 0
    %1736 = vmatmul.mubr.bf16.gmra.mrb[0].mxu0 %v1462
    %v1737 = vpop.f32.mrb[0].mxu0
    %v1738 = vadd.f32 0.0, %v1737
    %v1739 = vpop.f32.mrb[0].mxu0
    %v1740 = vadd.f32 0.0, %v1739
    %v1741 = vpop.f32.mrb[0].mxu0
    %v1742 = vpop.f32.mrb[0].mxu0
    %1743 = vdwg.mxu0
    %v1744 = vadd.f32 %v1466, %v1697
    %v1745 = vadd.f32 %v1467, %v1699
    %v1746 = vadd.f32 %v1468, %v1738
    %v1747 = vadd.f32 %v1469, %v1740
    %v1748 = vxor.u32 %v1744, 2147483648
    %v1749 = vxor.u32 %v1745, 2147483648
    %v1750 = vxor.u32 %v1746, 2147483648
    %v1751 = vxor.u32 %v1747, 2147483648
    %v1752 = vmul.f32 %v1748, 1.442695
    %v1753 = vpow.pop %v1752
    %v1754 = vmul.f32 %v1749, 1.442695
    %v1755 = vpow.pop %v1754
    %v1756 = vmul.f32 %v1750, 1.442695
    %v1757 = vpow.pop %v1756
    %v1758 = vmul.f32 %v1751, 1.442695
    %v1759 = vpow.pop %v1758
    %v1760 = vadd.f32 %v1753, 1.0
    %v1761 = vadd.f32 %v1755, 1.0
    %v1762 = vadd.f32 %v1757, 1.0
    %v1763 = vadd.f32 %v1759, 1.0
    %v1764 = vrcp.pop %v1760
    %v1765 = vmul.f32 1.0, %v1764
    %v1766 = vrcp.pop %v1761
    %v1767 = vmul.f32 1.0, %v1766
    %v1768 = vrcp.pop %v1762
    %v1769 = vmul.f32 1.0, %v1768
    %v1770 = vrcp.pop %v1763
    %v1771 = vmul.f32 1.0, %v1770
    %v1772 = vmul.f32 %v1769, 2.0
    %v1773 = vsub.f32 %v1772, 1.0
    %v1774 = vmul.f32 %v1767, %v1459
    %v1775 = vmul.f32 %v1765, %v1773
    %v1776 = vadd.f32 %v1774, %v1775
    %v1777 = vtanh.pop %v1776
    %v1778 = vmul.f32 %v1771, %v1777
    %v1779 = vpack.c.bf16 %v1778, %v1778
    %s1780 = scalar_lea.vmem [#allocation3], 12
    %1781 = vst [vmem:[%s1780] sm:$0xf] %v1779
    %s1782 = scalar_lea.vmem [#allocation2], 128
    %v1783 = vld [vmem:[%s1782] sm:$0xff]
    %v1784 = vld [vmem:[%s1782 + $0x8] sm:$0xff]
    %v1785 = vld [vmem:[%s1782 + $0x10] sm:$0xff]
    %v1786 = vld [vmem:[%s1782 + $0x18] sm:$0xff]
    %v1787 = vld [vmem:[#allocation10] sm:$0xff]
    %v1788 = vld [vmem:[#allocation10 + $0x8] sm:$0xff]
    %v1789 = vld [vmem:[#allocation10 + $0x10] sm:$0xff]
    %v1790 = vld [vmem:[#allocation10 + $0x18] sm:$0xff]
    %v1791 = vld [vmem:[#allocation10 + $0x20] sm:$0xff]
    %v1792 = vld [vmem:[#allocation10 + $0x28] sm:$0xff]
    %v1793 = vld [vmem:[#allocation10 + $0x30] sm:$0xff]
    %v1794 = vld [vmem:[#allocation10 + $0x38] sm:$0xff]
    %v1795 = vld [vmem:[#allocation10 + $0x40] sm:$0xff]
    %v1796 = vld [vmem:[#allocation10 + $0x48] sm:$0xff]
    %v1797 = vld [vmem:[#allocation10 + $0x50] sm:$0xff]
    %v1798 = vld [vmem:[#allocation10 + $0x58] sm:$0xff]
    %v1799 = vld [vmem:[#allocation10 + $0x60] sm:$0xff]
    %v1800 = vld [vmem:[#allocation10 + $0x68] sm:$0xff]
    %v1801 = vld [vmem:[#allocation10 + $0x70] sm:$0xff]
    %v1802 = vld [vmem:[#allocation10 + $0x78] sm:$0xff]
    %v1803 = vld [vmem:[#allocation10 + $0x80] sm:$0xff]
    %v1804 = vld [vmem:[#allocation10 + $0x88] sm:$0xff]
    %v1805 = vld [vmem:[#allocation10 + $0x90] sm:$0xff]
    %v1806 = vld [vmem:[#allocation10 + $0x98] sm:$0xff]
    %v1807 = vld [vmem:[#allocation10 + $0xa0] sm:$0xff]
    %v1808 = vld [vmem:[#allocation10 + $0xa8] sm:$0xff]
    %v1809 = vld [vmem:[#allocation10 + $0xb0] sm:$0xff]
    %v1810 = vld [vmem:[#allocation10 + $0xb8] sm:$0xff]
    %v1811 = vld [vmem:[#allocation10 + $0xc0] sm:$0xff]
    %v1812 = vld [vmem:[#allocation10 + $0xc8] sm:$0xff]
    %v1813 = vld [vmem:[#allocation10 + $0xd0] sm:$0xff]
    %v1814 = vld [vmem:[#allocation10 + $0xd8] sm:$0xff]
    %v1815 = vld [vmem:[#allocation10 + $0xe0] sm:$0xff]
    %v1816 = vld [vmem:[#allocation10 + $0xe8] sm:$0xff]
    %v1817 = vld [vmem:[#allocation10 + $0xf0] sm:$0xff]
    %v1818 = vld [vmem:[#allocation10 + $0xf8] sm:$0xff]
    %v1851 = vunpack.c.l.b16 %v1787
    %v1852 = vunpack.c.h.b16 %v1787
    %v1853 = vunpack.c.l.b16 %v1788
    %v1854 = vunpack.c.h.b16 %v1788
    %v1855 = vunpack.c.l.b16 %v1789
    %v1856 = vunpack.c.h.b16 %v1789
    %v1857 = vunpack.c.l.b16 %v1790
    %v1858 = vunpack.c.h.b16 %v1790
    %v1859 = vunpack.c.l.b16 %v1791
    %v1860 = vunpack.c.h.b16 %v1791
    %v1861 = vunpack.c.l.b16 %v1792
    %v1862 = vunpack.c.h.b16 %v1792
    %v1863 = vunpack.c.l.b16 %v1793
    %v1864 = vunpack.c.h.b16 %v1793
    %v1865 = vunpack.c.l.b16 %v1794
    %v1866 = vunpack.c.h.b16 %v1794
    %v1867 = vunpack.c.l.b16 %v1795
    %v1868 = vunpack.c.h.b16 %v1795
    %v1869 = vunpack.c.l.b16 %v1796
    %v1870 = vunpack.c.h.b16 %v1796
    %v1871 = vunpack.c.l.b16 %v1797
    %v1872 = vunpack.c.h.b16 %v1797
    %v1873 = vunpack.c.l.b16 %v1798
    %v1874 = vunpack.c.h.b16 %v1798
    %v1875 = vunpack.c.l.b16 %v1799
    %v1876 = vunpack.c.h.b16 %v1799
    %v1877 = vunpack.c.l.b16 %v1800
    %v1878 = vunpack.c.h.b16 %v1800
    %v1879 = vunpack.c.l.b16 %v1801
    %v1880 = vunpack.c.h.b16 %v1801
    %v1881 = vunpack.c.l.b16 %v1802
    %v1882 = vunpack.c.h.b16 %v1802
    %v1883 = vunpack.c.l.b16 %v1803
    %v1884 = vunpack.c.h.b16 %v1803
    %v1885 = vunpack.c.l.b16 %v1804
    %v1886 = vunpack.c.h.b16 %v1804
    %v1887 = vunpack.c.l.b16 %v1805
    %v1888 = vunpack.c.h.b16 %v1805
    %v1889 = vunpack.c.l.b16 %v1806
    %v1890 = vunpack.c.h.b16 %v1806
    %v1891 = vunpack.c.l.b16 %v1807
    %v1892 = vunpack.c.h.b16 %v1807
    %v1893 = vunpack.c.l.b16 %v1808
    %v1894 = vunpack.c.h.b16 %v1808
    %v1895 = vunpack.c.l.b16 %v1809
    %v1896 = vunpack.c.h.b16 %v1809
    %v1897 = vunpack.c.l.b16 %v1810
    %v1898 = vunpack.c.h.b16 %v1810
    %v1899 = vunpack.c.l.b16 %v1811
    %v1900 = vunpack.c.h.b16 %v1811
    %v1901 = vunpack.c.l.b16 %v1812
    %v1902 = vunpack.c.h.b16 %v1812
    %v1903 = vunpack.c.l.b16 %v1813
    %v1904 = vunpack.c.h.b16 %v1813
    %v1905 = vunpack.c.l.b16 %v1814
    %v1906 = vunpack.c.h.b16 %v1814
    %v1907 = vunpack.c.l.b16 %v1815
    %v1908 = vunpack.c.h.b16 %v1815
    %v1909 = vunpack.c.l.b16 %v1816
    %v1910 = vunpack.c.h.b16 %v1816
    %v1911 = vunpack.c.l.b16 %v1817
    %v1912 = vunpack.c.h.b16 %v1817
    %v1913 = vunpack.c.l.b16 %v1818
    %v1914 = vunpack.c.h.b16 %v1818
    %v1915 = vpack.c.b16 %v1855, %v1851
    %v1916 = vpack.c.b16 %v1856, %v1852
    %v1917 = vpack.c.b16 %v1857, %v1853
    %v1918 = vpack.c.b16 %v1858, %v1854
    %v1919 = vpack.c.b16 %v1863, %v1859
    %v1920 = vpack.c.b16 %v1864, %v1860
    %v1921 = vpack.c.b16 %v1865, %v1861
    %v1922 = vpack.c.b16 %v1866, %v1862
    %v1923 = vpack.c.b16 %v1871, %v1867
    %v1924 = vpack.c.b16 %v1872, %v1868
    %v1925 = vpack.c.b16 %v1873, %v1869
    %v1926 = vpack.c.b16 %v1874, %v1870
    %v1927 = vpack.c.b16 %v1879, %v1875
    %v1928 = vpack.c.b16 %v1880, %v1876
    %v1929 = vpack.c.b16 %v1881, %v1877
    %v1930 = vpack.c.b16 %v1882, %v1878
    %v1931 = vpack.c.b16 %v1887, %v1883
    %v1932 = vpack.c.b16 %v1888, %v1884
    %v1933 = vpack.c.b16 %v1889, %v1885
    %v1934 = vpack.c.b16 %v1890, %v1886
    %v1935 = vpack.c.b16 %v1895, %v1891
    %v1936 = vpack.c.b16 %v1896, %v1892
    %v1937 = vpack.c.b16 %v1897, %v1893
    %v1938 = vpack.c.b16 %v1898, %v1894
    %v1939 = vpack.c.b16 %v1903, %v1899
    %v1940 = vpack.c.b16 %v1904, %v1900
    %v1941 = vpack.c.b16 %v1905, %v1901
    %v1942 = vpack.c.b16 %v1906, %v1902
    %v1943 = vpack.c.b16 %v1911, %v1907
    %v1944 = vpack.c.b16 %v1912, %v1908
    %v1945 = vpack.c.b16 %v1913, %v1909
    %v1946 = vpack.c.b16 %v1914, %v1910
    %1979 = vmatprep.subr.bf16.mxu0 %v1916
    %1980 = vmatpush1.bf16.msra.mxu0 %v1915
    %1981 = vmatprep.subr.bf16.mxu0 %v1920
    %1982 = vmatpush1.bf16.msra.mxu0 %v1919
    %1983 = vmatprep.subr.bf16.mxu0 %v1924
    %1984 = vmatpush1.bf16.msra.mxu0 %v1923
    %1985 = vmatprep.subr.bf16.mxu0 %v1928
    %1986 = vmatpush1.bf16.msra.mxu0 %v1927
    %1987 = vmatprep.subr.bf16.mxu0 %v1932
    %1988 = vmatpush1.bf16.msra.mxu0 %v1931
    %1989 = vmatprep.subr.bf16.mxu0 %v1936
    %1990 = vmatpush1.bf16.msra.mxu0 %v1935
    %1991 = vmatprep.subr.bf16.mxu0 %v1940
    %1992 = vmatpush1.bf16.msra.mxu0 %v1939
    %1993 = vmatprep.subr.bf16.mxu0 %v1944
    %1994 = vmatpush1.bf16.msra.mxu0 %v1943
    %1995 = vmatprep.subr.bf16.mxu0 0
    %1996 = vmatpush1.bf16.msra.mxu0 0
    %1997 = vmatprep.subr.bf16.mxu0 0
    %1998 = vmatpush1.bf16.msra.mxu0 0
    %1999 = vmatprep.subr.bf16.mxu0 0
    %2000 = vmatpush1.bf16.msra.mxu0 0
    %2001 = vmatprep.subr.bf16.mxu0 0
    %2002 = vmatpush1.bf16.msra.mxu0 0
    %2003 = vmatprep.subr.bf16.mxu0 0
    %2004 = vmatpush1.bf16.msra.mxu0 0
    %2005 = vmatprep.subr.bf16.mxu0 0
    %2006 = vmatpush1.bf16.msra.mxu0 0
    %2007 = vmatprep.subr.bf16.mxu0 0
    %2008 = vmatpush1.bf16.msra.mxu0 0
    %2009 = vmatprep.subr.bf16.mxu0 0
    %2010 = vmatpush1.bf16.msra.mxu0 0
    %2011 = vmatprep.mubr.bf16.mxu0 0
    %2012 = vmatmul.mubr.bf16.gmra.mrb[0].mxu0 %v1779
    %v2013 = vpop.f32.mrb[0].mxu0
    %v2014 = vadd.f32 0.0, %v2013
    %v2015 = vpop.f32.mrb[0].mxu0
    %v2016 = vadd.f32 0.0, %v2015
    %v2017 = vpop.f32.mrb[0].mxu0
    %v2018 = vpop.f32.mrb[0].mxu0
    %2019 = vdwg.mxu0
    %2020 = vmatprep.subr.bf16.mxu0 %v1918
    %2021 = vmatpush1.bf16.msra.mxu0 %v1917
    %2022 = vmatprep.subr.bf16.mxu0 %v1922
    %2023 = vmatpush1.bf16.msra.mxu0 %v1921
    %2024 = vmatprep.subr.bf16.mxu0 %v1926
    %2025 = vmatpush1.bf16.msra.mxu0 %v1925
    %2026 = vmatprep.subr.bf16.mxu0 %v1930
    %2027 = vmatpush1.bf16.msra.mxu0 %v1929
    %2028 = vmatprep.subr.bf16.mxu0 %v1934
    %2029 = vmatpush1.bf16.msra.mxu0 %v1933
    %2030 = vmatprep.subr.bf16.mxu0 %v1938
    %2031 = vmatpush1.bf16.msra.mxu0 %v1937
    %2032 = vmatprep.subr.bf16.mxu0 %v1942
    %2033 = vmatpush1.bf16.msra.mxu0 %v1941
    %2034 = vmatprep.subr.bf16.mxu0 %v1946
    %2035 = vmatpush1.bf16.msra.mxu0 %v1945
    %2036 = vmatprep.subr.bf16.mxu0 0
    %2037 = vmatpush1.bf16.msra.mxu0 0
    %2038 = vmatprep.subr.bf16.mxu0 0
    %2039 = vmatpush1.bf16.msra.mxu0 0
    %2040 = vmatprep.subr.bf16.mxu0 0
    %2041 = vmatpush1.bf16.msra.mxu0 0
    %2042 = vmatprep.subr.bf16.mxu0 0
    %2043 = vmatpush1.bf16.msra.mxu0 0
    %2044 = vmatprep.subr.bf16.mxu0 0
    %2045 = vmatpush1.bf16.msra.mxu0 0
    %2046 = vmatprep.subr.bf16.mxu0 0
    %2047 = vmatpush1.bf16.msra.mxu0 0
    %2048 = vmatprep.subr.bf16.mxu0 0
    %2049 = vmatpush1.bf16.msra.mxu0 0
    %2050 = vmatprep.subr.bf16.mxu0 0
    %2051 = vmatpush1.bf16.msra.mxu0 0
    %2052 = vmatprep.mubr.bf16.mxu0 0
    %2053 = vmatmul.mubr.bf16.gmra.mrb[0].mxu0 %v1779
    %v2054 = vpop.f32.mrb[0].mxu0
    %v2055 = vadd.f32 0.0, %v2054
    %v2056 = vpop.f32.mrb[0].mxu0
    %v2057 = vadd.f32 0.0, %v2056
    %v2058 = vpop.f32.mrb[0].mxu0
    %v2059 = vpop.f32.mrb[0].mxu0
    %2060 = vdwg.mxu0
    %v2061 = vadd.f32 %v1783, %v2014
    %v2062 = vadd.f32 %v1784, %v2016
    %v2063 = vadd.f32 %v1785, %v2055
    %v2064 = vadd.f32 %v1786, %v2057
    %v2065 = vxor.u32 %v2061, 2147483648
    %v2066 = vxor.u32 %v2062, 2147483648
    %v2067 = vxor.u32 %v2063, 2147483648
    %v2068 = vxor.u32 %v2064, 2147483648
    %v2069 = vmul.f32 %v2065, 1.442695
    %v2070 = vpow.pop %v2069
    %v2071 = vmul.f32 %v2066, 1.442695
    %v2072 = vpow.pop %v2071
    %v2073 = vmul.f32 %v2067, 1.442695
    %v2074 = vpow.pop %v2073
    %v2075 = vmul.f32 %v2068, 1.442695
    %v2076 = vpow.pop %v2075
    %v2077 = vadd.f32 %v2070, 1.0
    %v2078 = vadd.f32 %v2072, 1.0
    %v2079 = vadd.f32 %v2074, 1.0
    %v2080 = vadd.f32 %v2076, 1.0
    %v2081 = vrcp.pop %v2077
    %v2082 = vmul.f32 1.0, %v2081
    %v2083 = vrcp.pop %v2078
    %v2084 = vmul.f32 1.0, %v2083
    %v2085 = vrcp.pop %v2079
    %v2086 = vmul.f32 1.0, %v2085
    %v2087 = vrcp.pop %v2080
    %v2088 = vmul.f32 1.0, %v2087
    %v2089 = vmul.f32 %v2086, 2.0
    %v2090 = vsub.f32 %v2089, 1.0
    %v2091 = vmul.f32 %v2084, %v1776
    %v2092 = vmul.f32 %v2082, %v2090
    %v2093 = vadd.f32 %v2091, %v2092
    %v2094 = vtanh.pop %v2093
    %v2095 = vmul.f32 %v2088, %v2094
    %v2096 = vpack.c.bf16 %v2095, %v2095
    %s2097 = scalar_lea.vmem [#allocation3], 16
    %2098 = vst [vmem:[%s2097] sm:$0xf] %v2096
    %s2099 = scalar_lea.vmem [#allocation2], 160
    %v2100 = vld [vmem:[%s2099] sm:$0xff]
    %v2101 = vld [vmem:[%s2099 + $0x8] sm:$0xff]
    %v2102 = vld [vmem:[%s2099 + $0x10] sm:$0xff]
    %v2103 = vld [vmem:[%s2099 + $0x18] sm:$0xff]
    %v2104 = vld [vmem:[#allocation10] sm:$0xff]
    %v2105 = vld [vmem:[#allocation10 + $0x8] sm:$0xff]
    %v2106 = vld [vmem:[#allocation10 + $0x10] sm:$0xff]
    %v2107 = vld [vmem:[#allocation10 + $0x18] sm:$0xff]
    %v2108 = vld [vmem:[#allocation10 + $0x20] sm:$0xff]
    %v2109 = vld [vmem:[#allocation10 + $0x28] sm:$0xff]
    %v2110 = vld [vmem:[#allocation10 + $0x30] sm:$0xff]
    %v2111 = vld [vmem:[#allocation10 + $0x38] sm:$0xff]
    %v2112 = vld [vmem:[#allocation10 + $0x40] sm:$0xff]
    %v2113 = vld [vmem:[#allocation10 + $0x48] sm:$0xff]
    %v2114 = vld [vmem:[#allocation10 + $0x50] sm:$0xff]
    %v2115 = vld [vmem:[#allocation10 + $0x58] sm:$0xff]
    %v2116 = vld [vmem:[#allocation10 + $0x60] sm:$0xff]
    %v2117 = vld [vmem:[#allocation10 + $0x68] sm:$0xff]
    %v2118 = vld [vmem:[#allocation10 + $0x70] sm:$0xff]
    %v2119 = vld [vmem:[#allocation10 + $0x78] sm:$0xff]
    %v2120 = vld [vmem:[#allocation10 + $0x80] sm:$0xff]
    %v2121 = vld [vmem:[#allocation10 + $0x88] sm:$0xff]
    %v2122 = vld [vmem:[#allocation10 + $0x90] sm:$0xff]
    %v2123 = vld [vmem:[#allocation10 + $0x98] sm:$0xff]
    %v2124 = vld [vmem:[#allocation10 + $0xa0] sm:$0xff]
    %v2125 = vld [vmem:[#allocation10 + $0xa8] sm:$0xff]
    %v2126 = vld [vmem:[#allocation10 + $0xb0] sm:$0xff]
    %v2127 = vld [vmem:[#allocation10 + $0xb8] sm:$0xff]
    %v2128 = vld [vmem:[#allocation10 + $0xc0] sm:$0xff]
    %v2129 = vld [vmem:[#allocation10 + $0xc8] sm:$0xff]
    %v2130 = vld [vmem:[#allocation10 + $0xd0] sm:$0xff]
    %v2131 = vld [vmem:[#allocation10 + $0xd8] sm:$0xff]
    %v2132 = vld [vmem:[#allocation10 + $0xe0] sm:$0xff]
    %v2133 = vld [vmem:[#allocation10 + $0xe8] sm:$0xff]
    %v2134 = vld [vmem:[#allocation10 + $0xf0] sm:$0xff]
    %v2135 = vld [vmem:[#allocation10 + $0xf8] sm:$0xff]
    %v2168 = vunpack.c.l.b16 %v2104
    %v2169 = vunpack.c.h.b16 %v2104
    %v2170 = vunpack.c.l.b16 %v2105
    %v2171 = vunpack.c.h.b16 %v2105
    %v2172 = vunpack.c.l.b16 %v2106
    %v2173 = vunpack.c.h.b16 %v2106
    %v2174 = vunpack.c.l.b16 %v2107
    %v2175 = vunpack.c.h.b16 %v2107
    %v2176 = vunpack.c.l.b16 %v2108
    %v2177 = vunpack.c.h.b16 %v2108
    %v2178 = vunpack.c.l.b16 %v2109
    %v2179 = vunpack.c.h.b16 %v2109
    %v2180 = vunpack.c.l.b16 %v2110
    %v2181 = vunpack.c.h.b16 %v2110
    %v2182 = vunpack.c.l.b16 %v2111
    %v2183 = vunpack.c.h.b16 %v2111
    %v2184 = vunpack.c.l.b16 %v2112
    %v2185 = vunpack.c.h.b16 %v2112
    %v2186 = vunpack.c.l.b16 %v2113
    %v2187 = vunpack.c.h.b16 %v2113
    %v2188 = vunpack.c.l.b16 %v2114
    %v2189 = vunpack.c.h.b16 %v2114
    %v2190 = vunpack.c.l.b16 %v2115
    %v2191 = vunpack.c.h.b16 %v2115
    %v2192 = vunpack.c.l.b16 %v2116
    %v2193 = vunpack.c.h.b16 %v2116
    %v2194 = vunpack.c.l.b16 %v2117
    %v2195 = vunpack.c.h.b16 %v2117
    %v2196 = vunpack.c.l.b16 %v2118
    %v2197 = vunpack.c.h.b16 %v2118
    %v2198 = vunpack.c.l.b16 %v2119
    %v2199 = vunpack.c.h.b16 %v2119
    %v2200 = vunpack.c.l.b16 %v2120
    %v2201 = vunpack.c.h.b16 %v2120
    %v2202 = vunpack.c.l.b16 %v2121
    %v2203 = vunpack.c.h.b16 %v2121
    %v2204 = vunpack.c.l.b16 %v2122
    %v2205 = vunpack.c.h.b16 %v2122
    %v2206 = vunpack.c.l.b16 %v2123
    %v2207 = vunpack.c.h.b16 %v2123
    %v2208 = vunpack.c.l.b16 %v2124
    %v2209 = vunpack.c.h.b16 %v2124
    %v2210 = vunpack.c.l.b16 %v2125
    %v2211 = vunpack.c.h.b16 %v2125
    %v2212 = vunpack.c.l.b16 %v2126
    %v2213 = vunpack.c.h.b16 %v2126
    %v2214 = vunpack.c.l.b16 %v2127
    %v2215 = vunpack.c.h.b16 %v2127
    %v2216 = vunpack.c.l.b16 %v2128
    %v2217 = vunpack.c.h.b16 %v2128
    %v2218 = vunpack.c.l.b16 %v2129
    %v2219 = vunpack.c.h.b16 %v2129
    %v2220 = vunpack.c.l.b16 %v2130
    %v2221 = vunpack.c.h.b16 %v2130
    %v2222 = vunpack.c.l.b16 %v2131
    %v2223 = vunpack.c.h.b16 %v2131
    %v2224 = vunpack.c.l.b16 %v2132
    %v2225 = vunpack.c.h.b16 %v2132
    %v2226 = vunpack.c.l.b16 %v2133
    %v2227 = vunpack.c.h.b16 %v2133
    %v2228 = vunpack.c.l.b16 %v2134
    %v2229 = vunpack.c.h.b16 %v2134
    %v2230 = vunpack.c.l.b16 %v2135
    %v2231 = vunpack.c.h.b16 %v2135
    %v2232 = vpack.c.b16 %v2172, %v2168
    %v2233 = vpack.c.b16 %v2173, %v2169
    %v2234 = vpack.c.b16 %v2174, %v2170
    %v2235 = vpack.c.b16 %v2175, %v2171
    %v2236 = vpack.c.b16 %v2180, %v2176
    %v2237 = vpack.c.b16 %v2181, %v2177
    %v2238 = vpack.c.b16 %v2182, %v2178
    %v2239 = vpack.c.b16 %v2183, %v2179
    %v2240 = vpack.c.b16 %v2188, %v2184
    %v2241 = vpack.c.b16 %v2189, %v2185
    %v2242 = vpack.c.b16 %v2190, %v2186
    %v2243 = vpack.c.b16 %v2191, %v2187
    %v2244 = vpack.c.b16 %v2196, %v2192
    %v2245 = vpack.c.b16 %v2197, %v2193
    %v2246 = vpack.c.b16 %v2198, %v2194
    %v2247 = vpack.c.b16 %v2199, %v2195
    %v2248 = vpack.c.b16 %v2204, %v2200
    %v2249 = vpack.c.b16 %v2205, %v2201
    %v2250 = vpack.c.b16 %v2206, %v2202
    %v2251 = vpack.c.b16 %v2207, %v2203
    %v2252 = vpack.c.b16 %v2212, %v2208
    %v2253 = vpack.c.b16 %v2213, %v2209
    %v2254 = vpack.c.b16 %v2214, %v2210
    %v2255 = vpack.c.b16 %v2215, %v2211
    %v2256 = vpack.c.b16 %v2220, %v2216
    %v2257 = vpack.c.b16 %v2221, %v2217
    %v2258 = vpack.c.b16 %v2222, %v2218
    %v2259 = vpack.c.b16 %v2223, %v2219
    %v2260 = vpack.c.b16 %v2228, %v2224
    %v2261 = vpack.c.b16 %v2229, %v2225
    %v2262 = vpack.c.b16 %v2230, %v2226
    %v2263 = vpack.c.b16 %v2231, %v2227
    %2296 = vmatprep.subr.bf16.mxu0 %v2233
    %2297 = vmatpush1.bf16.msra.mxu0 %v2232
    %2298 = vmatprep.subr.bf16.mxu0 %v2237
    %2299 = vmatpush1.bf16.msra.mxu0 %v2236
    %2300 = vmatprep.subr.bf16.mxu0 %v2241
    %2301 = vmatpush1.bf16.msra.mxu0 %v2240
    %2302 = vmatprep.subr.bf16.mxu0 %v2245
    %2303 = vmatpush1.bf16.msra.mxu0 %v2244
    %2304 = vmatprep.subr.bf16.mxu0 %v2249
    %2305 = vmatpush1.bf16.msra.mxu0 %v2248
    %2306 = vmatprep.subr.bf16.mxu0 %v2253
    %2307 = vmatpush1.bf16.msra.mxu0 %v2252
    %2308 = vmatprep.subr.bf16.mxu0 %v2257
    %2309 = vmatpush1.bf16.msra.mxu0 %v2256
    %2310 = vmatprep.subr.bf16.mxu0 %v2261
    %2311 = vmatpush1.bf16.msra.mxu0 %v2260
    %2312 = vmatprep.subr.bf16.mxu0 0
    %2313 = vmatpush1.bf16.msra.mxu0 0
    %2314 = vmatprep.subr.bf16.mxu0 0
    %2315 = vmatpush1.bf16.msra.mxu0 0
    %2316 = vmatprep.subr.bf16.mxu0 0
    %2317 = vmatpush1.bf16.msra.mxu0 0
    %2318 = vmatprep.subr.bf16.mxu0 0
    %2319 = vmatpush1.bf16.msra.mxu0 0
    %2320 = vmatprep.subr.bf16.mxu0 0
    %2321 = vmatpush1.bf16.msra.mxu0 0
    %2322 = vmatprep.subr.bf16.mxu0 0
    %2323 = vmatpush1.bf16.msra.mxu0 0
    %2324 = vmatprep.subr.bf16.mxu0 0
    %2325 = vmatpush1.bf16.msra.mxu0 0
    %2326 = vmatprep.subr.bf16.mxu0 0
    %2327 = vmatpush1.bf16.msra.mxu0 0
    %2328 = vmatprep.mubr.bf16.mxu0 0
    %2329 = vmatmul.mubr.bf16.gmra.mrb[0].mxu0 %v2096
    %v2330 = vpop.f32.mrb[0].mxu0
    %v2331 = vadd.f32 0.0, %v2330
    %v2332 = vpop.f32.mrb[0].mxu0
    %v2333 = vadd.f32 0.0, %v2332
    %v2334 = vpop.f32.mrb[0].mxu0
    %v2335 = vpop.f32.mrb[0].mxu0
    %2336 = vdwg.mxu0
    %2337 = vmatprep.subr.bf16.mxu0 %v2235
    %2338 = vmatpush1.bf16.msra.mxu0 %v2234
    %2339 = vmatprep.subr.bf16.mxu0 %v2239
    %2340 = vmatpush1.bf16.msra.mxu0 %v2238
    %2341 = vmatprep.subr.bf16.mxu0 %v2243
    %2342 = vmatpush1.bf16.msra.mxu0 %v2242
    %2343 = vmatprep.subr.bf16.mxu0 %v2247
    %2344 = vmatpush1.bf16.msra.mxu0 %v2246
    %2345 = vmatprep.subr.bf16.mxu0 %v2251
    %2346 = vmatpush1.bf16.msra.mxu0 %v2250
    %2347 = vmatprep.subr.bf16.mxu0 %v2255
    %2348 = vmatpush1.bf16.msra.mxu0 %v2254
    %2349 = vmatprep.subr.bf16.mxu0 %v2259
    %2350 = vmatpush1.bf16.msra.mxu0 %v2258
    %2351 = vmatprep.subr.bf16.mxu0 %v2263
    %2352 = vmatpush1.bf16.msra.mxu0 %v2262
    %2353 = vmatprep.subr.bf16.mxu0 0
    %2354 = vmatpush1.bf16.msra.mxu0 0
    %2355 = vmatprep.subr.bf16.mxu0 0
    %2356 = vmatpush1.bf16.msra.mxu0 0
    %2357 = vmatprep.subr.bf16.mxu0 0
    %2358 = vmatpush1.bf16.msra.mxu0 0
    %2359 = vmatprep.subr.bf16.mxu0 0
    %2360 = vmatpush1.bf16.msra.mxu0 0
    %2361 = vmatprep.subr.bf16.mxu0 0
    %2362 = vmatpush1.bf16.msra.mxu0 0
    %2363 = vmatprep.subr.bf16.mxu0 0
    %2364 = vmatpush1.bf16.msra.mxu0 0
    %2365 = vmatprep.subr.bf16.mxu0 0
    %2366 = vmatpush1.bf16.msra.mxu0 0
    %2367 = vmatprep.subr.bf16.mxu0 0
    %2368 = vmatpush1.bf16.msra.mxu0 0
    %2369 = vmatprep.mubr.bf16.mxu0 0
    %2370 = vmatmul.mubr.bf16.gmra.mrb[0].mxu0 %v2096
    %v2371 = vpop.f32.mrb[0].mxu0
    %v2372 = vadd.f32 0.0, %v2371
    %v2373 = vpop.f32.mrb[0].mxu0
    %v2374 = vadd.f32 0.0, %v2373
    %v2375 = vpop.f32.mrb[0].mxu0
    %v2376 = vpop.f32.mrb[0].mxu0
    %2377 = vdwg.mxu0
    %v2378 = vadd.f32 %v2100, %v2331
    %v2379 = vadd.f32 %v2101, %v2333
    %v2380 = vadd.f32 %v2102, %v2372
    %v2381 = vadd.f32 %v2103, %v2374
    %v2382 = vxor.u32 %v2378, 2147483648
    %v2383 = vxor.u32 %v2379, 2147483648
    %v2384 = vxor.u32 %v2380, 2147483648
    %v2385 = vxor.u32 %v2381, 2147483648
    %v2386 = vmul.f32 %v2382, 1.442695
    %v2387 = vpow.pop %v2386
    %v2388 = vmul.f32 %v2383, 1.442695
    %v2389 = vpow.pop %v2388
    %v2390 = vmul.f32 %v2384, 1.442695
    %v2391 = vpow.pop %v2390
    %v2392 = vmul.f32 %v2385, 1.442695
    %v2393 = vpow.pop %v2392
    %v2394 = vadd.f32 %v2387, 1.0
    %v2395 = vadd.f32 %v2389, 1.0
    %v2396 = vadd.f32 %v2391, 1.0
    %v2397 = vadd.f32 %v2393, 1.0
    %v2398 = vrcp.pop %v2394
    %v2399 = vmul.f32 1.0, %v2398
    %v2400 = vrcp.pop %v2395
    %v2401 = vmul.f32 1.0, %v2400
    %v2402 = vrcp.pop %v2396
    %v2403 = vmul.f32 1.0, %v2402
    %v2404 = vrcp.pop %v2397
    %v2405 = vmul.f32 1.0, %v2404
    %v2406 = vmul.f32 %v2403, 2.0
    %v2407 = vsub.f32 %v2406, 1.0
    %v2408 = vmul.f32 %v2401, %v2093
    %v2409 = vmul.f32 %v2399, %v2407
    %v2410 = vadd.f32 %v2408, %v2409
    %v2411 = vtanh.pop %v2410
    %v2412 = vmul.f32 %v2405, %v2411
    %v2413 = vpack.c.bf16 %v2412, %v2412
    %s2414 = scalar_lea.vmem [#allocation3], 20
    %2415 = vst [vmem:[%s2414] sm:$0xf] %v2413
    %s2416 = scalar_lea.vmem [#allocation2], 192
    %v2417 = vld [vmem:[%s2416] sm:$0xff]
    %v2418 = vld [vmem:[%s2416 + $0x8] sm:$0xff]
    %v2419 = vld [vmem:[%s2416 + $0x10] sm:$0xff]
    %v2420 = vld [vmem:[%s2416 + $0x18] sm:$0xff]
    %v2421 = vld [vmem:[#allocation10] sm:$0xff]
    %v2422 = vld [vmem:[#allocation10 + $0x8] sm:$0xff]
    %v2423 = vld [vmem:[#allocation10 + $0x10] sm:$0xff]
    %v2424 = vld [vmem:[#allocation10 + $0x18] sm:$0xff]
    %v2425 = vld [vmem:[#allocation10 + $0x20] sm:$0xff]
    %v2426 = vld [vmem:[#allocation10 + $0x28] sm:$0xff]
    %v2427 = vld [vmem:[#allocation10 + $0x30] sm:$0xff]
    %v2428 = vld [vmem:[#allocation10 + $0x38] sm:$0xff]
    %v2429 = vld [vmem:[#allocation10 + $0x40] sm:$0xff]
    %v2430 = vld [vmem:[#allocation10 + $0x48] sm:$0xff]
    %v2431 = vld [vmem:[#allocation10 + $0x50] sm:$0xff]
    %v2432 = vld [vmem:[#allocation10 + $0x58] sm:$0xff]
    %v2433 = vld [vmem:[#allocation10 + $0x60] sm:$0xff]
    %v2434 = vld [vmem:[#allocation10 + $0x68] sm:$0xff]
    %v2435 = vld [vmem:[#allocation10 + $0x70] sm:$0xff]
    %v2436 = vld [vmem:[#allocation10 + $0x78] sm:$0xff]
    %v2437 = vld [vmem:[#allocation10 + $0x80] sm:$0xff]
    %v2438 = vld [vmem:[#allocation10 + $0x88] sm:$0xff]
    %v2439 = vld [vmem:[#allocation10 + $0x90] sm:$0xff]
    %v2440 = vld [vmem:[#allocation10 + $0x98] sm:$0xff]
    %v2441 = vld [vmem:[#allocation10 + $0xa0] sm:$0xff]
    %v2442 = vld [vmem:[#allocation10 + $0xa8] sm:$0xff]
    %v2443 = vld [vmem:[#allocation10 + $0xb0] sm:$0xff]
    %v2444 = vld [vmem:[#allocation10 + $0xb8] sm:$0xff]
    %v2445 = vld [vmem:[#allocation10 + $0xc0] sm:$0xff]
    %v2446 = vld [vmem:[#allocation10 + $0xc8] sm:$0xff]
    %v2447 = vld [vmem:[#allocation10 + $0xd0] sm:$0xff]
    %v2448 = vld [vmem:[#allocation10 + $0xd8] sm:$0xff]
    %v2449 = vld [vmem:[#allocation10 + $0xe0] sm:$0xff]
    %v2450 = vld [vmem:[#allocation10 + $0xe8] sm:$0xff]
    %v2451 = vld [vmem:[#allocation10 + $0xf0] sm:$0xff]
    %v2452 = vld [vmem:[#allocation10 + $0xf8] sm:$0xff]
    %v2485 = vunpack.c.l.b16 %v2421
    %v2486 = vunpack.c.h.b16 %v2421
    %v2487 = vunpack.c.l.b16 %v2422
    %v2488 = vunpack.c.h.b16 %v2422
    %v2489 = vunpack.c.l.b16 %v2423
    %v2490 = vunpack.c.h.b16 %v2423
    %v2491 = vunpack.c.l.b16 %v2424
    %v2492 = vunpack.c.h.b16 %v2424
    %v2493 = vunpack.c.l.b16 %v2425
    %v2494 = vunpack.c.h.b16 %v2425
    %v2495 = vunpack.c.l.b16 %v2426
    %v2496 = vunpack.c.h.b16 %v2426
    %v2497 = vunpack.c.l.b16 %v2427
    %v2498 = vunpack.c.h.b16 %v2427
    %v2499 = vunpack.c.l.b16 %v2428
    %v2500 = vunpack.c.h.b16 %v2428
    %v2501 = vunpack.c.l.b16 %v2429
    %v2502 = vunpack.c.h.b16 %v2429
    %v2503 = vunpack.c.l.b16 %v2430
    %v2504 = vunpack.c.h.b16 %v2430
    %v2505 = vunpack.c.l.b16 %v2431
    %v2506 = vunpack.c.h.b16 %v2431
    %v2507 = vunpack.c.l.b16 %v2432
    %v2508 = vunpack.c.h.b16 %v2432
    %v2509 = vunpack.c.l.b16 %v2433
    %v2510 = vunpack.c.h.b16 %v2433
    %v2511 = vunpack.c.l.b16 %v2434
    %v2512 = vunpack.c.h.b16 %v2434
    %v2513 = vunpack.c.l.b16 %v2435
    %v2514 = vunpack.c.h.b16 %v2435
    %v2515 = vunpack.c.l.b16 %v2436
    %v2516 = vunpack.c.h.b16 %v2436
    %v2517 = vunpack.c.l.b16 %v2437
    %v2518 = vunpack.c.h.b16 %v2437
    %v2519 = vunpack.c.l.b16 %v2438
    %v2520 = vunpack.c.h.b16 %v2438
    %v2521 = vunpack.c.l.b16 %v2439
    %v2522 = vunpack.c.h.b16 %v2439
    %v2523 = vunpack.c.l.b16 %v2440
    %v2524 = vunpack.c.h.b16 %v2440
    %v2525 = vunpack.c.l.b16 %v2441
    %v2526 = vunpack.c.h.b16 %v2441
    %v2527 = vunpack.c.l.b16 %v2442
    %v2528 = vunpack.c.h.b16 %v2442
    %v2529 = vunpack.c.l.b16 %v2443
    %v2530 = vunpack.c.h.b16 %v2443
    %v2531 = vunpack.c.l.b16 %v2444
    %v2532 = vunpack.c.h.b16 %v2444
    %v2533 = vunpack.c.l.b16 %v2445
    %v2534 = vunpack.c.h.b16 %v2445
    %v2535 = vunpack.c.l.b16 %v2446
    %v2536 = vunpack.c.h.b16 %v2446
    %v2537 = vunpack.c.l.b16 %v2447
    %v2538 = vunpack.c.h.b16 %v2447
    %v2539 = vunpack.c.l.b16 %v2448
    %v2540 = vunpack.c.h.b16 %v2448
    %v2541 = vunpack.c.l.b16 %v2449
    %v2542 = vunpack.c.h.b16 %v2449
    %v2543 = vunpack.c.l.b16 %v2450
    %v2544 = vunpack.c.h.b16 %v2450
    %v2545 = vunpack.c.l.b16 %v2451
    %v2546 = vunpack.c.h.b16 %v2451
    %v2547 = vunpack.c.l.b16 %v2452
    %v2548 = vunpack.c.h.b16 %v2452
    %v2549 = vpack.c.b16 %v2489, %v2485
    %v2550 = vpack.c.b16 %v2490, %v2486
    %v2551 = vpack.c.b16 %v2491, %v2487
    %v2552 = vpack.c.b16 %v2492, %v2488
    %v2553 = vpack.c.b16 %v2497, %v2493
    %v2554 = vpack.c.b16 %v2498, %v2494
    %v2555 = vpack.c.b16 %v2499, %v2495
    %v2556 = vpack.c.b16 %v2500, %v2496
    %v2557 = vpack.c.b16 %v2505, %v2501
    %v2558 = vpack.c.b16 %v2506, %v2502
    %v2559 = vpack.c.b16 %v2507, %v2503
    %v2560 = vpack.c.b16 %v2508, %v2504
    %v2561 = vpack.c.b16 %v2513, %v2509
    %v2562 = vpack.c.b16 %v2514, %v2510
    %v2563 = vpack.c.b16 %v2515, %v2511
    %v2564 = vpack.c.b16 %v2516, %v2512
    %v2565 = vpack.c.b16 %v2521, %v2517
    %v2566 = vpack.c.b16 %v2522, %v2518
    %v2567 = vpack.c.b16 %v2523, %v2519
    %v2568 = vpack.c.b16 %v2524, %v2520
    %v2569 = vpack.c.b16 %v2529, %v2525
    %v2570 = vpack.c.b16 %v2530, %v2526
    %v2571 = vpack.c.b16 %v2531, %v2527
    %v2572 = vpack.c.b16 %v2532, %v2528
    %v2573 = vpack.c.b16 %v2537, %v2533
    %v2574 = vpack.c.b16 %v2538, %v2534
    %v2575 = vpack.c.b16 %v2539, %v2535
    %v2576 = vpack.c.b16 %v2540, %v2536
    %v2577 = vpack.c.b16 %v2545, %v2541
    %v2578 = vpack.c.b16 %v2546, %v2542
    %v2579 = vpack.c.b16 %v2547, %v2543
    %v2580 = vpack.c.b16 %v2548, %v2544
    %2613 = vmatprep.subr.bf16.mxu0 %v2550
    %2614 = vmatpush1.bf16.msra.mxu0 %v2549
    %2615 = vmatprep.subr.bf16.mxu0 %v2554
    %2616 = vmatpush1.bf16.msra.mxu0 %v2553
    %2617 = vmatprep.subr.bf16.mxu0 %v2558
    %2618 = vmatpush1.bf16.msra.mxu0 %v2557
    %2619 = vmatprep.subr.bf16.mxu0 %v2562
    %2620 = vmatpush1.bf16.msra.mxu0 %v2561
    %2621 = vmatprep.subr.bf16.mxu0 %v2566
    %2622 = vmatpush1.bf16.msra.mxu0 %v2565
    %2623 = vmatprep.subr.bf16.mxu0 %v2570
    %2624 = vmatpush1.bf16.msra.mxu0 %v2569
    %2625 = vmatprep.subr.bf16.mxu0 %v2574
    %2626 = vmatpush1.bf16.msra.mxu0 %v2573
    %2627 = vmatprep.subr.bf16.mxu0 %v2578
    %2628 = vmatpush1.bf16.msra.mxu0 %v2577
    %2629 = vmatprep.subr.bf16.mxu0 0
    %2630 = vmatpush1.bf16.msra.mxu0 0
    %2631 = vmatprep.subr.bf16.mxu0 0
    %2632 = vmatpush1.bf16.msra.mxu0 0
    %2633 = vmatprep.subr.bf16.mxu0 0
    %2634 = vmatpush1.bf16.msra.mxu0 0
    %2635 = vmatprep.subr.bf16.mxu0 0
    %2636 = vmatpush1.bf16.msra.mxu0 0
    %2637 = vmatprep.subr.bf16.mxu0 0
    %2638 = vmatpush1.bf16.msra.mxu0 0
    %2639 = vmatprep.subr.bf16.mxu0 0
    %2640 = vmatpush1.bf16.msra.mxu0 0
    %2641 = vmatprep.subr.bf16.mxu0 0
    %2642 = vmatpush1.bf16.msra.mxu0 0
    %2643 = vmatprep.subr.bf16.mxu0 0
    %2644 = vmatpush1.bf16.msra.mxu0 0
    %2645 = vmatprep.mubr.bf16.mxu0 0
    %2646 = vmatmul.mubr.bf16.gmra.mrb[0].mxu0 %v2413
    %v2647 = vpop.f32.mrb[0].mxu0
    %v2648 = vadd.f32 0.0, %v2647
    %v2649 = vpop.f32.mrb[0].mxu0
    %v2650 = vadd.f32 0.0, %v2649
    %v2651 = vpop.f32.mrb[0].mxu0
    %v2652 = vpop.f32.mrb[0].mxu0
    %2653 = vdwg.mxu0
    %2654 = vmatprep.subr.bf16.mxu0 %v2552
    %2655 = vmatpush1.bf16.msra.mxu0 %v2551
    %2656 = vmatprep.subr.bf16.mxu0 %v2556
    %2657 = vmatpush1.bf16.msra.mxu0 %v2555
    %2658 = vmatprep.subr.bf16.mxu0 %v2560
    %2659 = vmatpush1.bf16.msra.mxu0 %v2559
    %2660 = vmatprep.subr.bf16.mxu0 %v2564
    %2661 = vmatpush1.bf16.msra.mxu0 %v2563
    %2662 = vmatprep.subr.bf16.mxu0 %v2568
    %2663 = vmatpush1.bf16.msra.mxu0 %v2567
    %2664 = vmatprep.subr.bf16.mxu0 %v2572
    %2665 = vmatpush1.bf16.msra.mxu0 %v2571
    %2666 = vmatprep.subr.bf16.mxu0 %v2576
    %2667 = vmatpush1.bf16.msra.mxu0 %v2575
    %2668 = vmatprep.subr.bf16.mxu0 %v2580
    %2669 = vmatpush1.bf16.msra.mxu0 %v2579
    %2670 = vmatprep.subr.bf16.mxu0 0
    %2671 = vmatpush1.bf16.msra.mxu0 0
    %2672 = vmatprep.subr.bf16.mxu0 0
    %2673 = vmatpush1.bf16.msra.mxu0 0
    %2674 = vmatprep.subr.bf16.mxu0 0
    %2675 = vmatpush1.bf16.msra.mxu0 0
    %2676 = vmatprep.subr.bf16.mxu0 0
    %2677 = vmatpush1.bf16.msra.mxu0 0
    %2678 = vmatprep.subr.bf16.mxu0 0
    %2679 = vmatpush1.bf16.msra.mxu0 0
    %2680 = vmatprep.subr.bf16.mxu0 0
    %2681 = vmatpush1.bf16.msra.mxu0 0
    %2682 = vmatprep.subr.bf16.mxu0 0
    %2683 = vmatpush1.bf16.msra.mxu0 0
    %2684 = vmatprep.subr.bf16.mxu0 0
    %2685 = vmatpush1.bf16.msra.mxu0 0
    %2686 = vmatprep.mubr.bf16.mxu0 0
    %2687 = vmatmul.mubr.bf16.gmra.mrb[0].mxu0 %v2413
    %v2688 = vpop.f32.mrb[0].mxu0
    %v2689 = vadd.f32 0.0, %v2688
    %v2690 = vpop.f32.mrb[0].mxu0
    %v2691 = vadd.f32 0.0, %v2690
    %v2692 = vpop.f32.mrb[0].mxu0
    %v2693 = vpop.f32.mrb[0].mxu0
    %2694 = vdwg.mxu0
    %v2695 = vadd.f32 %v2417, %v2648
    %v2696 = vadd.f32 %v2418, %v2650
    %v2697 = vadd.f32 %v2419, %v2689
    %v2698 = vadd.f32 %v2420, %v2691
    %v2699 = vxor.u32 %v2695, 2147483648
    %v2700 = vxor.u32 %v2696, 2147483648
    %v2701 = vxor.u32 %v2697, 2147483648
    %v2702 = vxor.u32 %v2698, 2147483648
    %v2703 = vmul.f32 %v2699, 1.442695
    %v2704 = vpow.pop %v2703
    %v2705 = vmul.f32 %v2700, 1.442695
    %v2706 = vpow.pop %v2705
    %v2707 = vmul.f32 %v2701, 1.442695
    %v2708 = vpow.pop %v2707
    %v2709 = vmul.f32 %v2702, 1.442695
    %v2710 = vpow.pop %v2709
    %v2711 = vadd.f32 %v2704, 1.0
    %v2712 = vadd.f32 %v2706, 1.0
    %v2713 = vadd.f32 %v2708, 1.0
    %v2714 = vadd.f32 %v2710, 1.0
    %v2715 = vrcp.pop %v2711
    %v2716 = vmul.f32 1.0, %v2715
    %v2717 = vrcp.pop %v2712
    %v2718 = vmul.f32 1.0, %v2717
    %v2719 = vrcp.pop %v2713
    %v2720 = vmul.f32 1.0, %v2719
    %v2721 = vrcp.pop %v2714
    %v2722 = vmul.f32 1.0, %v2721
    %v2723 = vmul.f32 %v2720, 2.0
    %v2724 = vsub.f32 %v2723, 1.0
    %v2725 = vmul.f32 %v2718, %v2410
    %v2726 = vmul.f32 %v2716, %v2724
    %v2727 = vadd.f32 %v2725, %v2726
    %v2728 = vtanh.pop %v2727
    %v2729 = vmul.f32 %v2722, %v2728
    %v2730 = vpack.c.bf16 %v2729, %v2729
    %s2731 = scalar_lea.vmem [#allocation3], 24
    %2732 = vst [vmem:[%s2731] sm:$0xf] %v2730
    %s2733 = scalar_lea.vmem [#allocation2], 224
    %v2734 = vld [vmem:[%s2733] sm:$0xff]
    %v2735 = vld [vmem:[%s2733 + $0x8] sm:$0xff]
    %v2736 = vld [vmem:[%s2733 + $0x10] sm:$0xff]
    %v2737 = vld [vmem:[%s2733 + $0x18] sm:$0xff]
    %v2738 = vld [vmem:[#allocation10] sm:$0xff]
    %v2739 = vld [vmem:[#allocation10 + $0x8] sm:$0xff]
    %v2740 = vld [vmem:[#allocation10 + $0x10] sm:$0xff]
    %v2741 = vld [vmem:[#allocation10 + $0x18] sm:$0xff]
    %v2742 = vld [vmem:[#allocation10 + $0x20] sm:$0xff]
    %v2743 = vld [vmem:[#allocation10 + $0x28] sm:$0xff]
    %v2744 = vld [vmem:[#allocation10 + $0x30] sm:$0xff]
    %v2745 = vld [vmem:[#allocation10 + $0x38] sm:$0xff]
    %v2746 = vld [vmem:[#allocation10 + $0x40] sm:$0xff]
    %v2747 = vld [vmem:[#allocation10 + $0x48] sm:$0xff]
    %v2748 = vld [vmem:[#allocation10 + $0x50] sm:$0xff]
    %v2749 = vld [vmem:[#allocation10 + $0x58] sm:$0xff]
    %v2750 = vld [vmem:[#allocation10 + $0x60] sm:$0xff]
    %v2751 = vld [vmem:[#allocation10 + $0x68] sm:$0xff]
    %v2752 = vld [vmem:[#allocation10 + $0x70] sm:$0xff]
    %v2753 = vld [vmem:[#allocation10 + $0x78] sm:$0xff]
    %v2754 = vld [vmem:[#allocation10 + $0x80] sm:$0xff]
    %v2755 = vld [vmem:[#allocation10 + $0x88] sm:$0xff]
    %v2756 = vld [vmem:[#allocation10 + $0x90] sm:$0xff]
    %v2757 = vld [vmem:[#allocation10 + $0x98] sm:$0xff]
    %v2758 = vld [vmem:[#allocation10 + $0xa0] sm:$0xff]
    %v2759 = vld [vmem:[#allocation10 + $0xa8] sm:$0xff]
    %v2760 = vld [vmem:[#allocation10 + $0xb0] sm:$0xff]
    %v2761 = vld [vmem:[#allocation10 + $0xb8] sm:$0xff]
    %v2762 = vld [vmem:[#allocation10 + $0xc0] sm:$0xff]
    %v2763 = vld [vmem:[#allocation10 + $0xc8] sm:$0xff]
    %v2764 = vld [vmem:[#allocation10 + $0xd0] sm:$0xff]
    %v2765 = vld [vmem:[#allocation10 + $0xd8] sm:$0xff]
    %v2766 = vld [vmem:[#allocation10 + $0xe0] sm:$0xff]
    %v2767 = vld [vmem:[#allocation10 + $0xe8] sm:$0xff]
    %v2768 = vld [vmem:[#allocation10 + $0xf0] sm:$0xff]
    %v2769 = vld [vmem:[#allocation10 + $0xf8] sm:$0xff]
    %v2802 = vunpack.c.l.b16 %v2738
    %v2803 = vunpack.c.h.b16 %v2738
    %v2804 = vunpack.c.l.b16 %v2739
    %v2805 = vunpack.c.h.b16 %v2739
    %v2806 = vunpack.c.l.b16 %v2740
    %v2807 = vunpack.c.h.b16 %v2740
    %v2808 = vunpack.c.l.b16 %v2741
    %v2809 = vunpack.c.h.b16 %v2741
    %v2810 = vunpack.c.l.b16 %v2742
    %v2811 = vunpack.c.h.b16 %v2742
    %v2812 = vunpack.c.l.b16 %v2743
    %v2813 = vunpack.c.h.b16 %v2743
    %v2814 = vunpack.c.l.b16 %v2744
    %v2815 = vunpack.c.h.b16 %v2744
    %v2816 = vunpack.c.l.b16 %v2745
    %v2817 = vunpack.c.h.b16 %v2745
    %v2818 = vunpack.c.l.b16 %v2746
    %v2819 = vunpack.c.h.b16 %v2746
    %v2820 = vunpack.c.l.b16 %v2747
    %v2821 = vunpack.c.h.b16 %v2747
    %v2822 = vunpack.c.l.b16 %v2748
    %v2823 = vunpack.c.h.b16 %v2748
    %v2824 = vunpack.c.l.b16 %v2749
    %v2825 = vunpack.c.h.b16 %v2749
    %v2826 = vunpack.c.l.b16 %v2750
    %v2827 = vunpack.c.h.b16 %v2750
    %v2828 = vunpack.c.l.b16 %v2751
    %v2829 = vunpack.c.h.b16 %v2751
    %v2830 = vunpack.c.l.b16 %v2752
    %v2831 = vunpack.c.h.b16 %v2752
    %v2832 = vunpack.c.l.b16 %v2753
    %v2833 = vunpack.c.h.b16 %v2753
    %v2834 = vunpack.c.l.b16 %v2754
    %v2835 = vunpack.c.h.b16 %v2754
    %v2836 = vunpack.c.l.b16 %v2755
    %v2837 = vunpack.c.h.b16 %v2755
    %v2838 = vunpack.c.l.b16 %v2756
    %v2839 = vunpack.c.h.b16 %v2756
    %v2840 = vunpack.c.l.b16 %v2757
    %v2841 = vunpack.c.h.b16 %v2757
    %v2842 = vunpack.c.l.b16 %v2758
    %v2843 = vunpack.c.h.b16 %v2758
    %v2844 = vunpack.c.l.b16 %v2759
    %v2845 = vunpack.c.h.b16 %v2759
    %v2846 = vunpack.c.l.b16 %v2760
    %v2847 = vunpack.c.h.b16 %v2760
    %v2848 = vunpack.c.l.b16 %v2761
    %v2849 = vunpack.c.h.b16 %v2761
    %v2850 = vunpack.c.l.b16 %v2762
    %v2851 = vunpack.c.h.b16 %v2762
    %v2852 = vunpack.c.l.b16 %v2763
    %v2853 = vunpack.c.h.b16 %v2763
    %v2854 = vunpack.c.l.b16 %v2764
    %v2855 = vunpack.c.h.b16 %v2764
    %v2856 = vunpack.c.l.b16 %v2765
    %v2857 = vunpack.c.h.b16 %v2765
    %v2858 = vunpack.c.l.b16 %v2766
    %v2859 = vunpack.c.h.b16 %v2766
    %v2860 = vunpack.c.l.b16 %v2767
    %v2861 = vunpack.c.h.b16 %v2767
    %v2862 = vunpack.c.l.b16 %v2768
    %v2863 = vunpack.c.h.b16 %v2768
    %v2864 = vunpack.c.l.b16 %v2769
    %v2865 = vunpack.c.h.b16 %v2769
    %v2866 = vpack.c.b16 %v2806, %v2802
    %v2867 = vpack.c.b16 %v2807, %v2803
    %v2868 = vpack.c.b16 %v2808, %v2804
    %v2869 = vpack.c.b16 %v2809, %v2805
    %v2870 = vpack.c.b16 %v2814, %v2810
    %v2871 = vpack.c.b16 %v2815, %v2811
    %v2872 = vpack.c.b16 %v2816, %v2812
    %v2873 = vpack.c.b16 %v2817, %v2813
    %v2874 = vpack.c.b16 %v2822, %v2818
    %v2875 = vpack.c.b16 %v2823, %v2819
    %v2876 = vpack.c.b16 %v2824, %v2820
    %v2877 = vpack.c.b16 %v2825, %v2821
    %v2878 = vpack.c.b16 %v2830, %v2826
    %v2879 = vpack.c.b16 %v2831, %v2827
    %v2880 = vpack.c.b16 %v2832, %v2828
    %v2881 = vpack.c.b16 %v2833, %v2829
    %v2882 = vpack.c.b16 %v2838, %v2834
    %v2883 = vpack.c.b16 %v2839, %v2835
    %v2884 = vpack.c.b16 %v2840, %v2836
    %v2885 = vpack.c.b16 %v2841, %v2837
    %v2886 = vpack.c.b16 %v2846, %v2842
    %v2887 = vpack.c.b16 %v2847, %v2843
    %v2888 = vpack.c.b16 %v2848, %v2844
    %v2889 = vpack.c.b16 %v2849, %v2845
    %v2890 = vpack.c.b16 %v2854, %v2850
    %v2891 = vpack.c.b16 %v2855, %v2851
    %v2892 = vpack.c.b16 %v2856, %v2852
    %v2893 = vpack.c.b16 %v2857, %v2853
    %v2894 = vpack.c.b16 %v2862, %v2858
    %v2895 = vpack.c.b16 %v2863, %v2859
    %v2896 = vpack.c.b16 %v2864, %v2860
    %v2897 = vpack.c.b16 %v2865, %v2861
    %2930 = vmatprep.subr.bf16.mxu0 %v2867
    %2931 = vmatpush1.bf16.msra.mxu0 %v2866
    %2932 = vmatprep.subr.bf16.mxu0 %v2871
    %2933 = vmatpush1.bf16.msra.mxu0 %v2870
    %2934 = vmatprep.subr.bf16.mxu0 %v2875
    %2935 = vmatpush1.bf16.msra.mxu0 %v2874
    %2936 = vmatprep.subr.bf16.mxu0 %v2879
    %2937 = vmatpush1.bf16.msra.mxu0 %v2878
    %2938 = vmatprep.subr.bf16.mxu0 %v2883
    %2939 = vmatpush1.bf16.msra.mxu0 %v2882
    %2940 = vmatprep.subr.bf16.mxu0 %v2887
    %2941 = vmatpush1.bf16.msra.mxu0 %v2886
    %2942 = vmatprep.subr.bf16.mxu0 %v2891
    %2943 = vmatpush1.bf16.msra.mxu0 %v2890
    %2944 = vmatprep.subr.bf16.mxu0 %v2895
    %2945 = vmatpush1.bf16.msra.mxu0 %v2894
    %2946 = vmatprep.subr.bf16.mxu0 0
    %2947 = vmatpush1.bf16.msra.mxu0 0
    %2948 = vmatprep.subr.bf16.mxu0 0
    %2949 = vmatpush1.bf16.msra.mxu0 0
    %2950 = vmatprep.subr.bf16.mxu0 0
    %2951 = vmatpush1.bf16.msra.mxu0 0
    %2952 = vmatprep.subr.bf16.mxu0 0
    %2953 = vmatpush1.bf16.msra.mxu0 0
    %2954 = vmatprep.subr.bf16.mxu0 0
    %2955 = vmatpush1.bf16.msra.mxu0 0
    %2956 = vmatprep.subr.bf16.mxu0 0
    %2957 = vmatpush1.bf16.msra.mxu0 0
    %2958 = vmatprep.subr.bf16.mxu0 0
    %2959 = vmatpush1.bf16.msra.mxu0 0
    %2960 = vmatprep.subr.bf16.mxu0 0
    %2961 = vmatpush1.bf16.msra.mxu0 0
    %2962 = vmatprep.mubr.bf16.mxu0 0
    %2963 = vmatmul.mubr.bf16.gmra.mrb[0].mxu0 %v2730
    %v2964 = vpop.f32.mrb[0].mxu0
    %v2965 = vadd.f32 0.0, %v2964
    %v2966 = vpop.f32.mrb[0].mxu0
    %v2967 = vadd.f32 0.0, %v2966
    %v2968 = vpop.f32.mrb[0].mxu0
    %v2969 = vpop.f32.mrb[0].mxu0
    %2970 = vdwg.mxu0
    %2971 = vmatprep.subr.bf16.mxu0 %v2869
    %2972 = vmatpush1.bf16.msra.mxu0 %v2868
    %2973 = vmatprep.subr.bf16.mxu0 %v2873
    %2974 = vmatpush1.bf16.msra.mxu0 %v2872
    %2975 = vmatprep.subr.bf16.mxu0 %v2877
    %2976 = vmatpush1.bf16.msra.mxu0 %v2876
    %2977 = vmatprep.subr.bf16.mxu0 %v2881
    %2978 = vmatpush1.bf16.msra.mxu0 %v2880
    %2979 = vmatprep.subr.bf16.mxu0 %v2885
    %2980 = vmatpush1.bf16.msra.mxu0 %v2884
    %2981 = vmatprep.subr.bf16.mxu0 %v2889
    %2982 = vmatpush1.bf16.msra.mxu0 %v2888
    %2983 = vmatprep.subr.bf16.mxu0 %v2893
    %2984 = vmatpush1.bf16.msra.mxu0 %v2892
    %2985 = vmatprep.subr.bf16.mxu0 %v2897
    %2986 = vmatpush1.bf16.msra.mxu0 %v2896
    %2987 = vmatprep.subr.bf16.mxu0 0
    %2988 = vmatpush1.bf16.msra.mxu0 0
    %2989 = vmatprep.subr.bf16.mxu0 0
    %2990 = vmatpush1.bf16.msra.mxu0 0
    %2991 = vmatprep.subr.bf16.mxu0 0
    %2992 = vmatpush1.bf16.msra.mxu0 0
    %2993 = vmatprep.subr.bf16.mxu0 0
    %2994 = vmatpush1.bf16.msra.mxu0 0
    %2995 = vmatprep.subr.bf16.mxu0 0
    %2996 = vmatpush1.bf16.msra.mxu0 0
    %2997 = vmatprep.subr.bf16.mxu0 0
    %2998 = vmatpush1.bf16.msra.mxu0 0
    %2999 = vmatprep.subr.bf16.mxu0 0
    %3000 = vmatpush1.bf16.msra.mxu0 0
    %3001 = vmatprep.subr.bf16.mxu0 0
    %3002 = vmatpush1.bf16.msra.mxu0 0
    %3003 = vmatprep.mubr.bf16.mxu0 0
    %3004 = vmatmul.mubr.bf16.gmra.mrb[0].mxu0 %v2730
    %v3005 = vpop.f32.mrb[0].mxu0
    %v3006 = vadd.f32 0.0, %v3005
    %v3007 = vpop.f32.mrb[0].mxu0
    %v3008 = vadd.f32 0.0, %v3007
    %v3009 = vpop.f32.mrb[0].mxu0
    %v3010 = vpop.f32.mrb[0].mxu0
    %3011 = vdwg.mxu0
    %v3012 = vadd.f32 %v2734, %v2965
    %v3013 = vadd.f32 %v2735, %v2967
    %v3014 = vadd.f32 %v2736, %v3006
    %v3015 = vadd.f32 %v2737, %v3008
    %v3016 = vxor.u32 %v3012, 2147483648
    %v3017 = vxor.u32 %v3013, 2147483648
    %v3018 = vxor.u32 %v3014, 2147483648
    %v3019 = vxor.u32 %v3015, 2147483648
    %v3020 = vmul.f32 %v3016, 1.442695
    %v3021 = vpow.pop %v3020
    %v3022 = vmul.f32 %v3017, 1.442695
    %v3023 = vpow.pop %v3022
    %v3024 = vmul.f32 %v3018, 1.442695
    %v3025 = vpow.pop %v3024
    %v3026 = vmul.f32 %v3019, 1.442695
    %v3027 = vpow.pop %v3026
    %v3028 = vadd.f32 %v3021, 1.0
    %v3029 = vadd.f32 %v3023, 1.0
    %v3030 = vadd.f32 %v3025, 1.0
    %v3031 = vadd.f32 %v3027, 1.0
    %v3032 = vrcp.pop %v3028
    %v3033 = vmul.f32 1.0, %v3032
    %v3034 = vrcp.pop %v3029
    %v3035 = vmul.f32 1.0, %v3034
    %v3036 = vrcp.pop %v3030
    %v3037 = vmul.f32 1.0, %v3036
    %v3038 = vrcp.pop %v3031
    %v3039 = vmul.f32 1.0, %v3038
    %v3040 = vmul.f32 %v3037, 2.0
    %v3041 = vsub.f32 %v3040, 1.0
    %v3042 = vmul.f32 %v3035, %v2727
    %v3043 = vmul.f32 %v3033, %v3041
    %v3044 = vadd.f32 %v3042, %v3043
    %v3045 = vtanh.pop %v3044
    %v3046 = vmul.f32 %v3039, %v3045
    %v3047 = vpack.c.bf16 %v3046, %v3046
    %s3048 = scalar_lea.vmem [#allocation3], 28
    %3049 = vst [vmem:[%s3048] sm:$0xf] %v3047
    %3050 = vst [vmem:[#allocation13] sm:$0xff] %v3046
    %3051 = vst [vmem:[#allocation15] sm:$0xff] %v3044
    %v3052 = vld [vmem:[#allocation3] sm:$0xf]
    %v3053 = vld [vmem:[#allocation3 + $0x4] sm:$0xf]
    %v3054 = vld [vmem:[#allocation3 + $0x8] sm:$0xf]
    %v3055 = vld [vmem:[#allocation3 + $0xc] sm:$0xf]
    %v3056 = vld [vmem:[#allocation3 + $0x10] sm:$0xf]
    %v3057 = vld [vmem:[#allocation3 + $0x14] sm:$0xf]
    %v3058 = vld [vmem:[#allocation3 + $0x18] sm:$0xf]
    %v3059 = vld [vmem:[#allocation3 + $0x1c] sm:$0xf]
    %v3060 = vld [vmem:[#allocation9] sm:$0xff]
    %v3061 = vld [vmem:[#allocation9 + $0x8] sm:$0xff]
    %v3062 = vld [vmem:[#allocation9 + $0x10] sm:$0xff]
    %v3063 = vld [vmem:[#allocation9 + $0x18] sm:$0xff]
    %v3064 = vld [vmem:[#allocation9 + $0x20] sm:$0xff]
    %v3065 = vld [vmem:[#allocation9 + $0x28] sm:$0xff]
    %v3066 = vld [vmem:[#allocation9 + $0x30] sm:$0xff]
    %v3067 = vld [vmem:[#allocation9 + $0x38] sm:$0xff]
    %v3068 = vld [vmem:[#allocation9 + $0x40] sm:$0xff]
    %v3069 = vld [vmem:[#allocation9 + $0x48] sm:$0xff]
    %v3070 = vld [vmem:[#allocation9 + $0x50] sm:$0xff]
    %v3071 = vld [vmem:[#allocation9 + $0x58] sm:$0xff]
    %v3072 = vld [vmem:[#allocation9 + $0x60] sm:$0xff]
    %v3073 = vld [vmem:[#allocation9 + $0x68] sm:$0xff]
    %v3074 = vld [vmem:[#allocation9 + $0x70] sm:$0xff]
    %v3075 = vld [vmem:[#allocation9 + $0x78] sm:$0xff]
    %v3076 = vld [vmem:[#allocation9 + $0x80] sm:$0xff]
    %v3077 = vld [vmem:[#allocation9 + $0x88] sm:$0xff]
    %v3078 = vld [vmem:[#allocation9 + $0x90] sm:$0xff]
    %v3079 = vld [vmem:[#allocation9 + $0x98] sm:$0xff]
    %v3080 = vld [vmem:[#allocation9 + $0xa0] sm:$0xff]
    %v3081 = vld [vmem:[#allocation9 + $0xa8] sm:$0xff]
    %v3082 = vld [vmem:[#allocation9 + $0xb0] sm:$0xff]
    %v3083 = vld [vmem:[#allocation9 + $0xb8] sm:$0xff]
    %v3084 = vld [vmem:[#allocation9 + $0xc0] sm:$0xff]
    %v3085 = vld [vmem:[#allocation9 + $0xc8] sm:$0xff]
    %v3086 = vld [vmem:[#allocation9 + $0xd0] sm:$0xff]
    %v3087 = vld [vmem:[#allocation9 + $0xd8] sm:$0xff]
    %v3088 = vld [vmem:[#allocation9 + $0xe0] sm:$0xff]
    %v3089 = vld [vmem:[#allocation9 + $0xe8] sm:$0xff]
    %v3090 = vld [vmem:[#allocation9 + $0xf0] sm:$0xff]
    %v3091 = vld [vmem:[#allocation9 + $0xf8] sm:$0xff]
    %s3092 = scalar_lea.vmem %s4, 4
    %v3093 = vld [vmem:[%s3092] sm:$0xf]
    %v3095 = vlaneseq
    %v3096 = vshrl.u32 %v3095, 7
    %v3097 = vsub.s32 0, %v3096
    %v3098 = vrot.slane %v3093, %v3097
    %v3099 = vlaneseq
    %v3100 = vshrl.u32 %v3099, 7
    %v3101 = vsub.s32 1, %v3100
    %v3102 = vrot.slane %v3093, %v3101
    %v3103 = vlaneseq
    %v3104 = vshrl.u32 %v3103, 7
    %v3105 = vsub.s32 2, %v3104
    %v3106 = vrot.slane %v3093, %v3105
    %v3107 = vlaneseq
    %v3108 = vshrl.u32 %v3107, 7
    %v3109 = vsub.s32 3, %v3108
    %v3110 = vrot.slane %v3093, %v3109
    %v3123 = vunpack.c.l.b16 %v3052
    %v3124 = vunpack.c.l.b16 %v3053
    %v3125 = vunpack.c.l.b16 %v3054
    %v3126 = vunpack.c.l.b16 %v3055
    %v3127 = vunpack.c.l.b16 %v3056
    %v3128 = vunpack.c.l.b16 %v3057
    %v3129 = vunpack.c.l.b16 %v3058
    %v3130 = vunpack.c.l.b16 %v3059
    %v3131 = vpack.c.b16 %v3124, %v3123
    %v3132 = vpack.c.b16 %v3126, %v3125
    %v3133 = vpack.c.b16 %v3128, %v3127
    %v3134 = vpack.c.b16 %v3130, %v3129
    %v3171 = vunpack.c.l.b16 %v3060
    %v3172 = vunpack.c.h.b16 %v3060
    %v3173 = vunpack.c.l.b16 %v3061
    %v3174 = vunpack.c.h.b16 %v3061
    %v3175 = vunpack.c.l.b16 %v3062
    %v3176 = vunpack.c.h.b16 %v3062
    %v3177 = vunpack.c.l.b16 %v3063
    %v3178 = vunpack.c.h.b16 %v3063
    %v3179 = vunpack.c.l.b16 %v3064
    %v3180 = vunpack.c.h.b16 %v3064
    %v3181 = vunpack.c.l.b16 %v3065
    %v3182 = vunpack.c.h.b16 %v3065
    %v3183 = vunpack.c.l.b16 %v3066
    %v3184 = vunpack.c.h.b16 %v3066
    %v3185 = vunpack.c.l.b16 %v3067
    %v3186 = vunpack.c.h.b16 %v3067
    %v3187 = vunpack.c.l.b16 %v3068
    %v3188 = vunpack.c.h.b16 %v3068
    %v3189 = vunpack.c.l.b16 %v3069
    %v3190 = vunpack.c.h.b16 %v3069
    %v3191 = vunpack.c.l.b16 %v3070
    %v3192 = vunpack.c.h.b16 %v3070
    %v3193 = vunpack.c.l.b16 %v3071
    %v3194 = vunpack.c.h.b16 %v3071
    %v3195 = vunpack.c.l.b16 %v3072
    %v3196 = vunpack.c.h.b16 %v3072
    %v3197 = vunpack.c.l.b16 %v3073
    %v3198 = vunpack.c.h.b16 %v3073
    %v3199 = vunpack.c.l.b16 %v3074
    %v3200 = vunpack.c.h.b16 %v3074
    %v3201 = vunpack.c.l.b16 %v3075
    %v3202 = vunpack.c.h.b16 %v3075
    %v3203 = vunpack.c.l.b16 %v3076
    %v3204 = vunpack.c.h.b16 %v3076
    %v3205 = vunpack.c.l.b16 %v3077
    %v3206 = vunpack.c.h.b16 %v3077
    %v3207 = vunpack.c.l.b16 %v3078
    %v3208 = vunpack.c.h.b16 %v3078
    %v3209 = vunpack.c.l.b16 %v3079
    %v3210 = vunpack.c.h.b16 %v3079
    %v3211 = vunpack.c.l.b16 %v3080
    %v3212 = vunpack.c.h.b16 %v3080
    %v3213 = vunpack.c.l.b16 %v3081
    %v3214 = vunpack.c.h.b16 %v3081
    %v3215 = vunpack.c.l.b16 %v3082
    %v3216 = vunpack.c.h.b16 %v3082
    %v3217 = vunpack.c.l.b16 %v3083
    %v3218 = vunpack.c.h.b16 %v3083
    %v3219 = vunpack.c.l.b16 %v3084
    %v3220 = vunpack.c.h.b16 %v3084
    %v3221 = vunpack.c.l.b16 %v3085
    %v3222 = vunpack.c.h.b16 %v3085
    %v3223 = vunpack.c.l.b16 %v3086
    %v3224 = vunpack.c.h.b16 %v3086
    %v3225 = vunpack.c.l.b16 %v3087
    %v3226 = vunpack.c.h.b16 %v3087
    %v3227 = vunpack.c.l.b16 %v3088
    %v3228 = vunpack.c.h.b16 %v3088
    %v3229 = vunpack.c.l.b16 %v3089
    %v3230 = vunpack.c.h.b16 %v3089
    %v3231 = vunpack.c.l.b16 %v3090
    %v3232 = vunpack.c.h.b16 %v3090
    %v3233 = vunpack.c.l.b16 %v3091
    %v3234 = vunpack.c.h.b16 %v3091
    %v3235 = vpack.c.b16 %v3175, %v3171
    %v3236 = vpack.c.b16 %v3176, %v3172
    %v3237 = vpack.c.b16 %v3177, %v3173
    %v3238 = vpack.c.b16 %v3178, %v3174
    %v3239 = vpack.c.b16 %v3183, %v3179
    %v3240 = vpack.c.b16 %v3184, %v3180
    %v3241 = vpack.c.b16 %v3185, %v3181
    %v3242 = vpack.c.b16 %v3186, %v3182
    %v3243 = vpack.c.b16 %v3191, %v3187
    %v3244 = vpack.c.b16 %v3192, %v3188
    %v3245 = vpack.c.b16 %v3193, %v3189
    %v3246 = vpack.c.b16 %v3194, %v3190
    %v3247 = vpack.c.b16 %v3199, %v3195
    %v3248 = vpack.c.b16 %v3200, %v3196
    %v3249 = vpack.c.b16 %v3201, %v3197
    %v3250 = vpack.c.b16 %v3202, %v3198
    %v3251 = vpack.c.b16 %v3207, %v3203
    %v3252 = vpack.c.b16 %v3208, %v3204
    %v3253 = vpack.c.b16 %v3209, %v3205
    %v3254 = vpack.c.b16 %v3210, %v3206
    %v3255 = vpack.c.b16 %v3215, %v3211
    %v3256 = vpack.c.b16 %v3216, %v3212
    %v3257 = vpack.c.b16 %v3217, %v3213
    %v3258 = vpack.c.b16 %v3218, %v3214
    %v3259 = vpack.c.b16 %v3223, %v3219
    %v3260 = vpack.c.b16 %v3224, %v3220
    %v3261 = vpack.c.b16 %v3225, %v3221
    %v3262 = vpack.c.b16 %v3226, %v3222
    %v3263 = vpack.c.b16 %v3231, %v3227
    %v3264 = vpack.c.b16 %v3232, %v3228
    %v3265 = vpack.c.b16 %v3233, %v3229
    %v3266 = vpack.c.b16 %v3234, %v3230
    %3299 = vmatprep.subr.bf16.mxu0 %v3236
    %3300 = vmatpush1.bf16.msra.mxu0 %v3235
    %3301 = vmatprep.subr.bf16.mxu0 %v3240
    %3302 = vmatpush1.bf16.msra.mxu0 %v3239
    %3303 = vmatprep.subr.bf16.mxu0 %v3244
    %3304 = vmatpush1.bf16.msra.mxu0 %v3243
    %3305 = vmatprep.subr.bf16.mxu0 %v3248
    %3306 = vmatpush1.bf16.msra.mxu0 %v3247
    %3307 = vmatprep.subr.bf16.mxu0 %v3252
    %3308 = vmatpush1.bf16.msra.mxu0 %v3251
    %3309 = vmatprep.subr.bf16.mxu0 %v3256
    %3310 = vmatpush1.bf16.msra.mxu0 %v3255
    %3311 = vmatprep.subr.bf16.mxu0 %v3260
    %3312 = vmatpush1.bf16.msra.mxu0 %v3259
    %3313 = vmatprep.subr.bf16.mxu0 %v3264
    %3314 = vmatpush1.bf16.msra.mxu0 %v3263
    %3315 = vmatprep.subr.bf16.mxu0 0
    %3316 = vmatpush1.bf16.msra.mxu0 0
    %3317 = vmatprep.subr.bf16.mxu0 0
    %3318 = vmatpush1.bf16.msra.mxu0 0
    %3319 = vmatprep.subr.bf16.mxu0 0
    %3320 = vmatpush1.bf16.msra.mxu0 0
    %3321 = vmatprep.subr.bf16.mxu0 0
    %3322 = vmatpush1.bf16.msra.mxu0 0
    %3323 = vmatprep.subr.bf16.mxu0 0
    %3324 = vmatpush1.bf16.msra.mxu0 0
    %3325 = vmatprep.subr.bf16.mxu0 0
    %3326 = vmatpush1.bf16.msra.mxu0 0
    %3327 = vmatprep.subr.bf16.mxu0 0
    %3328 = vmatpush1.bf16.msra.mxu0 0
    %3329 = vmatprep.subr.bf16.mxu0 0
    %3330 = vmatpush1.bf16.msra.mxu0 0
    %3331 = vmatprep.mubr.bf16.mxu0 0
    %3332 = vmatmul.mubr.bf16.gmra.mrb[0].mxu0 %v3131
    %v3333 = vpop.f32.mrb[0].mxu0
    %v3334 = vadd.f32 %v3098, %v3333
    %v3335 = vpop.f32.mrb[0].mxu0
    %v3336 = vadd.f32 %v3102, %v3335
    %v3337 = vpop.f32.mrb[0].mxu0
    %v3338 = vadd.f32 %v3098, %v3337
    %v3339 = vpop.f32.mrb[0].mxu0
    %v3340 = vadd.f32 %v3102, %v3339
    %3341 = vmatprep.mubr.bf16.mxu0 0
    %3342 = vmatmul.mubr.bf16.gmra.mrb[0].mxu0 %v3132
    %v3343 = vpop.f32.mrb[0].mxu0
    %v3344 = vadd.f32 %v3098, %v3343
    %v3345 = vpop.f32.mrb[0].mxu0
    %v3346 = vadd.f32 %v3102, %v3345
    %v3347 = vpop.f32.mrb[0].mxu0
    %v3348 = vadd.f32 %v3098, %v3347
    %v3349 = vpop.f32.mrb[0].mxu0
    %v3350 = vadd.f32 %v3102, %v3349
    %3351 = vmatprep.mubr.bf16.mxu0 0
    %3352 = vmatmul.mubr.bf16.gmra.mrb[0].mxu0 %v3133
    %v3353 = vpop.f32.mrb[0].mxu0
    %v3354 = vadd.f32 %v3098, %v3353
    %v3355 = vpop.f32.mrb[0].mxu0
    %v3356 = vadd.f32 %v3102, %v3355
    %v3357 = vpop.f32.mrb[0].mxu0
    %v3358 = vadd.f32 %v3098, %v3357
    %v3359 = vpop.f32.mrb[0].mxu0
    %v3360 = vadd.f32 %v3102, %v3359
    %3361 = vmatprep.mubr.bf16.mxu0 0
    %3362 = vmatmul.mubr.bf16.gmra.mrb[0].mxu0 %v3134
    %v3363 = vpop.f32.mrb[0].mxu0
    %v3364 = vadd.f32 %v3098, %v3363
    %v3365 = vpop.f32.mrb[0].mxu0
    %v3366 = vadd.f32 %v3102, %v3365
    %v3367 = vpop.f32.mrb[0].mxu0
    %v3368 = vadd.f32 %v3098, %v3367
    %v3369 = vpop.f32.mrb[0].mxu0
    %v3370 = vadd.f32 %v3102, %v3369
    %3371 = vdwg.mxu0
    %3372 = vmatprep.subr.bf16.mxu0 %v3238
    %3373 = vmatpush1.bf16.msra.mxu0 %v3237
    %3374 = vmatprep.subr.bf16.mxu0 %v3242
    %3375 = vmatpush1.bf16.msra.mxu0 %v3241
    %3376 = vmatprep.subr.bf16.mxu0 %v3246
    %3377 = vmatpush1.bf16.msra.mxu0 %v3245
    %3378 = vmatprep.subr.bf16.mxu0 %v3250
    %3379 = vmatpush1.bf16.msra.mxu0 %v3249
    %3380 = vmatprep.subr.bf16.mxu0 %v3254
    %3381 = vmatpush1.bf16.msra.mxu0 %v3253
    %3382 = vmatprep.subr.bf16.mxu0 %v3258
    %3383 = vmatpush1.bf16.msra.mxu0 %v3257
    %3384 = vmatprep.subr.bf16.mxu0 %v3262
    %3385 = vmatpush1.bf16.msra.mxu0 %v3261
    %3386 = vmatprep.subr.bf16.mxu0 %v3266
    %3387 = vmatpush1.bf16.msra.mxu0 %v3265
    %3388 = vmatprep.subr.bf16.mxu0 0
    %3389 = vmatpush1.bf16.msra.mxu0 0
    %3390 = vmatprep.subr.bf16.mxu0 0
    %3391 = vmatpush1.bf16.msra.mxu0 0
    %3392 = vmatprep.subr.bf16.mxu0 0
    %3393 = vmatpush1.bf16.msra.mxu0 0
    %3394 = vmatprep.subr.bf16.mxu0 0
    %3395 = vmatpush1.bf16.msra.mxu0 0
    %3396 = vmatprep.subr.bf16.mxu0 0
    %3397 = vmatpush1.bf16.msra.mxu0 0
    %3398 = vmatprep.subr.bf16.mxu0 0
    %3399 = vmatpush1.bf16.msra.mxu0 0
    %3400 = vmatprep.subr.bf16.mxu0 0
    %3401 = vmatpush1.bf16.msra.mxu0 0
    %3402 = vmatprep.subr.bf16.mxu0 0
    %3403 = vmatpush1.bf16.msra.mxu0 0
    %3404 = vmatprep.mubr.bf16.mxu0 0
    %3405 = vmatmul.mubr.bf16.gmra.mrb[0].mxu0 %v3131
    %v3406 = vpop.f32.mrb[0].mxu0
    %v3407 = vadd.f32 %v3106, %v3406
    %v3408 = vpop.f32.mrb[0].mxu0
    %v3409 = vadd.f32 %v3110, %v3408
    %v3410 = vpop.f32.mrb[0].mxu0
    %v3411 = vadd.f32 %v3106, %v3410
    %v3412 = vpop.f32.mrb[0].mxu0
    %v3413 = vadd.f32 %v3110, %v3412
    %3414 = vmatprep.mubr.bf16.mxu0 0
    %3415 = vmatmul.mubr.bf16.gmra.mrb[0].mxu0 %v3132
    %v3416 = vpop.f32.mrb[0].mxu0
    %v3417 = vadd.f32 %v3106, %v3416
    %v3418 = vpop.f32.mrb[0].mxu0
    %v3419 = vadd.f32 %v3110, %v3418
    %v3420 = vpop.f32.mrb[0].mxu0
    %v3421 = vadd.f32 %v3106, %v3420
    %v3422 = vpop.f32.mrb[0].mxu0
    %v3423 = vadd.f32 %v3110, %v3422
    %3424 = vmatprep.mubr.bf16.mxu0 0
    %3425 = vmatmul.mubr.bf16.gmra.mrb[0].mxu0 %v3133
    %v3426 = vpop.f32.mrb[0].mxu0
    %v3427 = vadd.f32 %v3106, %v3426
    %v3428 = vpop.f32.mrb[0].mxu0
    %v3429 = vadd.f32 %v3110, %v3428
    %v3430 = vpop.f32.mrb[0].mxu0
    %v3431 = vadd.f32 %v3106, %v3430
    %v3432 = vpop.f32.mrb[0].mxu0
    %v3433 = vadd.f32 %v3110, %v3432
    %3434 = vmatprep.mubr.bf16.mxu0 0
    %3435 = vmatmul.mubr.bf16.gmra.mrb[0].mxu0 %v3134
    %v3436 = vpop.f32.mrb[0].mxu0
    %v3437 = vadd.f32 %v3106, %v3436
    %v3438 = vpop.f32.mrb[0].mxu0
    %v3439 = vadd.f32 %v3110, %v3438
    %v3440 = vpop.f32.mrb[0].mxu0
    %v3441 = vadd.f32 %v3106, %v3440
    %v3442 = vpop.f32.mrb[0].mxu0
    %v3443 = vadd.f32 %v3110, %v3442
    %3444 = vdwg.mxu0
    %3445 = vst [vmem:[#allocation2] sm:$0xff] %v3334
    %3446 = vst [vmem:[#allocation2 + $0x8] sm:$0xff] %v3336
    %3447 = vst [vmem:[#allocation2 + $0x10] sm:$0xff] %v3407
    %3448 = vst [vmem:[#allocation2 + $0x18] sm:$0xff] %v3409
    %3449 = vst [vmem:[#allocation2 + $0x20] sm:$0xff] %v3338
    %3450 = vst [vmem:[#allocation2 + $0x28] sm:$0xff] %v3340
    %3451 = vst [vmem:[#allocation2 + $0x30] sm:$0xff] %v3411
    %3452 = vst [vmem:[#allocation2 + $0x38] sm:$0xff] %v3413
    %3453 = vst [vmem:[#allocation2 + $0x40] sm:$0xff] %v3344
    %3454 = vst [vmem:[#allocation2 + $0x48] sm:$0xff] %v3346
    %3455 = vst [vmem:[#allocation2 + $0x50] sm:$0xff] %v3417
    %3456 = vst [vmem:[#allocation2 + $0x58] sm:$0xff] %v3419
    %3457 = vst [vmem:[#allocation2 + $0x60] sm:$0xff] %v3348
    %3458 = vst [vmem:[#allocation2 + $0x68] sm:$0xff] %v3350
    %3459 = vst [vmem:[#allocation2 + $0x70] sm:$0xff] %v3421
    %3460 = vst [vmem:[#allocation2 + $0x78] sm:$0xff] %v3423
    %3461 = vst [vmem:[#allocation2 + $0x80] sm:$0xff] %v3354
    %3462 = vst [vmem:[#allocation2 + $0x88] sm:$0xff] %v3356
    %3463 = vst [vmem:[#allocation2 + $0x90] sm:$0xff] %v3427
    %3464 = vst [vmem:[#allocation2 + $0x98] sm:$0xff] %v3429
    %3465 = vst [vmem:[#allocation2 + $0xa0] sm:$0xff] %v3358
    %3466 = vst [vmem:[#allocation2 + $0xa8] sm:$0xff] %v3360
    %3467 = vst [vmem:[#allocation2 + $0xb0] sm:$0xff] %v3431
    %3468 = vst [vmem:[#allocation2 + $0xb8] sm:$0xff] %v3433
    %3469 = vst [vmem:[#allocation2 + $0xc0] sm:$0xff] %v3364
    %3470 = vst [vmem:[#allocation2 + $0xc8] sm:$0xff] %v3366
    %3471 = vst [vmem:[#allocation2 + $0xd0] sm:$0xff] %v3437
    %3472 = vst [vmem:[#allocation2 + $0xd8] sm:$0xff] %v3439
    %3473 = vst [vmem:[#allocation2 + $0xe0] sm:$0xff] %v3368
    %3474 = vst [vmem:[#allocation2 + $0xe8] sm:$0xff] %v3370
    %3475 = vst [vmem:[#allocation2 + $0xf0] sm:$0xff] %v3441
    %3476 = vst [vmem:[#allocation2 + $0xf8] sm:$0xff] %v3443
    %s3477 = scalar_lea.vmem [#allocation13], 8
    %v3478 = vld [vmem:[%s3477] sm:$0xff]
    %s3479 = scalar_lea.vmem [#allocation15], 8
    %v3480 = vld [vmem:[%s3479] sm:$0xff]
    %v3481 = vld [vmem:[#allocation2] sm:$0xff]
    %v3482 = vld [vmem:[#allocation2 + $0x8] sm:$0xff]
    %v3483 = vld [vmem:[#allocation2 + $0x10] sm:$0xff]
    %v3484 = vld [vmem:[#allocation2 + $0x18] sm:$0xff]
    %v3485 = vpack.c.bf16 %v3478, %v3478
    %s3486 = scalar_lea.vmem [#allocation10], 256
    %v3487 = vld [vmem:[%s3486] sm:$0xff]
    %v3488 = vld [vmem:[%s3486 + $0x8] sm:$0xff]
    %v3489 = vld [vmem:[%s3486 + $0x10] sm:$0xff]
    %v3490 = vld [vmem:[%s3486 + $0x18] sm:$0xff]
    %v3491 = vld [vmem:[%s3486 + $0x20] sm:$0xff]
    %v3492 = vld [vmem:[%s3486 + $0x28] sm:$0xff]
    %v3493 = vld [vmem:[%s3486 + $0x30] sm:$0xff]
    %v3494 = vld [vmem:[%s3486 + $0x38] sm:$0xff]
    %v3495 = vld [vmem:[%s3486 + $0x40] sm:$0xff]
    %v3496 = vld [vmem:[%s3486 + $0x48] sm:$0xff]
    %v3497 = vld [vmem:[%s3486 + $0x50] sm:$0xff]
    %v3498 = vld [vmem:[%s3486 + $0x58] sm:$0xff]
    %v3499 = vld [vmem:[%s3486 + $0x60] sm:$0xff]
    %v3500 = vld [vmem:[%s3486 + $0x68] sm:$0xff]
    %v3501 = vld [vmem:[%s3486 + $0x70] sm:$0xff]
    %v3502 = vld [vmem:[%s3486 + $0x78] sm:$0xff]
    %v3503 = vld [vmem:[%s3486 + $0x80] sm:$0xff]
    %v3504 = vld [vmem:[%s3486 + $0x88] sm:$0xff]
    %v3505 = vld [vmem:[%s3486 + $0x90] sm:$0xff]
    %v3506 = vld [vmem:[%s3486 + $0x98] sm:$0xff]
    %v3507 = vld [vmem:[%s3486 + $0xa0] sm:$0xff]
    %v3508 = vld [vmem:[%s3486 + $0xa8] sm:$0xff]
    %v3509 = vld [vmem:[%s3486 + $0xb0] sm:$0xff]
    %v3510 = vld [vmem:[%s3486 + $0xb8] sm:$0xff]
    %v3511 = vld [vmem:[%s3486 + $0xc0] sm:$0xff]
    %v3512 = vld [vmem:[%s3486 + $0xc8] sm:$0xff]
    %v3513 = vld [vmem:[%s3486 + $0xd0] sm:$0xff]
    %v3514 = vld [vmem:[%s3486 + $0xd8] sm:$0xff]
    %v3515 = vld [vmem:[%s3486 + $0xe0] sm:$0xff]
    %v3516 = vld [vmem:[%s3486 + $0xe8] sm:$0xff]
    %v3517 = vld [vmem:[%s3486 + $0xf0] sm:$0xff]
    %v3518 = vld [vmem:[%s3486 + $0xf8] sm:$0xff]
    %v3551 = vunpack.c.l.b16 %v3487
    %v3552 = vunpack.c.h.b16 %v3487
    %v3553 = vunpack.c.l.b16 %v3488
    %v3554 = vunpack.c.h.b16 %v3488
    %v3555 = vunpack.c.l.b16 %v3489
    %v3556 = vunpack.c.h.b16 %v3489
    %v3557 = vunpack.c.l.b16 %v3490
    %v3558 = vunpack.c.h.b16 %v3490
    %v3559 = vunpack.c.l.b16 %v3491
    %v3560 = vunpack.c.h.b16 %v3491
    %v3561 = vunpack.c.l.b16 %v3492
    %v3562 = vunpack.c.h.b16 %v3492
    %v3563 = vunpack.c.l.b16 %v3493
    %v3564 = vunpack.c.h.b16 %v3493
    %v3565 = vunpack.c.l.b16 %v3494
    %v3566 = vunpack.c.h.b16 %v3494
    %v3567 = vunpack.c.l.b16 %v3495
    %v3568 = vunpack.c.h.b16 %v3495
    %v3569 = vunpack.c.l.b16 %v3496
    %v3570 = vunpack.c.h.b16 %v3496
    %v3571 = vunpack.c.l.b16 %v3497
    %v3572 = vunpack.c.h.b16 %v3497
    %v3573 = vunpack.c.l.b16 %v3498
    %v3574 = vunpack.c.h.b16 %v3498
    %v3575 = vunpack.c.l.b16 %v3499
    %v3576 = vunpack.c.h.b16 %v3499
    %v3577 = vunpack.c.l.b16 %v3500
    %v3578 = vunpack.c.h.b16 %v3500
    %v3579 = vunpack.c.l.b16 %v3501
    %v3580 = vunpack.c.h.b16 %v3501
    %v3581 = vunpack.c.l.b16 %v3502
    %v3582 = vunpack.c.h.b16 %v3502
    %v3583 = vunpack.c.l.b16 %v3503
    %v3584 = vunpack.c.h.b16 %v3503
    %v3585 = vunpack.c.l.b16 %v3504
    %v3586 = vunpack.c.h.b16 %v3504
    %v3587 = vunpack.c.l.b16 %v3505
    %v3588 = vunpack.c.h.b16 %v3505
    %v3589 = vunpack.c.l.b16 %v3506
    %v3590 = vunpack.c.h.b16 %v3506
    %v3591 = vunpack.c.l.b16 %v3507
    %v3592 = vunpack.c.h.b16 %v3507
    %v3593 = vunpack.c.l.b16 %v3508
    %v3594 = vunpack.c.h.b16 %v3508
    %v3595 = vunpack.c.l.b16 %v3509
    %v3596 = vunpack.c.h.b16 %v3509
    %v3597 = vunpack.c.l.b16 %v3510
    %v3598 = vunpack.c.h.b16 %v3510
    %v3599 = vunpack.c.l.b16 %v3511
    %v3600 = vunpack.c.h.b16 %v3511
    %v3601 = vunpack.c.l.b16 %v3512
    %v3602 = vunpack.c.h.b16 %v3512
    %v3603 = vunpack.c.l.b16 %v3513
    %v3604 = vunpack.c.h.b16 %v3513
    %v3605 = vunpack.c.l.b16 %v3514
    %v3606 = vunpack.c.h.b16 %v3514
    %v3607 = vunpack.c.l.b16 %v3515
    %v3608 = vunpack.c.h.b16 %v3515
    %v3609 = vunpack.c.l.b16 %v3516
    %v3610 = vunpack.c.h.b16 %v3516
    %v3611 = vunpack.c.l.b16 %v3517
    %v3612 = vunpack.c.h.b16 %v3517
    %v3613 = vunpack.c.l.b16 %v3518
    %v3614 = vunpack.c.h.b16 %v3518
    %v3615 = vpack.c.b16 %v3555, %v3551
    %v3616 = vpack.c.b16 %v3556, %v3552
    %v3617 = vpack.c.b16 %v3557, %v3553
    %v3618 = vpack.c.b16 %v3558, %v3554
    %v3619 = vpack.c.b16 %v3563, %v3559
    %v3620 = vpack.c.b16 %v3564, %v3560
    %v3621 = vpack.c.b16 %v3565, %v3561
    %v3622 = vpack.c.b16 %v3566, %v3562
    %v3623 = vpack.c.b16 %v3571, %v3567
    %v3624 = vpack.c.b16 %v3572, %v3568
    %v3625 = vpack.c.b16 %v3573, %v3569
    %v3626 = vpack.c.b16 %v3574, %v3570
    %v3627 = vpack.c.b16 %v3579, %v3575
    %v3628 = vpack.c.b16 %v3580, %v3576
    %v3629 = vpack.c.b16 %v3581, %v3577
    %v3630 = vpack.c.b16 %v3582, %v3578
    %v3631 = vpack.c.b16 %v3587, %v3583
    %v3632 = vpack.c.b16 %v3588, %v3584
    %v3633 = vpack.c.b16 %v3589, %v3585
    %v3634 = vpack.c.b16 %v3590, %v3586
    %v3635 = vpack.c.b16 %v3595, %v3591
    %v3636 = vpack.c.b16 %v3596, %v3592
    %v3637 = vpack.c.b16 %v3597, %v3593
    %v3638 = vpack.c.b16 %v3598, %v3594
    %v3639 = vpack.c.b16 %v3603, %v3599
    %v3640 = vpack.c.b16 %v3604, %v3600
    %v3641 = vpack.c.b16 %v3605, %v3601
    %v3642 = vpack.c.b16 %v3606, %v3602
    %v3643 = vpack.c.b16 %v3611, %v3607
    %v3644 = vpack.c.b16 %v3612, %v3608
    %v3645 = vpack.c.b16 %v3613, %v3609
    %v3646 = vpack.c.b16 %v3614, %v3610
    %3679 = vmatprep.subr.bf16.mxu0 %v3616
    %3680 = vmatpush1.bf16.msra.mxu0 %v3615
    %3681 = vmatprep.subr.bf16.mxu0 %v3620
    %3682 = vmatpush1.bf16.msra.mxu0 %v3619
    %3683 = vmatprep.subr.bf16.mxu0 %v3624
    %3684 = vmatpush1.bf16.msra.mxu0 %v3623
    %3685 = vmatprep.subr.bf16.mxu0 %v3628
    %3686 = vmatpush1.bf16.msra.mxu0 %v3627
    %3687 = vmatprep.subr.bf16.mxu0 %v3632
    %3688 = vmatpush1.bf16.msra.mxu0 %v3631
    %3689 = vmatprep.subr.bf16.mxu0 %v3636
    %3690 = vmatpush1.bf16.msra.mxu0 %v3635
    %3691 = vmatprep.subr.bf16.mxu0 %v3640
    %3692 = vmatpush1.bf16.msra.mxu0 %v3639
    %3693 = vmatprep.subr.bf16.mxu0 %v3644
    %3694 = vmatpush1.bf16.msra.mxu0 %v3643
    %3695 = vmatprep.subr.bf16.mxu0 0
    %3696 = vmatpush1.bf16.msra.mxu0 0
    %3697 = vmatprep.subr.bf16.mxu0 0
    %3698 = vmatpush1.bf16.msra.mxu0 0
    %3699 = vmatprep.subr.bf16.mxu0 0
    %3700 = vmatpush1.bf16.msra.mxu0 0
    %3701 = vmatprep.subr.bf16.mxu0 0
    %3702 = vmatpush1.bf16.msra.mxu0 0
    %3703 = vmatprep.subr.bf16.mxu0 0
    %3704 = vmatpush1.bf16.msra.mxu0 0
    %3705 = vmatprep.subr.bf16.mxu0 0
    %3706 = vmatpush1.bf16.msra.mxu0 0
    %3707 = vmatprep.subr.bf16.mxu0 0
    %3708 = vmatpush1.bf16.msra.mxu0 0
    %3709 = vmatprep.subr.bf16.mxu0 0
    %3710 = vmatpush1.bf16.msra.mxu0 0
    %3711 = vmatprep.mubr.bf16.mxu0 0
    %3712 = vmatmul.mubr.bf16.gmra.mrb[0].mxu0 %v3485
    %v3713 = vpop.f32.mrb[0].mxu0
    %v3714 = vadd.f32 0.0, %v3713
    %v3715 = vpop.f32.mrb[0].mxu0
    %v3716 = vadd.f32 0.0, %v3715
    %v3717 = vpop.f32.mrb[0].mxu0
    %v3718 = vpop.f32.mrb[0].mxu0
    %3719 = vdwg.mxu0
    %3720 = vmatprep.subr.bf16.mxu0 %v3618
    %3721 = vmatpush1.bf16.msra.mxu0 %v3617
    %3722 = vmatprep.subr.bf16.mxu0 %v3622
    %3723 = vmatpush1.bf16.msra.mxu0 %v3621
    %3724 = vmatprep.subr.bf16.mxu0 %v3626
    %3725 = vmatpush1.bf16.msra.mxu0 %v3625
    %3726 = vmatprep.subr.bf16.mxu0 %v3630
    %3727 = vmatpush1.bf16.msra.mxu0 %v3629
    %3728 = vmatprep.subr.bf16.mxu0 %v3634
    %3729 = vmatpush1.bf16.msra.mxu0 %v3633
    %3730 = vmatprep.subr.bf16.mxu0 %v3638
    %3731 = vmatpush1.bf16.msra.mxu0 %v3637
    %3732 = vmatprep.subr.bf16.mxu0 %v3642
    %3733 = vmatpush1.bf16.msra.mxu0 %v3641
    %3734 = vmatprep.subr.bf16.mxu0 %v3646
    %3735 = vmatpush1.bf16.msra.mxu0 %v3645
    %3736 = vmatprep.subr.bf16.mxu0 0
    %3737 = vmatpush1.bf16.msra.mxu0 0
    %3738 = vmatprep.subr.bf16.mxu0 0
    %3739 = vmatpush1.bf16.msra.mxu0 0
    %3740 = vmatprep.subr.bf16.mxu0 0
    %3741 = vmatpush1.bf16.msra.mxu0 0
    %3742 = vmatprep.subr.bf16.mxu0 0
    %3743 = vmatpush1.bf16.msra.mxu0 0
    %3744 = vmatprep.subr.bf16.mxu0 0
    %3745 = vmatpush1.bf16.msra.mxu0 0
    %3746 = vmatprep.subr.bf16.mxu0 0
    %3747 = vmatpush1.bf16.msra.mxu0 0
    %3748 = vmatprep.subr.bf16.mxu0 0
    %3749 = vmatpush1.bf16.msra.mxu0 0
    %3750 = vmatprep.subr.bf16.mxu0 0
    %3751 = vmatpush1.bf16.msra.mxu0 0
    %3752 = vmatprep.mubr.bf16.mxu0 0
    %3753 = vmatmul.mubr.bf16.gmra.mrb[0].mxu0 %v3485
    %v3754 = vpop.f32.mrb[0].mxu0
    %v3755 = vadd.f32 0.0, %v3754
    %v3756 = vpop.f32.mrb[0].mxu0
    %v3757 = vadd.f32 0.0, %v3756
    %v3758 = vpop.f32.mrb[0].mxu0
    %v3759 = vpop.f32.mrb[0].mxu0
    %3760 = vdwg.mxu0
    %v3761 = vadd.f32 %v3481, %v3714
    %v3762 = vadd.f32 %v3482, %v3716
    %v3763 = vadd.f32 %v3483, %v3755
    %v3764 = vadd.f32 %v3484, %v3757
    %v3765 = vxor.u32 %v3761, 2147483648
    %v3766 = vxor.u32 %v3762, 2147483648
    %v3767 = vxor.u32 %v3763, 2147483648
    %v3768 = vxor.u32 %v3764, 2147483648
    %v3769 = vmul.f32 %v3765, 1.442695
    %v3770 = vpow.pop %v3769
    %v3771 = vmul.f32 %v3766, 1.442695
    %v3772 = vpow.pop %v3771
    %v3773 = vmul.f32 %v3767, 1.442695
    %v3774 = vpow.pop %v3773
    %v3775 = vmul.f32 %v3768, 1.442695
    %v3776 = vpow.pop %v3775
    %v3777 = vadd.f32 %v3770, 1.0
    %v3778 = vadd.f32 %v3772, 1.0
    %v3779 = vadd.f32 %v3774, 1.0
    %v3780 = vadd.f32 %v3776, 1.0
    %v3781 = vrcp.pop %v3777
    %v3782 = vmul.f32 1.0, %v3781
    %v3783 = vrcp.pop %v3778
    %v3784 = vmul.f32 1.0, %v3783
    %v3785 = vrcp.pop %v3779
    %v3786 = vmul.f32 1.0, %v3785
    %v3787 = vrcp.pop %v3780
    %v3788 = vmul.f32 1.0, %v3787
    %v3789 = vmul.f32 %v3786, 2.0
    %v3790 = vsub.f32 %v3789, 1.0
    %v3791 = vmul.f32 %v3784, %v3480
    %v3792 = vmul.f32 %v3782, %v3790
    %v3793 = vadd.f32 %v3791, %v3792
    %v3794 = vtanh.pop %v3793
    %v3795 = vmul.f32 %v3788, %v3794
    %3796 = vst [vmem:[#allocation12] sm:$0xff] %v3795
    %v3797 = vld [vmem:[%s831] sm:$0xff]
    %v3798 = vld [vmem:[%s831 + $0x8] sm:$0xff]
    %v3799 = vld [vmem:[%s831 + $0x10] sm:$0xff]
    %v3800 = vld [vmem:[%s831 + $0x18] sm:$0xff]
    %v3801 = vpack.c.bf16 %v3795, %v3795
    %v3802 = vld [vmem:[%s3486] sm:$0xff]
    %v3803 = vld [vmem:[%s3486 + $0x8] sm:$0xff]
    %v3804 = vld [vmem:[%s3486 + $0x10] sm:$0xff]
    %v3805 = vld [vmem:[%s3486 + $0x18] sm:$0xff]
    %v3806 = vld [vmem:[%s3486 + $0x20] sm:$0xff]
    %v3807 = vld [vmem:[%s3486 + $0x28] sm:$0xff]
    %v3808 = vld [vmem:[%s3486 + $0x30] sm:$0xff]
    %v3809 = vld [vmem:[%s3486 + $0x38] sm:$0xff]
    %v3810 = vld [vmem:[%s3486 + $0x40] sm:$0xff]
    %v3811 = vld [vmem:[%s3486 + $0x48] sm:$0xff]
    %v3812 = vld [vmem:[%s3486 + $0x50] sm:$0xff]
    %v3813 = vld [vmem:[%s3486 + $0x58] sm:$0xff]
    %v3814 = vld [vmem:[%s3486 + $0x60] sm:$0xff]
    %v3815 = vld [vmem:[%s3486 + $0x68] sm:$0xff]
    %v3816 = vld [vmem:[%s3486 + $0x70] sm:$0xff]
    %v3817 = vld [vmem:[%s3486 + $0x78] sm:$0xff]
    %v3818 = vld [vmem:[%s3486 + $0x80] sm:$0xff]
    %v3819 = vld [vmem:[%s3486 + $0x88] sm:$0xff]
    %v3820 = vld [vmem:[%s3486 + $0x90] sm:$0xff]
    %v3821 = vld [vmem:[%s3486 + $0x98] sm:$0xff]
    %v3822 = vld [vmem:[%s3486 + $0xa0] sm:$0xff]
    %v3823 = vld [vmem:[%s3486 + $0xa8] sm:$0xff]
    %v3824 = vld [vmem:[%s3486 + $0xb0] sm:$0xff]
    %v3825 = vld [vmem:[%s3486 + $0xb8] sm:$0xff]
    %v3826 = vld [vmem:[%s3486 + $0xc0] sm:$0xff]
    %v3827 = vld [vmem:[%s3486 + $0xc8] sm:$0xff]
    %v3828 = vld [vmem:[%s3486 + $0xd0] sm:$0xff]
    %v3829 = vld [vmem:[%s3486 + $0xd8] sm:$0xff]
    %v3830 = vld [vmem:[%s3486 + $0xe0] sm:$0xff]
    %v3831 = vld [vmem:[%s3486 + $0xe8] sm:$0xff]
    %v3832 = vld [vmem:[%s3486 + $0xf0] sm:$0xff]
    %v3833 = vld [vmem:[%s3486 + $0xf8] sm:$0xff]
    %v3866 = vunpack.c.l.b16 %v3802
    %v3867 = vunpack.c.h.b16 %v3802
    %v3868 = vunpack.c.l.b16 %v3803
    %v3869 = vunpack.c.h.b16 %v3803
    %v3870 = vunpack.c.l.b16 %v3804
    %v3871 = vunpack.c.h.b16 %v3804
    %v3872 = vunpack.c.l.b16 %v3805
    %v3873 = vunpack.c.h.b16 %v3805
    %v3874 = vunpack.c.l.b16 %v3806
    %v3875 = vunpack.c.h.b16 %v3806
    %v3876 = vunpack.c.l.b16 %v3807
    %v3877 = vunpack.c.h.b16 %v3807
    %v3878 = vunpack.c.l.b16 %v3808
    %v3879 = vunpack.c.h.b16 %v3808
    %v3880 = vunpack.c.l.b16 %v3809
    %v3881 = vunpack.c.h.b16 %v3809
    %v3882 = vunpack.c.l.b16 %v3810
    %v3883 = vunpack.c.h.b16 %v3810
    %v3884 = vunpack.c.l.b16 %v3811
    %v3885 = vunpack.c.h.b16 %v3811
    %v3886 = vunpack.c.l.b16 %v3812
    %v3887 = vunpack.c.h.b16 %v3812
    %v3888 = vunpack.c.l.b16 %v3813
    %v3889 = vunpack.c.h.b16 %v3813
    %v3890 = vunpack.c.l.b16 %v3814
    %v3891 = vunpack.c.h.b16 %v3814
    %v3892 = vunpack.c.l.b16 %v3815
    %v3893 = vunpack.c.h.b16 %v3815
    %v3894 = vunpack.c.l.b16 %v3816
    %v3895 = vunpack.c.h.b16 %v3816
    %v3896 = vunpack.c.l.b16 %v3817
    %v3897 = vunpack.c.h.b16 %v3817
    %v3898 = vunpack.c.l.b16 %v3818
    %v3899 = vunpack.c.h.b16 %v3818
    %v3900 = vunpack.c.l.b16 %v3819
    %v3901 = vunpack.c.h.b16 %v3819
    %v3902 = vunpack.c.l.b16 %v3820
    %v3903 = vunpack.c.h.b16 %v3820
    %v3904 = vunpack.c.l.b16 %v3821
    %v3905 = vunpack.c.h.b16 %v3821
    %v3906 = vunpack.c.l.b16 %v3822
    %v3907 = vunpack.c.h.b16 %v3822
    %v3908 = vunpack.c.l.b16 %v3823
    %v3909 = vunpack.c.h.b16 %v3823
    %v3910 = vunpack.c.l.b16 %v3824
    %v3911 = vunpack.c.h.b16 %v3824
    %v3912 = vunpack.c.l.b16 %v3825
    %v3913 = vunpack.c.h.b16 %v3825
    %v3914 = vunpack.c.l.b16 %v3826
    %v3915 = vunpack.c.h.b16 %v3826
    %v3916 = vunpack.c.l.b16 %v3827
    %v3917 = vunpack.c.h.b16 %v3827
    %v3918 = vunpack.c.l.b16 %v3828
    %v3919 = vunpack.c.h.b16 %v3828
    %v3920 = vunpack.c.l.b16 %v3829
    %v3921 = vunpack.c.h.b16 %v3829
    %v3922 = vunpack.c.l.b16 %v3830
    %v3923 = vunpack.c.h.b16 %v3830
    %v3924 = vunpack.c.l.b16 %v3831
    %v3925 = vunpack.c.h.b16 %v3831
    %v3926 = vunpack.c.l.b16 %v3832
    %v3927 = vunpack.c.h.b16 %v3832
    %v3928 = vunpack.c.l.b16 %v3833
    %v3929 = vunpack.c.h.b16 %v3833
    %v3930 = vpack.c.b16 %v3870, %v3866
    %v3931 = vpack.c.b16 %v3871, %v3867
    %v3932 = vpack.c.b16 %v3872, %v3868
    %v3933 = vpack.c.b16 %v3873, %v3869
    %v3934 = vpack.c.b16 %v3878, %v3874
    %v3935 = vpack.c.b16 %v3879, %v3875
    %v3936 = vpack.c.b16 %v3880, %v3876
    %v3937 = vpack.c.b16 %v3881, %v3877
    %v3938 = vpack.c.b16 %v3886, %v3882
    %v3939 = vpack.c.b16 %v3887, %v3883
    %v3940 = vpack.c.b16 %v3888, %v3884
    %v3941 = vpack.c.b16 %v3889, %v3885
    %v3942 = vpack.c.b16 %v3894, %v3890
    %v3943 = vpack.c.b16 %v3895, %v3891
    %v3944 = vpack.c.b16 %v3896, %v3892
    %v3945 = vpack.c.b16 %v3897, %v3893
    %v3946 = vpack.c.b16 %v3902, %v3898
    %v3947 = vpack.c.b16 %v3903, %v3899
    %v3948 = vpack.c.b16 %v3904, %v3900
    %v3949 = vpack.c.b16 %v3905, %v3901
    %v3950 = vpack.c.b16 %v3910, %v3906
    %v3951 = vpack.c.b16 %v3911, %v3907
    %v3952 = vpack.c.b16 %v3912, %v3908
    %v3953 = vpack.c.b16 %v3913, %v3909
    %v3954 = vpack.c.b16 %v3918, %v3914
    %v3955 = vpack.c.b16 %v3919, %v3915
    %v3956 = vpack.c.b16 %v3920, %v3916
    %v3957 = vpack.c.b16 %v3921, %v3917
    %v3958 = vpack.c.b16 %v3926, %v3922
    %v3959 = vpack.c.b16 %v3927, %v3923
    %v3960 = vpack.c.b16 %v3928, %v3924
    %v3961 = vpack.c.b16 %v3929, %v3925
    %3994 = vmatprep.subr.bf16.mxu0 %v3931
    %3995 = vmatpush1.bf16.msra.mxu0 %v3930
    %3996 = vmatprep.subr.bf16.mxu0 %v3935
    %3997 = vmatpush1.bf16.msra.mxu0 %v3934
    %3998 = vmatprep.subr.bf16.mxu0 %v3939
    %3999 = vmatpush1.bf16.msra.mxu0 %v3938
    %4000 = vmatprep.subr.bf16.mxu0 %v3943
    %4001 = vmatpush1.bf16.msra.mxu0 %v3942
    %4002 = vmatprep.subr.bf16.mxu0 %v3947
    %4003 = vmatpush1.bf16.msra.mxu0 %v3946
    %4004 = vmatprep.subr.bf16.mxu0 %v3951
    %4005 = vmatpush1.bf16.msra.mxu0 %v3950
    %4006 = vmatprep.subr.bf16.mxu0 %v3955
    %4007 = vmatpush1.bf16.msra.mxu0 %v3954
    %4008 = vmatprep.subr.bf16.mxu0 %v3959
    %4009 = vmatpush1.bf16.msra.mxu0 %v3958
    %4010 = vmatprep.subr.bf16.mxu0 0
    %4011 = vmatpush1.bf16.msra.mxu0 0
    %4012 = vmatprep.subr.bf16.mxu0 0
    %4013 = vmatpush1.bf16.msra.mxu0 0
    %4014 = vmatprep.subr.bf16.mxu0 0
    %4015 = vmatpush1.bf16.msra.mxu0 0
    %4016 = vmatprep.subr.bf16.mxu0 0
    %4017 = vmatpush1.bf16.msra.mxu0 0
    %4018 = vmatprep.subr.bf16.mxu0 0
    %4019 = vmatpush1.bf16.msra.mxu0 0
    %4020 = vmatprep.subr.bf16.mxu0 0
    %4021 = vmatpush1.bf16.msra.mxu0 0
    %4022 = vmatprep.subr.bf16.mxu0 0
    %4023 = vmatpush1.bf16.msra.mxu0 0
    %4024 = vmatprep.subr.bf16.mxu0 0
    %4025 = vmatpush1.bf16.msra.mxu0 0
    %4026 = vmatprep.mubr.bf16.mxu0 0
    %4027 = vmatmul.mubr.bf16.gmra.mrb[0].mxu0 %v3801
    %v4028 = vpop.f32.mrb[0].mxu0
    %v4029 = vadd.f32 0.0, %v4028
    %v4030 = vpop.f32.mrb[0].mxu0
    %v4031 = vadd.f32 0.0, %v4030
    %v4032 = vpop.f32.mrb[0].mxu0
    %v4033 = vpop.f32.mrb[0].mxu0
    %4034 = vdwg.mxu0
    %4035 = vmatprep.subr.bf16.mxu0 %v3933
    %4036 = vmatpush1.bf16.msra.mxu0 %v3932
    %4037 = vmatprep.subr.bf16.mxu0 %v3937
    %4038 = vmatpush1.bf16.msra.mxu0 %v3936
    %4039 = vmatprep.subr.bf16.mxu0 %v3941
    %4040 = vmatpush1.bf16.msra.mxu0 %v3940
    %4041 = vmatprep.subr.bf16.mxu0 %v3945
    %4042 = vmatpush1.bf16.msra.mxu0 %v3944
    %4043 = vmatprep.subr.bf16.mxu0 %v3949
    %4044 = vmatpush1.bf16.msra.mxu0 %v3948
    %4045 = vmatprep.subr.bf16.mxu0 %v3953
    %4046 = vmatpush1.bf16.msra.mxu0 %v3952
    %4047 = vmatprep.subr.bf16.mxu0 %v3957
    %4048 = vmatpush1.bf16.msra.mxu0 %v3956
    %4049 = vmatprep.subr.bf16.mxu0 %v3961
    %4050 = vmatpush1.bf16.msra.mxu0 %v3960
    %4051 = vmatprep.subr.bf16.mxu0 0
    %4052 = vmatpush1.bf16.msra.mxu0 0
    %4053 = vmatprep.subr.bf16.mxu0 0
    %4054 = vmatpush1.bf16.msra.mxu0 0
    %4055 = vmatprep.subr.bf16.mxu0 0
    %4056 = vmatpush1.bf16.msra.mxu0 0
    %4057 = vmatprep.subr.bf16.mxu0 0
    %4058 = vmatpush1.bf16.msra.mxu0 0
    %4059 = vmatprep.subr.bf16.mxu0 0
    %4060 = vmatpush1.bf16.msra.mxu0 0
    %4061 = vmatprep.subr.bf16.mxu0 0
    %4062 = vmatpush1.bf16.msra.mxu0 0
    %4063 = vmatprep.subr.bf16.mxu0 0
    %4064 = vmatpush1.bf16.msra.mxu0 0
    %4065 = vmatprep.subr.bf16.mxu0 0
    %4066 = vmatpush1.bf16.msra.mxu0 0
    %4067 = vmatprep.mubr.bf16.mxu0 0
    %4068 = vmatmul.mubr.bf16.gmra.mrb[0].mxu0 %v3801
    %v4069 = vpop.f32.mrb[0].mxu0
    %v4070 = vadd.f32 0.0, %v4069
    %v4071 = vpop.f32.mrb[0].mxu0
    %v4072 = vadd.f32 0.0, %v4071
    %v4073 = vpop.f32.mrb[0].mxu0
    %v4074 = vpop.f32.mrb[0].mxu0
    %4075 = vdwg.mxu0
    %v4076 = vadd.f32 %v3797, %v4029
    %v4077 = vadd.f32 %v3798, %v4031
    %v4078 = vadd.f32 %v3799, %v4070
    %v4079 = vadd.f32 %v3800, %v4072
    %v4080 = vxor.u32 %v4076, 2147483648
    %v4081 = vxor.u32 %v4077, 2147483648
    %v4082 = vxor.u32 %v4078, 2147483648
    %v4083 = vxor.u32 %v4079, 2147483648
    %v4084 = vmul.f32 %v4080, 1.442695
    %v4085 = vpow.pop %v4084
    %v4086 = vmul.f32 %v4081, 1.442695
    %v4087 = vpow.pop %v4086
    %v4088 = vmul.f32 %v4082, 1.442695
    %v4089 = vpow.pop %v4088
    %v4090 = vmul.f32 %v4083, 1.442695
    %v4091 = vpow.pop %v4090
    %v4092 = vadd.f32 %v4085, 1.0
    %v4093 = vadd.f32 %v4087, 1.0
    %v4094 = vadd.f32 %v4089, 1.0
    %v4095 = vadd.f32 %v4091, 1.0
    %v4096 = vrcp.pop %v4092
    %v4097 = vmul.f32 1.0, %v4096
    %v4098 = vrcp.pop %v4093
    %v4099 = vmul.f32 1.0, %v4098
    %v4100 = vrcp.pop %v4094
    %v4101 = vmul.f32 1.0, %v4100
    %v4102 = vrcp.pop %v4095
    %v4103 = vmul.f32 1.0, %v4102
    %v4104 = vmul.f32 %v4101, 2.0
    %v4105 = vsub.f32 %v4104, 1.0
    %v4106 = vmul.f32 %v4099, %v3793
    %v4107 = vmul.f32 %v4097, %v4105
    %v4108 = vadd.f32 %v4106, %v4107
    %v4109 = vtanh.pop %v4108
    %v4110 = vmul.f32 %v4103, %v4109
    %s4111 = scalar_lea.vmem [#allocation12], 8
    %4112 = vst [vmem:[%s4111] sm:$0xff] %v4110
    %v4113 = vld [vmem:[%s1148] sm:$0xff]
    %v4114 = vld [vmem:[%s1148 + $0x8] sm:$0xff]
    %v4115 = vld [vmem:[%s1148 + $0x10] sm:$0xff]
    %v4116 = vld [vmem:[%s1148 + $0x18] sm:$0xff]
    %v4117 = vpack.c.bf16 %v4110, %v4110
    %v4118 = vld [vmem:[%s3486] sm:$0xff]
    %v4119 = vld [vmem:[%s3486 + $0x8] sm:$0xff]
    %v4120 = vld [vmem:[%s3486 + $0x10] sm:$0xff]
    %v4121 = vld [vmem:[%s3486 + $0x18] sm:$0xff]
    %v4122 = vld [vmem:[%s3486 + $0x20] sm:$0xff]
    %v4123 = vld [vmem:[%s3486 + $0x28] sm:$0xff]
    %v4124 = vld [vmem:[%s3486 + $0x30] sm:$0xff]
    %v4125 = vld [vmem:[%s3486 + $0x38] sm:$0xff]
    %v4126 = vld [vmem:[%s3486 + $0x40] sm:$0xff]
    %v4127 = vld [vmem:[%s3486 + $0x48] sm:$0xff]
    %v4128 = vld [vmem:[%s3486 + $0x50] sm:$0xff]
    %v4129 = vld [vmem:[%s3486 + $0x58] sm:$0xff]
    %v4130 = vld [vmem:[%s3486 + $0x60] sm:$0xff]
    %v4131 = vld [vmem:[%s3486 + $0x68] sm:$0xff]
    %v4132 = vld [vmem:[%s3486 + $0x70] sm:$0xff]
    %v4133 = vld [vmem:[%s3486 + $0x78] sm:$0xff]
    %v4134 = vld [vmem:[%s3486 + $0x80] sm:$0xff]
    %v4135 = vld [vmem:[%s3486 + $0x88] sm:$0xff]
    %v4136 = vld [vmem:[%s3486 + $0x90] sm:$0xff]
    %v4137 = vld [vmem:[%s3486 + $0x98] sm:$0xff]
    %v4138 = vld [vmem:[%s3486 + $0xa0] sm:$0xff]
    %v4139 = vld [vmem:[%s3486 + $0xa8] sm:$0xff]
    %v4140 = vld [vmem:[%s3486 + $0xb0] sm:$0xff]
    %v4141 = vld [vmem:[%s3486 + $0xb8] sm:$0xff]
    %v4142 = vld [vmem:[%s3486 + $0xc0] sm:$0xff]
    %v4143 = vld [vmem:[%s3486 + $0xc8] sm:$0xff]
    %v4144 = vld [vmem:[%s3486 + $0xd0] sm:$0xff]
    %v4145 = vld [vmem:[%s3486 + $0xd8] sm:$0xff]
    %v4146 = vld [vmem:[%s3486 + $0xe0] sm:$0xff]
    %v4147 = vld [vmem:[%s3486 + $0xe8] sm:$0xff]
    %v4148 = vld [vmem:[%s3486 + $0xf0] sm:$0xff]
    %v4149 = vld [vmem:[%s3486 + $0xf8] sm:$0xff]
    %v4182 = vunpack.c.l.b16 %v4118
    %v4183 = vunpack.c.h.b16 %v4118
    %v4184 = vunpack.c.l.b16 %v4119
    %v4185 = vunpack.c.h.b16 %v4119
    %v4186 = vunpack.c.l.b16 %v4120
    %v4187 = vunpack.c.h.b16 %v4120
    %v4188 = vunpack.c.l.b16 %v4121
    %v4189 = vunpack.c.h.b16 %v4121
    %v4190 = vunpack.c.l.b16 %v4122
    %v4191 = vunpack.c.h.b16 %v4122
    %v4192 = vunpack.c.l.b16 %v4123
    %v4193 = vunpack.c.h.b16 %v4123
    %v4194 = vunpack.c.l.b16 %v4124
    %v4195 = vunpack.c.h.b16 %v4124
    %v4196 = vunpack.c.l.b16 %v4125
    %v4197 = vunpack.c.h.b16 %v4125
    %v4198 = vunpack.c.l.b16 %v4126
    %v4199 = vunpack.c.h.b16 %v4126
    %v4200 = vunpack.c.l.b16 %v4127
    %v4201 = vunpack.c.h.b16 %v4127
    %v4202 = vunpack.c.l.b16 %v4128
    %v4203 = vunpack.c.h.b16 %v4128
    %v4204 = vunpack.c.l.b16 %v4129
    %v4205 = vunpack.c.h.b16 %v4129
    %v4206 = vunpack.c.l.b16 %v4130
    %v4207 = vunpack.c.h.b16 %v4130
    %v4208 = vunpack.c.l.b16 %v4131
    %v4209 = vunpack.c.h.b16 %v4131
    %v4210 = vunpack.c.l.b16 %v4132
    %v4211 = vunpack.c.h.b16 %v4132
    %v4212 = vunpack.c.l.b16 %v4133
    %v4213 = vunpack.c.h.b16 %v4133
    %v4214 = vunpack.c.l.b16 %v4134
    %v4215 = vunpack.c.h.b16 %v4134
    %v4216 = vunpack.c.l.b16 %v4135
    %v4217 = vunpack.c.h.b16 %v4135
    %v4218 = vunpack.c.l.b16 %v4136
    %v4219 = vunpack.c.h.b16 %v4136
    %v4220 = vunpack.c.l.b16 %v4137
    %v4221 = vunpack.c.h.b16 %v4137
    %v4222 = vunpack.c.l.b16 %v4138
    %v4223 = vunpack.c.h.b16 %v4138
    %v4224 = vunpack.c.l.b16 %v4139
    %v4225 = vunpack.c.h.b16 %v4139
    %v4226 = vunpack.c.l.b16 %v4140
    %v4227 = vunpack.c.h.b16 %v4140
    %v4228 = vunpack.c.l.b16 %v4141
    %v4229 = vunpack.c.h.b16 %v4141
    %v4230 = vunpack.c.l.b16 %v4142
    %v4231 = vunpack.c.h.b16 %v4142
    %v4232 = vunpack.c.l.b16 %v4143
    %v4233 = vunpack.c.h.b16 %v4143
    %v4234 = vunpack.c.l.b16 %v4144
    %v4235 = vunpack.c.h.b16 %v4144
    %v4236 = vunpack.c.l.b16 %v4145
    %v4237 = vunpack.c.h.b16 %v4145
    %v4238 = vunpack.c.l.b16 %v4146
    %v4239 = vunpack.c.h.b16 %v4146
    %v4240 = vunpack.c.l.b16 %v4147
    %v4241 = vunpack.c.h.b16 %v4147
    %v4242 = vunpack.c.l.b16 %v4148
    %v4243 = vunpack.c.h.b16 %v4148
    %v4244 = vunpack.c.l.b16 %v4149
    %v4245 = vunpack.c.h.b16 %v4149
    %v4246 = vpack.c.b16 %v4186, %v4182
    %v4247 = vpack.c.b16 %v4187, %v4183
    %v4248 = vpack.c.b16 %v4188, %v4184
    %v4249 = vpack.c.b16 %v4189, %v4185
    %v4250 = vpack.c.b16 %v4194, %v4190
    %v4251 = vpack.c.b16 %v4195, %v4191
    %v4252 = vpack.c.b16 %v4196, %v4192
    %v4253 = vpack.c.b16 %v4197, %v4193
    %v4254 = vpack.c.b16 %v4202, %v4198
    %v4255 = vpack.c.b16 %v4203, %v4199
    %v4256 = vpack.c.b16 %v4204, %v4200
    %v4257 = vpack.c.b16 %v4205, %v4201
    %v4258 = vpack.c.b16 %v4210, %v4206
    %v4259 = vpack.c.b16 %v4211, %v4207
    %v4260 = vpack.c.b16 %v4212, %v4208
    %v4261 = vpack.c.b16 %v4213, %v4209
    %v4262 = vpack.c.b16 %v4218, %v4214
    %v4263 = vpack.c.b16 %v4219, %v4215
    %v4264 = vpack.c.b16 %v4220, %v4216
    %v4265 = vpack.c.b16 %v4221, %v4217
    %v4266 = vpack.c.b16 %v4226, %v4222
    %v4267 = vpack.c.b16 %v4227, %v4223
    %v4268 = vpack.c.b16 %v4228, %v4224
    %v4269 = vpack.c.b16 %v4229, %v4225
    %v4270 = vpack.c.b16 %v4234, %v4230
    %v4271 = vpack.c.b16 %v4235, %v4231
    %v4272 = vpack.c.b16 %v4236, %v4232
    %v4273 = vpack.c.b16 %v4237, %v4233
    %v4274 = vpack.c.b16 %v4242, %v4238
    %v4275 = vpack.c.b16 %v4243, %v4239
    %v4276 = vpack.c.b16 %v4244, %v4240
    %v4277 = vpack.c.b16 %v4245, %v4241
    %4310 = vmatprep.subr.bf16.mxu0 %v4247
    %4311 = vmatpush1.bf16.msra.mxu0 %v4246
    %4312 = vmatprep.subr.bf16.mxu0 %v4251
    %4313 = vmatpush1.bf16.msra.mxu0 %v4250
    %4314 = vmatprep.subr.bf16.mxu0 %v4255
    %4315 = vmatpush1.bf16.msra.mxu0 %v4254
    %4316 = vmatprep.subr.bf16.mxu0 %v4259
    %4317 = vmatpush1.bf16.msra.mxu0 %v4258
    %4318 = vmatprep.subr.bf16.mxu0 %v4263
    %4319 = vmatpush1.bf16.msra.mxu0 %v4262
    %4320 = vmatprep.subr.bf16.mxu0 %v4267
    %4321 = vmatpush1.bf16.msra.mxu0 %v4266
    %4322 = vmatprep.subr.bf16.mxu0 %v4271
    %4323 = vmatpush1.bf16.msra.mxu0 %v4270
    %4324 = vmatprep.subr.bf16.mxu0 %v4275
    %4325 = vmatpush1.bf16.msra.mxu0 %v4274
    %4326 = vmatprep.subr.bf16.mxu0 0
    %4327 = vmatpush1.bf16.msra.mxu0 0
    %4328 = vmatprep.subr.bf16.mxu0 0
    %4329 = vmatpush1.bf16.msra.mxu0 0
    %4330 = vmatprep.subr.bf16.mxu0 0
    %4331 = vmatpush1.bf16.msra.mxu0 0
    %4332 = vmatprep.subr.bf16.mxu0 0
    %4333 = vmatpush1.bf16.msra.mxu0 0
    %4334 = vmatprep.subr.bf16.mxu0 0
    %4335 = vmatpush1.bf16.msra.mxu0 0
    %4336 = vmatprep.subr.bf16.mxu0 0
    %4337 = vmatpush1.bf16.msra.mxu0 0
    %4338 = vmatprep.subr.bf16.mxu0 0
    %4339 = vmatpush1.bf16.msra.mxu0 0
    %4340 = vmatprep.subr.bf16.mxu0 0
    %4341 = vmatpush1.bf16.msra.mxu0 0
    %4342 = vmatprep.mubr.bf16.mxu0 0
    %4343 = vmatmul.mubr.bf16.gmra.mrb[0].mxu0 %v4117
    %v4344 = vpop.f32.mrb[0].mxu0
    %v4345 = vadd.f32 0.0, %v4344
    %v4346 = vpop.f32.mrb[0].mxu0
    %v4347 = vadd.f32 0.0, %v4346
    %v4348 = vpop.f32.mrb[0].mxu0
    %v4349 = vpop.f32.mrb[0].mxu0
    %4350 = vdwg.mxu0
    %4351 = vmatprep.subr.bf16.mxu0 %v4249
    %4352 = vmatpush1.bf16.msra.mxu0 %v4248
    %4353 = vmatprep.subr.bf16.mxu0 %v4253
    %4354 = vmatpush1.bf16.msra.mxu0 %v4252
    %4355 = vmatprep.subr.bf16.mxu0 %v4257
    %4356 = vmatpush1.bf16.msra.mxu0 %v4256
    %4357 = vmatprep.subr.bf16.mxu0 %v4261
    %4358 = vmatpush1.bf16.msra.mxu0 %v4260
    %4359 = vmatprep.subr.bf16.mxu0 %v4265
    %4360 = vmatpush1.bf16.msra.mxu0 %v4264
    %4361 = vmatprep.subr.bf16.mxu0 %v4269
    %4362 = vmatpush1.bf16.msra.mxu0 %v4268
    %4363 = vmatprep.subr.bf16.mxu0 %v4273
    %4364 = vmatpush1.bf16.msra.mxu0 %v4272
    %4365 = vmatprep.subr.bf16.mxu0 %v4277
    %4366 = vmatpush1.bf16.msra.mxu0 %v4276
    %4367 = vmatprep.subr.bf16.mxu0 0
    %4368 = vmatpush1.bf16.msra.mxu0 0
    %4369 = vmatprep.subr.bf16.mxu0 0
    %4370 = vmatpush1.bf16.msra.mxu0 0
    %4371 = vmatprep.subr.bf16.mxu0 0
    %4372 = vmatpush1.bf16.msra.mxu0 0
    %4373 = vmatprep.subr.bf16.mxu0 0
    %4374 = vmatpush1.bf16.msra.mxu0 0
    %4375 = vmatprep.subr.bf16.mxu0 0
    %4376 = vmatpush1.bf16.msra.mxu0 0
    %4377 = vmatprep.subr.bf16.mxu0 0
    %4378 = vmatpush1.bf16.msra.mxu0 0
    %4379 = vmatprep.subr.bf16.mxu0 0
    %4380 = vmatpush1.bf16.msra.mxu0 0
    %4381 = vmatprep.subr.bf16.mxu0 0
    %4382 = vmatpush1.bf16.msra.mxu0 0
    %4383 = vmatprep.mubr.bf16.mxu0 0
    %4384 = vmatmul.mubr.bf16.gmra.mrb[0].mxu0 %v4117
    %v4385 = vpop.f32.mrb[0].mxu0
    %v4386 = vadd.f32 0.0, %v4385
    %v4387 = vpop.f32.mrb[0].mxu0
    %v4388 = vadd.f32 0.0, %v4387
    %v4389 = vpop.f32.mrb[0].mxu0
    %v4390 = vpop.f32.mrb[0].mxu0
    %4391 = vdwg.mxu0
    %v4392 = vadd.f32 %v4113, %v4345
    %v4393 = vadd.f32 %v4114, %v4347
    %v4394 = vadd.f32 %v4115, %v4386
    %v4395 = vadd.f32 %v4116, %v4388
    %v4396 = vxor.u32 %v4392, 2147483648
    %v4397 = vxor.u32 %v4393, 2147483648
    %v4398 = vxor.u32 %v4394, 2147483648
    %v4399 = vxor.u32 %v4395, 2147483648
    %v4400 = vmul.f32 %v4396, 1.442695
    %v4401 = vpow.pop %v4400
    %v4402 = vmul.f32 %v4397, 1.442695
    %v4403 = vpow.pop %v4402
    %v4404 = vmul.f32 %v4398, 1.442695
    %v4405 = vpow.pop %v4404
    %v4406 = vmul.f32 %v4399, 1.442695
    %v4407 = vpow.pop %v4406
    %v4408 = vadd.f32 %v4401, 1.0
    %v4409 = vadd.f32 %v4403, 1.0
    %v4410 = vadd.f32 %v4405, 1.0
    %v4411 = vadd.f32 %v4407, 1.0
    %v4412 = vrcp.pop %v4408
    %v4413 = vmul.f32 1.0, %v4412
    %v4414 = vrcp.pop %v4409
    %v4415 = vmul.f32 1.0, %v4414
    %v4416 = vrcp.pop %v4410
    %v4417 = vmul.f32 1.0, %v4416
    %v4418 = vrcp.pop %v4411
    %v4419 = vmul.f32 1.0, %v4418
    %v4420 = vmul.f32 %v4417, 2.0
    %v4421 = vsub.f32 %v4420, 1.0
    %v4422 = vmul.f32 %v4415, %v4108
    %v4423 = vmul.f32 %v4413, %v4421
    %v4424 = vadd.f32 %v4422, %v4423
    %v4425 = vtanh.pop %v4424
    %v4426 = vmul.f32 %v4419, %v4425
    %s4427 = scalar_lea.vmem [#allocation12], 16
    %4428 = vst [vmem:[%s4427] sm:$0xff] %v4426
    %v4429 = vld [vmem:[%s1465] sm:$0xff]
    %v4430 = vld [vmem:[%s1465 + $0x8] sm:$0xff]
    %v4431 = vld [vmem:[%s1465 + $0x10] sm:$0xff]
    %v4432 = vld [vmem:[%s1465 + $0x18] sm:$0xff]
    %v4433 = vpack.c.bf16 %v4426, %v4426
    %v4434 = vld [vmem:[%s3486] sm:$0xff]
    %v4435 = vld [vmem:[%s3486 + $0x8] sm:$0xff]
    %v4436 = vld [vmem:[%s3486 + $0x10] sm:$0xff]
    %v4437 = vld [vmem:[%s3486 + $0x18] sm:$0xff]
    %v4438 = vld [vmem:[%s3486 + $0x20] sm:$0xff]
    %v4439 = vld [vmem:[%s3486 + $0x28] sm:$0xff]
    %v4440 = vld [vmem:[%s3486 + $0x30] sm:$0xff]
    %v4441 = vld [vmem:[%s3486 + $0x38] sm:$0xff]
    %v4442 = vld [vmem:[%s3486 + $0x40] sm:$0xff]
    %v4443 = vld [vmem:[%s3486 + $0x48] sm:$0xff]
    %v4444 = vld [vmem:[%s3486 + $0x50] sm:$0xff]
    %v4445 = vld [vmem:[%s3486 + $0x58] sm:$0xff]
    %v4446 = vld [vmem:[%s3486 + $0x60] sm:$0xff]
    %v4447 = vld [vmem:[%s3486 + $0x68] sm:$0xff]
    %v4448 = vld [vmem:[%s3486 + $0x70] sm:$0xff]
    %v4449 = vld [vmem:[%s3486 + $0x78] sm:$0xff]
    %v4450 = vld [vmem:[%s3486 + $0x80] sm:$0xff]
    %v4451 = vld [vmem:[%s3486 + $0x88] sm:$0xff]
    %v4452 = vld [vmem:[%s3486 + $0x90] sm:$0xff]
    %v4453 = vld [vmem:[%s3486 + $0x98] sm:$0xff]
    %v4454 = vld [vmem:[%s3486 + $0xa0] sm:$0xff]
    %v4455 = vld [vmem:[%s3486 + $0xa8] sm:$0xff]
    %v4456 = vld [vmem:[%s3486 + $0xb0] sm:$0xff]
    %v4457 = vld [vmem:[%s3486 + $0xb8] sm:$0xff]
    %v4458 = vld [vmem:[%s3486 + $0xc0] sm:$0xff]
    %v4459 = vld [vmem:[%s3486 + $0xc8] sm:$0xff]
    %v4460 = vld [vmem:[%s3486 + $0xd0] sm:$0xff]
    %v4461 = vld [vmem:[%s3486 + $0xd8] sm:$0xff]
    %v4462 = vld [vmem:[%s3486 + $0xe0] sm:$0xff]
    %v4463 = vld [vmem:[%s3486 + $0xe8] sm:$0xff]
    %v4464 = vld [vmem:[%s3486 + $0xf0] sm:$0xff]
    %v4465 = vld [vmem:[%s3486 + $0xf8] sm:$0xff]
    %v4498 = vunpack.c.l.b16 %v4434
    %v4499 = vunpack.c.h.b16 %v4434
    %v4500 = vunpack.c.l.b16 %v4435
    %v4501 = vunpack.c.h.b16 %v4435
    %v4502 = vunpack.c.l.b16 %v4436
    %v4503 = vunpack.c.h.b16 %v4436
    %v4504 = vunpack.c.l.b16 %v4437
    %v4505 = vunpack.c.h.b16 %v4437
    %v4506 = vunpack.c.l.b16 %v4438
    %v4507 = vunpack.c.h.b16 %v4438
    %v4508 = vunpack.c.l.b16 %v4439
    %v4509 = vunpack.c.h.b16 %v4439
    %v4510 = vunpack.c.l.b16 %v4440
    %v4511 = vunpack.c.h.b16 %v4440
    %v4512 = vunpack.c.l.b16 %v4441
    %v4513 = vunpack.c.h.b16 %v4441
    %v4514 = vunpack.c.l.b16 %v4442
    %v4515 = vunpack.c.h.b16 %v4442
    %v4516 = vunpack.c.l.b16 %v4443
    %v4517 = vunpack.c.h.b16 %v4443
    %v4518 = vunpack.c.l.b16 %v4444
    %v4519 = vunpack.c.h.b16 %v4444
    %v4520 = vunpack.c.l.b16 %v4445
    %v4521 = vunpack.c.h.b16 %v4445
    %v4522 = vunpack.c.l.b16 %v4446
    %v4523 = vunpack.c.h.b16 %v4446
    %v4524 = vunpack.c.l.b16 %v4447
    %v4525 = vunpack.c.h.b16 %v4447
    %v4526 = vunpack.c.l.b16 %v4448
    %v4527 = vunpack.c.h.b16 %v4448
    %v4528 = vunpack.c.l.b16 %v4449
    %v4529 = vunpack.c.h.b16 %v4449
    %v4530 = vunpack.c.l.b16 %v4450
    %v4531 = vunpack.c.h.b16 %v4450
    %v4532 = vunpack.c.l.b16 %v4451
    %v4533 = vunpack.c.h.b16 %v4451
    %v4534 = vunpack.c.l.b16 %v4452
    %v4535 = vunpack.c.h.b16 %v4452
    %v4536 = vunpack.c.l.b16 %v4453
    %v4537 = vunpack.c.h.b16 %v4453
    %v4538 = vunpack.c.l.b16 %v4454
    %v4539 = vunpack.c.h.b16 %v4454
    %v4540 = vunpack.c.l.b16 %v4455
    %v4541 = vunpack.c.h.b16 %v4455
    %v4542 = vunpack.c.l.b16 %v4456
    %v4543 = vunpack.c.h.b16 %v4456
    %v4544 = vunpack.c.l.b16 %v4457
    %v4545 = vunpack.c.h.b16 %v4457
    %v4546 = vunpack.c.l.b16 %v4458
    %v4547 = vunpack.c.h.b16 %v4458
    %v4548 = vunpack.c.l.b16 %v4459
    %v4549 = vunpack.c.h.b16 %v4459
    %v4550 = vunpack.c.l.b16 %v4460
    %v4551 = vunpack.c.h.b16 %v4460
    %v4552 = vunpack.c.l.b16 %v4461
    %v4553 = vunpack.c.h.b16 %v4461
    %v4554 = vunpack.c.l.b16 %v4462
    %v4555 = vunpack.c.h.b16 %v4462
    %v4556 = vunpack.c.l.b16 %v4463
    %v4557 = vunpack.c.h.b16 %v4463
    %v4558 = vunpack.c.l.b16 %v4464
    %v4559 = vunpack.c.h.b16 %v4464
    %v4560 = vunpack.c.l.b16 %v4465
    %v4561 = vunpack.c.h.b16 %v4465
    %v4562 = vpack.c.b16 %v4502, %v4498
    %v4563 = vpack.c.b16 %v4503, %v4499
    %v4564 = vpack.c.b16 %v4504, %v4500
    %v4565 = vpack.c.b16 %v4505, %v4501
    %v4566 = vpack.c.b16 %v4510, %v4506
    %v4567 = vpack.c.b16 %v4511, %v4507
    %v4568 = vpack.c.b16 %v4512, %v4508
    %v4569 = vpack.c.b16 %v4513, %v4509
    %v4570 = vpack.c.b16 %v4518, %v4514
    %v4571 = vpack.c.b16 %v4519, %v4515
    %v4572 = vpack.c.b16 %v4520, %v4516
    %v4573 = vpack.c.b16 %v4521, %v4517
    %v4574 = vpack.c.b16 %v4526, %v4522
    %v4575 = vpack.c.b16 %v4527, %v4523
    %v4576 = vpack.c.b16 %v4528, %v4524
    %v4577 = vpack.c.b16 %v4529, %v4525
    %v4578 = vpack.c.b16 %v4534, %v4530
    %v4579 = vpack.c.b16 %v4535, %v4531
    %v4580 = vpack.c.b16 %v4536, %v4532
    %v4581 = vpack.c.b16 %v4537, %v4533
    %v4582 = vpack.c.b16 %v4542, %v4538
    %v4583 = vpack.c.b16 %v4543, %v4539
    %v4584 = vpack.c.b16 %v4544, %v4540
    %v4585 = vpack.c.b16 %v4545, %v4541
    %v4586 = vpack.c.b16 %v4550, %v4546
    %v4587 = vpack.c.b16 %v4551, %v4547
    %v4588 = vpack.c.b16 %v4552, %v4548
    %v4589 = vpack.c.b16 %v4553, %v4549
    %v4590 = vpack.c.b16 %v4558, %v4554
    %v4591 = vpack.c.b16 %v4559, %v4555
    %v4592 = vpack.c.b16 %v4560, %v4556
    %v4593 = vpack.c.b16 %v4561, %v4557
    %4626 = vmatprep.subr.bf16.mxu0 %v4563
    %4627 = vmatpush1.bf16.msra.mxu0 %v4562
    %4628 = vmatprep.subr.bf16.mxu0 %v4567
    %4629 = vmatpush1.bf16.msra.mxu0 %v4566
    %4630 = vmatprep.subr.bf16.mxu0 %v4571
    %4631 = vmatpush1.bf16.msra.mxu0 %v4570
    %4632 = vmatprep.subr.bf16.mxu0 %v4575
    %4633 = vmatpush1.bf16.msra.mxu0 %v4574
    %4634 = vmatprep.subr.bf16.mxu0 %v4579
    %4635 = vmatpush1.bf16.msra.mxu0 %v4578
    %4636 = vmatprep.subr.bf16.mxu0 %v4583
    %4637 = vmatpush1.bf16.msra.mxu0 %v4582
    %4638 = vmatprep.subr.bf16.mxu0 %v4587
    %4639 = vmatpush1.bf16.msra.mxu0 %v4586
    %4640 = vmatprep.subr.bf16.mxu0 %v4591
    %4641 = vmatpush1.bf16.msra.mxu0 %v4590
    %4642 = vmatprep.subr.bf16.mxu0 0
    %4643 = vmatpush1.bf16.msra.mxu0 0
    %4644 = vmatprep.subr.bf16.mxu0 0
    %4645 = vmatpush1.bf16.msra.mxu0 0
    %4646 = vmatprep.subr.bf16.mxu0 0
    %4647 = vmatpush1.bf16.msra.mxu0 0
    %4648 = vmatprep.subr.bf16.mxu0 0
    %4649 = vmatpush1.bf16.msra.mxu0 0
    %4650 = vmatprep.subr.bf16.mxu0 0
    %4651 = vmatpush1.bf16.msra.mxu0 0
    %4652 = vmatprep.subr.bf16.mxu0 0
    %4653 = vmatpush1.bf16.msra.mxu0 0
    %4654 = vmatprep.subr.bf16.mxu0 0
    %4655 = vmatpush1.bf16.msra.mxu0 0
    %4656 = vmatprep.subr.bf16.mxu0 0
    %4657 = vmatpush1.bf16.msra.mxu0 0
    %4658 = vmatprep.mubr.bf16.mxu0 0
    %4659 = vmatmul.mubr.bf16.gmra.mrb[0].mxu0 %v4433
    %v4660 = vpop.f32.mrb[0].mxu0
    %v4661 = vadd.f32 0.0, %v4660
    %v4662 = vpop.f32.mrb[0].mxu0
    %v4663 = vadd.f32 0.0, %v4662
    %v4664 = vpop.f32.mrb[0].mxu0
    %v4665 = vpop.f32.mrb[0].mxu0
    %4666 = vdwg.mxu0
    %4667 = vmatprep.subr.bf16.mxu0 %v4565
    %4668 = vmatpush1.bf16.msra.mxu0 %v4564
    %4669 = vmatprep.subr.bf16.mxu0 %v4569
    %4670 = vmatpush1.bf16.msra.mxu0 %v4568
    %4671 = vmatprep.subr.bf16.mxu0 %v4573
    %4672 = vmatpush1.bf16.msra.mxu0 %v4572
    %4673 = vmatprep.subr.bf16.mxu0 %v4577
    %4674 = vmatpush1.bf16.msra.mxu0 %v4576
    %4675 = vmatprep.subr.bf16.mxu0 %v4581
    %4676 = vmatpush1.bf16.msra.mxu0 %v4580
    %4677 = vmatprep.subr.bf16.mxu0 %v4585
    %4678 = vmatpush1.bf16.msra.mxu0 %v4584
    %4679 = vmatprep.subr.bf16.mxu0 %v4589
    %4680 = vmatpush1.bf16.msra.mxu0 %v4588
    %4681 = vmatprep.subr.bf16.mxu0 %v4593
    %4682 = vmatpush1.bf16.msra.mxu0 %v4592
    %4683 = vmatprep.subr.bf16.mxu0 0
    %4684 = vmatpush1.bf16.msra.mxu0 0
    %4685 = vmatprep.subr.bf16.mxu0 0
    %4686 = vmatpush1.bf16.msra.mxu0 0
    %4687 = vmatprep.subr.bf16.mxu0 0
    %4688 = vmatpush1.bf16.msra.mxu0 0
    %4689 = vmatprep.subr.bf16.mxu0 0
    %4690 = vmatpush1.bf16.msra.mxu0 0
    %4691 = vmatprep.subr.bf16.mxu0 0
    %4692 = vmatpush1.bf16.msra.mxu0 0
    %4693 = vmatprep.subr.bf16.mxu0 0
    %4694 = vmatpush1.bf16.msra.mxu0 0
    %4695 = vmatprep.subr.bf16.mxu0 0
    %4696 = vmatpush1.bf16.msra.mxu0 0
    %4697 = vmatprep.subr.bf16.mxu0 0
    %4698 = vmatpush1.bf16.msra.mxu0 0
    %4699 = vmatprep.mubr.bf16.mxu0 0
    %4700 = vmatmul.mubr.bf16.gmra.mrb[0].mxu0 %v4433
    %v4701 = vpop.f32.mrb[0].mxu0
    %v4702 = vadd.f32 0.0, %v4701
    %v4703 = vpop.f32.mrb[0].mxu0
    %v4704 = vadd.f32 0.0, %v4703
    %v4705 = vpop.f32.mrb[0].mxu0
    %v4706 = vpop.f32.mrb[0].mxu0
    %4707 = vdwg.mxu0
    %v4708 = vadd.f32 %v4429, %v4661
    %v4709 = vadd.f32 %v4430, %v4663
    %v4710 = vadd.f32 %v4431, %v4702
    %v4711 = vadd.f32 %v4432, %v4704
    %v4712 = vxor.u32 %v4708, 2147483648
    %v4713 = vxor.u32 %v4709, 2147483648
    %v4714 = vxor.u32 %v4710, 2147483648
    %v4715 = vxor.u32 %v4711, 2147483648
    %v4716 = vmul.f32 %v4712, 1.442695
    %v4717 = vpow.pop %v4716
    %v4718 = vmul.f32 %v4713, 1.442695
    %v4719 = vpow.pop %v4718
    %v4720 = vmul.f32 %v4714, 1.442695
    %v4721 = vpow.pop %v4720
    %v4722 = vmul.f32 %v4715, 1.442695
    %v4723 = vpow.pop %v4722
    %v4724 = vadd.f32 %v4717, 1.0
    %v4725 = vadd.f32 %v4719, 1.0
    %v4726 = vadd.f32 %v4721, 1.0
    %v4727 = vadd.f32 %v4723, 1.0
    %v4728 = vrcp.pop %v4724
    %v4729 = vmul.f32 1.0, %v4728
    %v4730 = vrcp.pop %v4725
    %v4731 = vmul.f32 1.0, %v4730
    %v4732 = vrcp.pop %v4726
    %v4733 = vmul.f32 1.0, %v4732
    %v4734 = vrcp.pop %v4727
    %v4735 = vmul.f32 1.0, %v4734
    %v4736 = vmul.f32 %v4733, 2.0
    %v4737 = vsub.f32 %v4736, 1.0
    %v4738 = vmul.f32 %v4731, %v4424
    %v4739 = vmul.f32 %v4729, %v4737
    %v4740 = vadd.f32 %v4738, %v4739
    %v4741 = vtanh.pop %v4740
    %v4742 = vmul.f32 %v4735, %v4741
    %s4743 = scalar_lea.vmem [#allocation12], 24
    %4744 = vst [vmem:[%s4743] sm:$0xff] %v4742
    %v4745 = vld [vmem:[%s1782] sm:$0xff]
    %v4746 = vld [vmem:[%s1782 + $0x8] sm:$0xff]
    %v4747 = vld [vmem:[%s1782 + $0x10] sm:$0xff]
    %v4748 = vld [vmem:[%s1782 + $0x18] sm:$0xff]
    %v4749 = vpack.c.bf16 %v4742, %v4742
    %v4750 = vld [vmem:[%s3486] sm:$0xff]
    %v4751 = vld [vmem:[%s3486 + $0x8] sm:$0xff]
    %v4752 = vld [vmem:[%s3486 + $0x10] sm:$0xff]
    %v4753 = vld [vmem:[%s3486 + $0x18] sm:$0xff]
    %v4754 = vld [vmem:[%s3486 + $0x20] sm:$0xff]
    %v4755 = vld [vmem:[%s3486 + $0x28] sm:$0xff]
    %v4756 = vld [vmem:[%s3486 + $0x30] sm:$0xff]
    %v4757 = vld [vmem:[%s3486 + $0x38] sm:$0xff]
    %v4758 = vld [vmem:[%s3486 + $0x40] sm:$0xff]
    %v4759 = vld [vmem:[%s3486 + $0x48] sm:$0xff]
    %v4760 = vld [vmem:[%s3486 + $0x50] sm:$0xff]
    %v4761 = vld [vmem:[%s3486 + $0x58] sm:$0xff]
    %v4762 = vld [vmem:[%s3486 + $0x60] sm:$0xff]
    %v4763 = vld [vmem:[%s3486 + $0x68] sm:$0xff]
    %v4764 = vld [vmem:[%s3486 + $0x70] sm:$0xff]
    %v4765 = vld [vmem:[%s3486 + $0x78] sm:$0xff]
    %v4766 = vld [vmem:[%s3486 + $0x80] sm:$0xff]
    %v4767 = vld [vmem:[%s3486 + $0x88] sm:$0xff]
    %v4768 = vld [vmem:[%s3486 + $0x90] sm:$0xff]
    %v4769 = vld [vmem:[%s3486 + $0x98] sm:$0xff]
    %v4770 = vld [vmem:[%s3486 + $0xa0] sm:$0xff]
    %v4771 = vld [vmem:[%s3486 + $0xa8] sm:$0xff]
    %v4772 = vld [vmem:[%s3486 + $0xb0] sm:$0xff]
    %v4773 = vld [vmem:[%s3486 + $0xb8] sm:$0xff]
    %v4774 = vld [vmem:[%s3486 + $0xc0] sm:$0xff]
    %v4775 = vld [vmem:[%s3486 + $0xc8] sm:$0xff]
    %v4776 = vld [vmem:[%s3486 + $0xd0] sm:$0xff]
    %v4777 = vld [vmem:[%s3486 + $0xd8] sm:$0xff]
    %v4778 = vld [vmem:[%s3486 + $0xe0] sm:$0xff]
    %v4779 = vld [vmem:[%s3486 + $0xe8] sm:$0xff]
    %v4780 = vld [vmem:[%s3486 + $0xf0] sm:$0xff]
    %v4781 = vld [vmem:[%s3486 + $0xf8] sm:$0xff]
    %v4814 = vunpack.c.l.b16 %v4750
    %v4815 = vunpack.c.h.b16 %v4750
    %v4816 = vunpack.c.l.b16 %v4751
    %v4817 = vunpack.c.h.b16 %v4751
    %v4818 = vunpack.c.l.b16 %v4752
    %v4819 = vunpack.c.h.b16 %v4752
    %v4820 = vunpack.c.l.b16 %v4753
    %v4821 = vunpack.c.h.b16 %v4753
    %v4822 = vunpack.c.l.b16 %v4754
    %v4823 = vunpack.c.h.b16 %v4754
    %v4824 = vunpack.c.l.b16 %v4755
    %v4825 = vunpack.c.h.b16 %v4755
    %v4826 = vunpack.c.l.b16 %v4756
    %v4827 = vunpack.c.h.b16 %v4756
    %v4828 = vunpack.c.l.b16 %v4757
    %v4829 = vunpack.c.h.b16 %v4757
    %v4830 = vunpack.c.l.b16 %v4758
    %v4831 = vunpack.c.h.b16 %v4758
    %v4832 = vunpack.c.l.b16 %v4759
    %v4833 = vunpack.c.h.b16 %v4759
    %v4834 = vunpack.c.l.b16 %v4760
    %v4835 = vunpack.c.h.b16 %v4760
    %v4836 = vunpack.c.l.b16 %v4761
    %v4837 = vunpack.c.h.b16 %v4761
    %v4838 = vunpack.c.l.b16 %v4762
    %v4839 = vunpack.c.h.b16 %v4762
    %v4840 = vunpack.c.l.b16 %v4763
    %v4841 = vunpack.c.h.b16 %v4763
    %v4842 = vunpack.c.l.b16 %v4764
    %v4843 = vunpack.c.h.b16 %v4764
    %v4844 = vunpack.c.l.b16 %v4765
    %v4845 = vunpack.c.h.b16 %v4765
    %v4846 = vunpack.c.l.b16 %v4766
    %v4847 = vunpack.c.h.b16 %v4766
    %v4848 = vunpack.c.l.b16 %v4767
    %v4849 = vunpack.c.h.b16 %v4767
    %v4850 = vunpack.c.l.b16 %v4768
    %v4851 = vunpack.c.h.b16 %v4768
    %v4852 = vunpack.c.l.b16 %v4769
    %v4853 = vunpack.c.h.b16 %v4769
    %v4854 = vunpack.c.l.b16 %v4770
    %v4855 = vunpack.c.h.b16 %v4770
    %v4856 = vunpack.c.l.b16 %v4771
    %v4857 = vunpack.c.h.b16 %v4771
    %v4858 = vunpack.c.l.b16 %v4772
    %v4859 = vunpack.c.h.b16 %v4772
    %v4860 = vunpack.c.l.b16 %v4773
    %v4861 = vunpack.c.h.b16 %v4773
    %v4862 = vunpack.c.l.b16 %v4774
    %v4863 = vunpack.c.h.b16 %v4774
    %v4864 = vunpack.c.l.b16 %v4775
    %v4865 = vunpack.c.h.b16 %v4775
    %v4866 = vunpack.c.l.b16 %v4776
    %v4867 = vunpack.c.h.b16 %v4776
    %v4868 = vunpack.c.l.b16 %v4777
    %v4869 = vunpack.c.h.b16 %v4777
    %v4870 = vunpack.c.l.b16 %v4778
    %v4871 = vunpack.c.h.b16 %v4778
    %v4872 = vunpack.c.l.b16 %v4779
    %v4873 = vunpack.c.h.b16 %v4779
    %v4874 = vunpack.c.l.b16 %v4780
    %v4875 = vunpack.c.h.b16 %v4780
    %v4876 = vunpack.c.l.b16 %v4781
    %v4877 = vunpack.c.h.b16 %v4781
    %v4878 = vpack.c.b16 %v4818, %v4814
    %v4879 = vpack.c.b16 %v4819, %v4815
    %v4880 = vpack.c.b16 %v4820, %v4816
    %v4881 = vpack.c.b16 %v4821, %v4817
    %v4882 = vpack.c.b16 %v4826, %v4822
    %v4883 = vpack.c.b16 %v4827, %v4823
    %v4884 = vpack.c.b16 %v4828, %v4824
    %v4885 = vpack.c.b16 %v4829, %v4825
    %v4886 = vpack.c.b16 %v4834, %v4830
    %v4887 = vpack.c.b16 %v4835, %v4831
    %v4888 = vpack.c.b16 %v4836, %v4832
    %v4889 = vpack.c.b16 %v4837, %v4833
    %v4890 = vpack.c.b16 %v4842, %v4838
    %v4891 = vpack.c.b16 %v4843, %v4839
    %v4892 = vpack.c.b16 %v4844, %v4840
    %v4893 = vpack.c.b16 %v4845, %v4841
    %v4894 = vpack.c.b16 %v4850, %v4846
    %v4895 = vpack.c.b16 %v4851, %v4847
    %v4896 = vpack.c.b16 %v4852, %v4848
    %v4897 = vpack.c.b16 %v4853, %v4849
    %v4898 = vpack.c.b16 %v4858, %v4854
    %v4899 = vpack.c.b16 %v4859, %v4855
    %v4900 = vpack.c.b16 %v4860, %v4856
    %v4901 = vpack.c.b16 %v4861, %v4857
    %v4902 = vpack.c.b16 %v4866, %v4862
    %v4903 = vpack.c.b16 %v4867, %v4863
    %v4904 = vpack.c.b16 %v4868, %v4864
    %v4905 = vpack.c.b16 %v4869, %v4865
    %v4906 = vpack.c.b16 %v4874, %v4870
    %v4907 = vpack.c.b16 %v4875, %v4871
    %v4908 = vpack.c.b16 %v4876, %v4872
    %v4909 = vpack.c.b16 %v4877, %v4873
    %4942 = vmatprep.subr.bf16.mxu0 %v4879
    %4943 = vmatpush1.bf16.msra.mxu0 %v4878
    %4944 = vmatprep.subr.bf16.mxu0 %v4883
    %4945 = vmatpush1.bf16.msra.mxu0 %v4882
    %4946 = vmatprep.subr.bf16.mxu0 %v4887
    %4947 = vmatpush1.bf16.msra.mxu0 %v4886
    %4948 = vmatprep.subr.bf16.mxu0 %v4891
    %4949 = vmatpush1.bf16.msra.mxu0 %v4890
    %4950 = vmatprep.subr.bf16.mxu0 %v4895
    %4951 = vmatpush1.bf16.msra.mxu0 %v4894
    %4952 = vmatprep.subr.bf16.mxu0 %v4899
    %4953 = vmatpush1.bf16.msra.mxu0 %v4898
    %4954 = vmatprep.subr.bf16.mxu0 %v4903
    %4955 = vmatpush1.bf16.msra.mxu0 %v4902
    %4956 = vmatprep.subr.bf16.mxu0 %v4907
    %4957 = vmatpush1.bf16.msra.mxu0 %v4906
    %4958 = vmatprep.subr.bf16.mxu0 0
    %4959 = vmatpush1.bf16.msra.mxu0 0
    %4960 = vmatprep.subr.bf16.mxu0 0
    %4961 = vmatpush1.bf16.msra.mxu0 0
    %4962 = vmatprep.subr.bf16.mxu0 0
    %4963 = vmatpush1.bf16.msra.mxu0 0
    %4964 = vmatprep.subr.bf16.mxu0 0
    %4965 = vmatpush1.bf16.msra.mxu0 0
    %4966 = vmatprep.subr.bf16.mxu0 0
    %4967 = vmatpush1.bf16.msra.mxu0 0
    %4968 = vmatprep.subr.bf16.mxu0 0
    %4969 = vmatpush1.bf16.msra.mxu0 0
    %4970 = vmatprep.subr.bf16.mxu0 0
    %4971 = vmatpush1.bf16.msra.mxu0 0
    %4972 = vmatprep.subr.bf16.mxu0 0
    %4973 = vmatpush1.bf16.msra.mxu0 0
    %4974 = vmatprep.mubr.bf16.mxu0 0
    %4975 = vmatmul.mubr.bf16.gmra.mrb[0].mxu0 %v4749
    %v4976 = vpop.f32.mrb[0].mxu0
    %v4977 = vadd.f32 0.0, %v4976
    %v4978 = vpop.f32.mrb[0].mxu0
    %v4979 = vadd.f32 0.0, %v4978
    %v4980 = vpop.f32.mrb[0].mxu0
    %v4981 = vpop.f32.mrb[0].mxu0
    %4982 = vdwg.mxu0
    %4983 = vmatprep.subr.bf16.mxu0 %v4881
    %4984 = vmatpush1.bf16.msra.mxu0 %v4880
    %4985 = vmatprep.subr.bf16.mxu0 %v4885
    %4986 = vmatpush1.bf16.msra.mxu0 %v4884
    %4987 = vmatprep.subr.bf16.mxu0 %v4889
    %4988 = vmatpush1.bf16.msra.mxu0 %v4888
    %4989 = vmatprep.subr.bf16.mxu0 %v4893
    %4990 = vmatpush1.bf16.msra.mxu0 %v4892
    %4991 = vmatprep.subr.bf16.mxu0 %v4897
    %4992 = vmatpush1.bf16.msra.mxu0 %v4896
    %4993 = vmatprep.subr.bf16.mxu0 %v4901
    %4994 = vmatpush1.bf16.msra.mxu0 %v4900
    %4995 = vmatprep.subr.bf16.mxu0 %v4905
    %4996 = vmatpush1.bf16.msra.mxu0 %v4904
    %4997 = vmatprep.subr.bf16.mxu0 %v4909
    %4998 = vmatpush1.bf16.msra.mxu0 %v4908
    %4999 = vmatprep.subr.bf16.mxu0 0
    %5000 = vmatpush1.bf16.msra.mxu0 0
    %5001 = vmatprep.subr.bf16.mxu0 0
    %5002 = vmatpush1.bf16.msra.mxu0 0
    %5003 = vmatprep.subr.bf16.mxu0 0
    %5004 = vmatpush1.bf16.msra.mxu0 0
    %5005 = vmatprep.subr.bf16.mxu0 0
    %5006 = vmatpush1.bf16.msra.mxu0 0
    %5007 = vmatprep.subr.bf16.mxu0 0
    %5008 = vmatpush1.bf16.msra.mxu0 0
    %5009 = vmatprep.subr.bf16.mxu0 0
    %5010 = vmatpush1.bf16.msra.mxu0 0
    %5011 = vmatprep.subr.bf16.mxu0 0
    %5012 = vmatpush1.bf16.msra.mxu0 0
    %5013 = vmatprep.subr.bf16.mxu0 0
    %5014 = vmatpush1.bf16.msra.mxu0 0
    %5015 = vmatprep.mubr.bf16.mxu0 0
    %5016 = vmatmul.mubr.bf16.gmra.mrb[0].mxu0 %v4749
    %v5017 = vpop.f32.mrb[0].mxu0
    %v5018 = vadd.f32 0.0, %v5017
    %v5019 = vpop.f32.mrb[0].mxu0
    %v5020 = vadd.f32 0.0, %v5019
    %v5021 = vpop.f32.mrb[0].mxu0
    %v5022 = vpop.f32.mrb[0].mxu0
    %5023 = vdwg.mxu0
    %v5024 = vadd.f32 %v4745, %v4977
    %v5025 = vadd.f32 %v4746, %v4979
    %v5026 = vadd.f32 %v4747, %v5018
    %v5027 = vadd.f32 %v4748, %v5020
    %v5028 = vxor.u32 %v5024, 2147483648
    %v5029 = vxor.u32 %v5025, 2147483648
    %v5030 = vxor.u32 %v5026, 2147483648
    %v5031 = vxor.u32 %v5027, 2147483648
    %v5032 = vmul.f32 %v5028, 1.442695
    %v5033 = vpow.pop %v5032
    %v5034 = vmul.f32 %v5029, 1.442695
    %v5035 = vpow.pop %v5034
    %v5036 = vmul.f32 %v5030, 1.442695
    %v5037 = vpow.pop %v5036
    %v5038 = vmul.f32 %v5031, 1.442695
    %v5039 = vpow.pop %v5038
    %v5040 = vadd.f32 %v5033, 1.0
    %v5041 = vadd.f32 %v5035, 1.0
    %v5042 = vadd.f32 %v5037, 1.0
    %v5043 = vadd.f32 %v5039, 1.0
    %v5044 = vrcp.pop %v5040
    %v5045 = vmul.f32 1.0, %v5044
    %v5046 = vrcp.pop %v5041
    %v5047 = vmul.f32 1.0, %v5046
    %v5048 = vrcp.pop %v5042
    %v5049 = vmul.f32 1.0, %v5048
    %v5050 = vrcp.pop %v5043
    %v5051 = vmul.f32 1.0, %v5050
    %v5052 = vmul.f32 %v5049, 2.0
    %v5053 = vsub.f32 %v5052, 1.0
    %v5054 = vmul.f32 %v5047, %v4740
    %v5055 = vmul.f32 %v5045, %v5053
    %v5056 = vadd.f32 %v5054, %v5055
    %v5057 = vtanh.pop %v5056
    %v5058 = vmul.f32 %v5051, %v5057
    %s5059 = scalar_lea.vmem [#allocation12], 32
    %5060 = vst [vmem:[%s5059] sm:$0xff] %v5058
    %v5061 = vld [vmem:[%s2099] sm:$0xff]
    %v5062 = vld [vmem:[%s2099 + $0x8] sm:$0xff]
    %v5063 = vld [vmem:[%s2099 + $0x10] sm:$0xff]
    %v5064 = vld [vmem:[%s2099 + $0x18] sm:$0xff]
    %v5065 = vpack.c.bf16 %v5058, %v5058
    %v5066 = vld [vmem:[%s3486] sm:$0xff]
    %v5067 = vld [vmem:[%s3486 + $0x8] sm:$0xff]
    %v5068 = vld [vmem:[%s3486 + $0x10] sm:$0xff]
    %v5069 = vld [vmem:[%s3486 + $0x18] sm:$0xff]
    %v5070 = vld [vmem:[%s3486 + $0x20] sm:$0xff]
    %v5071 = vld [vmem:[%s3486 + $0x28] sm:$0xff]
    %v5072 = vld [vmem:[%s3486 + $0x30] sm:$0xff]
    %v5073 = vld [vmem:[%s3486 + $0x38] sm:$0xff]
    %v5074 = vld [vmem:[%s3486 + $0x40] sm:$0xff]
    %v5075 = vld [vmem:[%s3486 + $0x48] sm:$0xff]
    %v5076 = vld [vmem:[%s3486 + $0x50] sm:$0xff]
    %v5077 = vld [vmem:[%s3486 + $0x58] sm:$0xff]
    %v5078 = vld [vmem:[%s3486 + $0x60] sm:$0xff]
    %v5079 = vld [vmem:[%s3486 + $0x68] sm:$0xff]
    %v5080 = vld [vmem:[%s3486 + $0x70] sm:$0xff]
    %v5081 = vld [vmem:[%s3486 + $0x78] sm:$0xff]
    %v5082 = vld [vmem:[%s3486 + $0x80] sm:$0xff]
    %v5083 = vld [vmem:[%s3486 + $0x88] sm:$0xff]
    %v5084 = vld [vmem:[%s3486 + $0x90] sm:$0xff]
    %v5085 = vld [vmem:[%s3486 + $0x98] sm:$0xff]
    %v5086 = vld [vmem:[%s3486 + $0xa0] sm:$0xff]
    %v5087 = vld [vmem:[%s3486 + $0xa8] sm:$0xff]
    %v5088 = vld [vmem:[%s3486 + $0xb0] sm:$0xff]
    %v5089 = vld [vmem:[%s3486 + $0xb8] sm:$0xff]
    %v5090 = vld [vmem:[%s3486 + $0xc0] sm:$0xff]
    %v5091 = vld [vmem:[%s3486 + $0xc8] sm:$0xff]
    %v5092 = vld [vmem:[%s3486 + $0xd0] sm:$0xff]
    %v5093 = vld [vmem:[%s3486 + $0xd8] sm:$0xff]
    %v5094 = vld [vmem:[%s3486 + $0xe0] sm:$0xff]
    %v5095 = vld [vmem:[%s3486 + $0xe8] sm:$0xff]
    %v5096 = vld [vmem:[%s3486 + $0xf0] sm:$0xff]
    %v5097 = vld [vmem:[%s3486 + $0xf8] sm:$0xff]
    %v5130 = vunpack.c.l.b16 %v5066
    %v5131 = vunpack.c.h.b16 %v5066
    %v5132 = vunpack.c.l.b16 %v5067
    %v5133 = vunpack.c.h.b16 %v5067
    %v5134 = vunpack.c.l.b16 %v5068
    %v5135 = vunpack.c.h.b16 %v5068
    %v5136 = vunpack.c.l.b16 %v5069
    %v5137 = vunpack.c.h.b16 %v5069
    %v5138 = vunpack.c.l.b16 %v5070
    %v5139 = vunpack.c.h.b16 %v5070
    %v5140 = vunpack.c.l.b16 %v5071
    %v5141 = vunpack.c.h.b16 %v5071
    %v5142 = vunpack.c.l.b16 %v5072
    %v5143 = vunpack.c.h.b16 %v5072
    %v5144 = vunpack.c.l.b16 %v5073
    %v5145 = vunpack.c.h.b16 %v5073
    %v5146 = vunpack.c.l.b16 %v5074
    %v5147 = vunpack.c.h.b16 %v5074
    %v5148 = vunpack.c.l.b16 %v5075
    %v5149 = vunpack.c.h.b16 %v5075
    %v5150 = vunpack.c.l.b16 %v5076
    %v5151 = vunpack.c.h.b16 %v5076
    %v5152 = vunpack.c.l.b16 %v5077
    %v5153 = vunpack.c.h.b16 %v5077
    %v5154 = vunpack.c.l.b16 %v5078
    %v5155 = vunpack.c.h.b16 %v5078
    %v5156 = vunpack.c.l.b16 %v5079
    %v5157 = vunpack.c.h.b16 %v5079
    %v5158 = vunpack.c.l.b16 %v5080
    %v5159 = vunpack.c.h.b16 %v5080
    %v5160 = vunpack.c.l.b16 %v5081
    %v5161 = vunpack.c.h.b16 %v5081
    %v5162 = vunpack.c.l.b16 %v5082
    %v5163 = vunpack.c.h.b16 %v5082
    %v5164 = vunpack.c.l.b16 %v5083
    %v5165 = vunpack.c.h.b16 %v5083
    %v5166 = vunpack.c.l.b16 %v5084
    %v5167 = vunpack.c.h.b16 %v5084
    %v5168 = vunpack.c.l.b16 %v5085
    %v5169 = vunpack.c.h.b16 %v5085
    %v5170 = vunpack.c.l.b16 %v5086
    %v5171 = vunpack.c.h.b16 %v5086
    %v5172 = vunpack.c.l.b16 %v5087
    %v5173 = vunpack.c.h.b16 %v5087
    %v5174 = vunpack.c.l.b16 %v5088
    %v5175 = vunpack.c.h.b16 %v5088
    %v5176 = vunpack.c.l.b16 %v5089
    %v5177 = vunpack.c.h.b16 %v5089
    %v5178 = vunpack.c.l.b16 %v5090
    %v5179 = vunpack.c.h.b16 %v5090
    %v5180 = vunpack.c.l.b16 %v5091
    %v5181 = vunpack.c.h.b16 %v5091
    %v5182 = vunpack.c.l.b16 %v5092
    %v5183 = vunpack.c.h.b16 %v5092
    %v5184 = vunpack.c.l.b16 %v5093
    %v5185 = vunpack.c.h.b16 %v5093
    %v5186 = vunpack.c.l.b16 %v5094
    %v5187 = vunpack.c.h.b16 %v5094
    %v5188 = vunpack.c.l.b16 %v5095
    %v5189 = vunpack.c.h.b16 %v5095
    %v5190 = vunpack.c.l.b16 %v5096
    %v5191 = vunpack.c.h.b16 %v5096
    %v5192 = vunpack.c.l.b16 %v5097
    %v5193 = vunpack.c.h.b16 %v5097
    %v5194 = vpack.c.b16 %v5134, %v5130
    %v5195 = vpack.c.b16 %v5135, %v5131
    %v5196 = vpack.c.b16 %v5136, %v5132
    %v5197 = vpack.c.b16 %v5137, %v5133
    %v5198 = vpack.c.b16 %v5142, %v5138
    %v5199 = vpack.c.b16 %v5143, %v5139
    %v5200 = vpack.c.b16 %v5144, %v5140
    %v5201 = vpack.c.b16 %v5145, %v5141
    %v5202 = vpack.c.b16 %v5150, %v5146
    %v5203 = vpack.c.b16 %v5151, %v5147
    %v5204 = vpack.c.b16 %v5152, %v5148
    %v5205 = vpack.c.b16 %v5153, %v5149
    %v5206 = vpack.c.b16 %v5158, %v5154
    %v5207 = vpack.c.b16 %v5159, %v5155
    %v5208 = vpack.c.b16 %v5160, %v5156
    %v5209 = vpack.c.b16 %v5161, %v5157
    %v5210 = vpack.c.b16 %v5166, %v5162
    %v5211 = vpack.c.b16 %v5167, %v5163
    %v5212 = vpack.c.b16 %v5168, %v5164
    %v5213 = vpack.c.b16 %v5169, %v5165
    %v5214 = vpack.c.b16 %v5174, %v5170
    %v5215 = vpack.c.b16 %v5175, %v5171
    %v5216 = vpack.c.b16 %v5176, %v5172
    %v5217 = vpack.c.b16 %v5177, %v5173
    %v5218 = vpack.c.b16 %v5182, %v5178
    %v5219 = vpack.c.b16 %v5183, %v5179
    %v5220 = vpack.c.b16 %v5184, %v5180
    %v5221 = vpack.c.b16 %v5185, %v5181
    %v5222 = vpack.c.b16 %v5190, %v5186
    %v5223 = vpack.c.b16 %v5191, %v5187
    %v5224 = vpack.c.b16 %v5192, %v5188
    %v5225 = vpack.c.b16 %v5193, %v5189
    %5258 = vmatprep.subr.bf16.mxu0 %v5195
    %5259 = vmatpush1.bf16.msra.mxu0 %v5194
    %5260 = vmatprep.subr.bf16.mxu0 %v5199
    %5261 = vmatpush1.bf16.msra.mxu0 %v5198
    %5262 = vmatprep.subr.bf16.mxu0 %v5203
    %5263 = vmatpush1.bf16.msra.mxu0 %v5202
    %5264 = vmatprep.subr.bf16.mxu0 %v5207
    %5265 = vmatpush1.bf16.msra.mxu0 %v5206
    %5266 = vmatprep.subr.bf16.mxu0 %v5211
    %5267 = vmatpush1.bf16.msra.mxu0 %v5210
    %5268 = vmatprep.subr.bf16.mxu0 %v5215
    %5269 = vmatpush1.bf16.msra.mxu0 %v5214
    %5270 = vmatprep.subr.bf16.mxu0 %v5219
    %5271 = vmatpush1.bf16.msra.mxu0 %v5218
    %5272 = vmatprep.subr.bf16.mxu0 %v5223
    %5273 = vmatpush1.bf16.msra.mxu0 %v5222
    %5274 = vmatprep.subr.bf16.mxu0 0
    %5275 = vmatpush1.bf16.msra.mxu0 0
    %5276 = vmatprep.subr.bf16.mxu0 0
    %5277 = vmatpush1.bf16.msra.mxu0 0
    %5278 = vmatprep.subr.bf16.mxu0 0
    %5279 = vmatpush1.bf16.msra.mxu0 0
    %5280 = vmatprep.subr.bf16.mxu0 0
    %5281 = vmatpush1.bf16.msra.mxu0 0
    %5282 = vmatprep.subr.bf16.mxu0 0
    %5283 = vmatpush1.bf16.msra.mxu0 0
    %5284 = vmatprep.subr.bf16.mxu0 0
    %5285 = vmatpush1.bf16.msra.mxu0 0
    %5286 = vmatprep.subr.bf16.mxu0 0
    %5287 = vmatpush1.bf16.msra.mxu0 0
    %5288 = vmatprep.subr.bf16.mxu0 0
    %5289 = vmatpush1.bf16.msra.mxu0 0
    %5290 = vmatprep.mubr.bf16.mxu0 0
    %5291 = vmatmul.mubr.bf16.gmra.mrb[0].mxu0 %v5065
    %v5292 = vpop.f32.mrb[0].mxu0
    %v5293 = vadd.f32 0.0, %v5292
    %v5294 = vpop.f32.mrb[0].mxu0
    %v5295 = vadd.f32 0.0, %v5294
    %v5296 = vpop.f32.mrb[0].mxu0
    %v5297 = vpop.f32.mrb[0].mxu0
    %5298 = vdwg.mxu0
    %5299 = vmatprep.subr.bf16.mxu0 %v5197
    %5300 = vmatpush1.bf16.msra.mxu0 %v5196
    %5301 = vmatprep.subr.bf16.mxu0 %v5201
    %5302 = vmatpush1.bf16.msra.mxu0 %v5200
    %5303 = vmatprep.subr.bf16.mxu0 %v5205
    %5304 = vmatpush1.bf16.msra.mxu0 %v5204
    %5305 = vmatprep.subr.bf16.mxu0 %v5209
    %5306 = vmatpush1.bf16.msra.mxu0 %v5208
    %5307 = vmatprep.subr.bf16.mxu0 %v5213
    %5308 = vmatpush1.bf16.msra.mxu0 %v5212
    %5309 = vmatprep.subr.bf16.mxu0 %v5217
    %5310 = vmatpush1.bf16.msra.mxu0 %v5216
    %5311 = vmatprep.subr.bf16.mxu0 %v5221
    %5312 = vmatpush1.bf16.msra.mxu0 %v5220
    %5313 = vmatprep.subr.bf16.mxu0 %v5225
    %5314 = vmatpush1.bf16.msra.mxu0 %v5224
    %5315 = vmatprep.subr.bf16.mxu0 0
    %5316 = vmatpush1.bf16.msra.mxu0 0
    %5317 = vmatprep.subr.bf16.mxu0 0
    %5318 = vmatpush1.bf16.msra.mxu0 0
    %5319 = vmatprep.subr.bf16.mxu0 0
    %5320 = vmatpush1.bf16.msra.mxu0 0
    %5321 = vmatprep.subr.bf16.mxu0 0
    %5322 = vmatpush1.bf16.msra.mxu0 0
    %5323 = vmatprep.subr.bf16.mxu0 0
    %5324 = vmatpush1.bf16.msra.mxu0 0
    %5325 = vmatprep.subr.bf16.mxu0 0
    %5326 = vmatpush1.bf16.msra.mxu0 0
    %5327 = vmatprep.subr.bf16.mxu0 0
    %5328 = vmatpush1.bf16.msra.mxu0 0
    %5329 = vmatprep.subr.bf16.mxu0 0
    %5330 = vmatpush1.bf16.msra.mxu0 0
    %5331 = vmatprep.mubr.bf16.mxu0 0
    %5332 = vmatmul.mubr.bf16.gmra.mrb[0].mxu0 %v5065
    %v5333 = vpop.f32.mrb[0].mxu0
    %v5334 = vadd.f32 0.0, %v5333
    %v5335 = vpop.f32.mrb[0].mxu0
    %v5336 = vadd.f32 0.0, %v5335
    %v5337 = vpop.f32.mrb[0].mxu0
    %v5338 = vpop.f32.mrb[0].mxu0
    %5339 = vdwg.mxu0
    %v5340 = vadd.f32 %v5061, %v5293
    %v5341 = vadd.f32 %v5062, %v5295
    %v5342 = vadd.f32 %v5063, %v5334
    %v5343 = vadd.f32 %v5064, %v5336
    %v5344 = vxor.u32 %v5340, 2147483648
    %v5345 = vxor.u32 %v5341, 2147483648
    %v5346 = vxor.u32 %v5342, 2147483648
    %v5347 = vxor.u32 %v5343, 2147483648
    %v5348 = vmul.f32 %v5344, 1.442695
    %v5349 = vpow.pop %v5348
    %v5350 = vmul.f32 %v5345, 1.442695
    %v5351 = vpow.pop %v5350
    %v5352 = vmul.f32 %v5346, 1.442695
    %v5353 = vpow.pop %v5352
    %v5354 = vmul.f32 %v5347, 1.442695
    %v5355 = vpow.pop %v5354
    %v5356 = vadd.f32 %v5349, 1.0
    %v5357 = vadd.f32 %v5351, 1.0
    %v5358 = vadd.f32 %v5353, 1.0
    %v5359 = vadd.f32 %v5355, 1.0
    %v5360 = vrcp.pop %v5356
    %v5361 = vmul.f32 1.0, %v5360
    %v5362 = vrcp.pop %v5357
    %v5363 = vmul.f32 1.0, %v5362
    %v5364 = vrcp.pop %v5358
    %v5365 = vmul.f32 1.0, %v5364
    %v5366 = vrcp.pop %v5359
    %v5367 = vmul.f32 1.0, %v5366
    %v5368 = vmul.f32 %v5365, 2.0
    %v5369 = vsub.f32 %v5368, 1.0
    %v5370 = vmul.f32 %v5363, %v5056
    %v5371 = vmul.f32 %v5361, %v5369
    %v5372 = vadd.f32 %v5370, %v5371
    %v5373 = vtanh.pop %v5372
    %v5374 = vmul.f32 %v5367, %v5373
    %s5375 = scalar_lea.vmem [#allocation12], 40
    %5376 = vst [vmem:[%s5375] sm:$0xff] %v5374
    %v5377 = vld [vmem:[%s2416] sm:$0xff]
    %v5378 = vld [vmem:[%s2416 + $0x8] sm:$0xff]
    %v5379 = vld [vmem:[%s2416 + $0x10] sm:$0xff]
    %v5380 = vld [vmem:[%s2416 + $0x18] sm:$0xff]
    %v5381 = vpack.c.bf16 %v5374, %v5374
    %v5382 = vld [vmem:[%s3486] sm:$0xff]
    %v5383 = vld [vmem:[%s3486 + $0x8] sm:$0xff]
    %v5384 = vld [vmem:[%s3486 + $0x10] sm:$0xff]
    %v5385 = vld [vmem:[%s3486 + $0x18] sm:$0xff]
    %v5386 = vld [vmem:[%s3486 + $0x20] sm:$0xff]
    %v5387 = vld [vmem:[%s3486 + $0x28] sm:$0xff]
    %v5388 = vld [vmem:[%s3486 + $0x30] sm:$0xff]
    %v5389 = vld [vmem:[%s3486 + $0x38] sm:$0xff]
    %v5390 = vld [vmem:[%s3486 + $0x40] sm:$0xff]
    %v5391 = vld [vmem:[%s3486 + $0x48] sm:$0xff]
    %v5392 = vld [vmem:[%s3486 + $0x50] sm:$0xff]
    %v5393 = vld [vmem:[%s3486 + $0x58] sm:$0xff]
    %v5394 = vld [vmem:[%s3486 + $0x60] sm:$0xff]
    %v5395 = vld [vmem:[%s3486 + $0x68] sm:$0xff]
    %v5396 = vld [vmem:[%s3486 + $0x70] sm:$0xff]
    %v5397 = vld [vmem:[%s3486 + $0x78] sm:$0xff]
    %v5398 = vld [vmem:[%s3486 + $0x80] sm:$0xff]
    %v5399 = vld [vmem:[%s3486 + $0x88] sm:$0xff]
    %v5400 = vld [vmem:[%s3486 + $0x90] sm:$0xff]
    %v5401 = vld [vmem:[%s3486 + $0x98] sm:$0xff]
    %v5402 = vld [vmem:[%s3486 + $0xa0] sm:$0xff]
    %v5403 = vld [vmem:[%s3486 + $0xa8] sm:$0xff]
    %v5404 = vld [vmem:[%s3486 + $0xb0] sm:$0xff]
    %v5405 = vld [vmem:[%s3486 + $0xb8] sm:$0xff]
    %v5406 = vld [vmem:[%s3486 + $0xc0] sm:$0xff]
    %v5407 = vld [vmem:[%s3486 + $0xc8] sm:$0xff]
    %v5408 = vld [vmem:[%s3486 + $0xd0] sm:$0xff]
    %v5409 = vld [vmem:[%s3486 + $0xd8] sm:$0xff]
    %v5410 = vld [vmem:[%s3486 + $0xe0] sm:$0xff]
    %v5411 = vld [vmem:[%s3486 + $0xe8] sm:$0xff]
    %v5412 = vld [vmem:[%s3486 + $0xf0] sm:$0xff]
    %v5413 = vld [vmem:[%s3486 + $0xf8] sm:$0xff]
    %v5446 = vunpack.c.l.b16 %v5382
    %v5447 = vunpack.c.h.b16 %v5382
    %v5448 = vunpack.c.l.b16 %v5383
    %v5449 = vunpack.c.h.b16 %v5383
    %v5450 = vunpack.c.l.b16 %v5384
    %v5451 = vunpack.c.h.b16 %v5384
    %v5452 = vunpack.c.l.b16 %v5385
    %v5453 = vunpack.c.h.b16 %v5385
    %v5454 = vunpack.c.l.b16 %v5386
    %v5455 = vunpack.c.h.b16 %v5386
    %v5456 = vunpack.c.l.b16 %v5387
    %v5457 = vunpack.c.h.b16 %v5387
    %v5458 = vunpack.c.l.b16 %v5388
    %v5459 = vunpack.c.h.b16 %v5388
    %v5460 = vunpack.c.l.b16 %v5389
    %v5461 = vunpack.c.h.b16 %v5389
    %v5462 = vunpack.c.l.b16 %v5390
    %v5463 = vunpack.c.h.b16 %v5390
    %v5464 = vunpack.c.l.b16 %v5391
    %v5465 = vunpack.c.h.b16 %v5391
    %v5466 = vunpack.c.l.b16 %v5392
    %v5467 = vunpack.c.h.b16 %v5392
    %v5468 = vunpack.c.l.b16 %v5393
    %v5469 = vunpack.c.h.b16 %v5393
    %v5470 = vunpack.c.l.b16 %v5394
    %v5471 = vunpack.c.h.b16 %v5394
    %v5472 = vunpack.c.l.b16 %v5395
    %v5473 = vunpack.c.h.b16 %v5395
    %v5474 = vunpack.c.l.b16 %v5396
    %v5475 = vunpack.c.h.b16 %v5396
    %v5476 = vunpack.c.l.b16 %v5397
    %v5477 = vunpack.c.h.b16 %v5397
    %v5478 = vunpack.c.l.b16 %v5398
    %v5479 = vunpack.c.h.b16 %v5398
    %v5480 = vunpack.c.l.b16 %v5399
    %v5481 = vunpack.c.h.b16 %v5399
    %v5482 = vunpack.c.l.b16 %v5400
    %v5483 = vunpack.c.h.b16 %v5400
    %v5484 = vunpack.c.l.b16 %v5401
    %v5485 = vunpack.c.h.b16 %v5401
    %v5486 = vunpack.c.l.b16 %v5402
    %v5487 = vunpack.c.h.b16 %v5402
    %v5488 = vunpack.c.l.b16 %v5403
    %v5489 = vunpack.c.h.b16 %v5403
    %v5490 = vunpack.c.l.b16 %v5404
    %v5491 = vunpack.c.h.b16 %v5404
    %v5492 = vunpack.c.l.b16 %v5405
    %v5493 = vunpack.c.h.b16 %v5405
    %v5494 = vunpack.c.l.b16 %v5406
    %v5495 = vunpack.c.h.b16 %v5406
    %v5496 = vunpack.c.l.b16 %v5407
    %v5497 = vunpack.c.h.b16 %v5407
    %v5498 = vunpack.c.l.b16 %v5408
    %v5499 = vunpack.c.h.b16 %v5408
    %v5500 = vunpack.c.l.b16 %v5409
    %v5501 = vunpack.c.h.b16 %v5409
    %v5502 = vunpack.c.l.b16 %v5410
    %v5503 = vunpack.c.h.b16 %v5410
    %v5504 = vunpack.c.l.b16 %v5411
    %v5505 = vunpack.c.h.b16 %v5411
    %v5506 = vunpack.c.l.b16 %v5412
    %v5507 = vunpack.c.h.b16 %v5412
    %v5508 = vunpack.c.l.b16 %v5413
    %v5509 = vunpack.c.h.b16 %v5413
    %v5510 = vpack.c.b16 %v5450, %v5446
    %v5511 = vpack.c.b16 %v5451, %v5447
    %v5512 = vpack.c.b16 %v5452, %v5448
    %v5513 = vpack.c.b16 %v5453, %v5449
    %v5514 = vpack.c.b16 %v5458, %v5454
    %v5515 = vpack.c.b16 %v5459, %v5455
    %v5516 = vpack.c.b16 %v5460, %v5456
    %v5517 = vpack.c.b16 %v5461, %v5457
    %v5518 = vpack.c.b16 %v5466, %v5462
    %v5519 = vpack.c.b16 %v5467, %v5463
    %v5520 = vpack.c.b16 %v5468, %v5464
    %v5521 = vpack.c.b16 %v5469, %v5465
    %v5522 = vpack.c.b16 %v5474, %v5470
    %v5523 = vpack.c.b16 %v5475, %v5471
    %v5524 = vpack.c.b16 %v5476, %v5472
    %v5525 = vpack.c.b16 %v5477, %v5473
    %v5526 = vpack.c.b16 %v5482, %v5478
    %v5527 = vpack.c.b16 %v5483, %v5479
    %v5528 = vpack.c.b16 %v5484, %v5480
    %v5529 = vpack.c.b16 %v5485, %v5481
    %v5530 = vpack.c.b16 %v5490, %v5486
    %v5531 = vpack.c.b16 %v5491, %v5487
    %v5532 = vpack.c.b16 %v5492, %v5488
    %v5533 = vpack.c.b16 %v5493, %v5489
    %v5534 = vpack.c.b16 %v5498, %v5494
    %v5535 = vpack.c.b16 %v5499, %v5495
    %v5536 = vpack.c.b16 %v5500, %v5496
    %v5537 = vpack.c.b16 %v5501, %v5497
    %v5538 = vpack.c.b16 %v5506, %v5502
    %v5539 = vpack.c.b16 %v5507, %v5503
    %v5540 = vpack.c.b16 %v5508, %v5504
    %v5541 = vpack.c.b16 %v5509, %v5505
    %5574 = vmatprep.subr.bf16.mxu0 %v5511
    %5575 = vmatpush1.bf16.msra.mxu0 %v5510
    %5576 = vmatprep.subr.bf16.mxu0 %v5515
    %5577 = vmatpush1.bf16.msra.mxu0 %v5514
    %5578 = vmatprep.subr.bf16.mxu0 %v5519
    %5579 = vmatpush1.bf16.msra.mxu0 %v5518
    %5580 = vmatprep.subr.bf16.mxu0 %v5523
    %5581 = vmatpush1.bf16.msra.mxu0 %v5522
    %5582 = vmatprep.subr.bf16.mxu0 %v5527
    %5583 = vmatpush1.bf16.msra.mxu0 %v5526
    %5584 = vmatprep.subr.bf16.mxu0 %v5531
    %5585 = vmatpush1.bf16.msra.mxu0 %v5530
    %5586 = vmatprep.subr.bf16.mxu0 %v5535
    %5587 = vmatpush1.bf16.msra.mxu0 %v5534
    %5588 = vmatprep.subr.bf16.mxu0 %v5539
    %5589 = vmatpush1.bf16.msra.mxu0 %v5538
    %5590 = vmatprep.subr.bf16.mxu0 0
    %5591 = vmatpush1.bf16.msra.mxu0 0
    %5592 = vmatprep.subr.bf16.mxu0 0
    %5593 = vmatpush1.bf16.msra.mxu0 0
    %5594 = vmatprep.subr.bf16.mxu0 0
    %5595 = vmatpush1.bf16.msra.mxu0 0
    %5596 = vmatprep.subr.bf16.mxu0 0
    %5597 = vmatpush1.bf16.msra.mxu0 0
    %5598 = vmatprep.subr.bf16.mxu0 0
    %5599 = vmatpush1.bf16.msra.mxu0 0
    %5600 = vmatprep.subr.bf16.mxu0 0
    %5601 = vmatpush1.bf16.msra.mxu0 0
    %5602 = vmatprep.subr.bf16.mxu0 0
    %5603 = vmatpush1.bf16.msra.mxu0 0
    %5604 = vmatprep.subr.bf16.mxu0 0
    %5605 = vmatpush1.bf16.msra.mxu0 0
    %5606 = vmatprep.mubr.bf16.mxu0 0
    %5607 = vmatmul.mubr.bf16.gmra.mrb[0].mxu0 %v5381
    %v5608 = vpop.f32.mrb[0].mxu0
    %v5609 = vadd.f32 0.0, %v5608
    %v5610 = vpop.f32.mrb[0].mxu0
    %v5611 = vadd.f32 0.0, %v5610
    %v5612 = vpop.f32.mrb[0].mxu0
    %v5613 = vpop.f32.mrb[0].mxu0
    %5614 = vdwg.mxu0
    %5615 = vmatprep.subr.bf16.mxu0 %v5513
    %5616 = vmatpush1.bf16.msra.mxu0 %v5512
    %5617 = vmatprep.subr.bf16.mxu0 %v5517
    %5618 = vmatpush1.bf16.msra.mxu0 %v5516
    %5619 = vmatprep.subr.bf16.mxu0 %v5521
    %5620 = vmatpush1.bf16.msra.mxu0 %v5520
    %5621 = vmatprep.subr.bf16.mxu0 %v5525
    %5622 = vmatpush1.bf16.msra.mxu0 %v5524
    %5623 = vmatprep.subr.bf16.mxu0 %v5529
    %5624 = vmatpush1.bf16.msra.mxu0 %v5528
    %5625 = vmatprep.subr.bf16.mxu0 %v5533
    %5626 = vmatpush1.bf16.msra.mxu0 %v5532
    %5627 = vmatprep.subr.bf16.mxu0 %v5537
    %5628 = vmatpush1.bf16.msra.mxu0 %v5536
    %5629 = vmatprep.subr.bf16.mxu0 %v5541
    %5630 = vmatpush1.bf16.msra.mxu0 %v5540
    %5631 = vmatprep.subr.bf16.mxu0 0
    %5632 = vmatpush1.bf16.msra.mxu0 0
    %5633 = vmatprep.subr.bf16.mxu0 0
    %5634 = vmatpush1.bf16.msra.mxu0 0
    %5635 = vmatprep.subr.bf16.mxu0 0
    %5636 = vmatpush1.bf16.msra.mxu0 0
    %5637 = vmatprep.subr.bf16.mxu0 0
    %5638 = vmatpush1.bf16.msra.mxu0 0
    %5639 = vmatprep.subr.bf16.mxu0 0
    %5640 = vmatpush1.bf16.msra.mxu0 0
    %5641 = vmatprep.subr.bf16.mxu0 0
    %5642 = vmatpush1.bf16.msra.mxu0 0
    %5643 = vmatprep.subr.bf16.mxu0 0
    %5644 = vmatpush1.bf16.msra.mxu0 0
    %5645 = vmatprep.subr.bf16.mxu0 0
    %5646 = vmatpush1.bf16.msra.mxu0 0
    %5647 = vmatprep.mubr.bf16.mxu0 0
    %5648 = vmatmul.mubr.bf16.gmra.mrb[0].mxu0 %v5381
    %v5649 = vpop.f32.mrb[0].mxu0
    %v5650 = vadd.f32 0.0, %v5649
    %v5651 = vpop.f32.mrb[0].mxu0
    %v5652 = vadd.f32 0.0, %v5651
    %v5653 = vpop.f32.mrb[0].mxu0
    %v5654 = vpop.f32.mrb[0].mxu0
    %5655 = vdwg.mxu0
    %v5656 = vadd.f32 %v5377, %v5609
    %v5657 = vadd.f32 %v5378, %v5611
    %v5658 = vadd.f32 %v5379, %v5650
    %v5659 = vadd.f32 %v5380, %v5652
    %v5660 = vxor.u32 %v5656, 2147483648
    %v5661 = vxor.u32 %v5657, 2147483648
    %v5662 = vxor.u32 %v5658, 2147483648
    %v5663 = vxor.u32 %v5659, 2147483648
    %v5664 = vmul.f32 %v5660, 1.442695
    %v5665 = vpow.pop %v5664
    %v5666 = vmul.f32 %v5661, 1.442695
    %v5667 = vpow.pop %v5666
    %v5668 = vmul.f32 %v5662, 1.442695
    %v5669 = vpow.pop %v5668
    %v5670 = vmul.f32 %v5663, 1.442695
    %v5671 = vpow.pop %v5670
    %v5672 = vadd.f32 %v5665, 1.0
    %v5673 = vadd.f32 %v5667, 1.0
    %v5674 = vadd.f32 %v5669, 1.0
    %v5675 = vadd.f32 %v5671, 1.0
    %v5676 = vrcp.pop %v5672
    %v5677 = vmul.f32 1.0, %v5676
    %v5678 = vrcp.pop %v5673
    %v5679 = vmul.f32 1.0, %v5678
    %v5680 = vrcp.pop %v5674
    %v5681 = vmul.f32 1.0, %v5680
    %v5682 = vrcp.pop %v5675
    %v5683 = vmul.f32 1.0, %v5682
    %v5684 = vmul.f32 %v5681, 2.0
    %v5685 = vsub.f32 %v5684, 1.0
    %v5686 = vmul.f32 %v5679, %v5372
    %v5687 = vmul.f32 %v5677, %v5685
    %v5688 = vadd.f32 %v5686, %v5687
    %v5689 = vtanh.pop %v5688
    %v5690 = vmul.f32 %v5683, %v5689
    %s5691 = scalar_lea.vmem [#allocation12], 48
    %5692 = vst [vmem:[%s5691] sm:$0xff] %v5690
    %v5693 = vld [vmem:[%s2733] sm:$0xff]
    %v5694 = vld [vmem:[%s2733 + $0x8] sm:$0xff]
    %v5695 = vld [vmem:[%s2733 + $0x10] sm:$0xff]
    %v5696 = vld [vmem:[%s2733 + $0x18] sm:$0xff]
    %v5697 = vpack.c.bf16 %v5690, %v5690
    %v5698 = vld [vmem:[%s3486] sm:$0xff]
    %v5699 = vld [vmem:[%s3486 + $0x8] sm:$0xff]
    %v5700 = vld [vmem:[%s3486 + $0x10] sm:$0xff]
    %v5701 = vld [vmem:[%s3486 + $0x18] sm:$0xff]
    %v5702 = vld [vmem:[%s3486 + $0x20] sm:$0xff]
    %v5703 = vld [vmem:[%s3486 + $0x28] sm:$0xff]
    %v5704 = vld [vmem:[%s3486 + $0x30] sm:$0xff]
    %v5705 = vld [vmem:[%s3486 + $0x38] sm:$0xff]
    %v5706 = vld [vmem:[%s3486 + $0x40] sm:$0xff]
    %v5707 = vld [vmem:[%s3486 + $0x48] sm:$0xff]
    %v5708 = vld [vmem:[%s3486 + $0x50] sm:$0xff]
    %v5709 = vld [vmem:[%s3486 + $0x58] sm:$0xff]
    %v5710 = vld [vmem:[%s3486 + $0x60] sm:$0xff]
    %v5711 = vld [vmem:[%s3486 + $0x68] sm:$0xff]
    %v5712 = vld [vmem:[%s3486 + $0x70] sm:$0xff]
    %v5713 = vld [vmem:[%s3486 + $0x78] sm:$0xff]
    %v5714 = vld [vmem:[%s3486 + $0x80] sm:$0xff]
    %v5715 = vld [vmem:[%s3486 + $0x88] sm:$0xff]
    %v5716 = vld [vmem:[%s3486 + $0x90] sm:$0xff]
    %v5717 = vld [vmem:[%s3486 + $0x98] sm:$0xff]
    %v5718 = vld [vmem:[%s3486 + $0xa0] sm:$0xff]
    %v5719 = vld [vmem:[%s3486 + $0xa8] sm:$0xff]
    %v5720 = vld [vmem:[%s3486 + $0xb0] sm:$0xff]
    %v5721 = vld [vmem:[%s3486 + $0xb8] sm:$0xff]
    %v5722 = vld [vmem:[%s3486 + $0xc0] sm:$0xff]
    %v5723 = vld [vmem:[%s3486 + $0xc8] sm:$0xff]
    %v5724 = vld [vmem:[%s3486 + $0xd0] sm:$0xff]
    %v5725 = vld [vmem:[%s3486 + $0xd8] sm:$0xff]
    %v5726 = vld [vmem:[%s3486 + $0xe0] sm:$0xff]
    %v5727 = vld [vmem:[%s3486 + $0xe8] sm:$0xff]
    %v5728 = vld [vmem:[%s3486 + $0xf0] sm:$0xff]
    %v5729 = vld [vmem:[%s3486 + $0xf8] sm:$0xff]
    %v5762 = vunpack.c.l.b16 %v5698
    %v5763 = vunpack.c.h.b16 %v5698
    %v5764 = vunpack.c.l.b16 %v5699
    %v5765 = vunpack.c.h.b16 %v5699
    %v5766 = vunpack.c.l.b16 %v5700
    %v5767 = vunpack.c.h.b16 %v5700
    %v5768 = vunpack.c.l.b16 %v5701
    %v5769 = vunpack.c.h.b16 %v5701
    %v5770 = vunpack.c.l.b16 %v5702
    %v5771 = vunpack.c.h.b16 %v5702
    %v5772 = vunpack.c.l.b16 %v5703
    %v5773 = vunpack.c.h.b16 %v5703
    %v5774 = vunpack.c.l.b16 %v5704
    %v5775 = vunpack.c.h.b16 %v5704
    %v5776 = vunpack.c.l.b16 %v5705
    %v5777 = vunpack.c.h.b16 %v5705
    %v5778 = vunpack.c.l.b16 %v5706
    %v5779 = vunpack.c.h.b16 %v5706
    %v5780 = vunpack.c.l.b16 %v5707
    %v5781 = vunpack.c.h.b16 %v5707
    %v5782 = vunpack.c.l.b16 %v5708
    %v5783 = vunpack.c.h.b16 %v5708
    %v5784 = vunpack.c.l.b16 %v5709
    %v5785 = vunpack.c.h.b16 %v5709
    %v5786 = vunpack.c.l.b16 %v5710
    %v5787 = vunpack.c.h.b16 %v5710
    %v5788 = vunpack.c.l.b16 %v5711
    %v5789 = vunpack.c.h.b16 %v5711
    %v5790 = vunpack.c.l.b16 %v5712
    %v5791 = vunpack.c.h.b16 %v5712
    %v5792 = vunpack.c.l.b16 %v5713
    %v5793 = vunpack.c.h.b16 %v5713
    %v5794 = vunpack.c.l.b16 %v5714
    %v5795 = vunpack.c.h.b16 %v5714
    %v5796 = vunpack.c.l.b16 %v5715
    %v5797 = vunpack.c.h.b16 %v5715
    %v5798 = vunpack.c.l.b16 %v5716
    %v5799 = vunpack.c.h.b16 %v5716
    %v5800 = vunpack.c.l.b16 %v5717
    %v5801 = vunpack.c.h.b16 %v5717
    %v5802 = vunpack.c.l.b16 %v5718
    %v5803 = vunpack.c.h.b16 %v5718
    %v5804 = vunpack.c.l.b16 %v5719
    %v5805 = vunpack.c.h.b16 %v5719
    %v5806 = vunpack.c.l.b16 %v5720
    %v5807 = vunpack.c.h.b16 %v5720
    %v5808 = vunpack.c.l.b16 %v5721
    %v5809 = vunpack.c.h.b16 %v5721
    %v5810 = vunpack.c.l.b16 %v5722
    %v5811 = vunpack.c.h.b16 %v5722
    %v5812 = vunpack.c.l.b16 %v5723
    %v5813 = vunpack.c.h.b16 %v5723
    %v5814 = vunpack.c.l.b16 %v5724
    %v5815 = vunpack.c.h.b16 %v5724
    %v5816 = vunpack.c.l.b16 %v5725
    %v5817 = vunpack.c.h.b16 %v5725
    %v5818 = vunpack.c.l.b16 %v5726
    %v5819 = vunpack.c.h.b16 %v5726
    %v5820 = vunpack.c.l.b16 %v5727
    %v5821 = vunpack.c.h.b16 %v5727
    %v5822 = vunpack.c.l.b16 %v5728
    %v5823 = vunpack.c.h.b16 %v5728
    %v5824 = vunpack.c.l.b16 %v5729
    %v5825 = vunpack.c.h.b16 %v5729
    %v5826 = vpack.c.b16 %v5766, %v5762
    %v5827 = vpack.c.b16 %v5767, %v5763
    %v5828 = vpack.c.b16 %v5768, %v5764
    %v5829 = vpack.c.b16 %v5769, %v5765
    %v5830 = vpack.c.b16 %v5774, %v5770
    %v5831 = vpack.c.b16 %v5775, %v5771
    %v5832 = vpack.c.b16 %v5776, %v5772
    %v5833 = vpack.c.b16 %v5777, %v5773
    %v5834 = vpack.c.b16 %v5782, %v5778
    %v5835 = vpack.c.b16 %v5783, %v5779
    %v5836 = vpack.c.b16 %v5784, %v5780
    %v5837 = vpack.c.b16 %v5785, %v5781
    %v5838 = vpack.c.b16 %v5790, %v5786
    %v5839 = vpack.c.b16 %v5791, %v5787
    %v5840 = vpack.c.b16 %v5792, %v5788
    %v5841 = vpack.c.b16 %v5793, %v5789
    %v5842 = vpack.c.b16 %v5798, %v5794
    %v5843 = vpack.c.b16 %v5799, %v5795
    %v5844 = vpack.c.b16 %v5800, %v5796
    %v5845 = vpack.c.b16 %v5801, %v5797
    %v5846 = vpack.c.b16 %v5806, %v5802
    %v5847 = vpack.c.b16 %v5807, %v5803
    %v5848 = vpack.c.b16 %v5808, %v5804
    %v5849 = vpack.c.b16 %v5809, %v5805
    %v5850 = vpack.c.b16 %v5814, %v5810
    %v5851 = vpack.c.b16 %v5815, %v5811
    %v5852 = vpack.c.b16 %v5816, %v5812
    %v5853 = vpack.c.b16 %v5817, %v5813
    %v5854 = vpack.c.b16 %v5822, %v5818
    %v5855 = vpack.c.b16 %v5823, %v5819
    %v5856 = vpack.c.b16 %v5824, %v5820
    %v5857 = vpack.c.b16 %v5825, %v5821
    %5890 = vmatprep.subr.bf16.mxu0 %v5827
    %5891 = vmatpush1.bf16.msra.mxu0 %v5826
    %5892 = vmatprep.subr.bf16.mxu0 %v5831
    %5893 = vmatpush1.bf16.msra.mxu0 %v5830
    %5894 = vmatprep.subr.bf16.mxu0 %v5835
    %5895 = vmatpush1.bf16.msra.mxu0 %v5834
    %5896 = vmatprep.subr.bf16.mxu0 %v5839
    %5897 = vmatpush1.bf16.msra.mxu0 %v5838
    %5898 = vmatprep.subr.bf16.mxu0 %v5843
    %5899 = vmatpush1.bf16.msra.mxu0 %v5842
    %5900 = vmatprep.subr.bf16.mxu0 %v5847
    %5901 = vmatpush1.bf16.msra.mxu0 %v5846
    %5902 = vmatprep.subr.bf16.mxu0 %v5851
    %5903 = vmatpush1.bf16.msra.mxu0 %v5850
    %5904 = vmatprep.subr.bf16.mxu0 %v5855
    %5905 = vmatpush1.bf16.msra.mxu0 %v5854
    %5906 = vmatprep.subr.bf16.mxu0 0
    %5907 = vmatpush1.bf16.msra.mxu0 0
    %5908 = vmatprep.subr.bf16.mxu0 0
    %5909 = vmatpush1.bf16.msra.mxu0 0
    %5910 = vmatprep.subr.bf16.mxu0 0
    %5911 = vmatpush1.bf16.msra.mxu0 0
    %5912 = vmatprep.subr.bf16.mxu0 0
    %5913 = vmatpush1.bf16.msra.mxu0 0
    %5914 = vmatprep.subr.bf16.mxu0 0
    %5915 = vmatpush1.bf16.msra.mxu0 0
    %5916 = vmatprep.subr.bf16.mxu0 0
    %5917 = vmatpush1.bf16.msra.mxu0 0
    %5918 = vmatprep.subr.bf16.mxu0 0
    %5919 = vmatpush1.bf16.msra.mxu0 0
    %5920 = vmatprep.subr.bf16.mxu0 0
    %5921 = vmatpush1.bf16.msra.mxu0 0
    %5922 = vmatprep.mubr.bf16.mxu0 0
    %5923 = vmatmul.mubr.bf16.gmra.mrb[0].mxu0 %v5697
    %v5924 = vpop.f32.mrb[0].mxu0
    %v5925 = vadd.f32 0.0, %v5924
    %v5926 = vpop.f32.mrb[0].mxu0
    %v5927 = vadd.f32 0.0, %v5926
    %v5928 = vpop.f32.mrb[0].mxu0
    %v5929 = vpop.f32.mrb[0].mxu0
    %5930 = vdwg.mxu0
    %5931 = vmatprep.subr.bf16.mxu0 %v5829
    %5932 = vmatpush1.bf16.msra.mxu0 %v5828
    %5933 = vmatprep.subr.bf16.mxu0 %v5833
    %5934 = vmatpush1.bf16.msra.mxu0 %v5832
    %5935 = vmatprep.subr.bf16.mxu0 %v5837
    %5936 = vmatpush1.bf16.msra.mxu0 %v5836
    %5937 = vmatprep.subr.bf16.mxu0 %v5841
    %5938 = vmatpush1.bf16.msra.mxu0 %v5840
    %5939 = vmatprep.subr.bf16.mxu0 %v5845
    %5940 = vmatpush1.bf16.msra.mxu0 %v5844
    %5941 = vmatprep.subr.bf16.mxu0 %v5849
    %5942 = vmatpush1.bf16.msra.mxu0 %v5848
    %5943 = vmatprep.subr.bf16.mxu0 %v5853
    %5944 = vmatpush1.bf16.msra.mxu0 %v5852
    %5945 = vmatprep.subr.bf16.mxu0 %v5857
    %5946 = vmatpush1.bf16.msra.mxu0 %v5856
    %5947 = vmatprep.subr.bf16.mxu0 0
    %5948 = vmatpush1.bf16.msra.mxu0 0
    %5949 = vmatprep.subr.bf16.mxu0 0
    %5950 = vmatpush1.bf16.msra.mxu0 0
    %5951 = vmatprep.subr.bf16.mxu0 0
    %5952 = vmatpush1.bf16.msra.mxu0 0
    %5953 = vmatprep.subr.bf16.mxu0 0
    %5954 = vmatpush1.bf16.msra.mxu0 0
    %5955 = vmatprep.subr.bf16.mxu0 0
    %5956 = vmatpush1.bf16.msra.mxu0 0
    %5957 = vmatprep.subr.bf16.mxu0 0
    %5958 = vmatpush1.bf16.msra.mxu0 0
    %5959 = vmatprep.subr.bf16.mxu0 0
    %5960 = vmatpush1.bf16.msra.mxu0 0
    %5961 = vmatprep.subr.bf16.mxu0 0
    %5962 = vmatpush1.bf16.msra.mxu0 0
    %5963 = vmatprep.mubr.bf16.mxu0 0
    %5964 = vmatmul.mubr.bf16.gmra.mrb[0].mxu0 %v5697
    %v5965 = vpop.f32.mrb[0].mxu0
    %v5966 = vadd.f32 0.0, %v5965
    %v5967 = vpop.f32.mrb[0].mxu0
    %v5968 = vadd.f32 0.0, %v5967
    %v5969 = vpop.f32.mrb[0].mxu0
    %v5970 = vpop.f32.mrb[0].mxu0
    %5971 = vdwg.mxu0
    %v5972 = vadd.f32 %v5693, %v5925
    %v5973 = vadd.f32 %v5694, %v5927
    %v5974 = vadd.f32 %v5695, %v5966
    %v5975 = vadd.f32 %v5696, %v5968
    %v5976 = vxor.u32 %v5972, 2147483648
    %v5977 = vxor.u32 %v5973, 2147483648
    %v5978 = vxor.u32 %v5974, 2147483648
    %v5979 = vxor.u32 %v5975, 2147483648
    %v5980 = vmul.f32 %v5976, 1.442695
    %v5981 = vpow.pop %v5980
    %v5982 = vmul.f32 %v5977, 1.442695
    %v5983 = vpow.pop %v5982
    %v5984 = vmul.f32 %v5978, 1.442695
    %v5985 = vpow.pop %v5984
    %v5986 = vmul.f32 %v5979, 1.442695
    %v5987 = vpow.pop %v5986
    %v5988 = vadd.f32 %v5981, 1.0
    %v5989 = vadd.f32 %v5983, 1.0
    %v5990 = vadd.f32 %v5985, 1.0
    %v5991 = vadd.f32 %v5987, 1.0
    %v5992 = vrcp.pop %v5988
    %v5993 = vmul.f32 1.0, %v5992
    %v5994 = vrcp.pop %v5989
    %v5995 = vmul.f32 1.0, %v5994
    %v5996 = vrcp.pop %v5990
    %v5997 = vmul.f32 1.0, %v5996
    %v5998 = vrcp.pop %v5991
    %v5999 = vmul.f32 1.0, %v5998
    %v6000 = vmul.f32 %v5997, 2.0
    %v6001 = vsub.f32 %v6000, 1.0
    %v6002 = vmul.f32 %v5995, %v5688
    %v6003 = vmul.f32 %v5993, %v6001
    %v6004 = vadd.f32 %v6002, %v6003
    %v6005 = vtanh.pop %v6004
    %v6006 = vmul.f32 %v5999, %v6005
    %s6007 = scalar_lea.vmem [#allocation12], 56
    %6008 = vst [vmem:[%s6007] sm:$0xff] %v6006
    %6009 = vst [vmem:[%s3477] sm:$0xff] %v6006
    %6010 = vst [vmem:[%s3479] sm:$0xff] %v6004
    // Predicated region
    $region42: #{tpu_custom_call.1} parent=1 // pred_check
      _
    $region43: #{tpu_custom_call.1} parent=1 // pred_check_branch
      %6012 = sbr.rel (0) target = $region45
    $region44: #{tpu_custom_call.1} parent=1 // pred_region
      %s6014 = ssub.s32 1024, 1024
      %6015 = vsyncadd [#allocation6], %s6014
      %s6016 = sshll.u32 [#allocation12], 4
      %s6017 = int_to_ptr.vmem [resolvable:$true] %s6016
      %6022 = dma.vmem_to_hbm [thread:$0]  %s6017, 1024, %s5, [#allocation6], 128, 128, 8
    $region45: #{tpu_custom_call.1} parent=1 // pred_fallthru
      _
    // Predicated region
    $region46: #{tpu_custom_call.1} parent=1 // pred_check
      _
    $region47: #{tpu_custom_call.1} parent=1 // pred_check_branch
      %6024 = sbr.rel (0) target = $region49
    $region48: #{tpu_custom_call.1} parent=1 // pred_region
      %s6026 = ssub.s32 256, 256
      %6027 = vsyncadd [#allocation14], %s6026
      %s6028 = sshll.u32 [#allocation13], 4
      %s6029 = int_to_ptr.vmem [resolvable:$true] %s6028
      %6034 = dma.vmem_to_hbm [thread:$0]  %s6029, 256, %s6, [#allocation14], 128, 128, 8
    $region49: #{tpu_custom_call.1} parent=1 // pred_fallthru
      _
    // Predicated region
    $region50: #{tpu_custom_call.1} parent=1 // pred_check
      _
    $region51: #{tpu_custom_call.1} parent=1 // pred_check_branch
      %6036 = sbr.rel (0) target = $region53
    $region52: #{tpu_custom_call.1} parent=1 // pred_region
      %s6038 = ssub.s32 256, 256
      %6039 = vsyncadd [#allocation14], %s6038
      %s6040 = sshll.u32 [#allocation15], 4
      %s6041 = int_to_ptr.vmem [resolvable:$true] %s6040
      %6046 = dma.vmem_to_hbm [thread:$0]  %s6041, 256, %s7, [#allocation14], 128, 128, 8
    $region53: #{tpu_custom_call.1} parent=1 // pred_fallthru
      _
    // Predicated region
    $region54: #{tpu_custom_call.1} parent=1 // pred_check
      _
    $region55: #{tpu_custom_call.1} parent=1 // pred_check_branch
      %6048 = sbr.rel (0) target = $region57
    $region56: #{tpu_custom_call.1} parent=1 // pred_region
      %6049 = dma.done [#allocation6], 1024
    $region57: #{tpu_custom_call.1} parent=1 // pred_fallthru
      _
    // Predicated region
    $region58: #{tpu_custom_call.1} parent=1 // pred_check
      _
    $region59: #{tpu_custom_call.1} parent=1 // pred_check_branch
      %6051 = sbr.rel (0) target = $region61
    $region60: #{tpu_custom_call.1} parent=1 // pred_region
      %6052 = dma.done [#allocation14], 256
    $region61: #{tpu_custom_call.1} parent=1 // pred_fallthru
      _
    // Predicated region
    $region62: #{tpu_custom_call.1} parent=1 // pred_check
      _
    $region63: #{tpu_custom_call.1} parent=1 // pred_check_branch
      %6054 = sbr.rel (0) target = $region65
    $region64: #{tpu_custom_call.1} parent=1 // pred_region
      %6055 = dma.done [#allocation14], 256
    $region65: #{tpu_custom_call.1} parent=1 // pred_fallthru
      _
    %6056 = vsyncpa [#allocation5], 1
    %6057 = vsyncpa [#allocation8], 1
    %6058 = vsyncpa [#allocation11], 1
    %6059 = vsyncpa [#allocation6], 1
    %6060 = vsyncpa [#allocation14], 1

</llo_original>
